<compile_context>
chip_gen: v6e
topology: v6e:2x2x1
jax: 0.10.0
libtpu: 0.0.40
codegen_flags: <defaults>
</compile_context>

<pallas_src>
import functools

import numpy as np
import jax
import jax.numpy as jnp
from jax.experimental import pallas as pl
from jax.experimental.pallas import tpu as pltpu

NDF = 8
IMAGE_H = 16
IMAGE_W = 16
BN_EPS = 1e-5
LRELU_SLOPE = 0.2
KSIZE = 4
STRIDE = 2
PAD = 1
KK = KSIZE * KSIZE
_PREC = jax.lax.Precision.HIGHEST  # see precision note at the top


def _lrelu(v):
    return jnp.where(v >= 0.0, v, LRELU_SLOPE * v)


# ----------------------------------------------------------------------------
# Single fused Pallas kernel: all 4 conv stages (+ bias, BN, LeakyReLU)
# ----------------------------------------------------------------------------
def encoder_fused_kernel(p1_ref, w1_ref, b1_ref,
                         g2_ref, w2_ref, pr2_ref,
                         g3_ref, w3_ref, pr3_ref,
                         g4_ref, w4_ref, pr4_ref,
                         o_ref):
    # ---- stage 1: conv as matmul on host-prepared patches, + bias, LeakyReLU
    a = jnp.dot(p1_ref[...], w1_ref[...],
                preferred_element_type=jnp.float32, precision=_PREC)
    a = _lrelu(a + b1_ref[...])                       # (M1, NDF)

    # ---- stages 2..4: two matmuls per stage, all intermediates stay on-chip
    for g_ref, w_ref, pr_ref in ((g2_ref, w2_ref, pr2_ref),
                                 (g3_ref, w3_ref, pr3_ref),
                                 (g4_ref, w4_ref, pr4_ref)):
        m_out = g_ref.shape[0] // KK

        # (1) single wide gather matmul: rows (j, m) of the stacked one-hot
        #     selection matrix pick (zero-padded) activation rows.
        gathered = jnp.dot(g_ref[...].astype(jnp.float32), a,
                           preferred_element_type=jnp.float32, precision=_PREC)

        # Relayout (KK*m_out, c_in) -> lane-dense (m_out, KK*c_in): 16 static
        # sublane slices + one lane concat (no minor-dim-merging reshape).
        patches = jnp.concatenate(
            [gathered[j * m_out:(j + 1) * m_out, :] for j in range(KK)],
            axis=1)

        # (2) single weight matmul with wide contraction K = 16*c_in.
        y = jnp.dot(patches, w_ref[...],
                    preferred_element_type=jnp.float32, precision=_PREC)
        y = y + pr_ref[0:1, :]                        # + conv bias

        # training-mode BatchNorm: biased variance over the (N,H,W)=M axis
        mean = jnp.mean(y, axis=0, keepdims=True)
        var = jnp.mean(jnp.square(y - mean), axis=0, keepdims=True)
        y = (y - mean) * jax.lax.rsqrt(var + BN_EPS)
        y = y * pr_ref[1:2, :] + pr_ref[2:3, :]       # gamma, beta
        a = _lrelu(y)

    o_ref[...] = a                                    # (M4, 8*NDF)


# ----------------------------------------------------------------------------
# Host-side helpers (one-time / trace-time only)
# ----------------------------------------------------------------------------
def im2col(x_nhwc, k=KSIZE, s=STRIDE, p=PAD):
    """Patch matrix for stage 1.  K-axis feature order = (c_in, kh, kw)."""
    N, H, W, C = x_nhwc.shape
    Ho = (H + 2 * p - k) // s + 1
    Wo = (W + 2 * p - k) // s + 1
    xp = jnp.pad(x_nhwc, ((0, 0), (p, p), (p, p), (0, 0)))
    cols = jnp.stack(
        [jnp.stack([xp[:, kh:kh + s * Ho:s, kw:kw + s * Wo:s, :] for kw in range(k)],
                   axis=-1)
         for kh in range(k)],
        axis=-2,
    )  # (N, Ho, Wo, C, kh, kw)
    return cols.reshape(N * Ho * Wo, C * k * k), (N, Ho, Wo)


def _build_gather_stacked(n, h_in, w_in, k=KSIZE, s=STRIDE, p=PAD):
    """Stacked one-hot selection matrix (k*k*M_out, M_in), row order (j, m).

    Row j*M_out + m selects (or zeros, for padding) the source activation row
    feeding kernel tap j = kh*k + kw of output position m.  Vectorized numpy.
    """
    ho = (h_in + 2 * p - k) // s + 1
    wo = (w_in + 2 * p - k) // s + 1
    m_out = n * ho * wo
    m_in = n * h_in * w_in
    g = np.zeros((k * k, m_out, m_in), np.float32)

    b = np.arange(n)[:, None, None]            # (n,1,1)
    oh = np.arange(ho)[None, :, None]          # (1,ho,1)
    ow = np.arange(wo)[None, None, :]          # (1,1,wo)
    dst = (b * ho + oh) * wo + ow              # (n,ho,wo)

    for kh in range(k):
        for kw in range(k):
            ih = s * oh + kh - p               # (1,ho,1)
            iw = s * ow + kw - p               # (1,1,wo)
            valid = np.broadcast_to(
                (ih >= 0) & (ih < h_in) & (iw >= 0) & (iw < w_in), (n, ho, wo))
            src = np.broadcast_to((b * h_in + ih) * w_in + iw, (n, ho, wo))
            j = kh * k + kw
            g[j, dst[valid], src[valid]] = 1.0

    return g.reshape(k * k * m_out, m_in), ho, wo


@functools.lru_cache(maxsize=16)
def _gather_operands(n, h1, w1):
    """Gather matrices for stages 2..4, cached per (batch, stage-1 spatial)."""
    gs = []
    h, w = h1, w1
    for _ in range(3):
        g, h, w = _build_gather_stacked(n, h, w)
        gs.append(g)
    return tuple(gs), (h, w)


def init_conv_params(key, c_in, c_out, k=KSIZE):
    """xavier_normal_ weights + PyTorch-default uniform bias."""
    kw, kb = jax.random.split(key)
    fan_in = c_in * k * k
    fan_out = c_out * k * k
    std = (2.0 / (fan_in + fan_out)) ** 0.5
    w = std * jax.random.normal(kw, (c_out, c_in, k, k), dtype=jnp.float32)
    bound = 1.0 / (fan_in ** 0.5)
    b = jax.random.uniform(kb, (c_out,), minval=-bound, maxval=bound, dtype=jnp.float32)
    return w, b


def init_encoder_params(seed=0):
    key = jax.random.PRNGKey(seed)
    keys = jax.random.split(key, 4)
    channels = [(3, NDF), (NDF, 2 * NDF), (2 * NDF, 4 * NDF), (4 * NDF, 8 * NDF)]
    params = {}
    for i, ((c_in, c_out), k) in enumerate(zip(channels, keys), start=1):
        w, b = init_conv_params(k, c_in, c_out)
        params[f"conv{i}_w"] = w
        params[f"conv{i}_b"] = b
        if i > 1:  # BatchNorm defaults: gamma=1, beta=0
            params[f"bn{i}_g"] = jnp.ones((c_out,), jnp.float32)
            params[f"bn{i}_b"] = jnp.zeros((c_out,), jnp.float32)
    return params


def prepare_kernel_params(params):
    """One-time weight relayout, hoisted out of the jitted forward."""
    kp = {
        "w1": jnp.transpose(params["conv1_w"].reshape(NDF, 3 * KK)).astype(jnp.float32),
        "b1": params["conv1_b"].reshape(1, NDF).astype(jnp.float32),
    }
    for i in (2, 3, 4):
        w = params[f"conv{i}_w"]                       # (c_out, c_in, 4, 4)
        c_out, c_in = w.shape[0], w.shape[1]
        # Rows ordered ((kh,kw), c_in) to match the in-kernel patch columns.
        kp[f"w{i}"] = jnp.transpose(w, (2, 3, 1, 0)).reshape(
            KK * c_in, c_out).astype(jnp.float32)
        # packed per-channel params: [bias; gamma; beta]  -> one small operand
        kp[f"p{i}"] = jnp.stack(
            [params[f"conv{i}_b"], params[f"bn{i}_g"], params[f"bn{i}_b"]],
            axis=0).astype(jnp.float32)
    return kp


# ----------------------------------------------------------------------------
# Forward pass (single pallas_call)
# ----------------------------------------------------------------------------
def encoder_forward(kparams, x_nchw):
    x = x_nchw.reshape(-1, 3, IMAGE_H, IMAGE_W).astype(jnp.float32)   # x.view(-1,3,H,W)
    n = x.shape[0]
    x_nhwc = jnp.transpose(x, (0, 2, 3, 1))
    p1, (_, ho1, wo1) = im2col(x_nhwc)                                # (n*64, 48)

    (g2np, g3np, g4np), (ho4, wo4) = _gather_operands(n, ho1, wo1)
    # 0/1 is exact in bf16; halves the gather-matrix HBM->VMEM traffic.
    g2 = jnp.asarray(g2np, dtype=jnp.bfloat16)
    g3 = jnp.asarray(g3np, dtype=jnp.bfloat16)
    g4 = jnp.asarray(g4np, dtype=jnp.bfloat16)

    m4 = n * ho4 * wo4
    c4 = 8 * NDF

    inputs = (p1, kparams["w1"], kparams["b1"],
              g2, kparams["w2"], kparams["p2"],
              g3, kparams["w3"], kparams["p3"],
              g4, kparams["w4"], kparams["p4"])

    out = pl.pallas_call(
        encoder_fused_kernel,
        out_shape=jax.ShapeDtypeStruct((m4, c4), jnp.float32),
        in_specs=[pl.BlockSpec(a.shape, lambda: (0, 0)) for a in inputs],
        out_specs=pl.BlockSpec((m4, c4), lambda: (0, 0)),
        compiler_params=pltpu.CompilerParams(
            vmem_limit_bytes=32 * 1024 * 1024),
    )(*inputs)

    if ho4 == 1 and wo4 == 1:
        # (N, C) already has NCHW element order when spatial is 1x1:
        # metadata-only reshape, no transpose op emitted.
        return out.reshape(n, c4, 1, 1)
    return jnp.transpose(out.reshape(n, ho4, wo4, c4), (0, 3, 1, 2))


# ----------------------------------------------------------------------------
# Pure-JAX reference (for correctness check only)
# ----------------------------------------------------------------------------
def encoder_reference(params, x_nchw):
    x = x_nchw.reshape(-1, 3, IMAGE_H, IMAGE_W).astype(jnp.float32)

    def conv(v, w, b):
        y = jax.lax.conv_general_dilated(
            v, w, window_strides=(STRIDE, STRIDE),
            padding=((PAD, PAD), (PAD, PAD)),
            dimension_numbers=("NCHW", "OIHW", "NCHW"),
            precision=_PREC)
        return y + b.reshape(1, -1, 1, 1)

    def bn(y, g, b):
        mean = jnp.mean(y, axis=(0, 2, 3), keepdims=True)
        var = jnp.mean(jnp.square(y - mean), axis=(0, 2, 3), keepdims=True)
        return ((y - mean) * jax.lax.rsqrt(var + BN_EPS)
                * g.reshape(1, -1, 1, 1) + b.reshape(1, -1, 1, 1))

    y = _lrelu(conv(x, params["conv1_w"], params["conv1_b"]))
    y = _lrelu(bn(conv(y, params["conv2_w"], params["conv2_b"]),
                  params["bn2_g"], params["bn2_b"]))
    y = _lrelu(bn(conv(y, params["conv3_w"], params["conv3_b"]),
                  params["bn3_g"], params["bn3_b"]))
    y = _lrelu(bn(conv(y, params["conv4_w"], params["conv4_b"]),
                  params["bn4_g"], params["bn4_b"]))
    return y


if __name__ == "__main__":
    key = jax.random.PRNGKey(0)
    x = jax.random.normal(key, (2, 3, IMAGE_H, IMAGE_W), dtype=jnp.float32)

    params = init_encoder_params(seed=0)
    kparams = prepare_kernel_params(params)        # one-time relayout, outside jit

    fwd = jax.jit(encoder_forward)
    out = fwd(kparams, x)
    jax.block_until_ready(out)

    expected_shape = (2, 8 * NDF, IMAGE_H // 16, IMAGE_W // 16)   # (2, 64, 1, 1)
    assert out.shape == expected_shape, out.shape
    assert bool(jnp.all(jnp.isfinite(out)))

    ref = jax.jit(encoder_reference)(params, x)
    jax.block_until_ready(ref)
    max_err = float(jnp.max(jnp.abs(out - ref)))
    assert max_err < 5e-3, f"mismatch vs pure-JAX reference: max_err={max_err}"

    print("KERNEL_OK")
</pallas_src>

<mosaic_0001>
module attributes {stable_mosaic.version = 11 : i64} {
  func.func @encoder_fused_kernel(%arg0: memref<128x48xf32, #tpu.memory_space<vmem>>, %arg1: memref<48x8xf32, #tpu.memory_space<vmem>>, %arg2: memref<1x8xf32, #tpu.memory_space<vmem>>, %arg3: memref<512x128xbf16, #tpu.memory_space<vmem>>, %arg4: memref<128x16xf32, #tpu.memory_space<vmem>>, %arg5: memref<3x16xf32, #tpu.memory_space<vmem>>, %arg6: memref<128x32xbf16, #tpu.memory_space<vmem>>, %arg7: memref<256x32xf32, #tpu.memory_space<vmem>>, %arg8: memref<3x32xf32, #tpu.memory_space<vmem>>, %arg9: memref<32x8xbf16, #tpu.memory_space<vmem>>, %arg10: memref<512x64xf32, #tpu.memory_space<vmem>>, %arg11: memref<3x64xf32, #tpu.memory_space<vmem>>, %arg12: memref<2x64xf32, #tpu.memory_space<vmem>>) attributes {dimension_semantics = [], scalar_prefetch = 0 : i64, scratch_operands = 0 : i64, tpu.core_type = #tpu.core_type<tc>} {
    %c0 = arith.constant 0 : index
    %c0_0 = arith.constant 0 : index
    %0 = vector.load %arg0[%c0, %c0_0] : memref<128x48xf32, #tpu.memory_space<vmem>>, vector<128x48xf32>
    %c0_1 = arith.constant 0 : index
    %c0_2 = arith.constant 0 : index
    %1 = vector.load %arg1[%c0_1, %c0_2] : memref<48x8xf32, #tpu.memory_space<vmem>>, vector<48x8xf32>
    %cst = arith.constant dense<0.000000e+00> : vector<128x8xf32>
    %2 = tpu.matmul %0, %1, %cst {dimension_numbers = #tpu.dot_dimension_numbers<[1], [0], [0], [1], [0, 0, 1, 1], [], []>, precision = #tpu.contract_precision<fp32>} : vector<128x48xf32>, vector<48x8xf32>, vector<128x8xf32> -> vector<128x8xf32>
    %c0_3 = arith.constant 0 : index
    %c0_4 = arith.constant 0 : index
    %3 = vector.load %arg2[%c0_3, %c0_4] : memref<1x8xf32, #tpu.memory_space<vmem>>, vector<1x8xf32>
    %4 = vector.broadcast %3 : vector<1x8xf32> to vector<128x8xf32>
    %5 = arith.addf %2, %4 : vector<128x8xf32>
    %cst_5 = arith.constant 0.000000e+00 : f32
    %6 = vector.broadcast %cst_5 : f32 to vector<128x8xf32>
    %7 = arith.cmpf oge, %5, %6 : vector<128x8xf32>
    %cst_6 = arith.constant 2.000000e-01 : f32
    %8 = vector.broadcast %cst_6 : f32 to vector<128x8xf32>
    %9 = arith.mulf %8, %5 : vector<128x8xf32>
    %10 = arith.select %7, %5, %9 : vector<128x8xi1>, vector<128x8xf32>
    %c0_7 = arith.constant 0 : index
    %c0_8 = arith.constant 0 : index
    %11 = vector.load %arg3[%c0_7, %c0_8] : memref<512x128xbf16, #tpu.memory_space<vmem>>, vector<512x128xbf16>
    %12 = arith.extf %11 : vector<512x128xbf16> to vector<512x128xf32>
    %cst_9 = arith.constant dense<0.000000e+00> : vector<512x8xf32>
    %13 = tpu.matmul %12, %10, %cst_9 {dimension_numbers = #tpu.dot_dimension_numbers<[1], [0], [0], [1], [0, 0, 1, 1], [], []>, precision = #tpu.contract_precision<fp32>} : vector<512x128xf32>, vector<128x8xf32>, vector<512x8xf32> -> vector<512x8xf32>
    %14 = vector.extract_strided_slice %13 {offsets = [0, 0], sizes = [32, 8], strides = [1, 1]} : vector<512x8xf32> to vector<32x8xf32>
    %15 = vector.extract_strided_slice %13 {offsets = [32, 0], sizes = [32, 8], strides = [1, 1]} : vector<512x8xf32> to vector<32x8xf32>
    %16 = vector.extract_strided_slice %13 {offsets = [64, 0], sizes = [32, 8], strides = [1, 1]} : vector<512x8xf32> to vector<32x8xf32>
    %17 = vector.extract_strided_slice %13 {offsets = [96, 0], sizes = [32, 8], strides = [1, 1]} : vector<512x8xf32> to vector<32x8xf32>
    %18 = vector.extract_strided_slice %13 {offsets = [128, 0], sizes = [32, 8], strides = [1, 1]} : vector<512x8xf32> to vector<32x8xf32>
    %19 = vector.extract_strided_slice %13 {offsets = [160, 0], sizes = [32, 8], strides = [1, 1]} : vector<512x8xf32> to vector<32x8xf32>
    %20 = vector.extract_strided_slice %13 {offsets = [192, 0], sizes = [32, 8], strides = [1, 1]} : vector<512x8xf32> to vector<32x8xf32>
    %21 = vector.extract_strided_slice %13 {offsets = [224, 0], sizes = [32, 8], strides = [1, 1]} : vector<512x8xf32> to vector<32x8xf32>
    %22 = vector.extract_strided_slice %13 {offsets = [256, 0], sizes = [32, 8], strides = [1, 1]} : vector<512x8xf32> to vector<32x8xf32>
    %23 = vector.extract_strided_slice %13 {offsets = [288, 0], sizes = [32, 8], strides = [1, 1]} : vector<512x8xf32> to vector<32x8xf32>
    %24 = vector.extract_strided_slice %13 {offsets = [320, 0], sizes = [32, 8], strides = [1, 1]} : vector<512x8xf32> to vector<32x8xf32>
    %25 = vector.extract_strided_slice %13 {offsets = [352, 0], sizes = [32, 8], strides = [1, 1]} : vector<512x8xf32> to vector<32x8xf32>
    %26 = vector.extract_strided_slice %13 {offsets = [384, 0], sizes = [32, 8], strides = [1, 1]} : vector<512x8xf32> to vector<32x8xf32>
    %27 = vector.extract_strided_slice %13 {offsets = [416, 0], sizes = [32, 8], strides = [1, 1]} : vector<512x8xf32> to vector<32x8xf32>
    %28 = vector.extract_strided_slice %13 {offsets = [448, 0], sizes = [32, 8], strides = [1, 1]} : vector<512x8xf32> to vector<32x8xf32>
    %29 = vector.extract_strided_slice %13 {offsets = [480, 0], sizes = [32, 8], strides = [1, 1]} : vector<512x8xf32> to vector<32x8xf32>
    %30 = tpu.concatenate %14, %15, %16, %17, %18, %19, %20, %21, %22, %23, %24, %25, %26, %27, %28, %29 in 1 : vector<32x8xf32>, vector<32x8xf32>, vector<32x8xf32>, vector<32x8xf32>, vector<32x8xf32>, vector<32x8xf32>, vector<32x8xf32>, vector<32x8xf32>, vector<32x8xf32>, vector<32x8xf32>, vector<32x8xf32>, vector<32x8xf32>, vector<32x8xf32>, vector<32x8xf32>, vector<32x8xf32>, vector<32x8xf32> -> vector<32x128xf32>
    %c0_10 = arith.constant 0 : index
    %c0_11 = arith.constant 0 : index
    %31 = vector.load %arg4[%c0_10, %c0_11] : memref<128x16xf32, #tpu.memory_space<vmem>>, vector<128x16xf32>
    %cst_12 = arith.constant dense<0.000000e+00> : vector<32x16xf32>
    %32 = tpu.matmul %30, %31, %cst_12 {dimension_numbers = #tpu.dot_dimension_numbers<[1], [0], [0], [1], [0, 0, 1, 1], [], []>, precision = #tpu.contract_precision<fp32>} : vector<32x128xf32>, vector<128x16xf32>, vector<32x16xf32> -> vector<32x16xf32>
    %c0_13 = arith.constant 0 : index
    %c0_14 = arith.constant 0 : index
    %33 = vector.load %arg5[%c0_13, %c0_14] : memref<3x16xf32, #tpu.memory_space<vmem>>, vector<1x16xf32>
    %34 = vector.broadcast %33 : vector<1x16xf32> to vector<32x16xf32>
    %35 = arith.addf %32, %34 : vector<32x16xf32>
    %cst_15 = arith.constant dense<0.000000e+00> : vector<16xf32>
    %36 = vector.multi_reduction <add>, %35, %cst_15 [0] : vector<32x16xf32> to vector<16xf32>
    %37 = vector.shape_cast %36 : vector<16xf32> to vector<1x16xf32>
    %cst_16 = arith.constant 3.200000e+01 : f32
    %38 = vector.broadcast %cst_16 : f32 to vector<1x16xf32>
    %39 = arith.divf %37, %38 : vector<1x16xf32>
    %40 = vector.broadcast %39 : vector<1x16xf32> to vector<32x16xf32>
    %41 = arith.subf %35, %40 : vector<32x16xf32>
    %42 = arith.mulf %41, %41 : vector<32x16xf32>
    %cst_17 = arith.constant dense<0.000000e+00> : vector<16xf32>
    %43 = vector.multi_reduction <add>, %42, %cst_17 [0] : vector<32x16xf32> to vector<16xf32>
    %44 = vector.shape_cast %43 : vector<16xf32> to vector<1x16xf32>
    %cst_18 = arith.constant 3.200000e+01 : f32
    %45 = vector.broadcast %cst_18 : f32 to vector<1x16xf32>
    %46 = arith.divf %44, %45 : vector<1x16xf32>
    %47 = vector.broadcast %39 : vector<1x16xf32> to vector<32x16xf32>
    %48 = arith.subf %35, %47 : vector<32x16xf32>
    %cst_19 = arith.constant 9.99999974E-6 : f32
    %49 = vector.broadcast %cst_19 : f32 to vector<1x16xf32>
    %50 = arith.addf %46, %49 : vector<1x16xf32>
    %51 = math.rsqrt %50 : vector<1x16xf32>
    %52 = vector.broadcast %51 : vector<1x16xf32> to vector<32x16xf32>
    %53 = arith.mulf %48, %52 : vector<32x16xf32>
    %c1 = arith.constant 1 : index
    %c0_20 = arith.constant 0 : index
    %54 = vector.load %arg5[%c1, %c0_20] : memref<3x16xf32, #tpu.memory_space<vmem>>, vector<1x16xf32>
    %55 = vector.broadcast %54 : vector<1x16xf32> to vector<32x16xf32>
    %56 = arith.mulf %53, %55 : vector<32x16xf32>
    %c2 = arith.constant 2 : index
    %c0_21 = arith.constant 0 : index
    %57 = vector.load %arg5[%c2, %c0_21] : memref<3x16xf32, #tpu.memory_space<vmem>>, vector<1x16xf32>
    %58 = vector.broadcast %57 : vector<1x16xf32> to vector<32x16xf32>
    %59 = arith.addf %56, %58 : vector<32x16xf32>
    %cst_22 = arith.constant 0.000000e+00 : f32
    %60 = vector.broadcast %cst_22 : f32 to vector<32x16xf32>
    %61 = arith.cmpf oge, %59, %60 : vector<32x16xf32>
    %cst_23 = arith.constant 2.000000e-01 : f32
    %62 = vector.broadcast %cst_23 : f32 to vector<32x16xf32>
    %63 = arith.mulf %62, %59 : vector<32x16xf32>
    %64 = arith.select %61, %59, %63 : vector<32x16xi1>, vector<32x16xf32>
    %c0_24 = arith.constant 0 : index
    %c0_25 = arith.constant 0 : index
    %65 = vector.load %arg6[%c0_24, %c0_25] : memref<128x32xbf16, #tpu.memory_space<vmem>>, vector<128x32xbf16>
    %66 = arith.extf %65 : vector<128x32xbf16> to vector<128x32xf32>
    %cst_26 = arith.constant dense<0.000000e+00> : vector<128x16xf32>
    %67 = tpu.matmul %66, %64, %cst_26 {dimension_numbers = #tpu.dot_dimension_numbers<[1], [0], [0], [1], [0, 0, 1, 1], [], []>, precision = #tpu.contract_precision<fp32>} : vector<128x32xf32>, vector<32x16xf32>, vector<128x16xf32> -> vector<128x16xf32>
    %68 = vector.extract_strided_slice %67 {offsets = [0, 0], sizes = [8, 16], strides = [1, 1]} : vector<128x16xf32> to vector<8x16xf32>
    %69 = vector.extract_strided_slice %67 {offsets = [8, 0], sizes = [8, 16], strides = [1, 1]} : vector<128x16xf32> to vector<8x16xf32>
    %70 = vector.extract_strided_slice %67 {offsets = [16, 0], sizes = [8, 16], strides = [1, 1]} : vector<128x16xf32> to vector<8x16xf32>
    %71 = vector.extract_strided_slice %67 {offsets = [24, 0], sizes = [8, 16], strides = [1, 1]} : vector<128x16xf32> to vector<8x16xf32>
    %72 = vector.extract_strided_slice %67 {offsets = [32, 0], sizes = [8, 16], strides = [1, 1]} : vector<128x16xf32> to vector<8x16xf32>
    %73 = vector.extract_strided_slice %67 {offsets = [40, 0], sizes = [8, 16], strides = [1, 1]} : vector<128x16xf32> to vector<8x16xf32>
    %74 = vector.extract_strided_slice %67 {offsets = [48, 0], sizes = [8, 16], strides = [1, 1]} : vector<128x16xf32> to vector<8x16xf32>
    %75 = vector.extract_strided_slice %67 {offsets = [56, 0], sizes = [8, 16], strides = [1, 1]} : vector<128x16xf32> to vector<8x16xf32>
    %76 = vector.extract_strided_slice %67 {offsets = [64, 0], sizes = [8, 16], strides = [1, 1]} : vector<128x16xf32> to vector<8x16xf32>
    %77 = vector.extract_strided_slice %67 {offsets = [72, 0], sizes = [8, 16], strides = [1, 1]} : vector<128x16xf32> to vector<8x16xf32>
    %78 = vector.extract_strided_slice %67 {offsets = [80, 0], sizes = [8, 16], strides = [1, 1]} : vector<128x16xf32> to vector<8x16xf32>
    %79 = vector.extract_strided_slice %67 {offsets = [88, 0], sizes = [8, 16], strides = [1, 1]} : vector<128x16xf32> to vector<8x16xf32>
    %80 = vector.extract_strided_slice %67 {offsets = [96, 0], sizes = [8, 16], strides = [1, 1]} : vector<128x16xf32> to vector<8x16xf32>
    %81 = vector.extract_strided_slice %67 {offsets = [104, 0], sizes = [8, 16], strides = [1, 1]} : vector<128x16xf32> to vector<8x16xf32>
    %82 = vector.extract_strided_slice %67 {offsets = [112, 0], sizes = [8, 16], strides = [1, 1]} : vector<128x16xf32> to vector<8x16xf32>
    %83 = vector.extract_strided_slice %67 {offsets = [120, 0], sizes = [8, 16], strides = [1, 1]} : vector<128x16xf32> to vector<8x16xf32>
    %84 = tpu.concatenate %68, %69, %70, %71, %72, %73, %74, %75, %76, %77, %78, %79, %80, %81, %82, %83 in 1 : vector<8x16xf32>, vector<8x16xf32>, vector<8x16xf32>, vector<8x16xf32>, vector<8x16xf32>, vector<8x16xf32>, vector<8x16xf32>, vector<8x16xf32>, vector<8x16xf32>, vector<8x16xf32>, vector<8x16xf32>, vector<8x16xf32>, vector<8x16xf32>, vector<8x16xf32>, vector<8x16xf32>, vector<8x16xf32> -> vector<8x256xf32>
    %c0_27 = arith.constant 0 : index
    %c0_28 = arith.constant 0 : index
    %85 = vector.load %arg7[%c0_27, %c0_28] : memref<256x32xf32, #tpu.memory_space<vmem>>, vector<256x32xf32>
    %cst_29 = arith.constant dense<0.000000e+00> : vector<8x32xf32>
    %86 = tpu.matmul %84, %85, %cst_29 {dimension_numbers = #tpu.dot_dimension_numbers<[1], [0], [0], [1], [0, 0, 1, 1], [], []>, precision = #tpu.contract_precision<fp32>} : vector<8x256xf32>, vector<256x32xf32>, vector<8x32xf32> -> vector<8x32xf32>
    %c0_30 = arith.constant 0 : index
    %c0_31 = arith.constant 0 : index
    %87 = vector.load %arg8[%c0_30, %c0_31] : memref<3x32xf32, #tpu.memory_space<vmem>>, vector<1x32xf32>
    %88 = vector.broadcast %87 : vector<1x32xf32> to vector<8x32xf32>
    %89 = arith.addf %86, %88 : vector<8x32xf32>
    %cst_32 = arith.constant dense<0.000000e+00> : vector<32xf32>
    %90 = vector.multi_reduction <add>, %89, %cst_32 [0] : vector<8x32xf32> to vector<32xf32>
    %91 = vector.shape_cast %90 : vector<32xf32> to vector<1x32xf32>
    %cst_33 = arith.constant 8.000000e+00 : f32
    %92 = vector.broadcast %cst_33 : f32 to vector<1x32xf32>
    %93 = arith.divf %91, %92 : vector<1x32xf32>
    %94 = vector.broadcast %93 : vector<1x32xf32> to vector<8x32xf32>
    %95 = arith.subf %89, %94 : vector<8x32xf32>
    %96 = arith.mulf %95, %95 : vector<8x32xf32>
    %cst_34 = arith.constant dense<0.000000e+00> : vector<32xf32>
    %97 = vector.multi_reduction <add>, %96, %cst_34 [0] : vector<8x32xf32> to vector<32xf32>
    %98 = vector.shape_cast %97 : vector<32xf32> to vector<1x32xf32>
    %cst_35 = arith.constant 8.000000e+00 : f32
    %99 = vector.broadcast %cst_35 : f32 to vector<1x32xf32>
    %100 = arith.divf %98, %99 : vector<1x32xf32>
    %101 = vector.broadcast %93 : vector<1x32xf32> to vector<8x32xf32>
    %102 = arith.subf %89, %101 : vector<8x32xf32>
    %cst_36 = arith.constant 9.99999974E-6 : f32
    %103 = vector.broadcast %cst_36 : f32 to vector<1x32xf32>
    %104 = arith.addf %100, %103 : vector<1x32xf32>
    %105 = math.rsqrt %104 : vector<1x32xf32>
    %106 = vector.broadcast %105 : vector<1x32xf32> to vector<8x32xf32>
    %107 = arith.mulf %102, %106 : vector<8x32xf32>
    %c1_37 = arith.constant 1 : index
    %c0_38 = arith.constant 0 : index
    %108 = vector.load %arg8[%c1_37, %c0_38] : memref<3x32xf32, #tpu.memory_space<vmem>>, vector<1x32xf32>
    %109 = vector.broadcast %108 : vector<1x32xf32> to vector<8x32xf32>
    %110 = arith.mulf %107, %109 : vector<8x32xf32>
    %c2_39 = arith.constant 2 : index
    %c0_40 = arith.constant 0 : index
    %111 = vector.load %arg8[%c2_39, %c0_40] : memref<3x32xf32, #tpu.memory_space<vmem>>, vector<1x32xf32>
    %112 = vector.broadcast %111 : vector<1x32xf32> to vector<8x32xf32>
    %113 = arith.addf %110, %112 : vector<8x32xf32>
    %cst_41 = arith.constant 0.000000e+00 : f32
    %114 = vector.broadcast %cst_41 : f32 to vector<8x32xf32>
    %115 = arith.cmpf oge, %113, %114 : vector<8x32xf32>
    %cst_42 = arith.constant 2.000000e-01 : f32
    %116 = vector.broadcast %cst_42 : f32 to vector<8x32xf32>
    %117 = arith.mulf %116, %113 : vector<8x32xf32>
    %118 = arith.select %115, %113, %117 : vector<8x32xi1>, vector<8x32xf32>
    %c0_43 = arith.constant 0 : index
    %c0_44 = arith.constant 0 : index
    %119 = vector.load %arg9[%c0_43, %c0_44] : memref<32x8xbf16, #tpu.memory_space<vmem>>, vector<32x8xbf16>
    %120 = arith.extf %119 : vector<32x8xbf16> to vector<32x8xf32>
    %cst_45 = arith.constant dense<0.000000e+00> : vector<32x32xf32>
    %121 = tpu.matmul %120, %118, %cst_45 {dimension_numbers = #tpu.dot_dimension_numbers<[1], [0], [0], [1], [0, 0, 1, 1], [], []>, precision = #tpu.contract_precision<fp32>} : vector<32x8xf32>, vector<8x32xf32>, vector<32x32xf32> -> vector<32x32xf32>
    %122 = vector.extract_strided_slice %121 {offsets = [0, 0], sizes = [2, 32], strides = [1, 1]} : vector<32x32xf32> to vector<2x32xf32>
    %123 = vector.extract_strided_slice %121 {offsets = [2, 0], sizes = [2, 32], strides = [1, 1]} : vector<32x32xf32> to vector<2x32xf32>
    %124 = vector.extract_strided_slice %121 {offsets = [4, 0], sizes = [2, 32], strides = [1, 1]} : vector<32x32xf32> to vector<2x32xf32>
    %125 = vector.extract_strided_slice %121 {offsets = [6, 0], sizes = [2, 32], strides = [1, 1]} : vector<32x32xf32> to vector<2x32xf32>
    %126 = vector.extract_strided_slice %121 {offsets = [8, 0], sizes = [2, 32], strides = [1, 1]} : vector<32x32xf32> to vector<2x32xf32>
    %127 = vector.extract_strided_slice %121 {offsets = [10, 0], sizes = [2, 32], strides = [1, 1]} : vector<32x32xf32> to vector<2x32xf32>
    %128 = vector.extract_strided_slice %121 {offsets = [12, 0], sizes = [2, 32], strides = [1, 1]} : vector<32x32xf32> to vector<2x32xf32>
    %129 = vector.extract_strided_slice %121 {offsets = [14, 0], sizes = [2, 32], strides = [1, 1]} : vector<32x32xf32> to vector<2x32xf32>
    %130 = vector.extract_strided_slice %121 {offsets = [16, 0], sizes = [2, 32], strides = [1, 1]} : vector<32x32xf32> to vector<2x32xf32>
    %131 = vector.extract_strided_slice %121 {offsets = [18, 0], sizes = [2, 32], strides = [1, 1]} : vector<32x32xf32> to vector<2x32xf32>
    %132 = vector.extract_strided_slice %121 {offsets = [20, 0], sizes = [2, 32], strides = [1, 1]} : vector<32x32xf32> to vector<2x32xf32>
    %133 = vector.extract_strided_slice %121 {offsets = [22, 0], sizes = [2, 32], strides = [1, 1]} : vector<32x32xf32> to vector<2x32xf32>
    %134 = vector.extract_strided_slice %121 {offsets = [24, 0], sizes = [2, 32], strides = [1, 1]} : vector<32x32xf32> to vector<2x32xf32>
    %135 = vector.extract_strided_slice %121 {offsets = [26, 0], sizes = [2, 32], strides = [1, 1]} : vector<32x32xf32> to vector<2x32xf32>
    %136 = vector.extract_strided_slice %121 {offsets = [28, 0], sizes = [2, 32], strides = [1, 1]} : vector<32x32xf32> to vector<2x32xf32>
    %137 = vector.extract_strided_slice %121 {offsets = [30, 0], sizes = [2, 32], strides = [1, 1]} : vector<32x32xf32> to vector<2x32xf32>
    %138 = tpu.concatenate %122, %123, %124, %125, %126, %127, %128, %129, %130, %131, %132, %133, %134, %135, %136, %137 in 1 : vector<2x32xf32>, vector<2x32xf32>, vector<2x32xf32>, vector<2x32xf32>, vector<2x32xf32>, vector<2x32xf32>, vector<2x32xf32>, vector<2x32xf32>, vector<2x32xf32>, vector<2x32xf32>, vector<2x32xf32>, vector<2x32xf32>, vector<2x32xf32>, vector<2x32xf32>, vector<2x32xf32>, vector<2x32xf32> -> vector<2x512xf32>
    %c0_46 = arith.constant 0 : index
    %c0_47 = arith.constant 0 : index
    %139 = vector.load %arg10[%c0_46, %c0_47] : memref<512x64xf32, #tpu.memory_space<vmem>>, vector<512x64xf32>
    %cst_48 = arith.constant dense<0.000000e+00> : vector<2x64xf32>
    %140 = tpu.matmul %138, %139, %cst_48 {dimension_numbers = #tpu.dot_dimension_numbers<[1], [0], [0], [1], [0, 0, 1, 1], [], []>, precision = #tpu.contract_precision<fp32>} : vector<2x512xf32>, vector<512x64xf32>, vector<2x64xf32> -> vector<2x64xf32>
    %c0_49 = arith.constant 0 : index
    %c0_50 = arith.constant 0 : index
    %141 = vector.load %arg11[%c0_49, %c0_50] : memref<3x64xf32, #tpu.memory_space<vmem>>, vector<1x64xf32>
    %142 = vector.broadcast %141 : vector<1x64xf32> to vector<2x64xf32>
    %143 = arith.addf %140, %142 : vector<2x64xf32>
    %cst_51 = arith.constant dense<0.000000e+00> : vector<64xf32>
    %144 = vector.multi_reduction <add>, %143, %cst_51 [0] : vector<2x64xf32> to vector<64xf32>
    %145 = vector.shape_cast %144 : vector<64xf32> to vector<1x64xf32>
    %cst_52 = arith.constant 2.000000e+00 : f32
    %146 = vector.broadcast %cst_52 : f32 to vector<1x64xf32>
    %147 = arith.divf %145, %146 : vector<1x64xf32>
    %148 = vector.broadcast %147 : vector<1x64xf32> to vector<2x64xf32>
    %149 = arith.subf %143, %148 : vector<2x64xf32>
    %150 = arith.mulf %149, %149 : vector<2x64xf32>
    %cst_53 = arith.constant dense<0.000000e+00> : vector<64xf32>
    %151 = vector.multi_reduction <add>, %150, %cst_53 [0] : vector<2x64xf32> to vector<64xf32>
    %152 = vector.shape_cast %151 : vector<64xf32> to vector<1x64xf32>
    %cst_54 = arith.constant 2.000000e+00 : f32
    %153 = vector.broadcast %cst_54 : f32 to vector<1x64xf32>
    %154 = arith.divf %152, %153 : vector<1x64xf32>
    %155 = vector.broadcast %147 : vector<1x64xf32> to vector<2x64xf32>
    %156 = arith.subf %143, %155 : vector<2x64xf32>
    %cst_55 = arith.constant 9.99999974E-6 : f32
    %157 = vector.broadcast %cst_55 : f32 to vector<1x64xf32>
    %158 = arith.addf %154, %157 : vector<1x64xf32>
    %159 = math.rsqrt %158 : vector<1x64xf32>
    %160 = vector.broadcast %159 : vector<1x64xf32> to vector<2x64xf32>
    %161 = arith.mulf %156, %160 : vector<2x64xf32>
    %c1_56 = arith.constant 1 : index
    %c0_57 = arith.constant 0 : index
    %162 = vector.load %arg11[%c1_56, %c0_57] : memref<3x64xf32, #tpu.memory_space<vmem>>, vector<1x64xf32>
    %163 = vector.broadcast %162 : vector<1x64xf32> to vector<2x64xf32>
    %164 = arith.mulf %161, %163 : vector<2x64xf32>
    %c2_58 = arith.constant 2 : index
    %c0_59 = arith.constant 0 : index
    %165 = vector.load %arg11[%c2_58, %c0_59] : memref<3x64xf32, #tpu.memory_space<vmem>>, vector<1x64xf32>
    %166 = vector.broadcast %165 : vector<1x64xf32> to vector<2x64xf32>
    %167 = arith.addf %164, %166 : vector<2x64xf32>
    %cst_60 = arith.constant 0.000000e+00 : f32
    %168 = vector.broadcast %cst_60 : f32 to vector<2x64xf32>
    %169 = arith.cmpf oge, %167, %168 : vector<2x64xf32>
    %cst_61 = arith.constant 2.000000e-01 : f32
    %170 = vector.broadcast %cst_61 : f32 to vector<2x64xf32>
    %171 = arith.mulf %170, %167 : vector<2x64xf32>
    %172 = arith.select %169, %167, %171 : vector<2x64xi1>, vector<2x64xf32>
    %c0_62 = arith.constant 0 : index
    %c0_63 = arith.constant 0 : index
    %173 = vector.load %arg12[%c0_62, %c0_63] : memref<2x64xf32, #tpu.memory_space<vmem>>, vector<2x64xf32>
    tpu.vector_store %arg12[%c0_62, %c0_63], %172 {strides = array<i32>} : memref<2x64xf32, #tpu.memory_space<vmem>>, vector<2x64xf32>,
    return
  }
}

</mosaic_0001>

<llo_original>
// kernel: encoder_forward.1
$region0: #{encoder_forward.1}
  #allocation0 [shape = 'u32[]', space=smem, size = 0x4, offset = 0x4, fixed_abs, tag = 'smem constant byte address 0x4 - core index']
  #allocation1 [shape = 'u32[144,128]{1,0:T(1,128)}', space=vmem, size = 0x12000, scoped, tag = 'internal scratch']
  %s0 = inlined_call_operand.vmem [shape: f32[128,48], index: 0, kind: input, shape index: {}]
  %s1 = inlined_call_operand.vmem [shape: f32[48,8], index: 1, kind: input, shape index: {}]
  %s2 = inlined_call_operand.vmem [shape: f32[1,8], index: 2, kind: input, shape index: {}]
  %s3 = inlined_call_operand.vmem [shape: bf16[512,128], index: 3, kind: input, shape index: {}]
  %s4 = inlined_call_operand.vmem [shape: f32[128,16], index: 4, kind: input, shape index: {}]
  %s5 = inlined_call_operand.vmem [shape: f32[3,16], index: 5, kind: input, shape index: {}]
  %s6 = inlined_call_operand.vmem [shape: bf16[128,32], index: 6, kind: input, shape index: {}]
  %s7 = inlined_call_operand.vmem [shape: f32[256,32], index: 7, kind: input, shape index: {}]
  %s8 = inlined_call_operand.vmem [shape: f32[3,32], index: 8, kind: input, shape index: {}]
  %s9 = inlined_call_operand.vmem [shape: bf16[32,8], index: 9, kind: input, shape index: {}]
  %s10 = inlined_call_operand.vmem [shape: f32[512,64], index: 10, kind: input, shape index: {}]
  %s11 = inlined_call_operand.vmem [shape: f32[3,64], index: 11, kind: input, shape index: {}]
  %s12 = inlined_call_operand.hbm [shape: f32[2,64], index: 12, kind: output, shape index: {}]
  %s13 = sld [smem:[#allocation0]]
  $region58: #{encoder_forward.1} parent=0
    _
  %s15 = ssub.s32 1, %s13
  %s16 = scalar_select 0, %s15, %s13
  $region1: #{encoder_forward.1} parent=0
    #allocation2 [shape = 'u8[1024]{0}', space=vmem, size = 0x400, scoped, tag = 'output window, operand 0, single buffered']
    #allocation3 [shape = 's32[1]{0}', space=sflag, size = 0x4, scoped, tag = 'scoped memory for encoder_forward.1']
    %17 = vsyncpa [#allocation3], 0
    // Predicated region
    $region2: #{encoder_forward.1} parent=1 // pred_check
      _
    $region3: #{encoder_forward.1} parent=1 // pred_check_branch
      %19 = sbr.rel (0) target = $region5
    $region4: #{encoder_forward.1} parent=1 // pred_region
      _
    $region5: #{encoder_forward.1} parent=1 // pred_fallthru
      _
    // Predicated region
    $region6: #{encoder_forward.1} parent=1 // pred_check
      _
    $region7: #{encoder_forward.1} parent=1 // pred_check_branch
      %21 = sbr.rel (0) target = $region9
    $region8: #{encoder_forward.1} parent=1 // pred_region
      _
    $region9: #{encoder_forward.1} parent=1 // pred_fallthru
      _
    // Predicated region
    $region10: #{encoder_forward.1} parent=1 // pred_check
      _
    $region11: #{encoder_forward.1} parent=1 // pred_check_branch
      %23 = sbr.rel (0) target = $region13
    $region12: #{encoder_forward.1} parent=1 // pred_region
      _
    $region13: #{encoder_forward.1} parent=1 // pred_fallthru
      _
    // Predicated region
    $region14: #{encoder_forward.1} parent=1 // pred_check
      _
    $region15: #{encoder_forward.1} parent=1 // pred_check_branch
      %25 = sbr.rel (0) target = $region17
    $region16: #{encoder_forward.1} parent=1 // pred_region
      _
    $region17: #{encoder_forward.1} parent=1 // pred_fallthru
      _
    // Predicated region
    $region18: #{encoder_forward.1} parent=1 // pred_check
      _
    $region19: #{encoder_forward.1} parent=1 // pred_check_branch
      %27 = sbr.rel (0) target = $region21
    $region20: #{encoder_forward.1} parent=1 // pred_region
      _
    $region21: #{encoder_forward.1} parent=1 // pred_fallthru
      _
    // Predicated region
    $region22: #{encoder_forward.1} parent=1 // pred_check
      _
    $region23: #{encoder_forward.1} parent=1 // pred_check_branch
      %29 = sbr.rel (0) target = $region25
    $region24: #{encoder_forward.1} parent=1 // pred_region
      _
    $region25: #{encoder_forward.1} parent=1 // pred_fallthru
      _
    // Predicated region
    $region26: #{encoder_forward.1} parent=1 // pred_check
      _
    $region27: #{encoder_forward.1} parent=1 // pred_check_branch
      %31 = sbr.rel (0) target = $region29
    $region28: #{encoder_forward.1} parent=1 // pred_region
      _
    $region29: #{encoder_forward.1} parent=1 // pred_fallthru
      _
    // Predicated region
    $region30: #{encoder_forward.1} parent=1 // pred_check
      _
    $region31: #{encoder_forward.1} parent=1 // pred_check_branch
      %33 = sbr.rel (0) target = $region33
    $region32: #{encoder_forward.1} parent=1 // pred_region
      _
    $region33: #{encoder_forward.1} parent=1 // pred_fallthru
      _
    // Predicated region
    $region34: #{encoder_forward.1} parent=1 // pred_check
      _
    $region35: #{encoder_forward.1} parent=1 // pred_check_branch
      %35 = sbr.rel (0) target = $region37
    $region36: #{encoder_forward.1} parent=1 // pred_region
      _
    $region37: #{encoder_forward.1} parent=1 // pred_fallthru
      _
    // Predicated region
    $region38: #{encoder_forward.1} parent=1 // pred_check
      _
    $region39: #{encoder_forward.1} parent=1 // pred_check_branch
      %37 = sbr.rel (0) target = $region41
    $region40: #{encoder_forward.1} parent=1 // pred_region
      _
    $region41: #{encoder_forward.1} parent=1 // pred_fallthru
      _
    // Predicated region
    $region42: #{encoder_forward.1} parent=1 // pred_check
      _
    $region43: #{encoder_forward.1} parent=1 // pred_check_branch
      %39 = sbr.rel (0) target = $region45
    $region44: #{encoder_forward.1} parent=1 // pred_region
      _
    $region45: #{encoder_forward.1} parent=1 // pred_fallthru
      _
    // Predicated region
    $region46: #{encoder_forward.1} parent=1 // pred_check
      _
    $region47: #{encoder_forward.1} parent=1 // pred_check_branch
      %41 = sbr.rel (0) target = $region49
    $region48: #{encoder_forward.1} parent=1 // pred_region
      _
    $region49: #{encoder_forward.1} parent=1 // pred_fallthru
      _
    %v42 = vld [vmem:[%s0] sm:$0xff]
    %v43 = vld [vmem:[%s0 + $0x8] sm:$0xff]
    %v44 = vld [vmem:[%s0 + $0x10] sm:$0xff]
    %v45 = vld [vmem:[%s0 + $0x18] sm:$0xff]
    %v46 = vld [vmem:[%s0 + $0x20] sm:$0xff]
    %v47 = vld [vmem:[%s0 + $0x28] sm:$0xff]
    %v48 = vld [vmem:[%s0 + $0x30] sm:$0xff]
    %v49 = vld [vmem:[%s0 + $0x38] sm:$0xff]
    %v50 = vld [vmem:[%s0 + $0x40] sm:$0xff]
    %v51 = vld [vmem:[%s0 + $0x48] sm:$0xff]
    %v52 = vld [vmem:[%s0 + $0x50] sm:$0xff]
    %v53 = vld [vmem:[%s0 + $0x58] sm:$0xff]
    %v54 = vld [vmem:[%s0 + $0x60] sm:$0xff]
    %v55 = vld [vmem:[%s0 + $0x68] sm:$0xff]
    %v56 = vld [vmem:[%s0 + $0x70] sm:$0xff]
    %v57 = vld [vmem:[%s0 + $0x78] sm:$0xff]
    %v58 = vld [vmem:[%s1] sm:$0xff]
    %v59 = vld [vmem:[%s1 + $0x8] sm:$0xff]
    %v60 = vld [vmem:[%s1 + $0x10] sm:$0xff]
    %v61 = vld [vmem:[%s1 + $0x18] sm:$0xff]
    %v62 = vld [vmem:[%s1 + $0x20] sm:$0xff]
    %v63 = vld [vmem:[%s1 + $0x28] sm:$0xff]
    %v64 = vld [vmem:[%s2] sm:$0x1]
    %v66 = vlaneseq
    %v67 = vshrl.u32 %v66, 7
    %v68 = vsub.s32 0, %v67
    %v69 = vrot.slane %v64, %v68
    %vm71 = vcmask 392192
    %v73 = vsel %vm71, %v42, 0
    %v76 = vsel %vm71, %v43, 0
    %v79 = vsel %vm71, %v44, 0
    %v82 = vsel %vm71, %v45, 0
    %v85 = vsel %vm71, %v46, 0
    %v88 = vsel %vm71, %v47, 0
    %v91 = vsel %vm71, %v48, 0
    %v94 = vsel %vm71, %v49, 0
    %v97 = vsel %vm71, %v50, 0
    %v100 = vsel %vm71, %v51, 0
    %v103 = vsel %vm71, %v52, 0
    %v106 = vsel %vm71, %v53, 0
    %v109 = vsel %vm71, %v54, 0
    %v112 = vsel %vm71, %v55, 0
    %v115 = vsel %vm71, %v56, 0
    %v118 = vsel %vm71, %v57, 0
    %120 = vmatprep.subr.mxu0 0.0
    %121 = vmatpush1.msra.mxu0 0.0
    %122 = vmatprep.subr.mxu0 0.0
    %123 = vmatpush1.msra.mxu0 0.0
    %124 = vmatprep.subr.mxu0 0.0
    %125 = vmatpush1.msra.mxu0 0.0
    %126 = vmatprep.subr.mxu0 0.0
    %127 = vmatpush1.msra.mxu0 0.0
    %128 = vmatprep.subr.mxu0 0.0
    %129 = vmatpush1.msra.mxu0 0.0
    %130 = vmatprep.subr.mxu0 0.0
    %131 = vmatpush1.msra.mxu0 0.0
    %132 = vmatprep.subr.mxu0 0.0
    %133 = vmatpush1.msra.mxu0 0.0
    %134 = vmatprep.subr.mxu0 0.0
    %135 = vmatpush1.msra.mxu0 0.0
    %136 = vmatprep.subr.mxu0 0.0
    %137 = vmatpush1.msra.mxu0 0.0
    %138 = vmatprep.subr.mxu0 0.0
    %139 = vmatpush1.msra.mxu0 0.0
    %140 = vmatprep.subr.mxu0 0.0
    %v141 = vand.u32 %v63, 4294901760
    %142 = vmatpush1.msra.mxu0 %v141
    %143 = vmatprep.subr.mxu0 0.0
    %v144 = vand.u32 %v62, 4294901760
    %145 = vmatpush1.msra.mxu0 %v144
    %146 = vmatprep.subr.mxu0 0.0
    %v147 = vand.u32 %v61, 4294901760
    %148 = vmatpush1.msra.mxu0 %v147
    %149 = vmatprep.subr.mxu0 0.0
    %v150 = vand.u32 %v60, 4294901760
    %151 = vmatpush1.msra.mxu0 %v150
    %152 = vmatprep.subr.mxu0 0.0
    %v153 = vand.u32 %v59, 4294901760
    %154 = vmatpush1.msra.mxu0 %v153
    %155 = vmatprep.subr.mxu0 0.0
    %v156 = vand.u32 %v58, 4294901760
    %157 = vmatpush1.msra.mxu0 %v156
    %158 = vmatprep.subr.mxu0 0.0
    %159 = vmatpush2.msra.mxu0 0.0
    %160 = vmatprep.subr.mxu0 0.0
    %161 = vmatpush2.msra.mxu0 0.0
    %162 = vmatprep.subr.mxu0 0.0
    %163 = vmatpush2.msra.mxu0 0.0
    %164 = vmatprep.subr.mxu0 0.0
    %165 = vmatpush2.msra.mxu0 0.0
    %166 = vmatprep.subr.mxu0 0.0
    %167 = vmatpush2.msra.mxu0 0.0
    %168 = vmatprep.subr.mxu0 0.0
    %169 = vmatpush2.msra.mxu0 0.0
    %170 = vmatprep.subr.mxu0 0.0
    %171 = vmatpush2.msra.mxu0 0.0
    %172 = vmatprep.subr.mxu0 0.0
    %173 = vmatpush2.msra.mxu0 0.0
    %174 = vmatprep.subr.mxu0 0.0
    %175 = vmatpush2.msra.mxu0 0.0
    %176 = vmatprep.subr.mxu0 0.0
    %177 = vmatpush2.msra.mxu0 0.0
    %178 = vmatprep.subr.mxu0 0.0
    %179 = vmatpush2.msra.mxu0 0.0
    %180 = vmatprep.subr.mxu0 0.0
    %181 = vmatpush2.msra.mxu0 0.0
    %182 = vmatprep.subr.mxu0 0.0
    %183 = vmatpush2.msra.mxu0 0.0
    %184 = vmatprep.subr.mxu0 0.0
    %185 = vmatpush2.msra.mxu0 0.0
    %186 = vmatprep.subr.mxu0 0.0
    %187 = vmatpush2.msra.mxu0 0.0
    %188 = vmatprep.subr.mxu0 0.0
    %189 = vmatpush2.msra.mxu0 0.0
    %190 = vmatprep.mubr.f32.mxu0 0.0
    %v191 = vand.u32 %v73, 4294901760
    %v192 = vsub.f32 %v73, %v191
    %v193 = vand.u32 %v192, 4294901760
    %v194 = vsub.f32 %v192, %v193
    %v195 = vand.u32 %v194, 4294901760
    %196 = vmatmul.mubr.f32.gmra.mxu0 %v195
    %v197 = vpop.f32.mrf.mxu0
    %v198 = vadd.f32 %v69, %v197
    %v199 = vpop.f32.mrf.mxu0
    %200 = vmatprep.mubr.f32.mxu0 0.0
    %v201 = vand.u32 %v76, 4294901760
    %v202 = vsub.f32 %v76, %v201
    %v203 = vand.u32 %v202, 4294901760
    %v204 = vsub.f32 %v202, %v203
    %v205 = vand.u32 %v204, 4294901760
    %206 = vmatmul.mubr.f32.gmra.mxu0 %v205
    %v207 = vpop.f32.mrf.mxu0
    %v208 = vadd.f32 %v69, %v207
    %v209 = vpop.f32.mrf.mxu0
    %210 = vmatprep.mubr.f32.mxu0 0.0
    %v211 = vand.u32 %v79, 4294901760
    %v212 = vsub.f32 %v79, %v211
    %v213 = vand.u32 %v212, 4294901760
    %v214 = vsub.f32 %v212, %v213
    %v215 = vand.u32 %v214, 4294901760
    %216 = vmatmul.mubr.f32.gmra.mxu0 %v215
    %v217 = vpop.f32.mrf.mxu0
    %v218 = vadd.f32 %v69, %v217
    %v219 = vpop.f32.mrf.mxu0
    %220 = vmatprep.mubr.f32.mxu0 0.0
    %v221 = vand.u32 %v82, 4294901760
    %v222 = vsub.f32 %v82, %v221
    %v223 = vand.u32 %v222, 4294901760
    %v224 = vsub.f32 %v222, %v223
    %v225 = vand.u32 %v224, 4294901760
    %226 = vmatmul.mubr.f32.gmra.mxu0 %v225
    %v227 = vpop.f32.mrf.mxu0
    %v228 = vadd.f32 %v69, %v227
    %v229 = vpop.f32.mrf.mxu0
    %230 = vmatprep.mubr.f32.mxu0 0.0
    %v231 = vand.u32 %v85, 4294901760
    %v232 = vsub.f32 %v85, %v231
    %v233 = vand.u32 %v232, 4294901760
    %v234 = vsub.f32 %v232, %v233
    %v235 = vand.u32 %v234, 4294901760
    %236 = vmatmul.mubr.f32.gmra.mxu0 %v235
    %v237 = vpop.f32.mrf.mxu0
    %v238 = vadd.f32 %v69, %v237
    %v239 = vpop.f32.mrf.mxu0
    %240 = vmatprep.mubr.f32.mxu0 0.0
    %v241 = vand.u32 %v88, 4294901760
    %v242 = vsub.f32 %v88, %v241
    %v243 = vand.u32 %v242, 4294901760
    %v244 = vsub.f32 %v242, %v243
    %v245 = vand.u32 %v244, 4294901760
    %246 = vmatmul.mubr.f32.gmra.mxu0 %v245
    %v247 = vpop.f32.mrf.mxu0
    %v248 = vadd.f32 %v69, %v247
    %v249 = vpop.f32.mrf.mxu0
    %250 = vmatprep.mubr.f32.mxu0 0.0
    %v251 = vand.u32 %v91, 4294901760
    %v252 = vsub.f32 %v91, %v251
    %v253 = vand.u32 %v252, 4294901760
    %v254 = vsub.f32 %v252, %v253
    %v255 = vand.u32 %v254, 4294901760
    %256 = vmatmul.mubr.f32.gmra.mxu0 %v255
    %v257 = vpop.f32.mrf.mxu0
    %v258 = vadd.f32 %v69, %v257
    %v259 = vpop.f32.mrf.mxu0
    %260 = vmatprep.mubr.f32.mxu0 0.0
    %v261 = vand.u32 %v94, 4294901760
    %v262 = vsub.f32 %v94, %v261
    %v263 = vand.u32 %v262, 4294901760
    %v264 = vsub.f32 %v262, %v263
    %v265 = vand.u32 %v264, 4294901760
    %266 = vmatmul.mubr.f32.gmra.mxu0 %v265
    %v267 = vpop.f32.mrf.mxu0
    %v268 = vadd.f32 %v69, %v267
    %v269 = vpop.f32.mrf.mxu0
    %270 = vmatprep.mubr.f32.mxu0 0.0
    %v271 = vand.u32 %v97, 4294901760
    %v272 = vsub.f32 %v97, %v271
    %v273 = vand.u32 %v272, 4294901760
    %v274 = vsub.f32 %v272, %v273
    %v275 = vand.u32 %v274, 4294901760
    %276 = vmatmul.mubr.f32.gmra.mxu0 %v275
    %v277 = vpop.f32.mrf.mxu0
    %v278 = vadd.f32 %v69, %v277
    %v279 = vpop.f32.mrf.mxu0
    %280 = vmatprep.mubr.f32.mxu0 0.0
    %v281 = vand.u32 %v100, 4294901760
    %v282 = vsub.f32 %v100, %v281
    %v283 = vand.u32 %v282, 4294901760
    %v284 = vsub.f32 %v282, %v283
    %v285 = vand.u32 %v284, 4294901760
    %286 = vmatmul.mubr.f32.gmra.mxu0 %v285
    %v287 = vpop.f32.mrf.mxu0
    %v288 = vadd.f32 %v69, %v287
    %v289 = vpop.f32.mrf.mxu0
    %290 = vmatprep.mubr.f32.mxu0 0.0
    %v291 = vand.u32 %v103, 4294901760
    %v292 = vsub.f32 %v103, %v291
    %v293 = vand.u32 %v292, 4294901760
    %v294 = vsub.f32 %v292, %v293
    %v295 = vand.u32 %v294, 4294901760
    %296 = vmatmul.mubr.f32.gmra.mxu0 %v295
    %v297 = vpop.f32.mrf.mxu0
    %v298 = vadd.f32 %v69, %v297
    %v299 = vpop.f32.mrf.mxu0
    %300 = vmatprep.mubr.f32.mxu0 0.0
    %v301 = vand.u32 %v106, 4294901760
    %v302 = vsub.f32 %v106, %v301
    %v303 = vand.u32 %v302, 4294901760
    %v304 = vsub.f32 %v302, %v303
    %v305 = vand.u32 %v304, 4294901760
    %306 = vmatmul.mubr.f32.gmra.mxu0 %v305
    %v307 = vpop.f32.mrf.mxu0
    %v308 = vadd.f32 %v69, %v307
    %v309 = vpop.f32.mrf.mxu0
    %310 = vmatprep.mubr.f32.mxu0 0.0
    %v311 = vand.u32 %v109, 4294901760
    %v312 = vsub.f32 %v109, %v311
    %v313 = vand.u32 %v312, 4294901760
    %v314 = vsub.f32 %v312, %v313
    %v315 = vand.u32 %v314, 4294901760
    %316 = vmatmul.mubr.f32.gmra.mxu0 %v315
    %v317 = vpop.f32.mrf.mxu0
    %v318 = vadd.f32 %v69, %v317
    %v319 = vpop.f32.mrf.mxu0
    %320 = vmatprep.mubr.f32.mxu0 0.0
    %v321 = vand.u32 %v112, 4294901760
    %v322 = vsub.f32 %v112, %v321
    %v323 = vand.u32 %v322, 4294901760
    %v324 = vsub.f32 %v322, %v323
    %v325 = vand.u32 %v324, 4294901760
    %326 = vmatmul.mubr.f32.gmra.mxu0 %v325
    %v327 = vpop.f32.mrf.mxu0
    %v328 = vadd.f32 %v69, %v327
    %v329 = vpop.f32.mrf.mxu0
    %330 = vmatprep.mubr.f32.mxu0 0.0
    %v331 = vand.u32 %v115, 4294901760
    %v332 = vsub.f32 %v115, %v331
    %v333 = vand.u32 %v332, 4294901760
    %v334 = vsub.f32 %v332, %v333
    %v335 = vand.u32 %v334, 4294901760
    %336 = vmatmul.mubr.f32.gmra.mxu0 %v335
    %v337 = vpop.f32.mrf.mxu0
    %v338 = vadd.f32 %v69, %v337
    %v339 = vpop.f32.mrf.mxu0
    %340 = vmatprep.mubr.f32.mxu0 0.0
    %v341 = vand.u32 %v118, 4294901760
    %v342 = vsub.f32 %v118, %v341
    %v343 = vand.u32 %v342, 4294901760
    %v344 = vsub.f32 %v342, %v343
    %v345 = vand.u32 %v344, 4294901760
    %346 = vmatmul.mubr.f32.gmra.mxu0 %v345
    %v347 = vpop.f32.mrf.mxu0
    %v348 = vadd.f32 %v69, %v347
    %v349 = vpop.f32.mrf.mxu0
    %350 = vdwg.mxu0
    %351 = vmatprep.subr.mxu0 0.0
    %352 = vmatpush1.msra.mxu0 0.0
    %353 = vmatprep.subr.mxu0 0.0
    %354 = vmatpush1.msra.mxu0 0.0
    %355 = vmatprep.subr.mxu0 0.0
    %356 = vmatpush1.msra.mxu0 0.0
    %357 = vmatprep.subr.mxu0 0.0
    %358 = vmatpush1.msra.mxu0 0.0
    %359 = vmatprep.subr.mxu0 0.0
    %360 = vmatpush1.msra.mxu0 0.0
    %361 = vmatprep.subr.mxu0 0.0
    %362 = vmatpush1.msra.mxu0 0.0
    %363 = vmatprep.subr.mxu0 0.0
    %364 = vmatpush1.msra.mxu0 0.0
    %365 = vmatprep.subr.mxu0 0.0
    %366 = vmatpush1.msra.mxu0 0.0
    %367 = vmatprep.subr.mxu0 0.0
    %368 = vmatpush1.msra.mxu0 0.0
    %369 = vmatprep.subr.mxu0 0.0
    %370 = vmatpush1.msra.mxu0 0.0
    %371 = vmatprep.subr.mxu0 0.0
    %v372 = vand.u32 %v63, 4294901760
    %v373 = vsub.f32 %v63, %v372
    %v374 = vand.u32 %v373, 4294901760
    %v375 = vsub.f32 %v373, %v374
    %v376 = vand.u32 %v375, 4294901760
    %377 = vmatpush1.msra.mxu0 %v376
    %378 = vmatprep.subr.mxu0 0.0
    %v379 = vand.u32 %v62, 4294901760
    %v380 = vsub.f32 %v62, %v379
    %v381 = vand.u32 %v380, 4294901760
    %v382 = vsub.f32 %v380, %v381
    %v383 = vand.u32 %v382, 4294901760
    %384 = vmatpush1.msra.mxu0 %v383
    %385 = vmatprep.subr.mxu0 0.0
    %v386 = vand.u32 %v61, 4294901760
    %v387 = vsub.f32 %v61, %v386
    %v388 = vand.u32 %v387, 4294901760
    %v389 = vsub.f32 %v387, %v388
    %v390 = vand.u32 %v389, 4294901760
    %391 = vmatpush1.msra.mxu0 %v390
    %392 = vmatprep.subr.mxu0 0.0
    %v393 = vand.u32 %v60, 4294901760
    %v394 = vsub.f32 %v60, %v393
    %v395 = vand.u32 %v394, 4294901760
    %v396 = vsub.f32 %v394, %v395
    %v397 = vand.u32 %v396, 4294901760
    %398 = vmatpush1.msra.mxu0 %v397
    %399 = vmatprep.subr.mxu0 0.0
    %v400 = vand.u32 %v59, 4294901760
    %v401 = vsub.f32 %v59, %v400
    %v402 = vand.u32 %v401, 4294901760
    %v403 = vsub.f32 %v401, %v402
    %v404 = vand.u32 %v403, 4294901760
    %405 = vmatpush1.msra.mxu0 %v404
    %406 = vmatprep.subr.mxu0 0.0
    %v407 = vand.u32 %v58, 4294901760
    %v408 = vsub.f32 %v58, %v407
    %v409 = vand.u32 %v408, 4294901760
    %v410 = vsub.f32 %v408, %v409
    %v411 = vand.u32 %v410, 4294901760
    %412 = vmatpush1.msra.mxu0 %v411
    %413 = vmatprep.subr.mxu0 0.0
    %414 = vmatpush2.msra.mxu0 0.0
    %415 = vmatprep.subr.mxu0 0.0
    %416 = vmatpush2.msra.mxu0 0.0
    %417 = vmatprep.subr.mxu0 0.0
    %418 = vmatpush2.msra.mxu0 0.0
    %419 = vmatprep.subr.mxu0 0.0
    %420 = vmatpush2.msra.mxu0 0.0
    %421 = vmatprep.subr.mxu0 0.0
    %422 = vmatpush2.msra.mxu0 0.0
    %423 = vmatprep.subr.mxu0 0.0
    %424 = vmatpush2.msra.mxu0 0.0
    %425 = vmatprep.subr.mxu0 0.0
    %426 = vmatpush2.msra.mxu0 0.0
    %427 = vmatprep.subr.mxu0 0.0
    %428 = vmatpush2.msra.mxu0 0.0
    %429 = vmatprep.subr.mxu0 0.0
    %430 = vmatpush2.msra.mxu0 0.0
    %431 = vmatprep.subr.mxu0 0.0
    %432 = vmatpush2.msra.mxu0 0.0
    %433 = vmatprep.subr.mxu0 0.0
    %434 = vmatpush2.msra.mxu0 0.0
    %435 = vmatprep.subr.mxu0 0.0
    %436 = vmatpush2.msra.mxu0 0.0
    %437 = vmatprep.subr.mxu0 0.0
    %438 = vmatpush2.msra.mxu0 0.0
    %439 = vmatprep.subr.mxu0 0.0
    %440 = vmatpush2.msra.mxu0 0.0
    %441 = vmatprep.subr.mxu0 0.0
    %442 = vmatpush2.msra.mxu0 0.0
    %443 = vmatprep.subr.mxu0 0.0
    %444 = vmatpush2.msra.mxu0 0.0
    %445 = vmatprep.mubr.f32.mxu0 0.0
    %v446 = vand.u32 %v73, 4294901760
    %447 = vmatmul.mubr.f32.gmra.mxu0 %v446
    %v448 = vpop.f32.mrf.mxu0
    %v449 = vadd.f32 %v198, %v448
    %v450 = vpop.f32.mrf.mxu0
    %451 = vmatprep.mubr.f32.mxu0 0.0
    %v452 = vand.u32 %v76, 4294901760
    %453 = vmatmul.mubr.f32.gmra.mxu0 %v452
    %v454 = vpop.f32.mrf.mxu0
    %v455 = vadd.f32 %v208, %v454
    %v456 = vpop.f32.mrf.mxu0
    %457 = vmatprep.mubr.f32.mxu0 0.0
    %v458 = vand.u32 %v79, 4294901760
    %459 = vmatmul.mubr.f32.gmra.mxu0 %v458
    %v460 = vpop.f32.mrf.mxu0
    %v461 = vadd.f32 %v218, %v460
    %v462 = vpop.f32.mrf.mxu0
    %463 = vmatprep.mubr.f32.mxu0 0.0
    %v464 = vand.u32 %v82, 4294901760
    %465 = vmatmul.mubr.f32.gmra.mxu0 %v464
    %v466 = vpop.f32.mrf.mxu0
    %v467 = vadd.f32 %v228, %v466
    %v468 = vpop.f32.mrf.mxu0
    %469 = vmatprep.mubr.f32.mxu0 0.0
    %v470 = vand.u32 %v85, 4294901760
    %471 = vmatmul.mubr.f32.gmra.mxu0 %v470
    %v472 = vpop.f32.mrf.mxu0
    %v473 = vadd.f32 %v238, %v472
    %v474 = vpop.f32.mrf.mxu0
    %475 = vmatprep.mubr.f32.mxu0 0.0
    %v476 = vand.u32 %v88, 4294901760
    %477 = vmatmul.mubr.f32.gmra.mxu0 %v476
    %v478 = vpop.f32.mrf.mxu0
    %v479 = vadd.f32 %v248, %v478
    %v480 = vpop.f32.mrf.mxu0
    %481 = vmatprep.mubr.f32.mxu0 0.0
    %v482 = vand.u32 %v91, 4294901760
    %483 = vmatmul.mubr.f32.gmra.mxu0 %v482
    %v484 = vpop.f32.mrf.mxu0
    %v485 = vadd.f32 %v258, %v484
    %v486 = vpop.f32.mrf.mxu0
    %487 = vmatprep.mubr.f32.mxu0 0.0
    %v488 = vand.u32 %v94, 4294901760
    %489 = vmatmul.mubr.f32.gmra.mxu0 %v488
    %v490 = vpop.f32.mrf.mxu0
    %v491 = vadd.f32 %v268, %v490
    %v492 = vpop.f32.mrf.mxu0
    %493 = vmatprep.mubr.f32.mxu0 0.0
    %v494 = vand.u32 %v97, 4294901760
    %495 = vmatmul.mubr.f32.gmra.mxu0 %v494
    %v496 = vpop.f32.mrf.mxu0
    %v497 = vadd.f32 %v278, %v496
    %v498 = vpop.f32.mrf.mxu0
    %499 = vmatprep.mubr.f32.mxu0 0.0
    %v500 = vand.u32 %v100, 4294901760
    %501 = vmatmul.mubr.f32.gmra.mxu0 %v500
    %v502 = vpop.f32.mrf.mxu0
    %v503 = vadd.f32 %v288, %v502
    %v504 = vpop.f32.mrf.mxu0
    %505 = vmatprep.mubr.f32.mxu0 0.0
    %v506 = vand.u32 %v103, 4294901760
    %507 = vmatmul.mubr.f32.gmra.mxu0 %v506
    %v508 = vpop.f32.mrf.mxu0
    %v509 = vadd.f32 %v298, %v508
    %v510 = vpop.f32.mrf.mxu0
    %511 = vmatprep.mubr.f32.mxu0 0.0
    %v512 = vand.u32 %v106, 4294901760
    %513 = vmatmul.mubr.f32.gmra.mxu0 %v512
    %v514 = vpop.f32.mrf.mxu0
    %v515 = vadd.f32 %v308, %v514
    %v516 = vpop.f32.mrf.mxu0
    %517 = vmatprep.mubr.f32.mxu0 0.0
    %v518 = vand.u32 %v109, 4294901760
    %519 = vmatmul.mubr.f32.gmra.mxu0 %v518
    %v520 = vpop.f32.mrf.mxu0
    %v521 = vadd.f32 %v318, %v520
    %v522 = vpop.f32.mrf.mxu0
    %523 = vmatprep.mubr.f32.mxu0 0.0
    %v524 = vand.u32 %v112, 4294901760
    %525 = vmatmul.mubr.f32.gmra.mxu0 %v524
    %v526 = vpop.f32.mrf.mxu0
    %v527 = vadd.f32 %v328, %v526
    %v528 = vpop.f32.mrf.mxu0
    %529 = vmatprep.mubr.f32.mxu0 0.0
    %v530 = vand.u32 %v115, 4294901760
    %531 = vmatmul.mubr.f32.gmra.mxu0 %v530
    %v532 = vpop.f32.mrf.mxu0
    %v533 = vadd.f32 %v338, %v532
    %v534 = vpop.f32.mrf.mxu0
    %535 = vmatprep.mubr.f32.mxu0 0.0
    %v536 = vand.u32 %v118, 4294901760
    %537 = vmatmul.mubr.f32.gmra.mxu0 %v536
    %v538 = vpop.f32.mrf.mxu0
    %v539 = vadd.f32 %v348, %v538
    %v540 = vpop.f32.mrf.mxu0
    %541 = vdwg.mxu0
    %542 = vmatprep.subr.mxu0 0.0
    %543 = vmatpush1.msra.mxu0 0.0
    %544 = vmatprep.subr.mxu0 0.0
    %545 = vmatpush1.msra.mxu0 0.0
    %546 = vmatprep.subr.mxu0 0.0
    %547 = vmatpush1.msra.mxu0 0.0
    %548 = vmatprep.subr.mxu0 0.0
    %549 = vmatpush1.msra.mxu0 0.0
    %550 = vmatprep.subr.mxu0 0.0
    %551 = vmatpush1.msra.mxu0 0.0
    %552 = vmatprep.subr.mxu0 0.0
    %553 = vmatpush1.msra.mxu0 0.0
    %554 = vmatprep.subr.mxu0 0.0
    %555 = vmatpush1.msra.mxu0 0.0
    %556 = vmatprep.subr.mxu0 0.0
    %557 = vmatpush1.msra.mxu0 0.0
    %558 = vmatprep.subr.mxu0 0.0
    %559 = vmatpush1.msra.mxu0 0.0
    %560 = vmatprep.subr.mxu0 0.0
    %561 = vmatpush1.msra.mxu0 0.0
    %562 = vmatprep.subr.mxu0 0.0
    %v563 = vand.u32 %v63, 4294901760
    %v564 = vsub.f32 %v63, %v563
    %565 = vmatpush1.msra.mxu0 %v564
    %566 = vmatprep.subr.mxu0 0.0
    %v567 = vand.u32 %v62, 4294901760
    %v568 = vsub.f32 %v62, %v567
    %569 = vmatpush1.msra.mxu0 %v568
    %570 = vmatprep.subr.mxu0 0.0
    %v571 = vand.u32 %v61, 4294901760
    %v572 = vsub.f32 %v61, %v571
    %573 = vmatpush1.msra.mxu0 %v572
    %574 = vmatprep.subr.mxu0 0.0
    %v575 = vand.u32 %v60, 4294901760
    %v576 = vsub.f32 %v60, %v575
    %577 = vmatpush1.msra.mxu0 %v576
    %578 = vmatprep.subr.mxu0 0.0
    %v579 = vand.u32 %v59, 4294901760
    %v580 = vsub.f32 %v59, %v579
    %581 = vmatpush1.msra.mxu0 %v580
    %582 = vmatprep.subr.mxu0 0.0
    %v583 = vand.u32 %v58, 4294901760
    %v584 = vsub.f32 %v58, %v583
    %585 = vmatpush1.msra.mxu0 %v584
    %586 = vmatprep.subr.mxu0 0.0
    %587 = vmatpush2.msra.mxu0 0.0
    %588 = vmatprep.subr.mxu0 0.0
    %589 = vmatpush2.msra.mxu0 0.0
    %590 = vmatprep.subr.mxu0 0.0
    %591 = vmatpush2.msra.mxu0 0.0
    %592 = vmatprep.subr.mxu0 0.0
    %593 = vmatpush2.msra.mxu0 0.0
    %594 = vmatprep.subr.mxu0 0.0
    %595 = vmatpush2.msra.mxu0 0.0
    %596 = vmatprep.subr.mxu0 0.0
    %597 = vmatpush2.msra.mxu0 0.0
    %598 = vmatprep.subr.mxu0 0.0
    %599 = vmatpush2.msra.mxu0 0.0
    %600 = vmatprep.subr.mxu0 0.0
    %601 = vmatpush2.msra.mxu0 0.0
    %602 = vmatprep.subr.mxu0 0.0
    %603 = vmatpush2.msra.mxu0 0.0
    %604 = vmatprep.subr.mxu0 0.0
    %605 = vmatpush2.msra.mxu0 0.0
    %606 = vmatprep.subr.mxu0 0.0
    %607 = vmatpush2.msra.mxu0 0.0
    %608 = vmatprep.subr.mxu0 0.0
    %609 = vmatpush2.msra.mxu0 0.0
    %610 = vmatprep.subr.mxu0 0.0
    %611 = vmatpush2.msra.mxu0 0.0
    %612 = vmatprep.subr.mxu0 0.0
    %613 = vmatpush2.msra.mxu0 0.0
    %614 = vmatprep.subr.mxu0 0.0
    %615 = vmatpush2.msra.mxu0 0.0
    %616 = vmatprep.subr.mxu0 0.0
    %617 = vmatpush2.msra.mxu0 0.0
    %618 = vmatprep.mubr.f32.mxu0 0.0
    %v619 = vand.u32 %v73, 4294901760
    %v620 = vsub.f32 %v73, %v619
    %621 = vmatmul.mubr.f32.gmra.mxu0 %v620
    %v622 = vpop.f32.mrf.mxu0
    %v623 = vadd.f32 %v449, %v622
    %v624 = vpop.f32.mrf.mxu0
    %625 = vmatprep.mubr.f32.mxu0 0.0
    %v626 = vand.u32 %v76, 4294901760
    %v627 = vsub.f32 %v76, %v626
    %628 = vmatmul.mubr.f32.gmra.mxu0 %v627
    %v629 = vpop.f32.mrf.mxu0
    %v630 = vadd.f32 %v455, %v629
    %v631 = vpop.f32.mrf.mxu0
    %632 = vmatprep.mubr.f32.mxu0 0.0
    %v633 = vand.u32 %v79, 4294901760
    %v634 = vsub.f32 %v79, %v633
    %635 = vmatmul.mubr.f32.gmra.mxu0 %v634
    %v636 = vpop.f32.mrf.mxu0
    %v637 = vadd.f32 %v461, %v636
    %v638 = vpop.f32.mrf.mxu0
    %639 = vmatprep.mubr.f32.mxu0 0.0
    %v640 = vand.u32 %v82, 4294901760
    %v641 = vsub.f32 %v82, %v640
    %642 = vmatmul.mubr.f32.gmra.mxu0 %v641
    %v643 = vpop.f32.mrf.mxu0
    %v644 = vadd.f32 %v467, %v643
    %v645 = vpop.f32.mrf.mxu0
    %646 = vmatprep.mubr.f32.mxu0 0.0
    %v647 = vand.u32 %v85, 4294901760
    %v648 = vsub.f32 %v85, %v647
    %649 = vmatmul.mubr.f32.gmra.mxu0 %v648
    %v650 = vpop.f32.mrf.mxu0
    %v651 = vadd.f32 %v473, %v650
    %v652 = vpop.f32.mrf.mxu0
    %653 = vmatprep.mubr.f32.mxu0 0.0
    %v654 = vand.u32 %v88, 4294901760
    %v655 = vsub.f32 %v88, %v654
    %656 = vmatmul.mubr.f32.gmra.mxu0 %v655
    %v657 = vpop.f32.mrf.mxu0
    %v658 = vadd.f32 %v479, %v657
    %v659 = vpop.f32.mrf.mxu0
    %660 = vmatprep.mubr.f32.mxu0 0.0
    %v661 = vand.u32 %v91, 4294901760
    %v662 = vsub.f32 %v91, %v661
    %663 = vmatmul.mubr.f32.gmra.mxu0 %v662
    %v664 = vpop.f32.mrf.mxu0
    %v665 = vadd.f32 %v485, %v664
    %v666 = vpop.f32.mrf.mxu0
    %667 = vmatprep.mubr.f32.mxu0 0.0
    %v668 = vand.u32 %v94, 4294901760
    %v669 = vsub.f32 %v94, %v668
    %670 = vmatmul.mubr.f32.gmra.mxu0 %v669
    %v671 = vpop.f32.mrf.mxu0
    %v672 = vadd.f32 %v491, %v671
    %v673 = vpop.f32.mrf.mxu0
    %674 = vmatprep.mubr.f32.mxu0 0.0
    %v675 = vand.u32 %v97, 4294901760
    %v676 = vsub.f32 %v97, %v675
    %677 = vmatmul.mubr.f32.gmra.mxu0 %v676
    %v678 = vpop.f32.mrf.mxu0
    %v679 = vadd.f32 %v497, %v678
    %v680 = vpop.f32.mrf.mxu0
    %681 = vmatprep.mubr.f32.mxu0 0.0
    %v682 = vand.u32 %v100, 4294901760
    %v683 = vsub.f32 %v100, %v682
    %684 = vmatmul.mubr.f32.gmra.mxu0 %v683
    %v685 = vpop.f32.mrf.mxu0
    %v686 = vadd.f32 %v503, %v685
    %v687 = vpop.f32.mrf.mxu0
    %688 = vmatprep.mubr.f32.mxu0 0.0
    %v689 = vand.u32 %v103, 4294901760
    %v690 = vsub.f32 %v103, %v689
    %691 = vmatmul.mubr.f32.gmra.mxu0 %v690
    %v692 = vpop.f32.mrf.mxu0
    %v693 = vadd.f32 %v509, %v692
    %v694 = vpop.f32.mrf.mxu0
    %695 = vmatprep.mubr.f32.mxu0 0.0
    %v696 = vand.u32 %v106, 4294901760
    %v697 = vsub.f32 %v106, %v696
    %698 = vmatmul.mubr.f32.gmra.mxu0 %v697
    %v699 = vpop.f32.mrf.mxu0
    %v700 = vadd.f32 %v515, %v699
    %v701 = vpop.f32.mrf.mxu0
    %702 = vmatprep.mubr.f32.mxu0 0.0
    %v703 = vand.u32 %v109, 4294901760
    %v704 = vsub.f32 %v109, %v703
    %705 = vmatmul.mubr.f32.gmra.mxu0 %v704
    %v706 = vpop.f32.mrf.mxu0
    %v707 = vadd.f32 %v521, %v706
    %v708 = vpop.f32.mrf.mxu0
    %709 = vmatprep.mubr.f32.mxu0 0.0
    %v710 = vand.u32 %v112, 4294901760
    %v711 = vsub.f32 %v112, %v710
    %712 = vmatmul.mubr.f32.gmra.mxu0 %v711
    %v713 = vpop.f32.mrf.mxu0
    %v714 = vadd.f32 %v527, %v713
    %v715 = vpop.f32.mrf.mxu0
    %716 = vmatprep.mubr.f32.mxu0 0.0
    %v717 = vand.u32 %v115, 4294901760
    %v718 = vsub.f32 %v115, %v717
    %719 = vmatmul.mubr.f32.gmra.mxu0 %v718
    %v720 = vpop.f32.mrf.mxu0
    %v721 = vadd.f32 %v533, %v720
    %v722 = vpop.f32.mrf.mxu0
    %723 = vmatprep.mubr.f32.mxu0 0.0
    %v724 = vand.u32 %v118, 4294901760
    %v725 = vsub.f32 %v118, %v724
    %726 = vmatmul.mubr.f32.gmra.mxu0 %v725
    %v727 = vpop.f32.mrf.mxu0
    %v728 = vadd.f32 %v539, %v727
    %v729 = vpop.f32.mrf.mxu0
    %730 = vdwg.mxu0
    %731 = vmatprep.subr.mxu0 0.0
    %732 = vmatpush1.msra.mxu0 0.0
    %733 = vmatprep.subr.mxu0 0.0
    %734 = vmatpush1.msra.mxu0 0.0
    %735 = vmatprep.subr.mxu0 0.0
    %736 = vmatpush1.msra.mxu0 0.0
    %737 = vmatprep.subr.mxu0 0.0
    %738 = vmatpush1.msra.mxu0 0.0
    %739 = vmatprep.subr.mxu0 0.0
    %740 = vmatpush1.msra.mxu0 0.0
    %741 = vmatprep.subr.mxu0 0.0
    %742 = vmatpush1.msra.mxu0 0.0
    %743 = vmatprep.subr.mxu0 0.0
    %744 = vmatpush1.msra.mxu0 0.0
    %745 = vmatprep.subr.mxu0 0.0
    %746 = vmatpush1.msra.mxu0 0.0
    %747 = vmatprep.subr.mxu0 0.0
    %748 = vmatpush1.msra.mxu0 0.0
    %749 = vmatprep.subr.mxu0 0.0
    %750 = vmatpush1.msra.mxu0 0.0
    %751 = vmatprep.subr.mxu0 0.0
    %v752 = vand.u32 %v63, 4294901760
    %753 = vmatpush1.msra.mxu0 %v752
    %754 = vmatprep.subr.mxu0 0.0
    %v755 = vand.u32 %v62, 4294901760
    %756 = vmatpush1.msra.mxu0 %v755
    %757 = vmatprep.subr.mxu0 0.0
    %v758 = vand.u32 %v61, 4294901760
    %759 = vmatpush1.msra.mxu0 %v758
    %760 = vmatprep.subr.mxu0 0.0
    %v761 = vand.u32 %v60, 4294901760
    %762 = vmatpush1.msra.mxu0 %v761
    %763 = vmatprep.subr.mxu0 0.0
    %v764 = vand.u32 %v59, 4294901760
    %765 = vmatpush1.msra.mxu0 %v764
    %766 = vmatprep.subr.mxu0 0.0
    %v767 = vand.u32 %v58, 4294901760
    %768 = vmatpush1.msra.mxu0 %v767
    %769 = vmatprep.subr.mxu0 0.0
    %770 = vmatpush2.msra.mxu0 0.0
    %771 = vmatprep.subr.mxu0 0.0
    %772 = vmatpush2.msra.mxu0 0.0
    %773 = vmatprep.subr.mxu0 0.0
    %774 = vmatpush2.msra.mxu0 0.0
    %775 = vmatprep.subr.mxu0 0.0
    %776 = vmatpush2.msra.mxu0 0.0
    %777 = vmatprep.subr.mxu0 0.0
    %778 = vmatpush2.msra.mxu0 0.0
    %779 = vmatprep.subr.mxu0 0.0
    %780 = vmatpush2.msra.mxu0 0.0
    %781 = vmatprep.subr.mxu0 0.0
    %782 = vmatpush2.msra.mxu0 0.0
    %783 = vmatprep.subr.mxu0 0.0
    %784 = vmatpush2.msra.mxu0 0.0
    %785 = vmatprep.subr.mxu0 0.0
    %786 = vmatpush2.msra.mxu0 0.0
    %787 = vmatprep.subr.mxu0 0.0
    %788 = vmatpush2.msra.mxu0 0.0
    %789 = vmatprep.subr.mxu0 0.0
    %790 = vmatpush2.msra.mxu0 0.0
    %791 = vmatprep.subr.mxu0 0.0
    %792 = vmatpush2.msra.mxu0 0.0
    %793 = vmatprep.subr.mxu0 0.0
    %794 = vmatpush2.msra.mxu0 0.0
    %795 = vmatprep.subr.mxu0 0.0
    %796 = vmatpush2.msra.mxu0 0.0
    %797 = vmatprep.subr.mxu0 0.0
    %798 = vmatpush2.msra.mxu0 0.0
    %799 = vmatprep.subr.mxu0 0.0
    %800 = vmatpush2.msra.mxu0 0.0
    %801 = vmatprep.mubr.f32.mxu0 0.0
    %v802 = vand.u32 %v73, 4294901760
    %v803 = vsub.f32 %v73, %v802
    %v804 = vand.u32 %v803, 4294901760
    %805 = vmatmul.mubr.f32.gmra.mxu0 %v804
    %v806 = vpop.f32.mrf.mxu0
    %v807 = vadd.f32 %v623, %v806
    %v808 = vpop.f32.mrf.mxu0
    %809 = vmatprep.mubr.f32.mxu0 0.0
    %v810 = vand.u32 %v76, 4294901760
    %v811 = vsub.f32 %v76, %v810
    %v812 = vand.u32 %v811, 4294901760
    %813 = vmatmul.mubr.f32.gmra.mxu0 %v812
    %v814 = vpop.f32.mrf.mxu0
    %v815 = vadd.f32 %v630, %v814
    %v816 = vpop.f32.mrf.mxu0
    %817 = vmatprep.mubr.f32.mxu0 0.0
    %v818 = vand.u32 %v79, 4294901760
    %v819 = vsub.f32 %v79, %v818
    %v820 = vand.u32 %v819, 4294901760
    %821 = vmatmul.mubr.f32.gmra.mxu0 %v820
    %v822 = vpop.f32.mrf.mxu0
    %v823 = vadd.f32 %v637, %v822
    %v824 = vpop.f32.mrf.mxu0
    %825 = vmatprep.mubr.f32.mxu0 0.0
    %v826 = vand.u32 %v82, 4294901760
    %v827 = vsub.f32 %v82, %v826
    %v828 = vand.u32 %v827, 4294901760
    %829 = vmatmul.mubr.f32.gmra.mxu0 %v828
    %v830 = vpop.f32.mrf.mxu0
    %v831 = vadd.f32 %v644, %v830
    %v832 = vpop.f32.mrf.mxu0
    %833 = vmatprep.mubr.f32.mxu0 0.0
    %v834 = vand.u32 %v85, 4294901760
    %v835 = vsub.f32 %v85, %v834
    %v836 = vand.u32 %v835, 4294901760
    %837 = vmatmul.mubr.f32.gmra.mxu0 %v836
    %v838 = vpop.f32.mrf.mxu0
    %v839 = vadd.f32 %v651, %v838
    %v840 = vpop.f32.mrf.mxu0
    %841 = vmatprep.mubr.f32.mxu0 0.0
    %v842 = vand.u32 %v88, 4294901760
    %v843 = vsub.f32 %v88, %v842
    %v844 = vand.u32 %v843, 4294901760
    %845 = vmatmul.mubr.f32.gmra.mxu0 %v844
    %v846 = vpop.f32.mrf.mxu0
    %v847 = vadd.f32 %v658, %v846
    %v848 = vpop.f32.mrf.mxu0
    %849 = vmatprep.mubr.f32.mxu0 0.0
    %v850 = vand.u32 %v91, 4294901760
    %v851 = vsub.f32 %v91, %v850
    %v852 = vand.u32 %v851, 4294901760
    %853 = vmatmul.mubr.f32.gmra.mxu0 %v852
    %v854 = vpop.f32.mrf.mxu0
    %v855 = vadd.f32 %v665, %v854
    %v856 = vpop.f32.mrf.mxu0
    %857 = vmatprep.mubr.f32.mxu0 0.0
    %v858 = vand.u32 %v94, 4294901760
    %v859 = vsub.f32 %v94, %v858
    %v860 = vand.u32 %v859, 4294901760
    %861 = vmatmul.mubr.f32.gmra.mxu0 %v860
    %v862 = vpop.f32.mrf.mxu0
    %v863 = vadd.f32 %v672, %v862
    %v864 = vpop.f32.mrf.mxu0
    %865 = vmatprep.mubr.f32.mxu0 0.0
    %v866 = vand.u32 %v97, 4294901760
    %v867 = vsub.f32 %v97, %v866
    %v868 = vand.u32 %v867, 4294901760
    %869 = vmatmul.mubr.f32.gmra.mxu0 %v868
    %v870 = vpop.f32.mrf.mxu0
    %v871 = vadd.f32 %v679, %v870
    %v872 = vpop.f32.mrf.mxu0
    %873 = vmatprep.mubr.f32.mxu0 0.0
    %v874 = vand.u32 %v100, 4294901760
    %v875 = vsub.f32 %v100, %v874
    %v876 = vand.u32 %v875, 4294901760
    %877 = vmatmul.mubr.f32.gmra.mxu0 %v876
    %v878 = vpop.f32.mrf.mxu0
    %v879 = vadd.f32 %v686, %v878
    %v880 = vpop.f32.mrf.mxu0
    %881 = vmatprep.mubr.f32.mxu0 0.0
    %v882 = vand.u32 %v103, 4294901760
    %v883 = vsub.f32 %v103, %v882
    %v884 = vand.u32 %v883, 4294901760
    %885 = vmatmul.mubr.f32.gmra.mxu0 %v884
    %v886 = vpop.f32.mrf.mxu0
    %v887 = vadd.f32 %v693, %v886
    %v888 = vpop.f32.mrf.mxu0
    %889 = vmatprep.mubr.f32.mxu0 0.0
    %v890 = vand.u32 %v106, 4294901760
    %v891 = vsub.f32 %v106, %v890
    %v892 = vand.u32 %v891, 4294901760
    %893 = vmatmul.mubr.f32.gmra.mxu0 %v892
    %v894 = vpop.f32.mrf.mxu0
    %v895 = vadd.f32 %v700, %v894
    %v896 = vpop.f32.mrf.mxu0
    %897 = vmatprep.mubr.f32.mxu0 0.0
    %v898 = vand.u32 %v109, 4294901760
    %v899 = vsub.f32 %v109, %v898
    %v900 = vand.u32 %v899, 4294901760
    %901 = vmatmul.mubr.f32.gmra.mxu0 %v900
    %v902 = vpop.f32.mrf.mxu0
    %v903 = vadd.f32 %v707, %v902
    %v904 = vpop.f32.mrf.mxu0
    %905 = vmatprep.mubr.f32.mxu0 0.0
    %v906 = vand.u32 %v112, 4294901760
    %v907 = vsub.f32 %v112, %v906
    %v908 = vand.u32 %v907, 4294901760
    %909 = vmatmul.mubr.f32.gmra.mxu0 %v908
    %v910 = vpop.f32.mrf.mxu0
    %v911 = vadd.f32 %v714, %v910
    %v912 = vpop.f32.mrf.mxu0
    %913 = vmatprep.mubr.f32.mxu0 0.0
    %v914 = vand.u32 %v115, 4294901760
    %v915 = vsub.f32 %v115, %v914
    %v916 = vand.u32 %v915, 4294901760
    %917 = vmatmul.mubr.f32.gmra.mxu0 %v916
    %v918 = vpop.f32.mrf.mxu0
    %v919 = vadd.f32 %v721, %v918
    %v920 = vpop.f32.mrf.mxu0
    %921 = vmatprep.mubr.f32.mxu0 0.0
    %v922 = vand.u32 %v118, 4294901760
    %v923 = vsub.f32 %v118, %v922
    %v924 = vand.u32 %v923, 4294901760
    %925 = vmatmul.mubr.f32.gmra.mxu0 %v924
    %v926 = vpop.f32.mrf.mxu0
    %v927 = vadd.f32 %v728, %v926
    %v928 = vpop.f32.mrf.mxu0
    %929 = vdwg.mxu0
    %930 = vmatprep.subr.mxu0 0.0
    %931 = vmatpush1.msra.mxu0 0.0
    %932 = vmatprep.subr.mxu0 0.0
    %933 = vmatpush1.msra.mxu0 0.0
    %934 = vmatprep.subr.mxu0 0.0
    %935 = vmatpush1.msra.mxu0 0.0
    %936 = vmatprep.subr.mxu0 0.0
    %937 = vmatpush1.msra.mxu0 0.0
    %938 = vmatprep.subr.mxu0 0.0
    %939 = vmatpush1.msra.mxu0 0.0
    %940 = vmatprep.subr.mxu0 0.0
    %941 = vmatpush1.msra.mxu0 0.0
    %942 = vmatprep.subr.mxu0 0.0
    %943 = vmatpush1.msra.mxu0 0.0
    %944 = vmatprep.subr.mxu0 0.0
    %945 = vmatpush1.msra.mxu0 0.0
    %946 = vmatprep.subr.mxu0 0.0
    %947 = vmatpush1.msra.mxu0 0.0
    %948 = vmatprep.subr.mxu0 0.0
    %949 = vmatpush1.msra.mxu0 0.0
    %950 = vmatprep.subr.mxu0 0.0
    %v951 = vand.u32 %v63, 4294901760
    %v952 = vsub.f32 %v63, %v951
    %v953 = vand.u32 %v952, 4294901760
    %954 = vmatpush1.msra.mxu0 %v953
    %955 = vmatprep.subr.mxu0 0.0
    %v956 = vand.u32 %v62, 4294901760
    %v957 = vsub.f32 %v62, %v956
    %v958 = vand.u32 %v957, 4294901760
    %959 = vmatpush1.msra.mxu0 %v958
    %960 = vmatprep.subr.mxu0 0.0
    %v961 = vand.u32 %v61, 4294901760
    %v962 = vsub.f32 %v61, %v961
    %v963 = vand.u32 %v962, 4294901760
    %964 = vmatpush1.msra.mxu0 %v963
    %965 = vmatprep.subr.mxu0 0.0
    %v966 = vand.u32 %v60, 4294901760
    %v967 = vsub.f32 %v60, %v966
    %v968 = vand.u32 %v967, 4294901760
    %969 = vmatpush1.msra.mxu0 %v968
    %970 = vmatprep.subr.mxu0 0.0
    %v971 = vand.u32 %v59, 4294901760
    %v972 = vsub.f32 %v59, %v971
    %v973 = vand.u32 %v972, 4294901760
    %974 = vmatpush1.msra.mxu0 %v973
    %975 = vmatprep.subr.mxu0 0.0
    %v976 = vand.u32 %v58, 4294901760
    %v977 = vsub.f32 %v58, %v976
    %v978 = vand.u32 %v977, 4294901760
    %979 = vmatpush1.msra.mxu0 %v978
    %980 = vmatprep.subr.mxu0 0.0
    %981 = vmatpush2.msra.mxu0 0.0
    %982 = vmatprep.subr.mxu0 0.0
    %983 = vmatpush2.msra.mxu0 0.0
    %984 = vmatprep.subr.mxu0 0.0
    %985 = vmatpush2.msra.mxu0 0.0
    %986 = vmatprep.subr.mxu0 0.0
    %987 = vmatpush2.msra.mxu0 0.0
    %988 = vmatprep.subr.mxu0 0.0
    %989 = vmatpush2.msra.mxu0 0.0
    %990 = vmatprep.subr.mxu0 0.0
    %991 = vmatpush2.msra.mxu0 0.0
    %992 = vmatprep.subr.mxu0 0.0
    %993 = vmatpush2.msra.mxu0 0.0
    %994 = vmatprep.subr.mxu0 0.0
    %995 = vmatpush2.msra.mxu0 0.0
    %996 = vmatprep.subr.mxu0 0.0
    %997 = vmatpush2.msra.mxu0 0.0
    %998 = vmatprep.subr.mxu0 0.0
    %999 = vmatpush2.msra.mxu0 0.0
    %1000 = vmatprep.subr.mxu0 0.0
    %1001 = vmatpush2.msra.mxu0 0.0
    %1002 = vmatprep.subr.mxu0 0.0
    %1003 = vmatpush2.msra.mxu0 0.0
    %1004 = vmatprep.subr.mxu0 0.0
    %1005 = vmatpush2.msra.mxu0 0.0
    %1006 = vmatprep.subr.mxu0 0.0
    %1007 = vmatpush2.msra.mxu0 0.0
    %1008 = vmatprep.subr.mxu0 0.0
    %1009 = vmatpush2.msra.mxu0 0.0
    %1010 = vmatprep.subr.mxu0 0.0
    %1011 = vmatpush2.msra.mxu0 0.0
    %1012 = vmatprep.mubr.f32.mxu0 0.0
    %v1013 = vand.u32 %v73, 4294901760
    %1014 = vmatmul.mubr.f32.gmra.mxu0 %v1013
    %v1015 = vpop.f32.mrf.mxu0
    %v1016 = vadd.f32 %v807, %v1015
    %v1017 = vpop.f32.mrf.mxu0
    %1018 = vmatprep.mubr.f32.mxu0 0.0
    %v1019 = vand.u32 %v76, 4294901760
    %1020 = vmatmul.mubr.f32.gmra.mxu0 %v1019
    %v1021 = vpop.f32.mrf.mxu0
    %v1022 = vadd.f32 %v815, %v1021
    %v1023 = vpop.f32.mrf.mxu0
    %1024 = vmatprep.mubr.f32.mxu0 0.0
    %v1025 = vand.u32 %v79, 4294901760
    %1026 = vmatmul.mubr.f32.gmra.mxu0 %v1025
    %v1027 = vpop.f32.mrf.mxu0
    %v1028 = vadd.f32 %v823, %v1027
    %v1029 = vpop.f32.mrf.mxu0
    %1030 = vmatprep.mubr.f32.mxu0 0.0
    %v1031 = vand.u32 %v82, 4294901760
    %1032 = vmatmul.mubr.f32.gmra.mxu0 %v1031
    %v1033 = vpop.f32.mrf.mxu0
    %v1034 = vadd.f32 %v831, %v1033
    %v1035 = vpop.f32.mrf.mxu0
    %1036 = vmatprep.mubr.f32.mxu0 0.0
    %v1037 = vand.u32 %v85, 4294901760
    %1038 = vmatmul.mubr.f32.gmra.mxu0 %v1037
    %v1039 = vpop.f32.mrf.mxu0
    %v1040 = vadd.f32 %v839, %v1039
    %v1041 = vpop.f32.mrf.mxu0
    %1042 = vmatprep.mubr.f32.mxu0 0.0
    %v1043 = vand.u32 %v88, 4294901760
    %1044 = vmatmul.mubr.f32.gmra.mxu0 %v1043
    %v1045 = vpop.f32.mrf.mxu0
    %v1046 = vadd.f32 %v847, %v1045
    %v1047 = vpop.f32.mrf.mxu0
    %1048 = vmatprep.mubr.f32.mxu0 0.0
    %v1049 = vand.u32 %v91, 4294901760
    %1050 = vmatmul.mubr.f32.gmra.mxu0 %v1049
    %v1051 = vpop.f32.mrf.mxu0
    %v1052 = vadd.f32 %v855, %v1051
    %v1053 = vpop.f32.mrf.mxu0
    %1054 = vmatprep.mubr.f32.mxu0 0.0
    %v1055 = vand.u32 %v94, 4294901760
    %1056 = vmatmul.mubr.f32.gmra.mxu0 %v1055
    %v1057 = vpop.f32.mrf.mxu0
    %v1058 = vadd.f32 %v863, %v1057
    %v1059 = vpop.f32.mrf.mxu0
    %1060 = vmatprep.mubr.f32.mxu0 0.0
    %v1061 = vand.u32 %v97, 4294901760
    %1062 = vmatmul.mubr.f32.gmra.mxu0 %v1061
    %v1063 = vpop.f32.mrf.mxu0
    %v1064 = vadd.f32 %v871, %v1063
    %v1065 = vpop.f32.mrf.mxu0
    %1066 = vmatprep.mubr.f32.mxu0 0.0
    %v1067 = vand.u32 %v100, 4294901760
    %1068 = vmatmul.mubr.f32.gmra.mxu0 %v1067
    %v1069 = vpop.f32.mrf.mxu0
    %v1070 = vadd.f32 %v879, %v1069
    %v1071 = vpop.f32.mrf.mxu0
    %1072 = vmatprep.mubr.f32.mxu0 0.0
    %v1073 = vand.u32 %v103, 4294901760
    %1074 = vmatmul.mubr.f32.gmra.mxu0 %v1073
    %v1075 = vpop.f32.mrf.mxu0
    %v1076 = vadd.f32 %v887, %v1075
    %v1077 = vpop.f32.mrf.mxu0
    %1078 = vmatprep.mubr.f32.mxu0 0.0
    %v1079 = vand.u32 %v106, 4294901760
    %1080 = vmatmul.mubr.f32.gmra.mxu0 %v1079
    %v1081 = vpop.f32.mrf.mxu0
    %v1082 = vadd.f32 %v895, %v1081
    %v1083 = vpop.f32.mrf.mxu0
    %1084 = vmatprep.mubr.f32.mxu0 0.0
    %v1085 = vand.u32 %v109, 4294901760
    %1086 = vmatmul.mubr.f32.gmra.mxu0 %v1085
    %v1087 = vpop.f32.mrf.mxu0
    %v1088 = vadd.f32 %v903, %v1087
    %v1089 = vpop.f32.mrf.mxu0
    %1090 = vmatprep.mubr.f32.mxu0 0.0
    %v1091 = vand.u32 %v112, 4294901760
    %1092 = vmatmul.mubr.f32.gmra.mxu0 %v1091
    %v1093 = vpop.f32.mrf.mxu0
    %v1094 = vadd.f32 %v911, %v1093
    %v1095 = vpop.f32.mrf.mxu0
    %1096 = vmatprep.mubr.f32.mxu0 0.0
    %v1097 = vand.u32 %v115, 4294901760
    %1098 = vmatmul.mubr.f32.gmra.mxu0 %v1097
    %v1099 = vpop.f32.mrf.mxu0
    %v1100 = vadd.f32 %v919, %v1099
    %v1101 = vpop.f32.mrf.mxu0
    %1102 = vmatprep.mubr.f32.mxu0 0.0
    %v1103 = vand.u32 %v118, 4294901760
    %1104 = vmatmul.mubr.f32.gmra.mxu0 %v1103
    %v1105 = vpop.f32.mrf.mxu0
    %v1106 = vadd.f32 %v927, %v1105
    %v1107 = vpop.f32.mrf.mxu0
    %1108 = vdwg.mxu0
    %1109 = vmatprep.subr.mxu0 0.0
    %1110 = vmatpush1.msra.mxu0 0.0
    %1111 = vmatprep.subr.mxu0 0.0
    %1112 = vmatpush1.msra.mxu0 0.0
    %1113 = vmatprep.subr.mxu0 0.0
    %1114 = vmatpush1.msra.mxu0 0.0
    %1115 = vmatprep.subr.mxu0 0.0
    %1116 = vmatpush1.msra.mxu0 0.0
    %1117 = vmatprep.subr.mxu0 0.0
    %1118 = vmatpush1.msra.mxu0 0.0
    %1119 = vmatprep.subr.mxu0 0.0
    %1120 = vmatpush1.msra.mxu0 0.0
    %1121 = vmatprep.subr.mxu0 0.0
    %1122 = vmatpush1.msra.mxu0 0.0
    %1123 = vmatprep.subr.mxu0 0.0
    %1124 = vmatpush1.msra.mxu0 0.0
    %1125 = vmatprep.subr.mxu0 0.0
    %1126 = vmatpush1.msra.mxu0 0.0
    %1127 = vmatprep.subr.mxu0 0.0
    %1128 = vmatpush1.msra.mxu0 0.0
    %1129 = vmatprep.subr.mxu0 0.0
    %v1130 = vand.u32 %v63, 4294901760
    %1131 = vmatpush1.msra.mxu0 %v1130
    %1132 = vmatprep.subr.mxu0 0.0
    %v1133 = vand.u32 %v62, 4294901760
    %1134 = vmatpush1.msra.mxu0 %v1133
    %1135 = vmatprep.subr.mxu0 0.0
    %v1136 = vand.u32 %v61, 4294901760
    %1137 = vmatpush1.msra.mxu0 %v1136
    %1138 = vmatprep.subr.mxu0 0.0
    %v1139 = vand.u32 %v60, 4294901760
    %1140 = vmatpush1.msra.mxu0 %v1139
    %1141 = vmatprep.subr.mxu0 0.0
    %v1142 = vand.u32 %v59, 4294901760
    %1143 = vmatpush1.msra.mxu0 %v1142
    %1144 = vmatprep.subr.mxu0 0.0
    %v1145 = vand.u32 %v58, 4294901760
    %1146 = vmatpush1.msra.mxu0 %v1145
    %1147 = vmatprep.subr.mxu0 0.0
    %1148 = vmatpush2.msra.mxu0 0.0
    %1149 = vmatprep.subr.mxu0 0.0
    %1150 = vmatpush2.msra.mxu0 0.0
    %1151 = vmatprep.subr.mxu0 0.0
    %1152 = vmatpush2.msra.mxu0 0.0
    %1153 = vmatprep.subr.mxu0 0.0
    %1154 = vmatpush2.msra.mxu0 0.0
    %1155 = vmatprep.subr.mxu0 0.0
    %1156 = vmatpush2.msra.mxu0 0.0
    %1157 = vmatprep.subr.mxu0 0.0
    %1158 = vmatpush2.msra.mxu0 0.0
    %1159 = vmatprep.subr.mxu0 0.0
    %1160 = vmatpush2.msra.mxu0 0.0
    %1161 = vmatprep.subr.mxu0 0.0
    %1162 = vmatpush2.msra.mxu0 0.0
    %1163 = vmatprep.subr.mxu0 0.0
    %1164 = vmatpush2.msra.mxu0 0.0
    %1165 = vmatprep.subr.mxu0 0.0
    %1166 = vmatpush2.msra.mxu0 0.0
    %1167 = vmatprep.subr.mxu0 0.0
    %1168 = vmatpush2.msra.mxu0 0.0
    %1169 = vmatprep.subr.mxu0 0.0
    %1170 = vmatpush2.msra.mxu0 0.0
    %1171 = vmatprep.subr.mxu0 0.0
    %1172 = vmatpush2.msra.mxu0 0.0
    %1173 = vmatprep.subr.mxu0 0.0
    %1174 = vmatpush2.msra.mxu0 0.0
    %1175 = vmatprep.subr.mxu0 0.0
    %1176 = vmatpush2.msra.mxu0 0.0
    %1177 = vmatprep.subr.mxu0 0.0
    %1178 = vmatpush2.msra.mxu0 0.0
    %1179 = vmatprep.mubr.f32.mxu0 0.0
    %v1180 = vand.u32 %v73, 4294901760
    %1181 = vmatmul.mubr.f32.gmra.mxu0 %v1180
    %v1182 = vpop.f32.mrf.mxu0
    %v1183 = vadd.f32 %v1016, %v1182
    %v1184 = vpop.f32.mrf.mxu0
    %1185 = vmatprep.mubr.f32.mxu0 0.0
    %v1186 = vand.u32 %v76, 4294901760
    %1187 = vmatmul.mubr.f32.gmra.mxu0 %v1186
    %v1188 = vpop.f32.mrf.mxu0
    %v1189 = vadd.f32 %v1022, %v1188
    %v1190 = vpop.f32.mrf.mxu0
    %1191 = vmatprep.mubr.f32.mxu0 0.0
    %v1192 = vand.u32 %v79, 4294901760
    %1193 = vmatmul.mubr.f32.gmra.mxu0 %v1192
    %v1194 = vpop.f32.mrf.mxu0
    %v1195 = vadd.f32 %v1028, %v1194
    %v1196 = vpop.f32.mrf.mxu0
    %1197 = vmatprep.mubr.f32.mxu0 0.0
    %v1198 = vand.u32 %v82, 4294901760
    %1199 = vmatmul.mubr.f32.gmra.mxu0 %v1198
    %v1200 = vpop.f32.mrf.mxu0
    %v1201 = vadd.f32 %v1034, %v1200
    %v1202 = vpop.f32.mrf.mxu0
    %1203 = vmatprep.mubr.f32.mxu0 0.0
    %v1204 = vand.u32 %v85, 4294901760
    %1205 = vmatmul.mubr.f32.gmra.mxu0 %v1204
    %v1206 = vpop.f32.mrf.mxu0
    %v1207 = vadd.f32 %v1040, %v1206
    %v1208 = vpop.f32.mrf.mxu0
    %1209 = vmatprep.mubr.f32.mxu0 0.0
    %v1210 = vand.u32 %v88, 4294901760
    %1211 = vmatmul.mubr.f32.gmra.mxu0 %v1210
    %v1212 = vpop.f32.mrf.mxu0
    %v1213 = vadd.f32 %v1046, %v1212
    %v1214 = vpop.f32.mrf.mxu0
    %1215 = vmatprep.mubr.f32.mxu0 0.0
    %v1216 = vand.u32 %v91, 4294901760
    %1217 = vmatmul.mubr.f32.gmra.mxu0 %v1216
    %v1218 = vpop.f32.mrf.mxu0
    %v1219 = vadd.f32 %v1052, %v1218
    %v1220 = vpop.f32.mrf.mxu0
    %1221 = vmatprep.mubr.f32.mxu0 0.0
    %v1222 = vand.u32 %v94, 4294901760
    %1223 = vmatmul.mubr.f32.gmra.mxu0 %v1222
    %v1224 = vpop.f32.mrf.mxu0
    %v1225 = vadd.f32 %v1058, %v1224
    %v1226 = vpop.f32.mrf.mxu0
    %1227 = vmatprep.mubr.f32.mxu0 0.0
    %v1228 = vand.u32 %v97, 4294901760
    %1229 = vmatmul.mubr.f32.gmra.mxu0 %v1228
    %v1230 = vpop.f32.mrf.mxu0
    %v1231 = vadd.f32 %v1064, %v1230
    %v1232 = vpop.f32.mrf.mxu0
    %1233 = vmatprep.mubr.f32.mxu0 0.0
    %v1234 = vand.u32 %v100, 4294901760
    %1235 = vmatmul.mubr.f32.gmra.mxu0 %v1234
    %v1236 = vpop.f32.mrf.mxu0
    %v1237 = vadd.f32 %v1070, %v1236
    %v1238 = vpop.f32.mrf.mxu0
    %1239 = vmatprep.mubr.f32.mxu0 0.0
    %v1240 = vand.u32 %v103, 4294901760
    %1241 = vmatmul.mubr.f32.gmra.mxu0 %v1240
    %v1242 = vpop.f32.mrf.mxu0
    %v1243 = vadd.f32 %v1076, %v1242
    %v1244 = vpop.f32.mrf.mxu0
    %1245 = vmatprep.mubr.f32.mxu0 0.0
    %v1246 = vand.u32 %v106, 4294901760
    %1247 = vmatmul.mubr.f32.gmra.mxu0 %v1246
    %v1248 = vpop.f32.mrf.mxu0
    %v1249 = vadd.f32 %v1082, %v1248
    %v1250 = vpop.f32.mrf.mxu0
    %1251 = vmatprep.mubr.f32.mxu0 0.0
    %v1252 = vand.u32 %v109, 4294901760
    %1253 = vmatmul.mubr.f32.gmra.mxu0 %v1252
    %v1254 = vpop.f32.mrf.mxu0
    %v1255 = vadd.f32 %v1088, %v1254
    %v1256 = vpop.f32.mrf.mxu0
    %1257 = vmatprep.mubr.f32.mxu0 0.0
    %v1258 = vand.u32 %v112, 4294901760
    %1259 = vmatmul.mubr.f32.gmra.mxu0 %v1258
    %v1260 = vpop.f32.mrf.mxu0
    %v1261 = vadd.f32 %v1094, %v1260
    %v1262 = vpop.f32.mrf.mxu0
    %1263 = vmatprep.mubr.f32.mxu0 0.0
    %v1264 = vand.u32 %v115, 4294901760
    %1265 = vmatmul.mubr.f32.gmra.mxu0 %v1264
    %v1266 = vpop.f32.mrf.mxu0
    %v1267 = vadd.f32 %v1100, %v1266
    %v1268 = vpop.f32.mrf.mxu0
    %1269 = vmatprep.mubr.f32.mxu0 0.0
    %v1270 = vand.u32 %v118, 4294901760
    %1271 = vmatmul.mubr.f32.gmra.mxu0 %v1270
    %v1272 = vpop.f32.mrf.mxu0
    %v1273 = vadd.f32 %v1106, %v1272
    %v1274 = vpop.f32.mrf.mxu0
    %1275 = vdwg.mxu0
    %vm1276 = vcmp.ge.f32.partialorder %v1183, 0.0
    %vm1277 = vcmp.ge.f32.partialorder %v1189, 0.0
    %vm1278 = vcmp.ge.f32.partialorder %v1195, 0.0
    %vm1279 = vcmp.ge.f32.partialorder %v1201, 0.0
    %vm1280 = vcmp.ge.f32.partialorder %v1207, 0.0
    %vm1281 = vcmp.ge.f32.partialorder %v1213, 0.0
    %vm1282 = vcmp.ge.f32.partialorder %v1219, 0.0
    %vm1283 = vcmp.ge.f32.partialorder %v1225, 0.0
    %vm1284 = vcmp.ge.f32.partialorder %v1231, 0.0
    %vm1285 = vcmp.ge.f32.partialorder %v1237, 0.0
    %vm1286 = vcmp.ge.f32.partialorder %v1243, 0.0
    %vm1287 = vcmp.ge.f32.partialorder %v1249, 0.0
    %vm1288 = vcmp.ge.f32.partialorder %v1255, 0.0
    %vm1289 = vcmp.ge.f32.partialorder %v1261, 0.0
    %vm1290 = vcmp.ge.f32.partialorder %v1267, 0.0
    %vm1291 = vcmp.ge.f32.partialorder %v1273, 0.0
    %v1292 = vmul.f32 %v1183, 0.2
    %v1293 = vmul.f32 %v1189, 0.2
    %v1294 = vmul.f32 %v1195, 0.2
    %v1295 = vmul.f32 %v1201, 0.2
    %v1296 = vmul.f32 %v1207, 0.2
    %v1297 = vmul.f32 %v1213, 0.2
    %v1298 = vmul.f32 %v1219, 0.2
    %v1299 = vmul.f32 %v1225, 0.2
    %v1300 = vmul.f32 %v1231, 0.2
    %v1301 = vmul.f32 %v1237, 0.2
    %v1302 = vmul.f32 %v1243, 0.2
    %v1303 = vmul.f32 %v1249, 0.2
    %v1304 = vmul.f32 %v1255, 0.2
    %v1305 = vmul.f32 %v1261, 0.2
    %v1306 = vmul.f32 %v1267, 0.2
    %v1307 = vmul.f32 %v1273, 0.2
    %v1308 = vsel %vm1276, %v1183, %v1292
    %v1309 = vsel %vm1277, %v1189, %v1293
    %v1310 = vsel %vm1278, %v1195, %v1294
    %v1311 = vsel %vm1279, %v1201, %v1295
    %v1312 = vsel %vm1280, %v1207, %v1296
    %v1313 = vsel %vm1281, %v1213, %v1297
    %v1314 = vsel %vm1282, %v1219, %v1298
    %v1315 = vsel %vm1283, %v1225, %v1299
    %v1316 = vsel %vm1284, %v1231, %v1300
    %v1317 = vsel %vm1285, %v1237, %v1301
    %v1318 = vsel %vm1286, %v1243, %v1302
    %v1319 = vsel %vm1287, %v1249, %v1303
    %v1320 = vsel %vm1288, %v1255, %v1304
    %v1321 = vsel %vm1289, %v1261, %v1305
    %v1322 = vsel %vm1290, %v1267, %v1306
    %v1323 = vsel %vm1291, %v1273, %v1307
    %v1324 = vld [vmem:[%s3] sm:$0xf]
    %v1325 = vld [vmem:[%s3 + $0x4] sm:$0xf]
    %v1326 = vld [vmem:[%s3 + $0x8] sm:$0xf]
    %v1327 = vld [vmem:[%s3 + $0xc] sm:$0xf]
    %v1328 = vld [vmem:[%s3 + $0x10] sm:$0xf]
    %v1329 = vld [vmem:[%s3 + $0x14] sm:$0xf]
    %v1330 = vld [vmem:[%s3 + $0x18] sm:$0xf]
    %v1331 = vld [vmem:[%s3 + $0x1c] sm:$0xf]
    %v1332 = vld [vmem:[%s3 + $0x20] sm:$0xf]
    %v1333 = vld [vmem:[%s3 + $0x24] sm:$0xf]
    %v1334 = vld [vmem:[%s3 + $0x28] sm:$0xf]
    %v1335 = vld [vmem:[%s3 + $0x2c] sm:$0xf]
    %v1336 = vld [vmem:[%s3 + $0x30] sm:$0xf]
    %v1337 = vld [vmem:[%s3 + $0x34] sm:$0xf]
    %v1338 = vld [vmem:[%s3 + $0x38] sm:$0xf]
    %v1339 = vld [vmem:[%s3 + $0x3c] sm:$0xf]
    %v1340 = vld [vmem:[%s3 + $0x40] sm:$0xf]
    %v1341 = vld [vmem:[%s3 + $0x44] sm:$0xf]
    %v1342 = vld [vmem:[%s3 + $0x48] sm:$0xf]
    %v1343 = vld [vmem:[%s3 + $0x4c] sm:$0xf]
    %v1344 = vld [vmem:[%s3 + $0x50] sm:$0xf]
    %v1345 = vld [vmem:[%s3 + $0x54] sm:$0xf]
    %v1346 = vld [vmem:[%s3 + $0x58] sm:$0xf]
    %v1347 = vld [vmem:[%s3 + $0x5c] sm:$0xf]
    %v1348 = vld [vmem:[%s3 + $0x60] sm:$0xf]
    %v1349 = vld [vmem:[%s3 + $0x64] sm:$0xf]
    %v1350 = vld [vmem:[%s3 + $0x68] sm:$0xf]
    %v1351 = vld [vmem:[%s3 + $0x6c] sm:$0xf]
    %v1352 = vld [vmem:[%s3 + $0x70] sm:$0xf]
    %v1353 = vld [vmem:[%s3 + $0x74] sm:$0xf]
    %v1354 = vld [vmem:[%s3 + $0x78] sm:$0xf]
    %v1355 = vld [vmem:[%s3 + $0x7c] sm:$0xf]
    %v1356 = vld [vmem:[%s3 + $0x80] sm:$0xf]
    %v1357 = vld [vmem:[%s3 + $0x84] sm:$0xf]
    %v1358 = vld [vmem:[%s3 + $0x88] sm:$0xf]
    %v1359 = vld [vmem:[%s3 + $0x8c] sm:$0xf]
    %v1360 = vld [vmem:[%s3 + $0x90] sm:$0xf]
    %v1361 = vld [vmem:[%s3 + $0x94] sm:$0xf]
    %v1362 = vld [vmem:[%s3 + $0x98] sm:$0xf]
    %v1363 = vld [vmem:[%s3 + $0x9c] sm:$0xf]
    %v1364 = vld [vmem:[%s3 + $0xa0] sm:$0xf]
    %v1365 = vld [vmem:[%s3 + $0xa4] sm:$0xf]
    %v1366 = vld [vmem:[%s3 + $0xa8] sm:$0xf]
    %v1367 = vld [vmem:[%s3 + $0xac] sm:$0xf]
    %v1368 = vld [vmem:[%s3 + $0xb0] sm:$0xf]
    %v1369 = vld [vmem:[%s3 + $0xb4] sm:$0xf]
    %v1370 = vld [vmem:[%s3 + $0xb8] sm:$0xf]
    %v1371 = vld [vmem:[%s3 + $0xbc] sm:$0xf]
    %v1372 = vld [vmem:[%s3 + $0xc0] sm:$0xf]
    %v1373 = vld [vmem:[%s3 + $0xc4] sm:$0xf]
    %v1374 = vld [vmem:[%s3 + $0xc8] sm:$0xf]
    %v1375 = vld [vmem:[%s3 + $0xcc] sm:$0xf]
    %v1376 = vld [vmem:[%s3 + $0xd0] sm:$0xf]
    %v1377 = vld [vmem:[%s3 + $0xd4] sm:$0xf]
    %v1378 = vld [vmem:[%s3 + $0xd8] sm:$0xf]
    %v1379 = vld [vmem:[%s3 + $0xdc] sm:$0xf]
    %v1380 = vld [vmem:[%s3 + $0xe0] sm:$0xf]
    %v1381 = vld [vmem:[%s3 + $0xe4] sm:$0xf]
    %v1382 = vld [vmem:[%s3 + $0xe8] sm:$0xf]
    %v1383 = vld [vmem:[%s3 + $0xec] sm:$0xf]
    %v1384 = vld [vmem:[%s3 + $0xf0] sm:$0xf]
    %v1385 = vld [vmem:[%s3 + $0xf4] sm:$0xf]
    %v1386 = vld [vmem:[%s3 + $0xf8] sm:$0xf]
    %v1387 = vld [vmem:[%s3 + $0xfc] sm:$0xf]
    %v1388 = vunpack.c.l.bf16 %v1324
    %v1389 = vunpack.c.l.bf16 %v1325
    %v1390 = vunpack.c.l.bf16 %v1326
    %v1391 = vunpack.c.l.bf16 %v1327
    %v1392 = vunpack.c.l.bf16 %v1328
    %v1393 = vunpack.c.l.bf16 %v1329
    %v1394 = vunpack.c.l.bf16 %v1330
    %v1395 = vunpack.c.l.bf16 %v1331
    %v1396 = vunpack.c.l.bf16 %v1332
    %v1397 = vunpack.c.l.bf16 %v1333
    %v1398 = vunpack.c.l.bf16 %v1334
    %v1399 = vunpack.c.l.bf16 %v1335
    %v1400 = vunpack.c.l.bf16 %v1336
    %v1401 = vunpack.c.l.bf16 %v1337
    %v1402 = vunpack.c.l.bf16 %v1338
    %v1403 = vunpack.c.l.bf16 %v1339
    %v1404 = vunpack.c.l.bf16 %v1340
    %v1405 = vunpack.c.l.bf16 %v1341
    %v1406 = vunpack.c.l.bf16 %v1342
    %v1407 = vunpack.c.l.bf16 %v1343
    %v1408 = vunpack.c.l.bf16 %v1344
    %v1409 = vunpack.c.l.bf16 %v1345
    %v1410 = vunpack.c.l.bf16 %v1346
    %v1411 = vunpack.c.l.bf16 %v1347
    %v1412 = vunpack.c.l.bf16 %v1348
    %v1413 = vunpack.c.l.bf16 %v1349
    %v1414 = vunpack.c.l.bf16 %v1350
    %v1415 = vunpack.c.l.bf16 %v1351
    %v1416 = vunpack.c.l.bf16 %v1352
    %v1417 = vunpack.c.l.bf16 %v1353
    %v1418 = vunpack.c.l.bf16 %v1354
    %v1419 = vunpack.c.l.bf16 %v1355
    %v1420 = vunpack.c.l.bf16 %v1356
    %v1421 = vunpack.c.l.bf16 %v1357
    %v1422 = vunpack.c.l.bf16 %v1358
    %v1423 = vunpack.c.l.bf16 %v1359
    %v1424 = vunpack.c.l.bf16 %v1360
    %v1425 = vunpack.c.l.bf16 %v1361
    %v1426 = vunpack.c.l.bf16 %v1362
    %v1427 = vunpack.c.l.bf16 %v1363
    %v1428 = vunpack.c.l.bf16 %v1364
    %v1429 = vunpack.c.l.bf16 %v1365
    %v1430 = vunpack.c.l.bf16 %v1366
    %v1431 = vunpack.c.l.bf16 %v1367
    %v1432 = vunpack.c.l.bf16 %v1368
    %v1433 = vunpack.c.l.bf16 %v1369
    %v1434 = vunpack.c.l.bf16 %v1370
    %v1435 = vunpack.c.l.bf16 %v1371
    %v1436 = vunpack.c.l.bf16 %v1372
    %v1437 = vunpack.c.l.bf16 %v1373
    %v1438 = vunpack.c.l.bf16 %v1374
    %v1439 = vunpack.c.l.bf16 %v1375
    %v1440 = vunpack.c.l.bf16 %v1376
    %v1441 = vunpack.c.l.bf16 %v1377
    %v1442 = vunpack.c.l.bf16 %v1378
    %v1443 = vunpack.c.l.bf16 %v1379
    %v1444 = vunpack.c.l.bf16 %v1380
    %v1445 = vunpack.c.l.bf16 %v1381
    %v1446 = vunpack.c.l.bf16 %v1382
    %v1447 = vunpack.c.l.bf16 %v1383
    %v1448 = vunpack.c.l.bf16 %v1384
    %v1449 = vunpack.c.l.bf16 %v1385
    %v1450 = vunpack.c.l.bf16 %v1386
    %v1451 = vunpack.c.l.bf16 %v1387
    %1452 = vmatprep.subr.mxu0 0.0
    %v1453 = vand.u32 %v1323, 4294901760
    %1454 = vmatpush1.msra.mxu0 %v1453
    %1455 = vmatprep.subr.mxu0 0.0
    %v1456 = vand.u32 %v1322, 4294901760
    %1457 = vmatpush1.msra.mxu0 %v1456
    %1458 = vmatprep.subr.mxu0 0.0
    %v1459 = vand.u32 %v1321, 4294901760
    %1460 = vmatpush1.msra.mxu0 %v1459
    %1461 = vmatprep.subr.mxu0 0.0
    %v1462 = vand.u32 %v1320, 4294901760
    %1463 = vmatpush1.msra.mxu0 %v1462
    %1464 = vmatprep.subr.mxu0 0.0
    %v1465 = vand.u32 %v1319, 4294901760
    %1466 = vmatpush1.msra.mxu0 %v1465
    %1467 = vmatprep.subr.mxu0 0.0
    %v1468 = vand.u32 %v1318, 4294901760
    %1469 = vmatpush1.msra.mxu0 %v1468
    %1470 = vmatprep.subr.mxu0 0.0
    %v1471 = vand.u32 %v1317, 4294901760
    %1472 = vmatpush1.msra.mxu0 %v1471
    %1473 = vmatprep.subr.mxu0 0.0
    %v1474 = vand.u32 %v1316, 4294901760
    %1475 = vmatpush1.msra.mxu0 %v1474
    %1476 = vmatprep.subr.mxu0 0.0
    %v1477 = vand.u32 %v1315, 4294901760
    %1478 = vmatpush1.msra.mxu0 %v1477
    %1479 = vmatprep.subr.mxu0 0.0
    %v1480 = vand.u32 %v1314, 4294901760
    %1481 = vmatpush1.msra.mxu0 %v1480
    %1482 = vmatprep.subr.mxu0 0.0
    %v1483 = vand.u32 %v1313, 4294901760
    %1484 = vmatpush1.msra.mxu0 %v1483
    %1485 = vmatprep.subr.mxu0 0.0
    %v1486 = vand.u32 %v1312, 4294901760
    %1487 = vmatpush1.msra.mxu0 %v1486
    %1488 = vmatprep.subr.mxu0 0.0
    %v1489 = vand.u32 %v1311, 4294901760
    %1490 = vmatpush1.msra.mxu0 %v1489
    %1491 = vmatprep.subr.mxu0 0.0
    %v1492 = vand.u32 %v1310, 4294901760
    %1493 = vmatpush1.msra.mxu0 %v1492
    %1494 = vmatprep.subr.mxu0 0.0
    %v1495 = vand.u32 %v1309, 4294901760
    %1496 = vmatpush1.msra.mxu0 %v1495
    %1497 = vmatprep.subr.mxu0 0.0
    %v1498 = vand.u32 %v1308, 4294901760
    %1499 = vmatpush1.msra.mxu0 %v1498
    %1500 = vmatprep.subr.mxu0 0.0
    %1501 = vmatpush2.msra.mxu0 0.0
    %1502 = vmatprep.subr.mxu0 0.0
    %1503 = vmatpush2.msra.mxu0 0.0
    %1504 = vmatprep.subr.mxu0 0.0
    %1505 = vmatpush2.msra.mxu0 0.0
    %1506 = vmatprep.subr.mxu0 0.0
    %1507 = vmatpush2.msra.mxu0 0.0
    %1508 = vmatprep.subr.mxu0 0.0
    %1509 = vmatpush2.msra.mxu0 0.0
    %1510 = vmatprep.subr.mxu0 0.0
    %1511 = vmatpush2.msra.mxu0 0.0
    %1512 = vmatprep.subr.mxu0 0.0
    %1513 = vmatpush2.msra.mxu0 0.0
    %1514 = vmatprep.subr.mxu0 0.0
    %1515 = vmatpush2.msra.mxu0 0.0
    %1516 = vmatprep.subr.mxu0 0.0
    %1517 = vmatpush2.msra.mxu0 0.0
    %1518 = vmatprep.subr.mxu0 0.0
    %1519 = vmatpush2.msra.mxu0 0.0
    %1520 = vmatprep.subr.mxu0 0.0
    %1521 = vmatpush2.msra.mxu0 0.0
    %1522 = vmatprep.subr.mxu0 0.0
    %1523 = vmatpush2.msra.mxu0 0.0
    %1524 = vmatprep.subr.mxu0 0.0
    %1525 = vmatpush2.msra.mxu0 0.0
    %1526 = vmatprep.subr.mxu0 0.0
    %1527 = vmatpush2.msra.mxu0 0.0
    %1528 = vmatprep.subr.mxu0 0.0
    %1529 = vmatpush2.msra.mxu0 0.0
    %1530 = vmatprep.subr.mxu0 0.0
    %1531 = vmatpush2.msra.mxu0 0.0
    %1532 = vmatprep.mubr.f32.mxu0 0.0
    %v1533 = vsub.f32 %v1388, %v1388
    %v1534 = vand.u32 %v1533, 4294901760
    %v1535 = vsub.f32 %v1533, %v1534
    %v1536 = vand.u32 %v1535, 4294901760
    %1537 = vmatmul.mubr.f32.gmra.mxu0 %v1536
    %v1538 = vpop.f32.mrf.mxu0
    %v1539 = vadd.f32 0.0, %v1538
    %v1540 = vpop.f32.mrf.mxu0
    %1541 = vmatprep.mubr.f32.mxu0 0.0
    %v1542 = vsub.f32 %v1389, %v1389
    %v1543 = vand.u32 %v1542, 4294901760
    %v1544 = vsub.f32 %v1542, %v1543
    %v1545 = vand.u32 %v1544, 4294901760
    %1546 = vmatmul.mubr.f32.gmra.mxu0 %v1545
    %v1547 = vpop.f32.mrf.mxu0
    %v1548 = vadd.f32 0.0, %v1547
    %v1549 = vpop.f32.mrf.mxu0
    %1550 = vmatprep.mubr.f32.mxu0 0.0
    %v1551 = vsub.f32 %v1390, %v1390
    %v1552 = vand.u32 %v1551, 4294901760
    %v1553 = vsub.f32 %v1551, %v1552
    %v1554 = vand.u32 %v1553, 4294901760
    %1555 = vmatmul.mubr.f32.gmra.mxu0 %v1554
    %v1556 = vpop.f32.mrf.mxu0
    %v1557 = vadd.f32 0.0, %v1556
    %v1558 = vpop.f32.mrf.mxu0
    %1559 = vmatprep.mubr.f32.mxu0 0.0
    %v1560 = vsub.f32 %v1391, %v1391
    %v1561 = vand.u32 %v1560, 4294901760
    %v1562 = vsub.f32 %v1560, %v1561
    %v1563 = vand.u32 %v1562, 4294901760
    %1564 = vmatmul.mubr.f32.gmra.mxu0 %v1563
    %v1565 = vpop.f32.mrf.mxu0
    %v1566 = vadd.f32 0.0, %v1565
    %v1567 = vpop.f32.mrf.mxu0
    %1568 = vmatprep.mubr.f32.mxu0 0.0
    %v1569 = vsub.f32 %v1392, %v1392
    %v1570 = vand.u32 %v1569, 4294901760
    %v1571 = vsub.f32 %v1569, %v1570
    %v1572 = vand.u32 %v1571, 4294901760
    %1573 = vmatmul.mubr.f32.gmra.mxu0 %v1572
    %v1574 = vpop.f32.mrf.mxu0
    %v1575 = vadd.f32 0.0, %v1574
    %v1576 = vpop.f32.mrf.mxu0
    %1577 = vmatprep.mubr.f32.mxu0 0.0
    %v1578 = vsub.f32 %v1393, %v1393
    %v1579 = vand.u32 %v1578, 4294901760
    %v1580 = vsub.f32 %v1578, %v1579
    %v1581 = vand.u32 %v1580, 4294901760
    %1582 = vmatmul.mubr.f32.gmra.mxu0 %v1581
    %v1583 = vpop.f32.mrf.mxu0
    %v1584 = vadd.f32 0.0, %v1583
    %v1585 = vpop.f32.mrf.mxu0
    %1586 = vmatprep.mubr.f32.mxu0 0.0
    %v1587 = vsub.f32 %v1394, %v1394
    %v1588 = vand.u32 %v1587, 4294901760
    %v1589 = vsub.f32 %v1587, %v1588
    %v1590 = vand.u32 %v1589, 4294901760
    %1591 = vmatmul.mubr.f32.gmra.mxu0 %v1590
    %v1592 = vpop.f32.mrf.mxu0
    %v1593 = vadd.f32 0.0, %v1592
    %v1594 = vpop.f32.mrf.mxu0
    %1595 = vmatprep.mubr.f32.mxu0 0.0
    %v1596 = vsub.f32 %v1395, %v1395
    %v1597 = vand.u32 %v1596, 4294901760
    %v1598 = vsub.f32 %v1596, %v1597
    %v1599 = vand.u32 %v1598, 4294901760
    %1600 = vmatmul.mubr.f32.gmra.mxu0 %v1599
    %v1601 = vpop.f32.mrf.mxu0
    %v1602 = vadd.f32 0.0, %v1601
    %v1603 = vpop.f32.mrf.mxu0
    %1604 = vmatprep.mubr.f32.mxu0 0.0
    %v1605 = vsub.f32 %v1396, %v1396
    %v1606 = vand.u32 %v1605, 4294901760
    %v1607 = vsub.f32 %v1605, %v1606
    %v1608 = vand.u32 %v1607, 4294901760
    %1609 = vmatmul.mubr.f32.gmra.mxu0 %v1608
    %v1610 = vpop.f32.mrf.mxu0
    %v1611 = vadd.f32 0.0, %v1610
    %v1612 = vpop.f32.mrf.mxu0
    %1613 = vmatprep.mubr.f32.mxu0 0.0
    %v1614 = vsub.f32 %v1397, %v1397
    %v1615 = vand.u32 %v1614, 4294901760
    %v1616 = vsub.f32 %v1614, %v1615
    %v1617 = vand.u32 %v1616, 4294901760
    %1618 = vmatmul.mubr.f32.gmra.mxu0 %v1617
    %v1619 = vpop.f32.mrf.mxu0
    %v1620 = vadd.f32 0.0, %v1619
    %v1621 = vpop.f32.mrf.mxu0
    %1622 = vmatprep.mubr.f32.mxu0 0.0
    %v1623 = vsub.f32 %v1398, %v1398
    %v1624 = vand.u32 %v1623, 4294901760
    %v1625 = vsub.f32 %v1623, %v1624
    %v1626 = vand.u32 %v1625, 4294901760
    %1627 = vmatmul.mubr.f32.gmra.mxu0 %v1626
    %v1628 = vpop.f32.mrf.mxu0
    %v1629 = vadd.f32 0.0, %v1628
    %v1630 = vpop.f32.mrf.mxu0
    %1631 = vmatprep.mubr.f32.mxu0 0.0
    %v1632 = vsub.f32 %v1399, %v1399
    %v1633 = vand.u32 %v1632, 4294901760
    %v1634 = vsub.f32 %v1632, %v1633
    %v1635 = vand.u32 %v1634, 4294901760
    %1636 = vmatmul.mubr.f32.gmra.mxu0 %v1635
    %v1637 = vpop.f32.mrf.mxu0
    %v1638 = vadd.f32 0.0, %v1637
    %v1639 = vpop.f32.mrf.mxu0
    %1640 = vmatprep.mubr.f32.mxu0 0.0
    %v1641 = vsub.f32 %v1400, %v1400
    %v1642 = vand.u32 %v1641, 4294901760
    %v1643 = vsub.f32 %v1641, %v1642
    %v1644 = vand.u32 %v1643, 4294901760
    %1645 = vmatmul.mubr.f32.gmra.mxu0 %v1644
    %v1646 = vpop.f32.mrf.mxu0
    %v1647 = vadd.f32 0.0, %v1646
    %v1648 = vpop.f32.mrf.mxu0
    %1649 = vmatprep.mubr.f32.mxu0 0.0
    %v1650 = vsub.f32 %v1401, %v1401
    %v1651 = vand.u32 %v1650, 4294901760
    %v1652 = vsub.f32 %v1650, %v1651
    %v1653 = vand.u32 %v1652, 4294901760
    %1654 = vmatmul.mubr.f32.gmra.mxu0 %v1653
    %v1655 = vpop.f32.mrf.mxu0
    %v1656 = vadd.f32 0.0, %v1655
    %v1657 = vpop.f32.mrf.mxu0
    %1658 = vmatprep.mubr.f32.mxu0 0.0
    %v1659 = vsub.f32 %v1402, %v1402
    %v1660 = vand.u32 %v1659, 4294901760
    %v1661 = vsub.f32 %v1659, %v1660
    %v1662 = vand.u32 %v1661, 4294901760
    %1663 = vmatmul.mubr.f32.gmra.mxu0 %v1662
    %v1664 = vpop.f32.mrf.mxu0
    %v1665 = vadd.f32 0.0, %v1664
    %v1666 = vpop.f32.mrf.mxu0
    %1667 = vmatprep.mubr.f32.mxu0 0.0
    %v1668 = vsub.f32 %v1403, %v1403
    %v1669 = vand.u32 %v1668, 4294901760
    %v1670 = vsub.f32 %v1668, %v1669
    %v1671 = vand.u32 %v1670, 4294901760
    %1672 = vmatmul.mubr.f32.gmra.mxu0 %v1671
    %v1673 = vpop.f32.mrf.mxu0
    %v1674 = vadd.f32 0.0, %v1673
    %v1675 = vpop.f32.mrf.mxu0
    %1676 = vmatprep.mubr.f32.mxu0 0.0
    %v1677 = vsub.f32 %v1404, %v1404
    %v1678 = vand.u32 %v1677, 4294901760
    %v1679 = vsub.f32 %v1677, %v1678
    %v1680 = vand.u32 %v1679, 4294901760
    %1681 = vmatmul.mubr.f32.gmra.mxu0 %v1680
    %v1682 = vpop.f32.mrf.mxu0
    %v1683 = vadd.f32 0.0, %v1682
    %v1684 = vpop.f32.mrf.mxu0
    %1685 = vmatprep.mubr.f32.mxu0 0.0
    %v1686 = vsub.f32 %v1405, %v1405
    %v1687 = vand.u32 %v1686, 4294901760
    %v1688 = vsub.f32 %v1686, %v1687
    %v1689 = vand.u32 %v1688, 4294901760
    %1690 = vmatmul.mubr.f32.gmra.mxu0 %v1689
    %v1691 = vpop.f32.mrf.mxu0
    %v1692 = vadd.f32 0.0, %v1691
    %v1693 = vpop.f32.mrf.mxu0
    %1694 = vmatprep.mubr.f32.mxu0 0.0
    %v1695 = vsub.f32 %v1406, %v1406
    %v1696 = vand.u32 %v1695, 4294901760
    %v1697 = vsub.f32 %v1695, %v1696
    %v1698 = vand.u32 %v1697, 4294901760
    %1699 = vmatmul.mubr.f32.gmra.mxu0 %v1698
    %v1700 = vpop.f32.mrf.mxu0
    %v1701 = vadd.f32 0.0, %v1700
    %v1702 = vpop.f32.mrf.mxu0
    %1703 = vmatprep.mubr.f32.mxu0 0.0
    %v1704 = vsub.f32 %v1407, %v1407
    %v1705 = vand.u32 %v1704, 4294901760
    %v1706 = vsub.f32 %v1704, %v1705
    %v1707 = vand.u32 %v1706, 4294901760
    %1708 = vmatmul.mubr.f32.gmra.mxu0 %v1707
    %v1709 = vpop.f32.mrf.mxu0
    %v1710 = vadd.f32 0.0, %v1709
    %v1711 = vpop.f32.mrf.mxu0
    %1712 = vmatprep.mubr.f32.mxu0 0.0
    %v1713 = vsub.f32 %v1408, %v1408
    %v1714 = vand.u32 %v1713, 4294901760
    %v1715 = vsub.f32 %v1713, %v1714
    %v1716 = vand.u32 %v1715, 4294901760
    %1717 = vmatmul.mubr.f32.gmra.mxu0 %v1716
    %v1718 = vpop.f32.mrf.mxu0
    %v1719 = vadd.f32 0.0, %v1718
    %v1720 = vpop.f32.mrf.mxu0
    %1721 = vmatprep.mubr.f32.mxu0 0.0
    %v1722 = vsub.f32 %v1409, %v1409
    %v1723 = vand.u32 %v1722, 4294901760
    %v1724 = vsub.f32 %v1722, %v1723
    %v1725 = vand.u32 %v1724, 4294901760
    %1726 = vmatmul.mubr.f32.gmra.mxu0 %v1725
    %v1727 = vpop.f32.mrf.mxu0
    %v1728 = vadd.f32 0.0, %v1727
    %v1729 = vpop.f32.mrf.mxu0
    %1730 = vmatprep.mubr.f32.mxu0 0.0
    %v1731 = vsub.f32 %v1410, %v1410
    %v1732 = vand.u32 %v1731, 4294901760
    %v1733 = vsub.f32 %v1731, %v1732
    %v1734 = vand.u32 %v1733, 4294901760
    %1735 = vmatmul.mubr.f32.gmra.mxu0 %v1734
    %v1736 = vpop.f32.mrf.mxu0
    %v1737 = vadd.f32 0.0, %v1736
    %v1738 = vpop.f32.mrf.mxu0
    %1739 = vmatprep.mubr.f32.mxu0 0.0
    %v1740 = vsub.f32 %v1411, %v1411
    %v1741 = vand.u32 %v1740, 4294901760
    %v1742 = vsub.f32 %v1740, %v1741
    %v1743 = vand.u32 %v1742, 4294901760
    %1744 = vmatmul.mubr.f32.gmra.mxu0 %v1743
    %v1745 = vpop.f32.mrf.mxu0
    %v1746 = vadd.f32 0.0, %v1745
    %v1747 = vpop.f32.mrf.mxu0
    %1748 = vmatprep.mubr.f32.mxu0 0.0
    %v1749 = vsub.f32 %v1412, %v1412
    %v1750 = vand.u32 %v1749, 4294901760
    %v1751 = vsub.f32 %v1749, %v1750
    %v1752 = vand.u32 %v1751, 4294901760
    %1753 = vmatmul.mubr.f32.gmra.mxu0 %v1752
    %v1754 = vpop.f32.mrf.mxu0
    %v1755 = vadd.f32 0.0, %v1754
    %v1756 = vpop.f32.mrf.mxu0
    %1757 = vmatprep.mubr.f32.mxu0 0.0
    %v1758 = vsub.f32 %v1413, %v1413
    %v1759 = vand.u32 %v1758, 4294901760
    %v1760 = vsub.f32 %v1758, %v1759
    %v1761 = vand.u32 %v1760, 4294901760
    %1762 = vmatmul.mubr.f32.gmra.mxu0 %v1761
    %v1763 = vpop.f32.mrf.mxu0
    %v1764 = vadd.f32 0.0, %v1763
    %v1765 = vpop.f32.mrf.mxu0
    %1766 = vmatprep.mubr.f32.mxu0 0.0
    %v1767 = vsub.f32 %v1414, %v1414
    %v1768 = vand.u32 %v1767, 4294901760
    %v1769 = vsub.f32 %v1767, %v1768
    %v1770 = vand.u32 %v1769, 4294901760
    %1771 = vmatmul.mubr.f32.gmra.mxu0 %v1770
    %v1772 = vpop.f32.mrf.mxu0
    %v1773 = vadd.f32 0.0, %v1772
    %v1774 = vpop.f32.mrf.mxu0
    %1775 = vmatprep.mubr.f32.mxu0 0.0
    %v1776 = vsub.f32 %v1415, %v1415
    %v1777 = vand.u32 %v1776, 4294901760
    %v1778 = vsub.f32 %v1776, %v1777
    %v1779 = vand.u32 %v1778, 4294901760
    %1780 = vmatmul.mubr.f32.gmra.mxu0 %v1779
    %v1781 = vpop.f32.mrf.mxu0
    %v1782 = vadd.f32 0.0, %v1781
    %v1783 = vpop.f32.mrf.mxu0
    %1784 = vmatprep.mubr.f32.mxu0 0.0
    %v1785 = vsub.f32 %v1416, %v1416
    %v1786 = vand.u32 %v1785, 4294901760
    %v1787 = vsub.f32 %v1785, %v1786
    %v1788 = vand.u32 %v1787, 4294901760
    %1789 = vmatmul.mubr.f32.gmra.mxu0 %v1788
    %v1790 = vpop.f32.mrf.mxu0
    %v1791 = vadd.f32 0.0, %v1790
    %v1792 = vpop.f32.mrf.mxu0
    %1793 = vmatprep.mubr.f32.mxu0 0.0
    %v1794 = vsub.f32 %v1417, %v1417
    %v1795 = vand.u32 %v1794, 4294901760
    %v1796 = vsub.f32 %v1794, %v1795
    %v1797 = vand.u32 %v1796, 4294901760
    %1798 = vmatmul.mubr.f32.gmra.mxu0 %v1797
    %v1799 = vpop.f32.mrf.mxu0
    %v1800 = vadd.f32 0.0, %v1799
    %v1801 = vpop.f32.mrf.mxu0
    %1802 = vmatprep.mubr.f32.mxu0 0.0
    %v1803 = vsub.f32 %v1418, %v1418
    %v1804 = vand.u32 %v1803, 4294901760
    %v1805 = vsub.f32 %v1803, %v1804
    %v1806 = vand.u32 %v1805, 4294901760
    %1807 = vmatmul.mubr.f32.gmra.mxu0 %v1806
    %v1808 = vpop.f32.mrf.mxu0
    %v1809 = vadd.f32 0.0, %v1808
    %v1810 = vpop.f32.mrf.mxu0
    %1811 = vmatprep.mubr.f32.mxu0 0.0
    %v1812 = vsub.f32 %v1419, %v1419
    %v1813 = vand.u32 %v1812, 4294901760
    %v1814 = vsub.f32 %v1812, %v1813
    %v1815 = vand.u32 %v1814, 4294901760
    %1816 = vmatmul.mubr.f32.gmra.mxu0 %v1815
    %v1817 = vpop.f32.mrf.mxu0
    %v1818 = vadd.f32 0.0, %v1817
    %v1819 = vpop.f32.mrf.mxu0
    %1820 = vmatprep.mubr.f32.mxu0 0.0
    %v1821 = vsub.f32 %v1420, %v1420
    %v1822 = vand.u32 %v1821, 4294901760
    %v1823 = vsub.f32 %v1821, %v1822
    %v1824 = vand.u32 %v1823, 4294901760
    %1825 = vmatmul.mubr.f32.gmra.mxu0 %v1824
    %v1826 = vpop.f32.mrf.mxu0
    %v1827 = vadd.f32 0.0, %v1826
    %v1828 = vpop.f32.mrf.mxu0
    %1829 = vmatprep.mubr.f32.mxu0 0.0
    %v1830 = vsub.f32 %v1421, %v1421
    %v1831 = vand.u32 %v1830, 4294901760
    %v1832 = vsub.f32 %v1830, %v1831
    %v1833 = vand.u32 %v1832, 4294901760
    %1834 = vmatmul.mubr.f32.gmra.mxu0 %v1833
    %v1835 = vpop.f32.mrf.mxu0
    %v1836 = vadd.f32 0.0, %v1835
    %v1837 = vpop.f32.mrf.mxu0
    %1838 = vmatprep.mubr.f32.mxu0 0.0
    %v1839 = vsub.f32 %v1422, %v1422
    %v1840 = vand.u32 %v1839, 4294901760
    %v1841 = vsub.f32 %v1839, %v1840
    %v1842 = vand.u32 %v1841, 4294901760
    %1843 = vmatmul.mubr.f32.gmra.mxu0 %v1842
    %v1844 = vpop.f32.mrf.mxu0
    %v1845 = vadd.f32 0.0, %v1844
    %v1846 = vpop.f32.mrf.mxu0
    %1847 = vmatprep.mubr.f32.mxu0 0.0
    %v1848 = vsub.f32 %v1423, %v1423
    %v1849 = vand.u32 %v1848, 4294901760
    %v1850 = vsub.f32 %v1848, %v1849
    %v1851 = vand.u32 %v1850, 4294901760
    %1852 = vmatmul.mubr.f32.gmra.mxu0 %v1851
    %v1853 = vpop.f32.mrf.mxu0
    %v1854 = vadd.f32 0.0, %v1853
    %v1855 = vpop.f32.mrf.mxu0
    %1856 = vmatprep.mubr.f32.mxu0 0.0
    %v1857 = vsub.f32 %v1424, %v1424
    %v1858 = vand.u32 %v1857, 4294901760
    %v1859 = vsub.f32 %v1857, %v1858
    %v1860 = vand.u32 %v1859, 4294901760
    %1861 = vmatmul.mubr.f32.gmra.mxu0 %v1860
    %v1862 = vpop.f32.mrf.mxu0
    %v1863 = vadd.f32 0.0, %v1862
    %v1864 = vpop.f32.mrf.mxu0
    %1865 = vmatprep.mubr.f32.mxu0 0.0
    %v1866 = vsub.f32 %v1425, %v1425
    %v1867 = vand.u32 %v1866, 4294901760
    %v1868 = vsub.f32 %v1866, %v1867
    %v1869 = vand.u32 %v1868, 4294901760
    %1870 = vmatmul.mubr.f32.gmra.mxu0 %v1869
    %v1871 = vpop.f32.mrf.mxu0
    %v1872 = vadd.f32 0.0, %v1871
    %v1873 = vpop.f32.mrf.mxu0
    %1874 = vmatprep.mubr.f32.mxu0 0.0
    %v1875 = vsub.f32 %v1426, %v1426
    %v1876 = vand.u32 %v1875, 4294901760
    %v1877 = vsub.f32 %v1875, %v1876
    %v1878 = vand.u32 %v1877, 4294901760
    %1879 = vmatmul.mubr.f32.gmra.mxu0 %v1878
    %v1880 = vpop.f32.mrf.mxu0
    %v1881 = vadd.f32 0.0, %v1880
    %v1882 = vpop.f32.mrf.mxu0
    %1883 = vmatprep.mubr.f32.mxu0 0.0
    %v1884 = vsub.f32 %v1427, %v1427
    %v1885 = vand.u32 %v1884, 4294901760
    %v1886 = vsub.f32 %v1884, %v1885
    %v1887 = vand.u32 %v1886, 4294901760
    %1888 = vmatmul.mubr.f32.gmra.mxu0 %v1887
    %v1889 = vpop.f32.mrf.mxu0
    %v1890 = vadd.f32 0.0, %v1889
    %v1891 = vpop.f32.mrf.mxu0
    %1892 = vmatprep.mubr.f32.mxu0 0.0
    %v1893 = vsub.f32 %v1428, %v1428
    %v1894 = vand.u32 %v1893, 4294901760
    %v1895 = vsub.f32 %v1893, %v1894
    %v1896 = vand.u32 %v1895, 4294901760
    %1897 = vmatmul.mubr.f32.gmra.mxu0 %v1896
    %v1898 = vpop.f32.mrf.mxu0
    %v1899 = vadd.f32 0.0, %v1898
    %v1900 = vpop.f32.mrf.mxu0
    %1901 = vmatprep.mubr.f32.mxu0 0.0
    %v1902 = vsub.f32 %v1429, %v1429
    %v1903 = vand.u32 %v1902, 4294901760
    %v1904 = vsub.f32 %v1902, %v1903
    %v1905 = vand.u32 %v1904, 4294901760
    %1906 = vmatmul.mubr.f32.gmra.mxu0 %v1905
    %v1907 = vpop.f32.mrf.mxu0
    %v1908 = vadd.f32 0.0, %v1907
    %v1909 = vpop.f32.mrf.mxu0
    %1910 = vmatprep.mubr.f32.mxu0 0.0
    %v1911 = vsub.f32 %v1430, %v1430
    %v1912 = vand.u32 %v1911, 4294901760
    %v1913 = vsub.f32 %v1911, %v1912
    %v1914 = vand.u32 %v1913, 4294901760
    %1915 = vmatmul.mubr.f32.gmra.mxu0 %v1914
    %v1916 = vpop.f32.mrf.mxu0
    %v1917 = vadd.f32 0.0, %v1916
    %v1918 = vpop.f32.mrf.mxu0
    %1919 = vmatprep.mubr.f32.mxu0 0.0
    %v1920 = vsub.f32 %v1431, %v1431
    %v1921 = vand.u32 %v1920, 4294901760
    %v1922 = vsub.f32 %v1920, %v1921
    %v1923 = vand.u32 %v1922, 4294901760
    %1924 = vmatmul.mubr.f32.gmra.mxu0 %v1923
    %v1925 = vpop.f32.mrf.mxu0
    %v1926 = vadd.f32 0.0, %v1925
    %v1927 = vpop.f32.mrf.mxu0
    %1928 = vmatprep.mubr.f32.mxu0 0.0
    %v1929 = vsub.f32 %v1432, %v1432
    %v1930 = vand.u32 %v1929, 4294901760
    %v1931 = vsub.f32 %v1929, %v1930
    %v1932 = vand.u32 %v1931, 4294901760
    %1933 = vmatmul.mubr.f32.gmra.mxu0 %v1932
    %v1934 = vpop.f32.mrf.mxu0
    %v1935 = vadd.f32 0.0, %v1934
    %v1936 = vpop.f32.mrf.mxu0
    %1937 = vmatprep.mubr.f32.mxu0 0.0
    %v1938 = vsub.f32 %v1433, %v1433
    %v1939 = vand.u32 %v1938, 4294901760
    %v1940 = vsub.f32 %v1938, %v1939
    %v1941 = vand.u32 %v1940, 4294901760
    %1942 = vmatmul.mubr.f32.gmra.mxu0 %v1941
    %v1943 = vpop.f32.mrf.mxu0
    %v1944 = vadd.f32 0.0, %v1943
    %v1945 = vpop.f32.mrf.mxu0
    %1946 = vmatprep.mubr.f32.mxu0 0.0
    %v1947 = vsub.f32 %v1434, %v1434
    %v1948 = vand.u32 %v1947, 4294901760
    %v1949 = vsub.f32 %v1947, %v1948
    %v1950 = vand.u32 %v1949, 4294901760
    %1951 = vmatmul.mubr.f32.gmra.mxu0 %v1950
    %v1952 = vpop.f32.mrf.mxu0
    %v1953 = vadd.f32 0.0, %v1952
    %v1954 = vpop.f32.mrf.mxu0
    %1955 = vmatprep.mubr.f32.mxu0 0.0
    %v1956 = vsub.f32 %v1435, %v1435
    %v1957 = vand.u32 %v1956, 4294901760
    %v1958 = vsub.f32 %v1956, %v1957
    %v1959 = vand.u32 %v1958, 4294901760
    %1960 = vmatmul.mubr.f32.gmra.mxu0 %v1959
    %v1961 = vpop.f32.mrf.mxu0
    %v1962 = vadd.f32 0.0, %v1961
    %v1963 = vpop.f32.mrf.mxu0
    %1964 = vmatprep.mubr.f32.mxu0 0.0
    %v1965 = vsub.f32 %v1436, %v1436
    %v1966 = vand.u32 %v1965, 4294901760
    %v1967 = vsub.f32 %v1965, %v1966
    %v1968 = vand.u32 %v1967, 4294901760
    %1969 = vmatmul.mubr.f32.gmra.mxu0 %v1968
    %v1970 = vpop.f32.mrf.mxu0
    %v1971 = vadd.f32 0.0, %v1970
    %v1972 = vpop.f32.mrf.mxu0
    %1973 = vmatprep.mubr.f32.mxu0 0.0
    %v1974 = vsub.f32 %v1437, %v1437
    %v1975 = vand.u32 %v1974, 4294901760
    %v1976 = vsub.f32 %v1974, %v1975
    %v1977 = vand.u32 %v1976, 4294901760
    %1978 = vmatmul.mubr.f32.gmra.mxu0 %v1977
    %v1979 = vpop.f32.mrf.mxu0
    %v1980 = vadd.f32 0.0, %v1979
    %v1981 = vpop.f32.mrf.mxu0
    %1982 = vmatprep.mubr.f32.mxu0 0.0
    %v1983 = vsub.f32 %v1438, %v1438
    %v1984 = vand.u32 %v1983, 4294901760
    %v1985 = vsub.f32 %v1983, %v1984
    %v1986 = vand.u32 %v1985, 4294901760
    %1987 = vmatmul.mubr.f32.gmra.mxu0 %v1986
    %v1988 = vpop.f32.mrf.mxu0
    %v1989 = vadd.f32 0.0, %v1988
    %v1990 = vpop.f32.mrf.mxu0
    %1991 = vmatprep.mubr.f32.mxu0 0.0
    %v1992 = vsub.f32 %v1439, %v1439
    %v1993 = vand.u32 %v1992, 4294901760
    %v1994 = vsub.f32 %v1992, %v1993
    %v1995 = vand.u32 %v1994, 4294901760
    %1996 = vmatmul.mubr.f32.gmra.mxu0 %v1995
    %v1997 = vpop.f32.mrf.mxu0
    %v1998 = vadd.f32 0.0, %v1997
    %v1999 = vpop.f32.mrf.mxu0
    %2000 = vmatprep.mubr.f32.mxu0 0.0
    %v2001 = vsub.f32 %v1440, %v1440
    %v2002 = vand.u32 %v2001, 4294901760
    %v2003 = vsub.f32 %v2001, %v2002
    %v2004 = vand.u32 %v2003, 4294901760
    %2005 = vmatmul.mubr.f32.gmra.mxu0 %v2004
    %v2006 = vpop.f32.mrf.mxu0
    %v2007 = vadd.f32 0.0, %v2006
    %v2008 = vpop.f32.mrf.mxu0
    %2009 = vmatprep.mubr.f32.mxu0 0.0
    %v2010 = vsub.f32 %v1441, %v1441
    %v2011 = vand.u32 %v2010, 4294901760
    %v2012 = vsub.f32 %v2010, %v2011
    %v2013 = vand.u32 %v2012, 4294901760
    %2014 = vmatmul.mubr.f32.gmra.mxu0 %v2013
    %v2015 = vpop.f32.mrf.mxu0
    %v2016 = vadd.f32 0.0, %v2015
    %v2017 = vpop.f32.mrf.mxu0
    %2018 = vmatprep.mubr.f32.mxu0 0.0
    %v2019 = vsub.f32 %v1442, %v1442
    %v2020 = vand.u32 %v2019, 4294901760
    %v2021 = vsub.f32 %v2019, %v2020
    %v2022 = vand.u32 %v2021, 4294901760
    %2023 = vmatmul.mubr.f32.gmra.mxu0 %v2022
    %v2024 = vpop.f32.mrf.mxu0
    %v2025 = vadd.f32 0.0, %v2024
    %v2026 = vpop.f32.mrf.mxu0
    %2027 = vmatprep.mubr.f32.mxu0 0.0
    %v2028 = vsub.f32 %v1443, %v1443
    %v2029 = vand.u32 %v2028, 4294901760
    %v2030 = vsub.f32 %v2028, %v2029
    %v2031 = vand.u32 %v2030, 4294901760
    %2032 = vmatmul.mubr.f32.gmra.mxu0 %v2031
    %v2033 = vpop.f32.mrf.mxu0
    %v2034 = vadd.f32 0.0, %v2033
    %v2035 = vpop.f32.mrf.mxu0
    %2036 = vmatprep.mubr.f32.mxu0 0.0
    %v2037 = vsub.f32 %v1444, %v1444
    %v2038 = vand.u32 %v2037, 4294901760
    %v2039 = vsub.f32 %v2037, %v2038
    %v2040 = vand.u32 %v2039, 4294901760
    %2041 = vmatmul.mubr.f32.gmra.mxu0 %v2040
    %v2042 = vpop.f32.mrf.mxu0
    %v2043 = vadd.f32 0.0, %v2042
    %v2044 = vpop.f32.mrf.mxu0
    %2045 = vmatprep.mubr.f32.mxu0 0.0
    %v2046 = vsub.f32 %v1445, %v1445
    %v2047 = vand.u32 %v2046, 4294901760
    %v2048 = vsub.f32 %v2046, %v2047
    %v2049 = vand.u32 %v2048, 4294901760
    %2050 = vmatmul.mubr.f32.gmra.mxu0 %v2049
    %v2051 = vpop.f32.mrf.mxu0
    %v2052 = vadd.f32 0.0, %v2051
    %v2053 = vpop.f32.mrf.mxu0
    %2054 = vmatprep.mubr.f32.mxu0 0.0
    %v2055 = vsub.f32 %v1446, %v1446
    %v2056 = vand.u32 %v2055, 4294901760
    %v2057 = vsub.f32 %v2055, %v2056
    %v2058 = vand.u32 %v2057, 4294901760
    %2059 = vmatmul.mubr.f32.gmra.mxu0 %v2058
    %v2060 = vpop.f32.mrf.mxu0
    %v2061 = vadd.f32 0.0, %v2060
    %v2062 = vpop.f32.mrf.mxu0
    %2063 = vmatprep.mubr.f32.mxu0 0.0
    %v2064 = vsub.f32 %v1447, %v1447
    %v2065 = vand.u32 %v2064, 4294901760
    %v2066 = vsub.f32 %v2064, %v2065
    %v2067 = vand.u32 %v2066, 4294901760
    %2068 = vmatmul.mubr.f32.gmra.mxu0 %v2067
    %v2069 = vpop.f32.mrf.mxu0
    %v2070 = vadd.f32 0.0, %v2069
    %v2071 = vpop.f32.mrf.mxu0
    %2072 = vmatprep.mubr.f32.mxu0 0.0
    %v2073 = vsub.f32 %v1448, %v1448
    %v2074 = vand.u32 %v2073, 4294901760
    %v2075 = vsub.f32 %v2073, %v2074
    %v2076 = vand.u32 %v2075, 4294901760
    %2077 = vmatmul.mubr.f32.gmra.mxu0 %v2076
    %v2078 = vpop.f32.mrf.mxu0
    %v2079 = vadd.f32 0.0, %v2078
    %v2080 = vpop.f32.mrf.mxu0
    %2081 = vmatprep.mubr.f32.mxu0 0.0
    %v2082 = vsub.f32 %v1449, %v1449
    %v2083 = vand.u32 %v2082, 4294901760
    %v2084 = vsub.f32 %v2082, %v2083
    %v2085 = vand.u32 %v2084, 4294901760
    %2086 = vmatmul.mubr.f32.gmra.mxu0 %v2085
    %v2087 = vpop.f32.mrf.mxu0
    %v2088 = vadd.f32 0.0, %v2087
    %v2089 = vpop.f32.mrf.mxu0
    %2090 = vmatprep.mubr.f32.mxu0 0.0
    %v2091 = vsub.f32 %v1450, %v1450
    %v2092 = vand.u32 %v2091, 4294901760
    %v2093 = vsub.f32 %v2091, %v2092
    %v2094 = vand.u32 %v2093, 4294901760
    %2095 = vmatmul.mubr.f32.gmra.mxu0 %v2094
    %v2096 = vpop.f32.mrf.mxu0
    %v2097 = vadd.f32 0.0, %v2096
    %v2098 = vpop.f32.mrf.mxu0
    %2099 = vmatprep.mubr.f32.mxu0 0.0
    %v2100 = vsub.f32 %v1451, %v1451
    %v2101 = vand.u32 %v2100, 4294901760
    %v2102 = vsub.f32 %v2100, %v2101
    %v2103 = vand.u32 %v2102, 4294901760
    %2104 = vmatmul.mubr.f32.gmra.mxu0 %v2103
    %v2105 = vpop.f32.mrf.mxu0
    %v2106 = vadd.f32 0.0, %v2105
    %v2107 = vpop.f32.mrf.mxu0
    %2108 = vdwg.mxu0
    %2109 = vmatprep.subr.mxu0 0.0
    %v2110 = vand.u32 %v1323, 4294901760
    %v2111 = vsub.f32 %v1323, %v2110
    %v2112 = vand.u32 %v2111, 4294901760
    %v2113 = vsub.f32 %v2111, %v2112
    %v2114 = vand.u32 %v2113, 4294901760
    %2115 = vmatpush1.msra.mxu0 %v2114
    %2116 = vmatprep.subr.mxu0 0.0
    %v2117 = vand.u32 %v1322, 4294901760
    %v2118 = vsub.f32 %v1322, %v2117
    %v2119 = vand.u32 %v2118, 4294901760
    %v2120 = vsub.f32 %v2118, %v2119
    %v2121 = vand.u32 %v2120, 4294901760
    %2122 = vmatpush1.msra.mxu0 %v2121
    %2123 = vmatprep.subr.mxu0 0.0
    %v2124 = vand.u32 %v1321, 4294901760
    %v2125 = vsub.f32 %v1321, %v2124
    %v2126 = vand.u32 %v2125, 4294901760
    %v2127 = vsub.f32 %v2125, %v2126
    %v2128 = vand.u32 %v2127, 4294901760
    %2129 = vmatpush1.msra.mxu0 %v2128
    %2130 = vmatprep.subr.mxu0 0.0
    %v2131 = vand.u32 %v1320, 4294901760
    %v2132 = vsub.f32 %v1320, %v2131
    %v2133 = vand.u32 %v2132, 4294901760
    %v2134 = vsub.f32 %v2132, %v2133
    %v2135 = vand.u32 %v2134, 4294901760
    %2136 = vmatpush1.msra.mxu0 %v2135
    %2137 = vmatprep.subr.mxu0 0.0
    %v2138 = vand.u32 %v1319, 4294901760
    %v2139 = vsub.f32 %v1319, %v2138
    %v2140 = vand.u32 %v2139, 4294901760
    %v2141 = vsub.f32 %v2139, %v2140
    %v2142 = vand.u32 %v2141, 4294901760
    %2143 = vmatpush1.msra.mxu0 %v2142
    %2144 = vmatprep.subr.mxu0 0.0
    %v2145 = vand.u32 %v1318, 4294901760
    %v2146 = vsub.f32 %v1318, %v2145
    %v2147 = vand.u32 %v2146, 4294901760
    %v2148 = vsub.f32 %v2146, %v2147
    %v2149 = vand.u32 %v2148, 4294901760
    %2150 = vmatpush1.msra.mxu0 %v2149
    %2151 = vmatprep.subr.mxu0 0.0
    %v2152 = vand.u32 %v1317, 4294901760
    %v2153 = vsub.f32 %v1317, %v2152
    %v2154 = vand.u32 %v2153, 4294901760
    %v2155 = vsub.f32 %v2153, %v2154
    %v2156 = vand.u32 %v2155, 4294901760
    %2157 = vmatpush1.msra.mxu0 %v2156
    %2158 = vmatprep.subr.mxu0 0.0
    %v2159 = vand.u32 %v1316, 4294901760
    %v2160 = vsub.f32 %v1316, %v2159
    %v2161 = vand.u32 %v2160, 4294901760
    %v2162 = vsub.f32 %v2160, %v2161
    %v2163 = vand.u32 %v2162, 4294901760
    %2164 = vmatpush1.msra.mxu0 %v2163
    %2165 = vmatprep.subr.mxu0 0.0
    %v2166 = vand.u32 %v1315, 4294901760
    %v2167 = vsub.f32 %v1315, %v2166
    %v2168 = vand.u32 %v2167, 4294901760
    %v2169 = vsub.f32 %v2167, %v2168
    %v2170 = vand.u32 %v2169, 4294901760
    %2171 = vmatpush1.msra.mxu0 %v2170
    %2172 = vmatprep.subr.mxu0 0.0
    %v2173 = vand.u32 %v1314, 4294901760
    %v2174 = vsub.f32 %v1314, %v2173
    %v2175 = vand.u32 %v2174, 4294901760
    %v2176 = vsub.f32 %v2174, %v2175
    %v2177 = vand.u32 %v2176, 4294901760
    %2178 = vmatpush1.msra.mxu0 %v2177
    %2179 = vmatprep.subr.mxu0 0.0
    %v2180 = vand.u32 %v1313, 4294901760
    %v2181 = vsub.f32 %v1313, %v2180
    %v2182 = vand.u32 %v2181, 4294901760
    %v2183 = vsub.f32 %v2181, %v2182
    %v2184 = vand.u32 %v2183, 4294901760
    %2185 = vmatpush1.msra.mxu0 %v2184
    %2186 = vmatprep.subr.mxu0 0.0
    %v2187 = vand.u32 %v1312, 4294901760
    %v2188 = vsub.f32 %v1312, %v2187
    %v2189 = vand.u32 %v2188, 4294901760
    %v2190 = vsub.f32 %v2188, %v2189
    %v2191 = vand.u32 %v2190, 4294901760
    %2192 = vmatpush1.msra.mxu0 %v2191
    %2193 = vmatprep.subr.mxu0 0.0
    %v2194 = vand.u32 %v1311, 4294901760
    %v2195 = vsub.f32 %v1311, %v2194
    %v2196 = vand.u32 %v2195, 4294901760
    %v2197 = vsub.f32 %v2195, %v2196
    %v2198 = vand.u32 %v2197, 4294901760
    %2199 = vmatpush1.msra.mxu0 %v2198
    %2200 = vmatprep.subr.mxu0 0.0
    %v2201 = vand.u32 %v1310, 4294901760
    %v2202 = vsub.f32 %v1310, %v2201
    %v2203 = vand.u32 %v2202, 4294901760
    %v2204 = vsub.f32 %v2202, %v2203
    %v2205 = vand.u32 %v2204, 4294901760
    %2206 = vmatpush1.msra.mxu0 %v2205
    %2207 = vmatprep.subr.mxu0 0.0
    %v2208 = vand.u32 %v1309, 4294901760
    %v2209 = vsub.f32 %v1309, %v2208
    %v2210 = vand.u32 %v2209, 4294901760
    %v2211 = vsub.f32 %v2209, %v2210
    %v2212 = vand.u32 %v2211, 4294901760
    %2213 = vmatpush1.msra.mxu0 %v2212
    %2214 = vmatprep.subr.mxu0 0.0
    %v2215 = vand.u32 %v1308, 4294901760
    %v2216 = vsub.f32 %v1308, %v2215
    %v2217 = vand.u32 %v2216, 4294901760
    %v2218 = vsub.f32 %v2216, %v2217
    %v2219 = vand.u32 %v2218, 4294901760
    %2220 = vmatpush1.msra.mxu0 %v2219
    %2221 = vmatprep.subr.mxu0 0.0
    %2222 = vmatpush2.msra.mxu0 0.0
    %2223 = vmatprep.subr.mxu0 0.0
    %2224 = vmatpush2.msra.mxu0 0.0
    %2225 = vmatprep.subr.mxu0 0.0
    %2226 = vmatpush2.msra.mxu0 0.0
    %2227 = vmatprep.subr.mxu0 0.0
    %2228 = vmatpush2.msra.mxu0 0.0
    %2229 = vmatprep.subr.mxu0 0.0
    %2230 = vmatpush2.msra.mxu0 0.0
    %2231 = vmatprep.subr.mxu0 0.0
    %2232 = vmatpush2.msra.mxu0 0.0
    %2233 = vmatprep.subr.mxu0 0.0
    %2234 = vmatpush2.msra.mxu0 0.0
    %2235 = vmatprep.subr.mxu0 0.0
    %2236 = vmatpush2.msra.mxu0 0.0
    %2237 = vmatprep.subr.mxu0 0.0
    %2238 = vmatpush2.msra.mxu0 0.0
    %2239 = vmatprep.subr.mxu0 0.0
    %2240 = vmatpush2.msra.mxu0 0.0
    %2241 = vmatprep.subr.mxu0 0.0
    %2242 = vmatpush2.msra.mxu0 0.0
    %2243 = vmatprep.subr.mxu0 0.0
    %2244 = vmatpush2.msra.mxu0 0.0
    %2245 = vmatprep.subr.mxu0 0.0
    %2246 = vmatpush2.msra.mxu0 0.0
    %2247 = vmatprep.subr.mxu0 0.0
    %2248 = vmatpush2.msra.mxu0 0.0
    %2249 = vmatprep.subr.mxu0 0.0
    %2250 = vmatpush2.msra.mxu0 0.0
    %2251 = vmatprep.subr.mxu0 0.0
    %2252 = vmatpush2.msra.mxu0 0.0
    %2253 = vmatprep.mubr.f32.mxu0 0.0
    %2254 = vmatmul.mubr.f32.gmra.mxu0 %v1388
    %v2255 = vpop.f32.mrf.mxu0
    %v2256 = vadd.f32 %v1539, %v2255
    %v2257 = vpop.f32.mrf.mxu0
    %2258 = vmatprep.mubr.f32.mxu0 0.0
    %2259 = vmatmul.mubr.f32.gmra.mxu0 %v1389
    %v2260 = vpop.f32.mrf.mxu0
    %v2261 = vadd.f32 %v1548, %v2260
    %v2262 = vpop.f32.mrf.mxu0
    %2263 = vmatprep.mubr.f32.mxu0 0.0
    %2264 = vmatmul.mubr.f32.gmra.mxu0 %v1390
    %v2265 = vpop.f32.mrf.mxu0
    %v2266 = vadd.f32 %v1557, %v2265
    %v2267 = vpop.f32.mrf.mxu0
    %2268 = vmatprep.mubr.f32.mxu0 0.0
    %2269 = vmatmul.mubr.f32.gmra.mxu0 %v1391
    %v2270 = vpop.f32.mrf.mxu0
    %v2271 = vadd.f32 %v1566, %v2270
    %v2272 = vpop.f32.mrf.mxu0
    %2273 = vmatprep.mubr.f32.mxu0 0.0
    %2274 = vmatmul.mubr.f32.gmra.mxu0 %v1392
    %v2275 = vpop.f32.mrf.mxu0
    %v2276 = vadd.f32 %v1575, %v2275
    %v2277 = vpop.f32.mrf.mxu0
    %2278 = vmatprep.mubr.f32.mxu0 0.0
    %2279 = vmatmul.mubr.f32.gmra.mxu0 %v1393
    %v2280 = vpop.f32.mrf.mxu0
    %v2281 = vadd.f32 %v1584, %v2280
    %v2282 = vpop.f32.mrf.mxu0
    %2283 = vmatprep.mubr.f32.mxu0 0.0
    %2284 = vmatmul.mubr.f32.gmra.mxu0 %v1394
    %v2285 = vpop.f32.mrf.mxu0
    %v2286 = vadd.f32 %v1593, %v2285
    %v2287 = vpop.f32.mrf.mxu0
    %2288 = vmatprep.mubr.f32.mxu0 0.0
    %2289 = vmatmul.mubr.f32.gmra.mxu0 %v1395
    %v2290 = vpop.f32.mrf.mxu0
    %v2291 = vadd.f32 %v1602, %v2290
    %v2292 = vpop.f32.mrf.mxu0
    %2293 = vmatprep.mubr.f32.mxu0 0.0
    %2294 = vmatmul.mubr.f32.gmra.mxu0 %v1396
    %v2295 = vpop.f32.mrf.mxu0
    %v2296 = vadd.f32 %v1611, %v2295
    %v2297 = vpop.f32.mrf.mxu0
    %2298 = vmatprep.mubr.f32.mxu0 0.0
    %2299 = vmatmul.mubr.f32.gmra.mxu0 %v1397
    %v2300 = vpop.f32.mrf.mxu0
    %v2301 = vadd.f32 %v1620, %v2300
    %v2302 = vpop.f32.mrf.mxu0
    %2303 = vmatprep.mubr.f32.mxu0 0.0
    %2304 = vmatmul.mubr.f32.gmra.mxu0 %v1398
    %v2305 = vpop.f32.mrf.mxu0
    %v2306 = vadd.f32 %v1629, %v2305
    %v2307 = vpop.f32.mrf.mxu0
    %2308 = vmatprep.mubr.f32.mxu0 0.0
    %2309 = vmatmul.mubr.f32.gmra.mxu0 %v1399
    %v2310 = vpop.f32.mrf.mxu0
    %v2311 = vadd.f32 %v1638, %v2310
    %v2312 = vpop.f32.mrf.mxu0
    %2313 = vmatprep.mubr.f32.mxu0 0.0
    %2314 = vmatmul.mubr.f32.gmra.mxu0 %v1400
    %v2315 = vpop.f32.mrf.mxu0
    %v2316 = vadd.f32 %v1647, %v2315
    %v2317 = vpop.f32.mrf.mxu0
    %2318 = vmatprep.mubr.f32.mxu0 0.0
    %2319 = vmatmul.mubr.f32.gmra.mxu0 %v1401
    %v2320 = vpop.f32.mrf.mxu0
    %v2321 = vadd.f32 %v1656, %v2320
    %v2322 = vpop.f32.mrf.mxu0
    %2323 = vmatprep.mubr.f32.mxu0 0.0
    %2324 = vmatmul.mubr.f32.gmra.mxu0 %v1402
    %v2325 = vpop.f32.mrf.mxu0
    %v2326 = vadd.f32 %v1665, %v2325
    %v2327 = vpop.f32.mrf.mxu0
    %2328 = vmatprep.mubr.f32.mxu0 0.0
    %2329 = vmatmul.mubr.f32.gmra.mxu0 %v1403
    %v2330 = vpop.f32.mrf.mxu0
    %v2331 = vadd.f32 %v1674, %v2330
    %v2332 = vpop.f32.mrf.mxu0
    %2333 = vmatprep.mubr.f32.mxu0 0.0
    %2334 = vmatmul.mubr.f32.gmra.mxu0 %v1404
    %v2335 = vpop.f32.mrf.mxu0
    %v2336 = vadd.f32 %v1683, %v2335
    %v2337 = vpop.f32.mrf.mxu0
    %2338 = vmatprep.mubr.f32.mxu0 0.0
    %2339 = vmatmul.mubr.f32.gmra.mxu0 %v1405
    %v2340 = vpop.f32.mrf.mxu0
    %v2341 = vadd.f32 %v1692, %v2340
    %v2342 = vpop.f32.mrf.mxu0
    %2343 = vmatprep.mubr.f32.mxu0 0.0
    %2344 = vmatmul.mubr.f32.gmra.mxu0 %v1406
    %v2345 = vpop.f32.mrf.mxu0
    %v2346 = vadd.f32 %v1701, %v2345
    %v2347 = vpop.f32.mrf.mxu0
    %2348 = vmatprep.mubr.f32.mxu0 0.0
    %2349 = vmatmul.mubr.f32.gmra.mxu0 %v1407
    %v2350 = vpop.f32.mrf.mxu0
    %v2351 = vadd.f32 %v1710, %v2350
    %v2352 = vpop.f32.mrf.mxu0
    %2353 = vmatprep.mubr.f32.mxu0 0.0
    %2354 = vmatmul.mubr.f32.gmra.mxu0 %v1408
    %v2355 = vpop.f32.mrf.mxu0
    %v2356 = vadd.f32 %v1719, %v2355
    %v2357 = vpop.f32.mrf.mxu0
    %2358 = vmatprep.mubr.f32.mxu0 0.0
    %2359 = vmatmul.mubr.f32.gmra.mxu0 %v1409
    %v2360 = vpop.f32.mrf.mxu0
    %v2361 = vadd.f32 %v1728, %v2360
    %v2362 = vpop.f32.mrf.mxu0
    %2363 = vmatprep.mubr.f32.mxu0 0.0
    %2364 = vmatmul.mubr.f32.gmra.mxu0 %v1410
    %v2365 = vpop.f32.mrf.mxu0
    %v2366 = vadd.f32 %v1737, %v2365
    %v2367 = vpop.f32.mrf.mxu0
    %2368 = vmatprep.mubr.f32.mxu0 0.0
    %2369 = vmatmul.mubr.f32.gmra.mxu0 %v1411
    %v2370 = vpop.f32.mrf.mxu0
    %v2371 = vadd.f32 %v1746, %v2370
    %v2372 = vpop.f32.mrf.mxu0
    %2373 = vmatprep.mubr.f32.mxu0 0.0
    %2374 = vmatmul.mubr.f32.gmra.mxu0 %v1412
    %v2375 = vpop.f32.mrf.mxu0
    %v2376 = vadd.f32 %v1755, %v2375
    %v2377 = vpop.f32.mrf.mxu0
    %2378 = vmatprep.mubr.f32.mxu0 0.0
    %2379 = vmatmul.mubr.f32.gmra.mxu0 %v1413
    %v2380 = vpop.f32.mrf.mxu0
    %v2381 = vadd.f32 %v1764, %v2380
    %v2382 = vpop.f32.mrf.mxu0
    %2383 = vmatprep.mubr.f32.mxu0 0.0
    %2384 = vmatmul.mubr.f32.gmra.mxu0 %v1414
    %v2385 = vpop.f32.mrf.mxu0
    %v2386 = vadd.f32 %v1773, %v2385
    %v2387 = vpop.f32.mrf.mxu0
    %2388 = vmatprep.mubr.f32.mxu0 0.0
    %2389 = vmatmul.mubr.f32.gmra.mxu0 %v1415
    %v2390 = vpop.f32.mrf.mxu0
    %v2391 = vadd.f32 %v1782, %v2390
    %v2392 = vpop.f32.mrf.mxu0
    %2393 = vmatprep.mubr.f32.mxu0 0.0
    %2394 = vmatmul.mubr.f32.gmra.mxu0 %v1416
    %v2395 = vpop.f32.mrf.mxu0
    %v2396 = vadd.f32 %v1791, %v2395
    %v2397 = vpop.f32.mrf.mxu0
    %2398 = vmatprep.mubr.f32.mxu0 0.0
    %2399 = vmatmul.mubr.f32.gmra.mxu0 %v1417
    %v2400 = vpop.f32.mrf.mxu0
    %v2401 = vadd.f32 %v1800, %v2400
    %v2402 = vpop.f32.mrf.mxu0
    %2403 = vmatprep.mubr.f32.mxu0 0.0
    %2404 = vmatmul.mubr.f32.gmra.mxu0 %v1418
    %v2405 = vpop.f32.mrf.mxu0
    %v2406 = vadd.f32 %v1809, %v2405
    %v2407 = vpop.f32.mrf.mxu0
    %2408 = vmatprep.mubr.f32.mxu0 0.0
    %2409 = vmatmul.mubr.f32.gmra.mxu0 %v1419
    %v2410 = vpop.f32.mrf.mxu0
    %v2411 = vadd.f32 %v1818, %v2410
    %v2412 = vpop.f32.mrf.mxu0
    %2413 = vmatprep.mubr.f32.mxu0 0.0
    %2414 = vmatmul.mubr.f32.gmra.mxu0 %v1420
    %v2415 = vpop.f32.mrf.mxu0
    %v2416 = vadd.f32 %v1827, %v2415
    %v2417 = vpop.f32.mrf.mxu0
    %2418 = vmatprep.mubr.f32.mxu0 0.0
    %2419 = vmatmul.mubr.f32.gmra.mxu0 %v1421
    %v2420 = vpop.f32.mrf.mxu0
    %v2421 = vadd.f32 %v1836, %v2420
    %v2422 = vpop.f32.mrf.mxu0
    %2423 = vmatprep.mubr.f32.mxu0 0.0
    %2424 = vmatmul.mubr.f32.gmra.mxu0 %v1422
    %v2425 = vpop.f32.mrf.mxu0
    %v2426 = vadd.f32 %v1845, %v2425
    %v2427 = vpop.f32.mrf.mxu0
    %2428 = vmatprep.mubr.f32.mxu0 0.0
    %2429 = vmatmul.mubr.f32.gmra.mxu0 %v1423
    %v2430 = vpop.f32.mrf.mxu0
    %v2431 = vadd.f32 %v1854, %v2430
    %v2432 = vpop.f32.mrf.mxu0
    %2433 = vmatprep.mubr.f32.mxu0 0.0
    %2434 = vmatmul.mubr.f32.gmra.mxu0 %v1424
    %v2435 = vpop.f32.mrf.mxu0
    %v2436 = vadd.f32 %v1863, %v2435
    %v2437 = vpop.f32.mrf.mxu0
    %2438 = vmatprep.mubr.f32.mxu0 0.0
    %2439 = vmatmul.mubr.f32.gmra.mxu0 %v1425
    %v2440 = vpop.f32.mrf.mxu0
    %v2441 = vadd.f32 %v1872, %v2440
    %v2442 = vpop.f32.mrf.mxu0
    %2443 = vmatprep.mubr.f32.mxu0 0.0
    %2444 = vmatmul.mubr.f32.gmra.mxu0 %v1426
    %v2445 = vpop.f32.mrf.mxu0
    %v2446 = vadd.f32 %v1881, %v2445
    %v2447 = vpop.f32.mrf.mxu0
    %2448 = vmatprep.mubr.f32.mxu0 0.0
    %2449 = vmatmul.mubr.f32.gmra.mxu0 %v1427
    %v2450 = vpop.f32.mrf.mxu0
    %v2451 = vadd.f32 %v1890, %v2450
    %v2452 = vpop.f32.mrf.mxu0
    %2453 = vmatprep.mubr.f32.mxu0 0.0
    %2454 = vmatmul.mubr.f32.gmra.mxu0 %v1428
    %v2455 = vpop.f32.mrf.mxu0
    %v2456 = vadd.f32 %v1899, %v2455
    %v2457 = vpop.f32.mrf.mxu0
    %2458 = vmatprep.mubr.f32.mxu0 0.0
    %2459 = vmatmul.mubr.f32.gmra.mxu0 %v1429
    %v2460 = vpop.f32.mrf.mxu0
    %v2461 = vadd.f32 %v1908, %v2460
    %v2462 = vpop.f32.mrf.mxu0
    %2463 = vmatprep.mubr.f32.mxu0 0.0
    %2464 = vmatmul.mubr.f32.gmra.mxu0 %v1430
    %v2465 = vpop.f32.mrf.mxu0
    %v2466 = vadd.f32 %v1917, %v2465
    %v2467 = vpop.f32.mrf.mxu0
    %2468 = vmatprep.mubr.f32.mxu0 0.0
    %2469 = vmatmul.mubr.f32.gmra.mxu0 %v1431
    %v2470 = vpop.f32.mrf.mxu0
    %v2471 = vadd.f32 %v1926, %v2470
    %v2472 = vpop.f32.mrf.mxu0
    %2473 = vmatprep.mubr.f32.mxu0 0.0
    %2474 = vmatmul.mubr.f32.gmra.mxu0 %v1432
    %v2475 = vpop.f32.mrf.mxu0
    %v2476 = vadd.f32 %v1935, %v2475
    %v2477 = vpop.f32.mrf.mxu0
    %2478 = vmatprep.mubr.f32.mxu0 0.0
    %2479 = vmatmul.mubr.f32.gmra.mxu0 %v1433
    %v2480 = vpop.f32.mrf.mxu0
    %v2481 = vadd.f32 %v1944, %v2480
    %v2482 = vpop.f32.mrf.mxu0
    %2483 = vmatprep.mubr.f32.mxu0 0.0
    %2484 = vmatmul.mubr.f32.gmra.mxu0 %v1434
    %v2485 = vpop.f32.mrf.mxu0
    %v2486 = vadd.f32 %v1953, %v2485
    %v2487 = vpop.f32.mrf.mxu0
    %2488 = vmatprep.mubr.f32.mxu0 0.0
    %2489 = vmatmul.mubr.f32.gmra.mxu0 %v1435
    %v2490 = vpop.f32.mrf.mxu0
    %v2491 = vadd.f32 %v1962, %v2490
    %v2492 = vpop.f32.mrf.mxu0
    %2493 = vmatprep.mubr.f32.mxu0 0.0
    %2494 = vmatmul.mubr.f32.gmra.mxu0 %v1436
    %v2495 = vpop.f32.mrf.mxu0
    %v2496 = vadd.f32 %v1971, %v2495
    %v2497 = vpop.f32.mrf.mxu0
    %2498 = vmatprep.mubr.f32.mxu0 0.0
    %2499 = vmatmul.mubr.f32.gmra.mxu0 %v1437
    %v2500 = vpop.f32.mrf.mxu0
    %v2501 = vadd.f32 %v1980, %v2500
    %v2502 = vpop.f32.mrf.mxu0
    %2503 = vmatprep.mubr.f32.mxu0 0.0
    %2504 = vmatmul.mubr.f32.gmra.mxu0 %v1438
    %v2505 = vpop.f32.mrf.mxu0
    %v2506 = vadd.f32 %v1989, %v2505
    %v2507 = vpop.f32.mrf.mxu0
    %2508 = vmatprep.mubr.f32.mxu0 0.0
    %2509 = vmatmul.mubr.f32.gmra.mxu0 %v1439
    %v2510 = vpop.f32.mrf.mxu0
    %v2511 = vadd.f32 %v1998, %v2510
    %v2512 = vpop.f32.mrf.mxu0
    %2513 = vmatprep.mubr.f32.mxu0 0.0
    %2514 = vmatmul.mubr.f32.gmra.mxu0 %v1440
    %v2515 = vpop.f32.mrf.mxu0
    %v2516 = vadd.f32 %v2007, %v2515
    %v2517 = vpop.f32.mrf.mxu0
    %2518 = vmatprep.mubr.f32.mxu0 0.0
    %2519 = vmatmul.mubr.f32.gmra.mxu0 %v1441
    %v2520 = vpop.f32.mrf.mxu0
    %v2521 = vadd.f32 %v2016, %v2520
    %v2522 = vpop.f32.mrf.mxu0
    %2523 = vmatprep.mubr.f32.mxu0 0.0
    %2524 = vmatmul.mubr.f32.gmra.mxu0 %v1442
    %v2525 = vpop.f32.mrf.mxu0
    %v2526 = vadd.f32 %v2025, %v2525
    %v2527 = vpop.f32.mrf.mxu0
    %2528 = vmatprep.mubr.f32.mxu0 0.0
    %2529 = vmatmul.mubr.f32.gmra.mxu0 %v1443
    %v2530 = vpop.f32.mrf.mxu0
    %v2531 = vadd.f32 %v2034, %v2530
    %v2532 = vpop.f32.mrf.mxu0
    %2533 = vmatprep.mubr.f32.mxu0 0.0
    %2534 = vmatmul.mubr.f32.gmra.mxu0 %v1444
    %v2535 = vpop.f32.mrf.mxu0
    %v2536 = vadd.f32 %v2043, %v2535
    %v2537 = vpop.f32.mrf.mxu0
    %2538 = vmatprep.mubr.f32.mxu0 0.0
    %2539 = vmatmul.mubr.f32.gmra.mxu0 %v1445
    %v2540 = vpop.f32.mrf.mxu0
    %v2541 = vadd.f32 %v2052, %v2540
    %v2542 = vpop.f32.mrf.mxu0
    %2543 = vmatprep.mubr.f32.mxu0 0.0
    %2544 = vmatmul.mubr.f32.gmra.mxu0 %v1446
    %v2545 = vpop.f32.mrf.mxu0
    %v2546 = vadd.f32 %v2061, %v2545
    %v2547 = vpop.f32.mrf.mxu0
    %2548 = vmatprep.mubr.f32.mxu0 0.0
    %2549 = vmatmul.mubr.f32.gmra.mxu0 %v1447
    %v2550 = vpop.f32.mrf.mxu0
    %v2551 = vadd.f32 %v2070, %v2550
    %v2552 = vpop.f32.mrf.mxu0
    %2553 = vmatprep.mubr.f32.mxu0 0.0
    %2554 = vmatmul.mubr.f32.gmra.mxu0 %v1448
    %v2555 = vpop.f32.mrf.mxu0
    %v2556 = vadd.f32 %v2079, %v2555
    %v2557 = vpop.f32.mrf.mxu0
    %2558 = vmatprep.mubr.f32.mxu0 0.0
    %2559 = vmatmul.mubr.f32.gmra.mxu0 %v1449
    %v2560 = vpop.f32.mrf.mxu0
    %v2561 = vadd.f32 %v2088, %v2560
    %v2562 = vpop.f32.mrf.mxu0
    %2563 = vmatprep.mubr.f32.mxu0 0.0
    %2564 = vmatmul.mubr.f32.gmra.mxu0 %v1450
    %v2565 = vpop.f32.mrf.mxu0
    %v2566 = vadd.f32 %v2097, %v2565
    %v2567 = vpop.f32.mrf.mxu0
    %2568 = vmatprep.mubr.f32.mxu0 0.0
    %2569 = vmatmul.mubr.f32.gmra.mxu0 %v1451
    %v2570 = vpop.f32.mrf.mxu0
    %v2571 = vadd.f32 %v2106, %v2570
    %v2572 = vpop.f32.mrf.mxu0
    %2573 = vdwg.mxu0
    %2574 = vmatprep.subr.mxu0 0.0
    %v2575 = vand.u32 %v1323, 4294901760
    %v2576 = vsub.f32 %v1323, %v2575
    %2577 = vmatpush1.msra.mxu0 %v2576
    %2578 = vmatprep.subr.mxu0 0.0
    %v2579 = vand.u32 %v1322, 4294901760
    %v2580 = vsub.f32 %v1322, %v2579
    %2581 = vmatpush1.msra.mxu0 %v2580
    %2582 = vmatprep.subr.mxu0 0.0
    %v2583 = vand.u32 %v1321, 4294901760
    %v2584 = vsub.f32 %v1321, %v2583
    %2585 = vmatpush1.msra.mxu0 %v2584
    %2586 = vmatprep.subr.mxu0 0.0
    %v2587 = vand.u32 %v1320, 4294901760
    %v2588 = vsub.f32 %v1320, %v2587
    %2589 = vmatpush1.msra.mxu0 %v2588
    %2590 = vmatprep.subr.mxu0 0.0
    %v2591 = vand.u32 %v1319, 4294901760
    %v2592 = vsub.f32 %v1319, %v2591
    %2593 = vmatpush1.msra.mxu0 %v2592
    %2594 = vmatprep.subr.mxu0 0.0
    %v2595 = vand.u32 %v1318, 4294901760
    %v2596 = vsub.f32 %v1318, %v2595
    %2597 = vmatpush1.msra.mxu0 %v2596
    %2598 = vmatprep.subr.mxu0 0.0
    %v2599 = vand.u32 %v1317, 4294901760
    %v2600 = vsub.f32 %v1317, %v2599
    %2601 = vmatpush1.msra.mxu0 %v2600
    %2602 = vmatprep.subr.mxu0 0.0
    %v2603 = vand.u32 %v1316, 4294901760
    %v2604 = vsub.f32 %v1316, %v2603
    %2605 = vmatpush1.msra.mxu0 %v2604
    %2606 = vmatprep.subr.mxu0 0.0
    %v2607 = vand.u32 %v1315, 4294901760
    %v2608 = vsub.f32 %v1315, %v2607
    %2609 = vmatpush1.msra.mxu0 %v2608
    %2610 = vmatprep.subr.mxu0 0.0
    %v2611 = vand.u32 %v1314, 4294901760
    %v2612 = vsub.f32 %v1314, %v2611
    %2613 = vmatpush1.msra.mxu0 %v2612
    %2614 = vmatprep.subr.mxu0 0.0
    %v2615 = vand.u32 %v1313, 4294901760
    %v2616 = vsub.f32 %v1313, %v2615
    %2617 = vmatpush1.msra.mxu0 %v2616
    %2618 = vmatprep.subr.mxu0 0.0
    %v2619 = vand.u32 %v1312, 4294901760
    %v2620 = vsub.f32 %v1312, %v2619
    %2621 = vmatpush1.msra.mxu0 %v2620
    %2622 = vmatprep.subr.mxu0 0.0
    %v2623 = vand.u32 %v1311, 4294901760
    %v2624 = vsub.f32 %v1311, %v2623
    %2625 = vmatpush1.msra.mxu0 %v2624
    %2626 = vmatprep.subr.mxu0 0.0
    %v2627 = vand.u32 %v1310, 4294901760
    %v2628 = vsub.f32 %v1310, %v2627
    %2629 = vmatpush1.msra.mxu0 %v2628
    %2630 = vmatprep.subr.mxu0 0.0
    %v2631 = vand.u32 %v1309, 4294901760
    %v2632 = vsub.f32 %v1309, %v2631
    %2633 = vmatpush1.msra.mxu0 %v2632
    %2634 = vmatprep.subr.mxu0 0.0
    %v2635 = vand.u32 %v1308, 4294901760
    %v2636 = vsub.f32 %v1308, %v2635
    %2637 = vmatpush1.msra.mxu0 %v2636
    %2638 = vmatprep.subr.mxu0 0.0
    %2639 = vmatpush2.msra.mxu0 0.0
    %2640 = vmatprep.subr.mxu0 0.0
    %2641 = vmatpush2.msra.mxu0 0.0
    %2642 = vmatprep.subr.mxu0 0.0
    %2643 = vmatpush2.msra.mxu0 0.0
    %2644 = vmatprep.subr.mxu0 0.0
    %2645 = vmatpush2.msra.mxu0 0.0
    %2646 = vmatprep.subr.mxu0 0.0
    %2647 = vmatpush2.msra.mxu0 0.0
    %2648 = vmatprep.subr.mxu0 0.0
    %2649 = vmatpush2.msra.mxu0 0.0
    %2650 = vmatprep.subr.mxu0 0.0
    %2651 = vmatpush2.msra.mxu0 0.0
    %2652 = vmatprep.subr.mxu0 0.0
    %2653 = vmatpush2.msra.mxu0 0.0
    %2654 = vmatprep.subr.mxu0 0.0
    %2655 = vmatpush2.msra.mxu0 0.0
    %2656 = vmatprep.subr.mxu0 0.0
    %2657 = vmatpush2.msra.mxu0 0.0
    %2658 = vmatprep.subr.mxu0 0.0
    %2659 = vmatpush2.msra.mxu0 0.0
    %2660 = vmatprep.subr.mxu0 0.0
    %2661 = vmatpush2.msra.mxu0 0.0
    %2662 = vmatprep.subr.mxu0 0.0
    %2663 = vmatpush2.msra.mxu0 0.0
    %2664 = vmatprep.subr.mxu0 0.0
    %2665 = vmatpush2.msra.mxu0 0.0
    %2666 = vmatprep.subr.mxu0 0.0
    %2667 = vmatpush2.msra.mxu0 0.0
    %2668 = vmatprep.subr.mxu0 0.0
    %2669 = vmatpush2.msra.mxu0 0.0
    %2670 = vmatprep.mubr.f32.mxu0 0.0
    %v2671 = vsub.f32 %v1388, %v1388
    %2672 = vmatmul.mubr.f32.gmra.mxu0 %v2671
    %v2673 = vpop.f32.mrf.mxu0
    %v2674 = vadd.f32 %v2256, %v2673
    %v2675 = vpop.f32.mrf.mxu0
    %2676 = vmatprep.mubr.f32.mxu0 0.0
    %v2677 = vsub.f32 %v1389, %v1389
    %2678 = vmatmul.mubr.f32.gmra.mxu0 %v2677
    %v2679 = vpop.f32.mrf.mxu0
    %v2680 = vadd.f32 %v2261, %v2679
    %v2681 = vpop.f32.mrf.mxu0
    %2682 = vmatprep.mubr.f32.mxu0 0.0
    %v2683 = vsub.f32 %v1390, %v1390
    %2684 = vmatmul.mubr.f32.gmra.mxu0 %v2683
    %v2685 = vpop.f32.mrf.mxu0
    %v2686 = vadd.f32 %v2266, %v2685
    %v2687 = vpop.f32.mrf.mxu0
    %2688 = vmatprep.mubr.f32.mxu0 0.0
    %v2689 = vsub.f32 %v1391, %v1391
    %2690 = vmatmul.mubr.f32.gmra.mxu0 %v2689
    %v2691 = vpop.f32.mrf.mxu0
    %v2692 = vadd.f32 %v2271, %v2691
    %v2693 = vpop.f32.mrf.mxu0
    %2694 = vmatprep.mubr.f32.mxu0 0.0
    %v2695 = vsub.f32 %v1392, %v1392
    %2696 = vmatmul.mubr.f32.gmra.mxu0 %v2695
    %v2697 = vpop.f32.mrf.mxu0
    %v2698 = vadd.f32 %v2276, %v2697
    %v2699 = vpop.f32.mrf.mxu0
    %2700 = vmatprep.mubr.f32.mxu0 0.0
    %v2701 = vsub.f32 %v1393, %v1393
    %2702 = vmatmul.mubr.f32.gmra.mxu0 %v2701
    %v2703 = vpop.f32.mrf.mxu0
    %v2704 = vadd.f32 %v2281, %v2703
    %v2705 = vpop.f32.mrf.mxu0
    %2706 = vmatprep.mubr.f32.mxu0 0.0
    %v2707 = vsub.f32 %v1394, %v1394
    %2708 = vmatmul.mubr.f32.gmra.mxu0 %v2707
    %v2709 = vpop.f32.mrf.mxu0
    %v2710 = vadd.f32 %v2286, %v2709
    %v2711 = vpop.f32.mrf.mxu0
    %2712 = vmatprep.mubr.f32.mxu0 0.0
    %v2713 = vsub.f32 %v1395, %v1395
    %2714 = vmatmul.mubr.f32.gmra.mxu0 %v2713
    %v2715 = vpop.f32.mrf.mxu0
    %v2716 = vadd.f32 %v2291, %v2715
    %v2717 = vpop.f32.mrf.mxu0
    %2718 = vmatprep.mubr.f32.mxu0 0.0
    %v2719 = vsub.f32 %v1396, %v1396
    %2720 = vmatmul.mubr.f32.gmra.mxu0 %v2719
    %v2721 = vpop.f32.mrf.mxu0
    %v2722 = vadd.f32 %v2296, %v2721
    %v2723 = vpop.f32.mrf.mxu0
    %2724 = vmatprep.mubr.f32.mxu0 0.0
    %v2725 = vsub.f32 %v1397, %v1397
    %2726 = vmatmul.mubr.f32.gmra.mxu0 %v2725
    %v2727 = vpop.f32.mrf.mxu0
    %v2728 = vadd.f32 %v2301, %v2727
    %v2729 = vpop.f32.mrf.mxu0
    %2730 = vmatprep.mubr.f32.mxu0 0.0
    %v2731 = vsub.f32 %v1398, %v1398
    %2732 = vmatmul.mubr.f32.gmra.mxu0 %v2731
    %v2733 = vpop.f32.mrf.mxu0
    %v2734 = vadd.f32 %v2306, %v2733
    %v2735 = vpop.f32.mrf.mxu0
    %2736 = vmatprep.mubr.f32.mxu0 0.0
    %v2737 = vsub.f32 %v1399, %v1399
    %2738 = vmatmul.mubr.f32.gmra.mxu0 %v2737
    %v2739 = vpop.f32.mrf.mxu0
    %v2740 = vadd.f32 %v2311, %v2739
    %v2741 = vpop.f32.mrf.mxu0
    %2742 = vmatprep.mubr.f32.mxu0 0.0
    %v2743 = vsub.f32 %v1400, %v1400
    %2744 = vmatmul.mubr.f32.gmra.mxu0 %v2743
    %v2745 = vpop.f32.mrf.mxu0
    %v2746 = vadd.f32 %v2316, %v2745
    %v2747 = vpop.f32.mrf.mxu0
    %2748 = vmatprep.mubr.f32.mxu0 0.0
    %v2749 = vsub.f32 %v1401, %v1401
    %2750 = vmatmul.mubr.f32.gmra.mxu0 %v2749
    %v2751 = vpop.f32.mrf.mxu0
    %v2752 = vadd.f32 %v2321, %v2751
    %v2753 = vpop.f32.mrf.mxu0
    %2754 = vmatprep.mubr.f32.mxu0 0.0
    %v2755 = vsub.f32 %v1402, %v1402
    %2756 = vmatmul.mubr.f32.gmra.mxu0 %v2755
    %v2757 = vpop.f32.mrf.mxu0
    %v2758 = vadd.f32 %v2326, %v2757
    %v2759 = vpop.f32.mrf.mxu0
    %2760 = vmatprep.mubr.f32.mxu0 0.0
    %v2761 = vsub.f32 %v1403, %v1403
    %2762 = vmatmul.mubr.f32.gmra.mxu0 %v2761
    %v2763 = vpop.f32.mrf.mxu0
    %v2764 = vadd.f32 %v2331, %v2763
    %v2765 = vpop.f32.mrf.mxu0
    %2766 = vmatprep.mubr.f32.mxu0 0.0
    %v2767 = vsub.f32 %v1404, %v1404
    %2768 = vmatmul.mubr.f32.gmra.mxu0 %v2767
    %v2769 = vpop.f32.mrf.mxu0
    %v2770 = vadd.f32 %v2336, %v2769
    %v2771 = vpop.f32.mrf.mxu0
    %2772 = vmatprep.mubr.f32.mxu0 0.0
    %v2773 = vsub.f32 %v1405, %v1405
    %2774 = vmatmul.mubr.f32.gmra.mxu0 %v2773
    %v2775 = vpop.f32.mrf.mxu0
    %v2776 = vadd.f32 %v2341, %v2775
    %v2777 = vpop.f32.mrf.mxu0
    %2778 = vmatprep.mubr.f32.mxu0 0.0
    %v2779 = vsub.f32 %v1406, %v1406
    %2780 = vmatmul.mubr.f32.gmra.mxu0 %v2779
    %v2781 = vpop.f32.mrf.mxu0
    %v2782 = vadd.f32 %v2346, %v2781
    %v2783 = vpop.f32.mrf.mxu0
    %2784 = vmatprep.mubr.f32.mxu0 0.0
    %v2785 = vsub.f32 %v1407, %v1407
    %2786 = vmatmul.mubr.f32.gmra.mxu0 %v2785
    %v2787 = vpop.f32.mrf.mxu0
    %v2788 = vadd.f32 %v2351, %v2787
    %v2789 = vpop.f32.mrf.mxu0
    %2790 = vmatprep.mubr.f32.mxu0 0.0
    %v2791 = vsub.f32 %v1408, %v1408
    %2792 = vmatmul.mubr.f32.gmra.mxu0 %v2791
    %v2793 = vpop.f32.mrf.mxu0
    %v2794 = vadd.f32 %v2356, %v2793
    %v2795 = vpop.f32.mrf.mxu0
    %2796 = vmatprep.mubr.f32.mxu0 0.0
    %v2797 = vsub.f32 %v1409, %v1409
    %2798 = vmatmul.mubr.f32.gmra.mxu0 %v2797
    %v2799 = vpop.f32.mrf.mxu0
    %v2800 = vadd.f32 %v2361, %v2799
    %v2801 = vpop.f32.mrf.mxu0
    %2802 = vmatprep.mubr.f32.mxu0 0.0
    %v2803 = vsub.f32 %v1410, %v1410
    %2804 = vmatmul.mubr.f32.gmra.mxu0 %v2803
    %v2805 = vpop.f32.mrf.mxu0
    %v2806 = vadd.f32 %v2366, %v2805
    %v2807 = vpop.f32.mrf.mxu0
    %2808 = vmatprep.mubr.f32.mxu0 0.0
    %v2809 = vsub.f32 %v1411, %v1411
    %2810 = vmatmul.mubr.f32.gmra.mxu0 %v2809
    %v2811 = vpop.f32.mrf.mxu0
    %v2812 = vadd.f32 %v2371, %v2811
    %v2813 = vpop.f32.mrf.mxu0
    %2814 = vmatprep.mubr.f32.mxu0 0.0
    %v2815 = vsub.f32 %v1412, %v1412
    %2816 = vmatmul.mubr.f32.gmra.mxu0 %v2815
    %v2817 = vpop.f32.mrf.mxu0
    %v2818 = vadd.f32 %v2376, %v2817
    %v2819 = vpop.f32.mrf.mxu0
    %2820 = vmatprep.mubr.f32.mxu0 0.0
    %v2821 = vsub.f32 %v1413, %v1413
    %2822 = vmatmul.mubr.f32.gmra.mxu0 %v2821
    %v2823 = vpop.f32.mrf.mxu0
    %v2824 = vadd.f32 %v2381, %v2823
    %v2825 = vpop.f32.mrf.mxu0
    %2826 = vmatprep.mubr.f32.mxu0 0.0
    %v2827 = vsub.f32 %v1414, %v1414
    %2828 = vmatmul.mubr.f32.gmra.mxu0 %v2827
    %v2829 = vpop.f32.mrf.mxu0
    %v2830 = vadd.f32 %v2386, %v2829
    %v2831 = vpop.f32.mrf.mxu0
    %2832 = vmatprep.mubr.f32.mxu0 0.0
    %v2833 = vsub.f32 %v1415, %v1415
    %2834 = vmatmul.mubr.f32.gmra.mxu0 %v2833
    %v2835 = vpop.f32.mrf.mxu0
    %v2836 = vadd.f32 %v2391, %v2835
    %v2837 = vpop.f32.mrf.mxu0
    %2838 = vmatprep.mubr.f32.mxu0 0.0
    %v2839 = vsub.f32 %v1416, %v1416
    %2840 = vmatmul.mubr.f32.gmra.mxu0 %v2839
    %v2841 = vpop.f32.mrf.mxu0
    %v2842 = vadd.f32 %v2396, %v2841
    %v2843 = vpop.f32.mrf.mxu0
    %2844 = vmatprep.mubr.f32.mxu0 0.0
    %v2845 = vsub.f32 %v1417, %v1417
    %2846 = vmatmul.mubr.f32.gmra.mxu0 %v2845
    %v2847 = vpop.f32.mrf.mxu0
    %v2848 = vadd.f32 %v2401, %v2847
    %v2849 = vpop.f32.mrf.mxu0
    %2850 = vmatprep.mubr.f32.mxu0 0.0
    %v2851 = vsub.f32 %v1418, %v1418
    %2852 = vmatmul.mubr.f32.gmra.mxu0 %v2851
    %v2853 = vpop.f32.mrf.mxu0
    %v2854 = vadd.f32 %v2406, %v2853
    %v2855 = vpop.f32.mrf.mxu0
    %2856 = vmatprep.mubr.f32.mxu0 0.0
    %v2857 = vsub.f32 %v1419, %v1419
    %2858 = vmatmul.mubr.f32.gmra.mxu0 %v2857
    %v2859 = vpop.f32.mrf.mxu0
    %v2860 = vadd.f32 %v2411, %v2859
    %v2861 = vpop.f32.mrf.mxu0
    %2862 = vmatprep.mubr.f32.mxu0 0.0
    %v2863 = vsub.f32 %v1420, %v1420
    %2864 = vmatmul.mubr.f32.gmra.mxu0 %v2863
    %v2865 = vpop.f32.mrf.mxu0
    %v2866 = vadd.f32 %v2416, %v2865
    %v2867 = vpop.f32.mrf.mxu0
    %2868 = vmatprep.mubr.f32.mxu0 0.0
    %v2869 = vsub.f32 %v1421, %v1421
    %2870 = vmatmul.mubr.f32.gmra.mxu0 %v2869
    %v2871 = vpop.f32.mrf.mxu0
    %v2872 = vadd.f32 %v2421, %v2871
    %v2873 = vpop.f32.mrf.mxu0
    %2874 = vmatprep.mubr.f32.mxu0 0.0
    %v2875 = vsub.f32 %v1422, %v1422
    %2876 = vmatmul.mubr.f32.gmra.mxu0 %v2875
    %v2877 = vpop.f32.mrf.mxu0
    %v2878 = vadd.f32 %v2426, %v2877
    %v2879 = vpop.f32.mrf.mxu0
    %2880 = vmatprep.mubr.f32.mxu0 0.0
    %v2881 = vsub.f32 %v1423, %v1423
    %2882 = vmatmul.mubr.f32.gmra.mxu0 %v2881
    %v2883 = vpop.f32.mrf.mxu0
    %v2884 = vadd.f32 %v2431, %v2883
    %v2885 = vpop.f32.mrf.mxu0
    %2886 = vmatprep.mubr.f32.mxu0 0.0
    %v2887 = vsub.f32 %v1424, %v1424
    %2888 = vmatmul.mubr.f32.gmra.mxu0 %v2887
    %v2889 = vpop.f32.mrf.mxu0
    %v2890 = vadd.f32 %v2436, %v2889
    %v2891 = vpop.f32.mrf.mxu0
    %2892 = vmatprep.mubr.f32.mxu0 0.0
    %v2893 = vsub.f32 %v1425, %v1425
    %2894 = vmatmul.mubr.f32.gmra.mxu0 %v2893
    %v2895 = vpop.f32.mrf.mxu0
    %v2896 = vadd.f32 %v2441, %v2895
    %v2897 = vpop.f32.mrf.mxu0
    %2898 = vmatprep.mubr.f32.mxu0 0.0
    %v2899 = vsub.f32 %v1426, %v1426
    %2900 = vmatmul.mubr.f32.gmra.mxu0 %v2899
    %v2901 = vpop.f32.mrf.mxu0
    %v2902 = vadd.f32 %v2446, %v2901
    %v2903 = vpop.f32.mrf.mxu0
    %2904 = vmatprep.mubr.f32.mxu0 0.0
    %v2905 = vsub.f32 %v1427, %v1427
    %2906 = vmatmul.mubr.f32.gmra.mxu0 %v2905
    %v2907 = vpop.f32.mrf.mxu0
    %v2908 = vadd.f32 %v2451, %v2907
    %v2909 = vpop.f32.mrf.mxu0
    %2910 = vmatprep.mubr.f32.mxu0 0.0
    %v2911 = vsub.f32 %v1428, %v1428
    %2912 = vmatmul.mubr.f32.gmra.mxu0 %v2911
    %v2913 = vpop.f32.mrf.mxu0
    %v2914 = vadd.f32 %v2456, %v2913
    %v2915 = vpop.f32.mrf.mxu0
    %2916 = vmatprep.mubr.f32.mxu0 0.0
    %v2917 = vsub.f32 %v1429, %v1429
    %2918 = vmatmul.mubr.f32.gmra.mxu0 %v2917
    %v2919 = vpop.f32.mrf.mxu0
    %v2920 = vadd.f32 %v2461, %v2919
    %v2921 = vpop.f32.mrf.mxu0
    %2922 = vmatprep.mubr.f32.mxu0 0.0
    %v2923 = vsub.f32 %v1430, %v1430
    %2924 = vmatmul.mubr.f32.gmra.mxu0 %v2923
    %v2925 = vpop.f32.mrf.mxu0
    %v2926 = vadd.f32 %v2466, %v2925
    %v2927 = vpop.f32.mrf.mxu0
    %2928 = vmatprep.mubr.f32.mxu0 0.0
    %v2929 = vsub.f32 %v1431, %v1431
    %2930 = vmatmul.mubr.f32.gmra.mxu0 %v2929
    %v2931 = vpop.f32.mrf.mxu0
    %v2932 = vadd.f32 %v2471, %v2931
    %v2933 = vpop.f32.mrf.mxu0
    %2934 = vmatprep.mubr.f32.mxu0 0.0
    %v2935 = vsub.f32 %v1432, %v1432
    %2936 = vmatmul.mubr.f32.gmra.mxu0 %v2935
    %v2937 = vpop.f32.mrf.mxu0
    %v2938 = vadd.f32 %v2476, %v2937
    %v2939 = vpop.f32.mrf.mxu0
    %2940 = vmatprep.mubr.f32.mxu0 0.0
    %v2941 = vsub.f32 %v1433, %v1433
    %2942 = vmatmul.mubr.f32.gmra.mxu0 %v2941
    %v2943 = vpop.f32.mrf.mxu0
    %v2944 = vadd.f32 %v2481, %v2943
    %v2945 = vpop.f32.mrf.mxu0
    %2946 = vmatprep.mubr.f32.mxu0 0.0
    %v2947 = vsub.f32 %v1434, %v1434
    %2948 = vmatmul.mubr.f32.gmra.mxu0 %v2947
    %v2949 = vpop.f32.mrf.mxu0
    %v2950 = vadd.f32 %v2486, %v2949
    %v2951 = vpop.f32.mrf.mxu0
    %2952 = vmatprep.mubr.f32.mxu0 0.0
    %v2953 = vsub.f32 %v1435, %v1435
    %2954 = vmatmul.mubr.f32.gmra.mxu0 %v2953
    %v2955 = vpop.f32.mrf.mxu0
    %v2956 = vadd.f32 %v2491, %v2955
    %v2957 = vpop.f32.mrf.mxu0
    %2958 = vmatprep.mubr.f32.mxu0 0.0
    %v2959 = vsub.f32 %v1436, %v1436
    %2960 = vmatmul.mubr.f32.gmra.mxu0 %v2959
    %v2961 = vpop.f32.mrf.mxu0
    %v2962 = vadd.f32 %v2496, %v2961
    %v2963 = vpop.f32.mrf.mxu0
    %2964 = vmatprep.mubr.f32.mxu0 0.0
    %v2965 = vsub.f32 %v1437, %v1437
    %2966 = vmatmul.mubr.f32.gmra.mxu0 %v2965
    %v2967 = vpop.f32.mrf.mxu0
    %v2968 = vadd.f32 %v2501, %v2967
    %v2969 = vpop.f32.mrf.mxu0
    %2970 = vmatprep.mubr.f32.mxu0 0.0
    %v2971 = vsub.f32 %v1438, %v1438
    %2972 = vmatmul.mubr.f32.gmra.mxu0 %v2971
    %v2973 = vpop.f32.mrf.mxu0
    %v2974 = vadd.f32 %v2506, %v2973
    %v2975 = vpop.f32.mrf.mxu0
    %2976 = vmatprep.mubr.f32.mxu0 0.0
    %v2977 = vsub.f32 %v1439, %v1439
    %2978 = vmatmul.mubr.f32.gmra.mxu0 %v2977
    %v2979 = vpop.f32.mrf.mxu0
    %v2980 = vadd.f32 %v2511, %v2979
    %v2981 = vpop.f32.mrf.mxu0
    %2982 = vmatprep.mubr.f32.mxu0 0.0
    %v2983 = vsub.f32 %v1440, %v1440
    %2984 = vmatmul.mubr.f32.gmra.mxu0 %v2983
    %v2985 = vpop.f32.mrf.mxu0
    %v2986 = vadd.f32 %v2516, %v2985
    %v2987 = vpop.f32.mrf.mxu0
    %2988 = vmatprep.mubr.f32.mxu0 0.0
    %v2989 = vsub.f32 %v1441, %v1441
    %2990 = vmatmul.mubr.f32.gmra.mxu0 %v2989
    %v2991 = vpop.f32.mrf.mxu0
    %v2992 = vadd.f32 %v2521, %v2991
    %v2993 = vpop.f32.mrf.mxu0
    %2994 = vmatprep.mubr.f32.mxu0 0.0
    %v2995 = vsub.f32 %v1442, %v1442
    %2996 = vmatmul.mubr.f32.gmra.mxu0 %v2995
    %v2997 = vpop.f32.mrf.mxu0
    %v2998 = vadd.f32 %v2526, %v2997
    %v2999 = vpop.f32.mrf.mxu0
    %3000 = vmatprep.mubr.f32.mxu0 0.0
    %v3001 = vsub.f32 %v1443, %v1443
    %3002 = vmatmul.mubr.f32.gmra.mxu0 %v3001
    %v3003 = vpop.f32.mrf.mxu0
    %v3004 = vadd.f32 %v2531, %v3003
    %v3005 = vpop.f32.mrf.mxu0
    %3006 = vmatprep.mubr.f32.mxu0 0.0
    %v3007 = vsub.f32 %v1444, %v1444
    %3008 = vmatmul.mubr.f32.gmra.mxu0 %v3007
    %v3009 = vpop.f32.mrf.mxu0
    %v3010 = vadd.f32 %v2536, %v3009
    %v3011 = vpop.f32.mrf.mxu0
    %3012 = vmatprep.mubr.f32.mxu0 0.0
    %v3013 = vsub.f32 %v1445, %v1445
    %3014 = vmatmul.mubr.f32.gmra.mxu0 %v3013
    %v3015 = vpop.f32.mrf.mxu0
    %v3016 = vadd.f32 %v2541, %v3015
    %v3017 = vpop.f32.mrf.mxu0
    %3018 = vmatprep.mubr.f32.mxu0 0.0
    %v3019 = vsub.f32 %v1446, %v1446
    %3020 = vmatmul.mubr.f32.gmra.mxu0 %v3019
    %v3021 = vpop.f32.mrf.mxu0
    %v3022 = vadd.f32 %v2546, %v3021
    %v3023 = vpop.f32.mrf.mxu0
    %3024 = vmatprep.mubr.f32.mxu0 0.0
    %v3025 = vsub.f32 %v1447, %v1447
    %3026 = vmatmul.mubr.f32.gmra.mxu0 %v3025
    %v3027 = vpop.f32.mrf.mxu0
    %v3028 = vadd.f32 %v2551, %v3027
    %v3029 = vpop.f32.mrf.mxu0
    %3030 = vmatprep.mubr.f32.mxu0 0.0
    %v3031 = vsub.f32 %v1448, %v1448
    %3032 = vmatmul.mubr.f32.gmra.mxu0 %v3031
    %v3033 = vpop.f32.mrf.mxu0
    %v3034 = vadd.f32 %v2556, %v3033
    %v3035 = vpop.f32.mrf.mxu0
    %3036 = vmatprep.mubr.f32.mxu0 0.0
    %v3037 = vsub.f32 %v1449, %v1449
    %3038 = vmatmul.mubr.f32.gmra.mxu0 %v3037
    %v3039 = vpop.f32.mrf.mxu0
    %v3040 = vadd.f32 %v2561, %v3039
    %v3041 = vpop.f32.mrf.mxu0
    %3042 = vmatprep.mubr.f32.mxu0 0.0
    %v3043 = vsub.f32 %v1450, %v1450
    %3044 = vmatmul.mubr.f32.gmra.mxu0 %v3043
    %v3045 = vpop.f32.mrf.mxu0
    %v3046 = vadd.f32 %v2566, %v3045
    %v3047 = vpop.f32.mrf.mxu0
    %3048 = vmatprep.mubr.f32.mxu0 0.0
    %v3049 = vsub.f32 %v1451, %v1451
    %3050 = vmatmul.mubr.f32.gmra.mxu0 %v3049
    %v3051 = vpop.f32.mrf.mxu0
    %v3052 = vadd.f32 %v2571, %v3051
    %v3053 = vpop.f32.mrf.mxu0
    %3054 = vdwg.mxu0
    %3055 = vmatprep.subr.mxu0 0.0
    %v3056 = vand.u32 %v1323, 4294901760
    %3057 = vmatpush1.msra.mxu0 %v3056
    %3058 = vmatprep.subr.mxu0 0.0
    %v3059 = vand.u32 %v1322, 4294901760
    %3060 = vmatpush1.msra.mxu0 %v3059
    %3061 = vmatprep.subr.mxu0 0.0
    %v3062 = vand.u32 %v1321, 4294901760
    %3063 = vmatpush1.msra.mxu0 %v3062
    %3064 = vmatprep.subr.mxu0 0.0
    %v3065 = vand.u32 %v1320, 4294901760
    %3066 = vmatpush1.msra.mxu0 %v3065
    %3067 = vmatprep.subr.mxu0 0.0
    %v3068 = vand.u32 %v1319, 4294901760
    %3069 = vmatpush1.msra.mxu0 %v3068
    %3070 = vmatprep.subr.mxu0 0.0
    %v3071 = vand.u32 %v1318, 4294901760
    %3072 = vmatpush1.msra.mxu0 %v3071
    %3073 = vmatprep.subr.mxu0 0.0
    %v3074 = vand.u32 %v1317, 4294901760
    %3075 = vmatpush1.msra.mxu0 %v3074
    %3076 = vmatprep.subr.mxu0 0.0
    %v3077 = vand.u32 %v1316, 4294901760
    %3078 = vmatpush1.msra.mxu0 %v3077
    %3079 = vmatprep.subr.mxu0 0.0
    %v3080 = vand.u32 %v1315, 4294901760
    %3081 = vmatpush1.msra.mxu0 %v3080
    %3082 = vmatprep.subr.mxu0 0.0
    %v3083 = vand.u32 %v1314, 4294901760
    %3084 = vmatpush1.msra.mxu0 %v3083
    %3085 = vmatprep.subr.mxu0 0.0
    %v3086 = vand.u32 %v1313, 4294901760
    %3087 = vmatpush1.msra.mxu0 %v3086
    %3088 = vmatprep.subr.mxu0 0.0
    %v3089 = vand.u32 %v1312, 4294901760
    %3090 = vmatpush1.msra.mxu0 %v3089
    %3091 = vmatprep.subr.mxu0 0.0
    %v3092 = vand.u32 %v1311, 4294901760
    %3093 = vmatpush1.msra.mxu0 %v3092
    %3094 = vmatprep.subr.mxu0 0.0
    %v3095 = vand.u32 %v1310, 4294901760
    %3096 = vmatpush1.msra.mxu0 %v3095
    %3097 = vmatprep.subr.mxu0 0.0
    %v3098 = vand.u32 %v1309, 4294901760
    %3099 = vmatpush1.msra.mxu0 %v3098
    %3100 = vmatprep.subr.mxu0 0.0
    %v3101 = vand.u32 %v1308, 4294901760
    %3102 = vmatpush1.msra.mxu0 %v3101
    %3103 = vmatprep.subr.mxu0 0.0
    %3104 = vmatpush2.msra.mxu0 0.0
    %3105 = vmatprep.subr.mxu0 0.0
    %3106 = vmatpush2.msra.mxu0 0.0
    %3107 = vmatprep.subr.mxu0 0.0
    %3108 = vmatpush2.msra.mxu0 0.0
    %3109 = vmatprep.subr.mxu0 0.0
    %3110 = vmatpush2.msra.mxu0 0.0
    %3111 = vmatprep.subr.mxu0 0.0
    %3112 = vmatpush2.msra.mxu0 0.0
    %3113 = vmatprep.subr.mxu0 0.0
    %3114 = vmatpush2.msra.mxu0 0.0
    %3115 = vmatprep.subr.mxu0 0.0
    %3116 = vmatpush2.msra.mxu0 0.0
    %3117 = vmatprep.subr.mxu0 0.0
    %3118 = vmatpush2.msra.mxu0 0.0
    %3119 = vmatprep.subr.mxu0 0.0
    %3120 = vmatpush2.msra.mxu0 0.0
    %3121 = vmatprep.subr.mxu0 0.0
    %3122 = vmatpush2.msra.mxu0 0.0
    %3123 = vmatprep.subr.mxu0 0.0
    %3124 = vmatpush2.msra.mxu0 0.0
    %3125 = vmatprep.subr.mxu0 0.0
    %3126 = vmatpush2.msra.mxu0 0.0
    %3127 = vmatprep.subr.mxu0 0.0
    %3128 = vmatpush2.msra.mxu0 0.0
    %3129 = vmatprep.subr.mxu0 0.0
    %3130 = vmatpush2.msra.mxu0 0.0
    %3131 = vmatprep.subr.mxu0 0.0
    %3132 = vmatpush2.msra.mxu0 0.0
    %3133 = vmatprep.subr.mxu0 0.0
    %3134 = vmatpush2.msra.mxu0 0.0
    %3135 = vmatprep.mubr.f32.mxu0 0.0
    %v3136 = vsub.f32 %v1388, %v1388
    %v3137 = vand.u32 %v3136, 4294901760
    %3138 = vmatmul.mubr.f32.gmra.mxu0 %v3137
    %v3139 = vpop.f32.mrf.mxu0
    %v3140 = vadd.f32 %v2674, %v3139
    %v3141 = vpop.f32.mrf.mxu0
    %3142 = vmatprep.mubr.f32.mxu0 0.0
    %v3143 = vsub.f32 %v1389, %v1389
    %v3144 = vand.u32 %v3143, 4294901760
    %3145 = vmatmul.mubr.f32.gmra.mxu0 %v3144
    %v3146 = vpop.f32.mrf.mxu0
    %v3147 = vadd.f32 %v2680, %v3146
    %v3148 = vpop.f32.mrf.mxu0
    %3149 = vmatprep.mubr.f32.mxu0 0.0
    %v3150 = vsub.f32 %v1390, %v1390
    %v3151 = vand.u32 %v3150, 4294901760
    %3152 = vmatmul.mubr.f32.gmra.mxu0 %v3151
    %v3153 = vpop.f32.mrf.mxu0
    %v3154 = vadd.f32 %v2686, %v3153
    %v3155 = vpop.f32.mrf.mxu0
    %3156 = vmatprep.mubr.f32.mxu0 0.0
    %v3157 = vsub.f32 %v1391, %v1391
    %v3158 = vand.u32 %v3157, 4294901760
    %3159 = vmatmul.mubr.f32.gmra.mxu0 %v3158
    %v3160 = vpop.f32.mrf.mxu0
    %v3161 = vadd.f32 %v2692, %v3160
    %v3162 = vpop.f32.mrf.mxu0
    %3163 = vmatprep.mubr.f32.mxu0 0.0
    %v3164 = vsub.f32 %v1392, %v1392
    %v3165 = vand.u32 %v3164, 4294901760
    %3166 = vmatmul.mubr.f32.gmra.mxu0 %v3165
    %v3167 = vpop.f32.mrf.mxu0
    %v3168 = vadd.f32 %v2698, %v3167
    %v3169 = vpop.f32.mrf.mxu0
    %3170 = vmatprep.mubr.f32.mxu0 0.0
    %v3171 = vsub.f32 %v1393, %v1393
    %v3172 = vand.u32 %v3171, 4294901760
    %3173 = vmatmul.mubr.f32.gmra.mxu0 %v3172
    %v3174 = vpop.f32.mrf.mxu0
    %v3175 = vadd.f32 %v2704, %v3174
    %v3176 = vpop.f32.mrf.mxu0
    %3177 = vmatprep.mubr.f32.mxu0 0.0
    %v3178 = vsub.f32 %v1394, %v1394
    %v3179 = vand.u32 %v3178, 4294901760
    %3180 = vmatmul.mubr.f32.gmra.mxu0 %v3179
    %v3181 = vpop.f32.mrf.mxu0
    %v3182 = vadd.f32 %v2710, %v3181
    %v3183 = vpop.f32.mrf.mxu0
    %3184 = vmatprep.mubr.f32.mxu0 0.0
    %v3185 = vsub.f32 %v1395, %v1395
    %v3186 = vand.u32 %v3185, 4294901760
    %3187 = vmatmul.mubr.f32.gmra.mxu0 %v3186
    %v3188 = vpop.f32.mrf.mxu0
    %v3189 = vadd.f32 %v2716, %v3188
    %v3190 = vpop.f32.mrf.mxu0
    %3191 = vmatprep.mubr.f32.mxu0 0.0
    %v3192 = vsub.f32 %v1396, %v1396
    %v3193 = vand.u32 %v3192, 4294901760
    %3194 = vmatmul.mubr.f32.gmra.mxu0 %v3193
    %v3195 = vpop.f32.mrf.mxu0
    %v3196 = vadd.f32 %v2722, %v3195
    %v3197 = vpop.f32.mrf.mxu0
    %3198 = vmatprep.mubr.f32.mxu0 0.0
    %v3199 = vsub.f32 %v1397, %v1397
    %v3200 = vand.u32 %v3199, 4294901760
    %3201 = vmatmul.mubr.f32.gmra.mxu0 %v3200
    %v3202 = vpop.f32.mrf.mxu0
    %v3203 = vadd.f32 %v2728, %v3202
    %v3204 = vpop.f32.mrf.mxu0
    %3205 = vmatprep.mubr.f32.mxu0 0.0
    %v3206 = vsub.f32 %v1398, %v1398
    %v3207 = vand.u32 %v3206, 4294901760
    %3208 = vmatmul.mubr.f32.gmra.mxu0 %v3207
    %v3209 = vpop.f32.mrf.mxu0
    %v3210 = vadd.f32 %v2734, %v3209
    %v3211 = vpop.f32.mrf.mxu0
    %3212 = vmatprep.mubr.f32.mxu0 0.0
    %v3213 = vsub.f32 %v1399, %v1399
    %v3214 = vand.u32 %v3213, 4294901760
    %3215 = vmatmul.mubr.f32.gmra.mxu0 %v3214
    %v3216 = vpop.f32.mrf.mxu0
    %v3217 = vadd.f32 %v2740, %v3216
    %v3218 = vpop.f32.mrf.mxu0
    %3219 = vmatprep.mubr.f32.mxu0 0.0
    %v3220 = vsub.f32 %v1400, %v1400
    %v3221 = vand.u32 %v3220, 4294901760
    %3222 = vmatmul.mubr.f32.gmra.mxu0 %v3221
    %v3223 = vpop.f32.mrf.mxu0
    %v3224 = vadd.f32 %v2746, %v3223
    %v3225 = vpop.f32.mrf.mxu0
    %3226 = vmatprep.mubr.f32.mxu0 0.0
    %v3227 = vsub.f32 %v1401, %v1401
    %v3228 = vand.u32 %v3227, 4294901760
    %3229 = vmatmul.mubr.f32.gmra.mxu0 %v3228
    %v3230 = vpop.f32.mrf.mxu0
    %v3231 = vadd.f32 %v2752, %v3230
    %v3232 = vpop.f32.mrf.mxu0
    %3233 = vmatprep.mubr.f32.mxu0 0.0
    %v3234 = vsub.f32 %v1402, %v1402
    %v3235 = vand.u32 %v3234, 4294901760
    %3236 = vmatmul.mubr.f32.gmra.mxu0 %v3235
    %v3237 = vpop.f32.mrf.mxu0
    %v3238 = vadd.f32 %v2758, %v3237
    %v3239 = vpop.f32.mrf.mxu0
    %3240 = vmatprep.mubr.f32.mxu0 0.0
    %v3241 = vsub.f32 %v1403, %v1403
    %v3242 = vand.u32 %v3241, 4294901760
    %3243 = vmatmul.mubr.f32.gmra.mxu0 %v3242
    %v3244 = vpop.f32.mrf.mxu0
    %v3245 = vadd.f32 %v2764, %v3244
    %v3246 = vpop.f32.mrf.mxu0
    %3247 = vmatprep.mubr.f32.mxu0 0.0
    %v3248 = vsub.f32 %v1404, %v1404
    %v3249 = vand.u32 %v3248, 4294901760
    %3250 = vmatmul.mubr.f32.gmra.mxu0 %v3249
    %v3251 = vpop.f32.mrf.mxu0
    %v3252 = vadd.f32 %v2770, %v3251
    %v3253 = vpop.f32.mrf.mxu0
    %3254 = vmatprep.mubr.f32.mxu0 0.0
    %v3255 = vsub.f32 %v1405, %v1405
    %v3256 = vand.u32 %v3255, 4294901760
    %3257 = vmatmul.mubr.f32.gmra.mxu0 %v3256
    %v3258 = vpop.f32.mrf.mxu0
    %v3259 = vadd.f32 %v2776, %v3258
    %v3260 = vpop.f32.mrf.mxu0
    %3261 = vmatprep.mubr.f32.mxu0 0.0
    %v3262 = vsub.f32 %v1406, %v1406
    %v3263 = vand.u32 %v3262, 4294901760
    %3264 = vmatmul.mubr.f32.gmra.mxu0 %v3263
    %v3265 = vpop.f32.mrf.mxu0
    %v3266 = vadd.f32 %v2782, %v3265
    %v3267 = vpop.f32.mrf.mxu0
    %3268 = vmatprep.mubr.f32.mxu0 0.0
    %v3269 = vsub.f32 %v1407, %v1407
    %v3270 = vand.u32 %v3269, 4294901760
    %3271 = vmatmul.mubr.f32.gmra.mxu0 %v3270
    %v3272 = vpop.f32.mrf.mxu0
    %v3273 = vadd.f32 %v2788, %v3272
    %v3274 = vpop.f32.mrf.mxu0
    %3275 = vmatprep.mubr.f32.mxu0 0.0
    %v3276 = vsub.f32 %v1408, %v1408
    %v3277 = vand.u32 %v3276, 4294901760
    %3278 = vmatmul.mubr.f32.gmra.mxu0 %v3277
    %v3279 = vpop.f32.mrf.mxu0
    %v3280 = vadd.f32 %v2794, %v3279
    %v3281 = vpop.f32.mrf.mxu0
    %3282 = vmatprep.mubr.f32.mxu0 0.0
    %v3283 = vsub.f32 %v1409, %v1409
    %v3284 = vand.u32 %v3283, 4294901760
    %3285 = vmatmul.mubr.f32.gmra.mxu0 %v3284
    %v3286 = vpop.f32.mrf.mxu0
    %v3287 = vadd.f32 %v2800, %v3286
    %v3288 = vpop.f32.mrf.mxu0
    %3289 = vmatprep.mubr.f32.mxu0 0.0
    %v3290 = vsub.f32 %v1410, %v1410
    %v3291 = vand.u32 %v3290, 4294901760
    %3292 = vmatmul.mubr.f32.gmra.mxu0 %v3291
    %v3293 = vpop.f32.mrf.mxu0
    %v3294 = vadd.f32 %v2806, %v3293
    %v3295 = vpop.f32.mrf.mxu0
    %3296 = vmatprep.mubr.f32.mxu0 0.0
    %v3297 = vsub.f32 %v1411, %v1411
    %v3298 = vand.u32 %v3297, 4294901760
    %3299 = vmatmul.mubr.f32.gmra.mxu0 %v3298
    %v3300 = vpop.f32.mrf.mxu0
    %v3301 = vadd.f32 %v2812, %v3300
    %v3302 = vpop.f32.mrf.mxu0
    %3303 = vmatprep.mubr.f32.mxu0 0.0
    %v3304 = vsub.f32 %v1412, %v1412
    %v3305 = vand.u32 %v3304, 4294901760
    %3306 = vmatmul.mubr.f32.gmra.mxu0 %v3305
    %v3307 = vpop.f32.mrf.mxu0
    %v3308 = vadd.f32 %v2818, %v3307
    %v3309 = vpop.f32.mrf.mxu0
    %3310 = vmatprep.mubr.f32.mxu0 0.0
    %v3311 = vsub.f32 %v1413, %v1413
    %v3312 = vand.u32 %v3311, 4294901760
    %3313 = vmatmul.mubr.f32.gmra.mxu0 %v3312
    %v3314 = vpop.f32.mrf.mxu0
    %v3315 = vadd.f32 %v2824, %v3314
    %v3316 = vpop.f32.mrf.mxu0
    %3317 = vmatprep.mubr.f32.mxu0 0.0
    %v3318 = vsub.f32 %v1414, %v1414
    %v3319 = vand.u32 %v3318, 4294901760
    %3320 = vmatmul.mubr.f32.gmra.mxu0 %v3319
    %v3321 = vpop.f32.mrf.mxu0
    %v3322 = vadd.f32 %v2830, %v3321
    %v3323 = vpop.f32.mrf.mxu0
    %3324 = vmatprep.mubr.f32.mxu0 0.0
    %v3325 = vsub.f32 %v1415, %v1415
    %v3326 = vand.u32 %v3325, 4294901760
    %3327 = vmatmul.mubr.f32.gmra.mxu0 %v3326
    %v3328 = vpop.f32.mrf.mxu0
    %v3329 = vadd.f32 %v2836, %v3328
    %v3330 = vpop.f32.mrf.mxu0
    %3331 = vmatprep.mubr.f32.mxu0 0.0
    %v3332 = vsub.f32 %v1416, %v1416
    %v3333 = vand.u32 %v3332, 4294901760
    %3334 = vmatmul.mubr.f32.gmra.mxu0 %v3333
    %v3335 = vpop.f32.mrf.mxu0
    %v3336 = vadd.f32 %v2842, %v3335
    %v3337 = vpop.f32.mrf.mxu0
    %3338 = vmatprep.mubr.f32.mxu0 0.0
    %v3339 = vsub.f32 %v1417, %v1417
    %v3340 = vand.u32 %v3339, 4294901760
    %3341 = vmatmul.mubr.f32.gmra.mxu0 %v3340
    %v3342 = vpop.f32.mrf.mxu0
    %v3343 = vadd.f32 %v2848, %v3342
    %v3344 = vpop.f32.mrf.mxu0
    %3345 = vmatprep.mubr.f32.mxu0 0.0
    %v3346 = vsub.f32 %v1418, %v1418
    %v3347 = vand.u32 %v3346, 4294901760
    %3348 = vmatmul.mubr.f32.gmra.mxu0 %v3347
    %v3349 = vpop.f32.mrf.mxu0
    %v3350 = vadd.f32 %v2854, %v3349
    %v3351 = vpop.f32.mrf.mxu0
    %3352 = vmatprep.mubr.f32.mxu0 0.0
    %v3353 = vsub.f32 %v1419, %v1419
    %v3354 = vand.u32 %v3353, 4294901760
    %3355 = vmatmul.mubr.f32.gmra.mxu0 %v3354
    %v3356 = vpop.f32.mrf.mxu0
    %v3357 = vadd.f32 %v2860, %v3356
    %v3358 = vpop.f32.mrf.mxu0
    %3359 = vmatprep.mubr.f32.mxu0 0.0
    %v3360 = vsub.f32 %v1420, %v1420
    %v3361 = vand.u32 %v3360, 4294901760
    %3362 = vmatmul.mubr.f32.gmra.mxu0 %v3361
    %v3363 = vpop.f32.mrf.mxu0
    %v3364 = vadd.f32 %v2866, %v3363
    %v3365 = vpop.f32.mrf.mxu0
    %3366 = vmatprep.mubr.f32.mxu0 0.0
    %v3367 = vsub.f32 %v1421, %v1421
    %v3368 = vand.u32 %v3367, 4294901760
    %3369 = vmatmul.mubr.f32.gmra.mxu0 %v3368
    %v3370 = vpop.f32.mrf.mxu0
    %v3371 = vadd.f32 %v2872, %v3370
    %v3372 = vpop.f32.mrf.mxu0
    %3373 = vmatprep.mubr.f32.mxu0 0.0
    %v3374 = vsub.f32 %v1422, %v1422
    %v3375 = vand.u32 %v3374, 4294901760
    %3376 = vmatmul.mubr.f32.gmra.mxu0 %v3375
    %v3377 = vpop.f32.mrf.mxu0
    %v3378 = vadd.f32 %v2878, %v3377
    %v3379 = vpop.f32.mrf.mxu0
    %3380 = vmatprep.mubr.f32.mxu0 0.0
    %v3381 = vsub.f32 %v1423, %v1423
    %v3382 = vand.u32 %v3381, 4294901760
    %3383 = vmatmul.mubr.f32.gmra.mxu0 %v3382
    %v3384 = vpop.f32.mrf.mxu0
    %v3385 = vadd.f32 %v2884, %v3384
    %v3386 = vpop.f32.mrf.mxu0
    %3387 = vmatprep.mubr.f32.mxu0 0.0
    %v3388 = vsub.f32 %v1424, %v1424
    %v3389 = vand.u32 %v3388, 4294901760
    %3390 = vmatmul.mubr.f32.gmra.mxu0 %v3389
    %v3391 = vpop.f32.mrf.mxu0
    %v3392 = vadd.f32 %v2890, %v3391
    %v3393 = vpop.f32.mrf.mxu0
    %3394 = vmatprep.mubr.f32.mxu0 0.0
    %v3395 = vsub.f32 %v1425, %v1425
    %v3396 = vand.u32 %v3395, 4294901760
    %3397 = vmatmul.mubr.f32.gmra.mxu0 %v3396
    %v3398 = vpop.f32.mrf.mxu0
    %v3399 = vadd.f32 %v2896, %v3398
    %v3400 = vpop.f32.mrf.mxu0
    %3401 = vmatprep.mubr.f32.mxu0 0.0
    %v3402 = vsub.f32 %v1426, %v1426
    %v3403 = vand.u32 %v3402, 4294901760
    %3404 = vmatmul.mubr.f32.gmra.mxu0 %v3403
    %v3405 = vpop.f32.mrf.mxu0
    %v3406 = vadd.f32 %v2902, %v3405
    %v3407 = vpop.f32.mrf.mxu0
    %3408 = vmatprep.mubr.f32.mxu0 0.0
    %v3409 = vsub.f32 %v1427, %v1427
    %v3410 = vand.u32 %v3409, 4294901760
    %3411 = vmatmul.mubr.f32.gmra.mxu0 %v3410
    %v3412 = vpop.f32.mrf.mxu0
    %v3413 = vadd.f32 %v2908, %v3412
    %v3414 = vpop.f32.mrf.mxu0
    %3415 = vmatprep.mubr.f32.mxu0 0.0
    %v3416 = vsub.f32 %v1428, %v1428
    %v3417 = vand.u32 %v3416, 4294901760
    %3418 = vmatmul.mubr.f32.gmra.mxu0 %v3417
    %v3419 = vpop.f32.mrf.mxu0
    %v3420 = vadd.f32 %v2914, %v3419
    %v3421 = vpop.f32.mrf.mxu0
    %3422 = vmatprep.mubr.f32.mxu0 0.0
    %v3423 = vsub.f32 %v1429, %v1429
    %v3424 = vand.u32 %v3423, 4294901760
    %3425 = vmatmul.mubr.f32.gmra.mxu0 %v3424
    %v3426 = vpop.f32.mrf.mxu0
    %v3427 = vadd.f32 %v2920, %v3426
    %v3428 = vpop.f32.mrf.mxu0
    %3429 = vmatprep.mubr.f32.mxu0 0.0
    %v3430 = vsub.f32 %v1430, %v1430
    %v3431 = vand.u32 %v3430, 4294901760
    %3432 = vmatmul.mubr.f32.gmra.mxu0 %v3431
    %v3433 = vpop.f32.mrf.mxu0
    %v3434 = vadd.f32 %v2926, %v3433
    %v3435 = vpop.f32.mrf.mxu0
    %3436 = vmatprep.mubr.f32.mxu0 0.0
    %v3437 = vsub.f32 %v1431, %v1431
    %v3438 = vand.u32 %v3437, 4294901760
    %3439 = vmatmul.mubr.f32.gmra.mxu0 %v3438
    %v3440 = vpop.f32.mrf.mxu0
    %v3441 = vadd.f32 %v2932, %v3440
    %v3442 = vpop.f32.mrf.mxu0
    %3443 = vmatprep.mubr.f32.mxu0 0.0
    %v3444 = vsub.f32 %v1432, %v1432
    %v3445 = vand.u32 %v3444, 4294901760
    %3446 = vmatmul.mubr.f32.gmra.mxu0 %v3445
    %v3447 = vpop.f32.mrf.mxu0
    %v3448 = vadd.f32 %v2938, %v3447
    %v3449 = vpop.f32.mrf.mxu0
    %3450 = vmatprep.mubr.f32.mxu0 0.0
    %v3451 = vsub.f32 %v1433, %v1433
    %v3452 = vand.u32 %v3451, 4294901760
    %3453 = vmatmul.mubr.f32.gmra.mxu0 %v3452
    %v3454 = vpop.f32.mrf.mxu0
    %v3455 = vadd.f32 %v2944, %v3454
    %v3456 = vpop.f32.mrf.mxu0
    %3457 = vmatprep.mubr.f32.mxu0 0.0
    %v3458 = vsub.f32 %v1434, %v1434
    %v3459 = vand.u32 %v3458, 4294901760
    %3460 = vmatmul.mubr.f32.gmra.mxu0 %v3459
    %v3461 = vpop.f32.mrf.mxu0
    %v3462 = vadd.f32 %v2950, %v3461
    %v3463 = vpop.f32.mrf.mxu0
    %3464 = vmatprep.mubr.f32.mxu0 0.0
    %v3465 = vsub.f32 %v1435, %v1435
    %v3466 = vand.u32 %v3465, 4294901760
    %3467 = vmatmul.mubr.f32.gmra.mxu0 %v3466
    %v3468 = vpop.f32.mrf.mxu0
    %v3469 = vadd.f32 %v2956, %v3468
    %v3470 = vpop.f32.mrf.mxu0
    %3471 = vmatprep.mubr.f32.mxu0 0.0
    %v3472 = vsub.f32 %v1436, %v1436
    %v3473 = vand.u32 %v3472, 4294901760
    %3474 = vmatmul.mubr.f32.gmra.mxu0 %v3473
    %v3475 = vpop.f32.mrf.mxu0
    %v3476 = vadd.f32 %v2962, %v3475
    %v3477 = vpop.f32.mrf.mxu0
    %3478 = vmatprep.mubr.f32.mxu0 0.0
    %v3479 = vsub.f32 %v1437, %v1437
    %v3480 = vand.u32 %v3479, 4294901760
    %3481 = vmatmul.mubr.f32.gmra.mxu0 %v3480
    %v3482 = vpop.f32.mrf.mxu0
    %v3483 = vadd.f32 %v2968, %v3482
    %v3484 = vpop.f32.mrf.mxu0
    %3485 = vmatprep.mubr.f32.mxu0 0.0
    %v3486 = vsub.f32 %v1438, %v1438
    %v3487 = vand.u32 %v3486, 4294901760
    %3488 = vmatmul.mubr.f32.gmra.mxu0 %v3487
    %v3489 = vpop.f32.mrf.mxu0
    %v3490 = vadd.f32 %v2974, %v3489
    %v3491 = vpop.f32.mrf.mxu0
    %3492 = vmatprep.mubr.f32.mxu0 0.0
    %v3493 = vsub.f32 %v1439, %v1439
    %v3494 = vand.u32 %v3493, 4294901760
    %3495 = vmatmul.mubr.f32.gmra.mxu0 %v3494
    %v3496 = vpop.f32.mrf.mxu0
    %v3497 = vadd.f32 %v2980, %v3496
    %v3498 = vpop.f32.mrf.mxu0
    %3499 = vmatprep.mubr.f32.mxu0 0.0
    %v3500 = vsub.f32 %v1440, %v1440
    %v3501 = vand.u32 %v3500, 4294901760
    %3502 = vmatmul.mubr.f32.gmra.mxu0 %v3501
    %v3503 = vpop.f32.mrf.mxu0
    %v3504 = vadd.f32 %v2986, %v3503
    %v3505 = vpop.f32.mrf.mxu0
    %3506 = vmatprep.mubr.f32.mxu0 0.0
    %v3507 = vsub.f32 %v1441, %v1441
    %v3508 = vand.u32 %v3507, 4294901760
    %3509 = vmatmul.mubr.f32.gmra.mxu0 %v3508
    %v3510 = vpop.f32.mrf.mxu0
    %v3511 = vadd.f32 %v2992, %v3510
    %v3512 = vpop.f32.mrf.mxu0
    %3513 = vmatprep.mubr.f32.mxu0 0.0
    %v3514 = vsub.f32 %v1442, %v1442
    %v3515 = vand.u32 %v3514, 4294901760
    %3516 = vmatmul.mubr.f32.gmra.mxu0 %v3515
    %v3517 = vpop.f32.mrf.mxu0
    %v3518 = vadd.f32 %v2998, %v3517
    %v3519 = vpop.f32.mrf.mxu0
    %3520 = vmatprep.mubr.f32.mxu0 0.0
    %v3521 = vsub.f32 %v1443, %v1443
    %v3522 = vand.u32 %v3521, 4294901760
    %3523 = vmatmul.mubr.f32.gmra.mxu0 %v3522
    %v3524 = vpop.f32.mrf.mxu0
    %v3525 = vadd.f32 %v3004, %v3524
    %v3526 = vpop.f32.mrf.mxu0
    %3527 = vmatprep.mubr.f32.mxu0 0.0
    %v3528 = vsub.f32 %v1444, %v1444
    %v3529 = vand.u32 %v3528, 4294901760
    %3530 = vmatmul.mubr.f32.gmra.mxu0 %v3529
    %v3531 = vpop.f32.mrf.mxu0
    %v3532 = vadd.f32 %v3010, %v3531
    %v3533 = vpop.f32.mrf.mxu0
    %3534 = vmatprep.mubr.f32.mxu0 0.0
    %v3535 = vsub.f32 %v1445, %v1445
    %v3536 = vand.u32 %v3535, 4294901760
    %3537 = vmatmul.mubr.f32.gmra.mxu0 %v3536
    %v3538 = vpop.f32.mrf.mxu0
    %v3539 = vadd.f32 %v3016, %v3538
    %v3540 = vpop.f32.mrf.mxu0
    %3541 = vmatprep.mubr.f32.mxu0 0.0
    %v3542 = vsub.f32 %v1446, %v1446
    %v3543 = vand.u32 %v3542, 4294901760
    %3544 = vmatmul.mubr.f32.gmra.mxu0 %v3543
    %v3545 = vpop.f32.mrf.mxu0
    %v3546 = vadd.f32 %v3022, %v3545
    %v3547 = vpop.f32.mrf.mxu0
    %3548 = vmatprep.mubr.f32.mxu0 0.0
    %v3549 = vsub.f32 %v1447, %v1447
    %v3550 = vand.u32 %v3549, 4294901760
    %3551 = vmatmul.mubr.f32.gmra.mxu0 %v3550
    %v3552 = vpop.f32.mrf.mxu0
    %v3553 = vadd.f32 %v3028, %v3552
    %v3554 = vpop.f32.mrf.mxu0
    %3555 = vmatprep.mubr.f32.mxu0 0.0
    %v3556 = vsub.f32 %v1448, %v1448
    %v3557 = vand.u32 %v3556, 4294901760
    %3558 = vmatmul.mubr.f32.gmra.mxu0 %v3557
    %v3559 = vpop.f32.mrf.mxu0
    %v3560 = vadd.f32 %v3034, %v3559
    %v3561 = vpop.f32.mrf.mxu0
    %3562 = vmatprep.mubr.f32.mxu0 0.0
    %v3563 = vsub.f32 %v1449, %v1449
    %v3564 = vand.u32 %v3563, 4294901760
    %3565 = vmatmul.mubr.f32.gmra.mxu0 %v3564
    %v3566 = vpop.f32.mrf.mxu0
    %v3567 = vadd.f32 %v3040, %v3566
    %v3568 = vpop.f32.mrf.mxu0
    %3569 = vmatprep.mubr.f32.mxu0 0.0
    %v3570 = vsub.f32 %v1450, %v1450
    %v3571 = vand.u32 %v3570, 4294901760
    %3572 = vmatmul.mubr.f32.gmra.mxu0 %v3571
    %v3573 = vpop.f32.mrf.mxu0
    %v3574 = vadd.f32 %v3046, %v3573
    %v3575 = vpop.f32.mrf.mxu0
    %3576 = vmatprep.mubr.f32.mxu0 0.0
    %v3577 = vsub.f32 %v1451, %v1451
    %v3578 = vand.u32 %v3577, 4294901760
    %3579 = vmatmul.mubr.f32.gmra.mxu0 %v3578
    %v3580 = vpop.f32.mrf.mxu0
    %v3581 = vadd.f32 %v3052, %v3580
    %v3582 = vpop.f32.mrf.mxu0
    %3583 = vdwg.mxu0
    %3584 = vmatprep.subr.mxu0 0.0
    %v3585 = vand.u32 %v1323, 4294901760
    %v3586 = vsub.f32 %v1323, %v3585
    %v3587 = vand.u32 %v3586, 4294901760
    %3588 = vmatpush1.msra.mxu0 %v3587
    %3589 = vmatprep.subr.mxu0 0.0
    %v3590 = vand.u32 %v1322, 4294901760
    %v3591 = vsub.f32 %v1322, %v3590
    %v3592 = vand.u32 %v3591, 4294901760
    %3593 = vmatpush1.msra.mxu0 %v3592
    %3594 = vmatprep.subr.mxu0 0.0
    %v3595 = vand.u32 %v1321, 4294901760
    %v3596 = vsub.f32 %v1321, %v3595
    %v3597 = vand.u32 %v3596, 4294901760
    %3598 = vmatpush1.msra.mxu0 %v3597
    %3599 = vmatprep.subr.mxu0 0.0
    %v3600 = vand.u32 %v1320, 4294901760
    %v3601 = vsub.f32 %v1320, %v3600
    %v3602 = vand.u32 %v3601, 4294901760
    %3603 = vmatpush1.msra.mxu0 %v3602
    %3604 = vmatprep.subr.mxu0 0.0
    %v3605 = vand.u32 %v1319, 4294901760
    %v3606 = vsub.f32 %v1319, %v3605
    %v3607 = vand.u32 %v3606, 4294901760
    %3608 = vmatpush1.msra.mxu0 %v3607
    %3609 = vmatprep.subr.mxu0 0.0
    %v3610 = vand.u32 %v1318, 4294901760
    %v3611 = vsub.f32 %v1318, %v3610
    %v3612 = vand.u32 %v3611, 4294901760
    %3613 = vmatpush1.msra.mxu0 %v3612
    %3614 = vmatprep.subr.mxu0 0.0
    %v3615 = vand.u32 %v1317, 4294901760
    %v3616 = vsub.f32 %v1317, %v3615
    %v3617 = vand.u32 %v3616, 4294901760
    %3618 = vmatpush1.msra.mxu0 %v3617
    %3619 = vmatprep.subr.mxu0 0.0
    %v3620 = vand.u32 %v1316, 4294901760
    %v3621 = vsub.f32 %v1316, %v3620
    %v3622 = vand.u32 %v3621, 4294901760
    %3623 = vmatpush1.msra.mxu0 %v3622
    %3624 = vmatprep.subr.mxu0 0.0
    %v3625 = vand.u32 %v1315, 4294901760
    %v3626 = vsub.f32 %v1315, %v3625
    %v3627 = vand.u32 %v3626, 4294901760
    %3628 = vmatpush1.msra.mxu0 %v3627
    %3629 = vmatprep.subr.mxu0 0.0
    %v3630 = vand.u32 %v1314, 4294901760
    %v3631 = vsub.f32 %v1314, %v3630
    %v3632 = vand.u32 %v3631, 4294901760
    %3633 = vmatpush1.msra.mxu0 %v3632
    %3634 = vmatprep.subr.mxu0 0.0
    %v3635 = vand.u32 %v1313, 4294901760
    %v3636 = vsub.f32 %v1313, %v3635
    %v3637 = vand.u32 %v3636, 4294901760
    %3638 = vmatpush1.msra.mxu0 %v3637
    %3639 = vmatprep.subr.mxu0 0.0
    %v3640 = vand.u32 %v1312, 4294901760
    %v3641 = vsub.f32 %v1312, %v3640
    %v3642 = vand.u32 %v3641, 4294901760
    %3643 = vmatpush1.msra.mxu0 %v3642
    %3644 = vmatprep.subr.mxu0 0.0
    %v3645 = vand.u32 %v1311, 4294901760
    %v3646 = vsub.f32 %v1311, %v3645
    %v3647 = vand.u32 %v3646, 4294901760
    %3648 = vmatpush1.msra.mxu0 %v3647
    %3649 = vmatprep.subr.mxu0 0.0
    %v3650 = vand.u32 %v1310, 4294901760
    %v3651 = vsub.f32 %v1310, %v3650
    %v3652 = vand.u32 %v3651, 4294901760
    %3653 = vmatpush1.msra.mxu0 %v3652
    %3654 = vmatprep.subr.mxu0 0.0
    %v3655 = vand.u32 %v1309, 4294901760
    %v3656 = vsub.f32 %v1309, %v3655
    %v3657 = vand.u32 %v3656, 4294901760
    %3658 = vmatpush1.msra.mxu0 %v3657
    %3659 = vmatprep.subr.mxu0 0.0
    %v3660 = vand.u32 %v1308, 4294901760
    %v3661 = vsub.f32 %v1308, %v3660
    %v3662 = vand.u32 %v3661, 4294901760
    %3663 = vmatpush1.msra.mxu0 %v3662
    %3664 = vmatprep.subr.mxu0 0.0
    %3665 = vmatpush2.msra.mxu0 0.0
    %3666 = vmatprep.subr.mxu0 0.0
    %3667 = vmatpush2.msra.mxu0 0.0
    %3668 = vmatprep.subr.mxu0 0.0
    %3669 = vmatpush2.msra.mxu0 0.0
    %3670 = vmatprep.subr.mxu0 0.0
    %3671 = vmatpush2.msra.mxu0 0.0
    %3672 = vmatprep.subr.mxu0 0.0
    %3673 = vmatpush2.msra.mxu0 0.0
    %3674 = vmatprep.subr.mxu0 0.0
    %3675 = vmatpush2.msra.mxu0 0.0
    %3676 = vmatprep.subr.mxu0 0.0
    %3677 = vmatpush2.msra.mxu0 0.0
    %3678 = vmatprep.subr.mxu0 0.0
    %3679 = vmatpush2.msra.mxu0 0.0
    %3680 = vmatprep.subr.mxu0 0.0
    %3681 = vmatpush2.msra.mxu0 0.0
    %3682 = vmatprep.subr.mxu0 0.0
    %3683 = vmatpush2.msra.mxu0 0.0
    %3684 = vmatprep.subr.mxu0 0.0
    %3685 = vmatpush2.msra.mxu0 0.0
    %3686 = vmatprep.subr.mxu0 0.0
    %3687 = vmatpush2.msra.mxu0 0.0
    %3688 = vmatprep.subr.mxu0 0.0
    %3689 = vmatpush2.msra.mxu0 0.0
    %3690 = vmatprep.subr.mxu0 0.0
    %3691 = vmatpush2.msra.mxu0 0.0
    %3692 = vmatprep.subr.mxu0 0.0
    %3693 = vmatpush2.msra.mxu0 0.0
    %3694 = vmatprep.subr.mxu0 0.0
    %3695 = vmatpush2.msra.mxu0 0.0
    %3696 = vmatprep.mubr.f32.mxu0 0.0
    %3697 = vmatmul.mubr.f32.gmra.mxu0 %v1388
    %v3698 = vpop.f32.mrf.mxu0
    %v3699 = vadd.f32 %v3140, %v3698
    %v3700 = vpop.f32.mrf.mxu0
    %3701 = vmatprep.mubr.f32.mxu0 0.0
    %3702 = vmatmul.mubr.f32.gmra.mxu0 %v1389
    %v3703 = vpop.f32.mrf.mxu0
    %v3704 = vadd.f32 %v3147, %v3703
    %v3705 = vpop.f32.mrf.mxu0
    %3706 = vmatprep.mubr.f32.mxu0 0.0
    %3707 = vmatmul.mubr.f32.gmra.mxu0 %v1390
    %v3708 = vpop.f32.mrf.mxu0
    %v3709 = vadd.f32 %v3154, %v3708
    %v3710 = vpop.f32.mrf.mxu0
    %3711 = vmatprep.mubr.f32.mxu0 0.0
    %3712 = vmatmul.mubr.f32.gmra.mxu0 %v1391
    %v3713 = vpop.f32.mrf.mxu0
    %v3714 = vadd.f32 %v3161, %v3713
    %v3715 = vpop.f32.mrf.mxu0
    %3716 = vmatprep.mubr.f32.mxu0 0.0
    %3717 = vmatmul.mubr.f32.gmra.mxu0 %v1392
    %v3718 = vpop.f32.mrf.mxu0
    %v3719 = vadd.f32 %v3168, %v3718
    %v3720 = vpop.f32.mrf.mxu0
    %3721 = vmatprep.mubr.f32.mxu0 0.0
    %3722 = vmatmul.mubr.f32.gmra.mxu0 %v1393
    %v3723 = vpop.f32.mrf.mxu0
    %v3724 = vadd.f32 %v3175, %v3723
    %v3725 = vpop.f32.mrf.mxu0
    %3726 = vmatprep.mubr.f32.mxu0 0.0
    %3727 = vmatmul.mubr.f32.gmra.mxu0 %v1394
    %v3728 = vpop.f32.mrf.mxu0
    %v3729 = vadd.f32 %v3182, %v3728
    %v3730 = vpop.f32.mrf.mxu0
    %3731 = vmatprep.mubr.f32.mxu0 0.0
    %3732 = vmatmul.mubr.f32.gmra.mxu0 %v1395
    %v3733 = vpop.f32.mrf.mxu0
    %v3734 = vadd.f32 %v3189, %v3733
    %v3735 = vpop.f32.mrf.mxu0
    %3736 = vmatprep.mubr.f32.mxu0 0.0
    %3737 = vmatmul.mubr.f32.gmra.mxu0 %v1396
    %v3738 = vpop.f32.mrf.mxu0
    %v3739 = vadd.f32 %v3196, %v3738
    %v3740 = vpop.f32.mrf.mxu0
    %3741 = vmatprep.mubr.f32.mxu0 0.0
    %3742 = vmatmul.mubr.f32.gmra.mxu0 %v1397
    %v3743 = vpop.f32.mrf.mxu0
    %v3744 = vadd.f32 %v3203, %v3743
    %v3745 = vpop.f32.mrf.mxu0
    %3746 = vmatprep.mubr.f32.mxu0 0.0
    %3747 = vmatmul.mubr.f32.gmra.mxu0 %v1398
    %v3748 = vpop.f32.mrf.mxu0
    %v3749 = vadd.f32 %v3210, %v3748
    %v3750 = vpop.f32.mrf.mxu0
    %3751 = vmatprep.mubr.f32.mxu0 0.0
    %3752 = vmatmul.mubr.f32.gmra.mxu0 %v1399
    %v3753 = vpop.f32.mrf.mxu0
    %v3754 = vadd.f32 %v3217, %v3753
    %v3755 = vpop.f32.mrf.mxu0
    %3756 = vmatprep.mubr.f32.mxu0 0.0
    %3757 = vmatmul.mubr.f32.gmra.mxu0 %v1400
    %v3758 = vpop.f32.mrf.mxu0
    %v3759 = vadd.f32 %v3224, %v3758
    %v3760 = vpop.f32.mrf.mxu0
    %3761 = vmatprep.mubr.f32.mxu0 0.0
    %3762 = vmatmul.mubr.f32.gmra.mxu0 %v1401
    %v3763 = vpop.f32.mrf.mxu0
    %v3764 = vadd.f32 %v3231, %v3763
    %v3765 = vpop.f32.mrf.mxu0
    %3766 = vmatprep.mubr.f32.mxu0 0.0
    %3767 = vmatmul.mubr.f32.gmra.mxu0 %v1402
    %v3768 = vpop.f32.mrf.mxu0
    %v3769 = vadd.f32 %v3238, %v3768
    %v3770 = vpop.f32.mrf.mxu0
    %3771 = vmatprep.mubr.f32.mxu0 0.0
    %3772 = vmatmul.mubr.f32.gmra.mxu0 %v1403
    %v3773 = vpop.f32.mrf.mxu0
    %v3774 = vadd.f32 %v3245, %v3773
    %v3775 = vpop.f32.mrf.mxu0
    %3776 = vmatprep.mubr.f32.mxu0 0.0
    %3777 = vmatmul.mubr.f32.gmra.mxu0 %v1404
    %v3778 = vpop.f32.mrf.mxu0
    %v3779 = vadd.f32 %v3252, %v3778
    %v3780 = vpop.f32.mrf.mxu0
    %3781 = vmatprep.mubr.f32.mxu0 0.0
    %3782 = vmatmul.mubr.f32.gmra.mxu0 %v1405
    %v3783 = vpop.f32.mrf.mxu0
    %v3784 = vadd.f32 %v3259, %v3783
    %v3785 = vpop.f32.mrf.mxu0
    %3786 = vmatprep.mubr.f32.mxu0 0.0
    %3787 = vmatmul.mubr.f32.gmra.mxu0 %v1406
    %v3788 = vpop.f32.mrf.mxu0
    %v3789 = vadd.f32 %v3266, %v3788
    %v3790 = vpop.f32.mrf.mxu0
    %3791 = vmatprep.mubr.f32.mxu0 0.0
    %3792 = vmatmul.mubr.f32.gmra.mxu0 %v1407
    %v3793 = vpop.f32.mrf.mxu0
    %v3794 = vadd.f32 %v3273, %v3793
    %v3795 = vpop.f32.mrf.mxu0
    %3796 = vmatprep.mubr.f32.mxu0 0.0
    %3797 = vmatmul.mubr.f32.gmra.mxu0 %v1408
    %v3798 = vpop.f32.mrf.mxu0
    %v3799 = vadd.f32 %v3280, %v3798
    %v3800 = vpop.f32.mrf.mxu0
    %3801 = vmatprep.mubr.f32.mxu0 0.0
    %3802 = vmatmul.mubr.f32.gmra.mxu0 %v1409
    %v3803 = vpop.f32.mrf.mxu0
    %v3804 = vadd.f32 %v3287, %v3803
    %v3805 = vpop.f32.mrf.mxu0
    %3806 = vmatprep.mubr.f32.mxu0 0.0
    %3807 = vmatmul.mubr.f32.gmra.mxu0 %v1410
    %v3808 = vpop.f32.mrf.mxu0
    %v3809 = vadd.f32 %v3294, %v3808
    %v3810 = vpop.f32.mrf.mxu0
    %3811 = vmatprep.mubr.f32.mxu0 0.0
    %3812 = vmatmul.mubr.f32.gmra.mxu0 %v1411
    %v3813 = vpop.f32.mrf.mxu0
    %v3814 = vadd.f32 %v3301, %v3813
    %v3815 = vpop.f32.mrf.mxu0
    %3816 = vmatprep.mubr.f32.mxu0 0.0
    %3817 = vmatmul.mubr.f32.gmra.mxu0 %v1412
    %v3818 = vpop.f32.mrf.mxu0
    %v3819 = vadd.f32 %v3308, %v3818
    %v3820 = vpop.f32.mrf.mxu0
    %3821 = vmatprep.mubr.f32.mxu0 0.0
    %3822 = vmatmul.mubr.f32.gmra.mxu0 %v1413
    %v3823 = vpop.f32.mrf.mxu0
    %v3824 = vadd.f32 %v3315, %v3823
    %v3825 = vpop.f32.mrf.mxu0
    %3826 = vmatprep.mubr.f32.mxu0 0.0
    %3827 = vmatmul.mubr.f32.gmra.mxu0 %v1414
    %v3828 = vpop.f32.mrf.mxu0
    %v3829 = vadd.f32 %v3322, %v3828
    %v3830 = vpop.f32.mrf.mxu0
    %3831 = vmatprep.mubr.f32.mxu0 0.0
    %3832 = vmatmul.mubr.f32.gmra.mxu0 %v1415
    %v3833 = vpop.f32.mrf.mxu0
    %v3834 = vadd.f32 %v3329, %v3833
    %v3835 = vpop.f32.mrf.mxu0
    %3836 = vmatprep.mubr.f32.mxu0 0.0
    %3837 = vmatmul.mubr.f32.gmra.mxu0 %v1416
    %v3838 = vpop.f32.mrf.mxu0
    %v3839 = vadd.f32 %v3336, %v3838
    %v3840 = vpop.f32.mrf.mxu0
    %3841 = vmatprep.mubr.f32.mxu0 0.0
    %3842 = vmatmul.mubr.f32.gmra.mxu0 %v1417
    %v3843 = vpop.f32.mrf.mxu0
    %v3844 = vadd.f32 %v3343, %v3843
    %v3845 = vpop.f32.mrf.mxu0
    %3846 = vmatprep.mubr.f32.mxu0 0.0
    %3847 = vmatmul.mubr.f32.gmra.mxu0 %v1418
    %v3848 = vpop.f32.mrf.mxu0
    %v3849 = vadd.f32 %v3350, %v3848
    %v3850 = vpop.f32.mrf.mxu0
    %3851 = vmatprep.mubr.f32.mxu0 0.0
    %3852 = vmatmul.mubr.f32.gmra.mxu0 %v1419
    %v3853 = vpop.f32.mrf.mxu0
    %v3854 = vadd.f32 %v3357, %v3853
    %v3855 = vpop.f32.mrf.mxu0
    %3856 = vmatprep.mubr.f32.mxu0 0.0
    %3857 = vmatmul.mubr.f32.gmra.mxu0 %v1420
    %v3858 = vpop.f32.mrf.mxu0
    %v3859 = vadd.f32 %v3364, %v3858
    %v3860 = vpop.f32.mrf.mxu0
    %3861 = vmatprep.mubr.f32.mxu0 0.0
    %3862 = vmatmul.mubr.f32.gmra.mxu0 %v1421
    %v3863 = vpop.f32.mrf.mxu0
    %v3864 = vadd.f32 %v3371, %v3863
    %v3865 = vpop.f32.mrf.mxu0
    %3866 = vmatprep.mubr.f32.mxu0 0.0
    %3867 = vmatmul.mubr.f32.gmra.mxu0 %v1422
    %v3868 = vpop.f32.mrf.mxu0
    %v3869 = vadd.f32 %v3378, %v3868
    %v3870 = vpop.f32.mrf.mxu0
    %3871 = vmatprep.mubr.f32.mxu0 0.0
    %3872 = vmatmul.mubr.f32.gmra.mxu0 %v1423
    %v3873 = vpop.f32.mrf.mxu0
    %v3874 = vadd.f32 %v3385, %v3873
    %v3875 = vpop.f32.mrf.mxu0
    %3876 = vmatprep.mubr.f32.mxu0 0.0
    %3877 = vmatmul.mubr.f32.gmra.mxu0 %v1424
    %v3878 = vpop.f32.mrf.mxu0
    %v3879 = vadd.f32 %v3392, %v3878
    %v3880 = vpop.f32.mrf.mxu0
    %3881 = vmatprep.mubr.f32.mxu0 0.0
    %3882 = vmatmul.mubr.f32.gmra.mxu0 %v1425
    %v3883 = vpop.f32.mrf.mxu0
    %v3884 = vadd.f32 %v3399, %v3883
    %v3885 = vpop.f32.mrf.mxu0
    %3886 = vmatprep.mubr.f32.mxu0 0.0
    %3887 = vmatmul.mubr.f32.gmra.mxu0 %v1426
    %v3888 = vpop.f32.mrf.mxu0
    %v3889 = vadd.f32 %v3406, %v3888
    %v3890 = vpop.f32.mrf.mxu0
    %3891 = vmatprep.mubr.f32.mxu0 0.0
    %3892 = vmatmul.mubr.f32.gmra.mxu0 %v1427
    %v3893 = vpop.f32.mrf.mxu0
    %v3894 = vadd.f32 %v3413, %v3893
    %v3895 = vpop.f32.mrf.mxu0
    %3896 = vmatprep.mubr.f32.mxu0 0.0
    %3897 = vmatmul.mubr.f32.gmra.mxu0 %v1428
    %v3898 = vpop.f32.mrf.mxu0
    %v3899 = vadd.f32 %v3420, %v3898
    %v3900 = vpop.f32.mrf.mxu0
    %3901 = vmatprep.mubr.f32.mxu0 0.0
    %3902 = vmatmul.mubr.f32.gmra.mxu0 %v1429
    %v3903 = vpop.f32.mrf.mxu0
    %v3904 = vadd.f32 %v3427, %v3903
    %v3905 = vpop.f32.mrf.mxu0
    %3906 = vmatprep.mubr.f32.mxu0 0.0
    %3907 = vmatmul.mubr.f32.gmra.mxu0 %v1430
    %v3908 = vpop.f32.mrf.mxu0
    %v3909 = vadd.f32 %v3434, %v3908
    %v3910 = vpop.f32.mrf.mxu0
    %3911 = vmatprep.mubr.f32.mxu0 0.0
    %3912 = vmatmul.mubr.f32.gmra.mxu0 %v1431
    %v3913 = vpop.f32.mrf.mxu0
    %v3914 = vadd.f32 %v3441, %v3913
    %v3915 = vpop.f32.mrf.mxu0
    %3916 = vmatprep.mubr.f32.mxu0 0.0
    %3917 = vmatmul.mubr.f32.gmra.mxu0 %v1432
    %v3918 = vpop.f32.mrf.mxu0
    %v3919 = vadd.f32 %v3448, %v3918
    %v3920 = vpop.f32.mrf.mxu0
    %3921 = vmatprep.mubr.f32.mxu0 0.0
    %3922 = vmatmul.mubr.f32.gmra.mxu0 %v1433
    %v3923 = vpop.f32.mrf.mxu0
    %v3924 = vadd.f32 %v3455, %v3923
    %v3925 = vpop.f32.mrf.mxu0
    %3926 = vmatprep.mubr.f32.mxu0 0.0
    %3927 = vmatmul.mubr.f32.gmra.mxu0 %v1434
    %v3928 = vpop.f32.mrf.mxu0
    %v3929 = vadd.f32 %v3462, %v3928
    %v3930 = vpop.f32.mrf.mxu0
    %3931 = vmatprep.mubr.f32.mxu0 0.0
    %3932 = vmatmul.mubr.f32.gmra.mxu0 %v1435
    %v3933 = vpop.f32.mrf.mxu0
    %v3934 = vadd.f32 %v3469, %v3933
    %v3935 = vpop.f32.mrf.mxu0
    %3936 = vmatprep.mubr.f32.mxu0 0.0
    %3937 = vmatmul.mubr.f32.gmra.mxu0 %v1436
    %v3938 = vpop.f32.mrf.mxu0
    %v3939 = vadd.f32 %v3476, %v3938
    %v3940 = vpop.f32.mrf.mxu0
    %3941 = vmatprep.mubr.f32.mxu0 0.0
    %3942 = vmatmul.mubr.f32.gmra.mxu0 %v1437
    %v3943 = vpop.f32.mrf.mxu0
    %v3944 = vadd.f32 %v3483, %v3943
    %v3945 = vpop.f32.mrf.mxu0
    %3946 = vmatprep.mubr.f32.mxu0 0.0
    %3947 = vmatmul.mubr.f32.gmra.mxu0 %v1438
    %v3948 = vpop.f32.mrf.mxu0
    %v3949 = vadd.f32 %v3490, %v3948
    %v3950 = vpop.f32.mrf.mxu0
    %3951 = vmatprep.mubr.f32.mxu0 0.0
    %3952 = vmatmul.mubr.f32.gmra.mxu0 %v1439
    %v3953 = vpop.f32.mrf.mxu0
    %v3954 = vadd.f32 %v3497, %v3953
    %v3955 = vpop.f32.mrf.mxu0
    %3956 = vmatprep.mubr.f32.mxu0 0.0
    %3957 = vmatmul.mubr.f32.gmra.mxu0 %v1440
    %v3958 = vpop.f32.mrf.mxu0
    %v3959 = vadd.f32 %v3504, %v3958
    %v3960 = vpop.f32.mrf.mxu0
    %3961 = vmatprep.mubr.f32.mxu0 0.0
    %3962 = vmatmul.mubr.f32.gmra.mxu0 %v1441
    %v3963 = vpop.f32.mrf.mxu0
    %v3964 = vadd.f32 %v3511, %v3963
    %v3965 = vpop.f32.mrf.mxu0
    %3966 = vmatprep.mubr.f32.mxu0 0.0
    %3967 = vmatmul.mubr.f32.gmra.mxu0 %v1442
    %v3968 = vpop.f32.mrf.mxu0
    %v3969 = vadd.f32 %v3518, %v3968
    %v3970 = vpop.f32.mrf.mxu0
    %3971 = vmatprep.mubr.f32.mxu0 0.0
    %3972 = vmatmul.mubr.f32.gmra.mxu0 %v1443
    %v3973 = vpop.f32.mrf.mxu0
    %v3974 = vadd.f32 %v3525, %v3973
    %v3975 = vpop.f32.mrf.mxu0
    %3976 = vmatprep.mubr.f32.mxu0 0.0
    %3977 = vmatmul.mubr.f32.gmra.mxu0 %v1444
    %v3978 = vpop.f32.mrf.mxu0
    %v3979 = vadd.f32 %v3532, %v3978
    %v3980 = vpop.f32.mrf.mxu0
    %3981 = vmatprep.mubr.f32.mxu0 0.0
    %3982 = vmatmul.mubr.f32.gmra.mxu0 %v1445
    %v3983 = vpop.f32.mrf.mxu0
    %v3984 = vadd.f32 %v3539, %v3983
    %v3985 = vpop.f32.mrf.mxu0
    %3986 = vmatprep.mubr.f32.mxu0 0.0
    %3987 = vmatmul.mubr.f32.gmra.mxu0 %v1446
    %v3988 = vpop.f32.mrf.mxu0
    %v3989 = vadd.f32 %v3546, %v3988
    %v3990 = vpop.f32.mrf.mxu0
    %3991 = vmatprep.mubr.f32.mxu0 0.0
    %3992 = vmatmul.mubr.f32.gmra.mxu0 %v1447
    %v3993 = vpop.f32.mrf.mxu0
    %v3994 = vadd.f32 %v3553, %v3993
    %v3995 = vpop.f32.mrf.mxu0
    %3996 = vmatprep.mubr.f32.mxu0 0.0
    %3997 = vmatmul.mubr.f32.gmra.mxu0 %v1448
    %v3998 = vpop.f32.mrf.mxu0
    %v3999 = vadd.f32 %v3560, %v3998
    %v4000 = vpop.f32.mrf.mxu0
    %4001 = vmatprep.mubr.f32.mxu0 0.0
    %4002 = vmatmul.mubr.f32.gmra.mxu0 %v1449
    %v4003 = vpop.f32.mrf.mxu0
    %v4004 = vadd.f32 %v3567, %v4003
    %v4005 = vpop.f32.mrf.mxu0
    %4006 = vmatprep.mubr.f32.mxu0 0.0
    %4007 = vmatmul.mubr.f32.gmra.mxu0 %v1450
    %v4008 = vpop.f32.mrf.mxu0
    %v4009 = vadd.f32 %v3574, %v4008
    %v4010 = vpop.f32.mrf.mxu0
    %4011 = vmatprep.mubr.f32.mxu0 0.0
    %4012 = vmatmul.mubr.f32.gmra.mxu0 %v1451
    %v4013 = vpop.f32.mrf.mxu0
    %v4014 = vadd.f32 %v3581, %v4013
    %v4015 = vpop.f32.mrf.mxu0
    %4016 = vdwg.mxu0
    %4017 = vmatprep.subr.mxu0 0.0
    %v4018 = vand.u32 %v1323, 4294901760
    %4019 = vmatpush1.msra.mxu0 %v4018
    %4020 = vmatprep.subr.mxu0 0.0
    %v4021 = vand.u32 %v1322, 4294901760
    %4022 = vmatpush1.msra.mxu0 %v4021
    %4023 = vmatprep.subr.mxu0 0.0
    %v4024 = vand.u32 %v1321, 4294901760
    %4025 = vmatpush1.msra.mxu0 %v4024
    %4026 = vmatprep.subr.mxu0 0.0
    %v4027 = vand.u32 %v1320, 4294901760
    %4028 = vmatpush1.msra.mxu0 %v4027
    %4029 = vmatprep.subr.mxu0 0.0
    %v4030 = vand.u32 %v1319, 4294901760
    %4031 = vmatpush1.msra.mxu0 %v4030
    %4032 = vmatprep.subr.mxu0 0.0
    %v4033 = vand.u32 %v1318, 4294901760
    %4034 = vmatpush1.msra.mxu0 %v4033
    %4035 = vmatprep.subr.mxu0 0.0
    %v4036 = vand.u32 %v1317, 4294901760
    %4037 = vmatpush1.msra.mxu0 %v4036
    %4038 = vmatprep.subr.mxu0 0.0
    %v4039 = vand.u32 %v1316, 4294901760
    %4040 = vmatpush1.msra.mxu0 %v4039
    %4041 = vmatprep.subr.mxu0 0.0
    %v4042 = vand.u32 %v1315, 4294901760
    %4043 = vmatpush1.msra.mxu0 %v4042
    %4044 = vmatprep.subr.mxu0 0.0
    %v4045 = vand.u32 %v1314, 4294901760
    %4046 = vmatpush1.msra.mxu0 %v4045
    %4047 = vmatprep.subr.mxu0 0.0
    %v4048 = vand.u32 %v1313, 4294901760
    %4049 = vmatpush1.msra.mxu0 %v4048
    %4050 = vmatprep.subr.mxu0 0.0
    %v4051 = vand.u32 %v1312, 4294901760
    %4052 = vmatpush1.msra.mxu0 %v4051
    %4053 = vmatprep.subr.mxu0 0.0
    %v4054 = vand.u32 %v1311, 4294901760
    %4055 = vmatpush1.msra.mxu0 %v4054
    %4056 = vmatprep.subr.mxu0 0.0
    %v4057 = vand.u32 %v1310, 4294901760
    %4058 = vmatpush1.msra.mxu0 %v4057
    %4059 = vmatprep.subr.mxu0 0.0
    %v4060 = vand.u32 %v1309, 4294901760
    %4061 = vmatpush1.msra.mxu0 %v4060
    %4062 = vmatprep.subr.mxu0 0.0
    %v4063 = vand.u32 %v1308, 4294901760
    %4064 = vmatpush1.msra.mxu0 %v4063
    %4065 = vmatprep.subr.mxu0 0.0
    %4066 = vmatpush2.msra.mxu0 0.0
    %4067 = vmatprep.subr.mxu0 0.0
    %4068 = vmatpush2.msra.mxu0 0.0
    %4069 = vmatprep.subr.mxu0 0.0
    %4070 = vmatpush2.msra.mxu0 0.0
    %4071 = vmatprep.subr.mxu0 0.0
    %4072 = vmatpush2.msra.mxu0 0.0
    %4073 = vmatprep.subr.mxu0 0.0
    %4074 = vmatpush2.msra.mxu0 0.0
    %4075 = vmatprep.subr.mxu0 0.0
    %4076 = vmatpush2.msra.mxu0 0.0
    %4077 = vmatprep.subr.mxu0 0.0
    %4078 = vmatpush2.msra.mxu0 0.0
    %4079 = vmatprep.subr.mxu0 0.0
    %4080 = vmatpush2.msra.mxu0 0.0
    %4081 = vmatprep.subr.mxu0 0.0
    %4082 = vmatpush2.msra.mxu0 0.0
    %4083 = vmatprep.subr.mxu0 0.0
    %4084 = vmatpush2.msra.mxu0 0.0
    %4085 = vmatprep.subr.mxu0 0.0
    %4086 = vmatpush2.msra.mxu0 0.0
    %4087 = vmatprep.subr.mxu0 0.0
    %4088 = vmatpush2.msra.mxu0 0.0
    %4089 = vmatprep.subr.mxu0 0.0
    %4090 = vmatpush2.msra.mxu0 0.0
    %4091 = vmatprep.subr.mxu0 0.0
    %4092 = vmatpush2.msra.mxu0 0.0
    %4093 = vmatprep.subr.mxu0 0.0
    %4094 = vmatpush2.msra.mxu0 0.0
    %4095 = vmatprep.subr.mxu0 0.0
    %4096 = vmatpush2.msra.mxu0 0.0
    %4097 = vmatprep.mubr.f32.mxu0 0.0
    %4098 = vmatmul.mubr.f32.gmra.mxu0 %v1388
    %v4099 = vpop.f32.mrf.mxu0
    %v4100 = vadd.f32 %v3699, %v4099
    %v4101 = vpop.f32.mrf.mxu0
    %4102 = vmatprep.mubr.f32.mxu0 0.0
    %4103 = vmatmul.mubr.f32.gmra.mxu0 %v1389
    %v4104 = vpop.f32.mrf.mxu0
    %v4105 = vadd.f32 %v3704, %v4104
    %v4106 = vpop.f32.mrf.mxu0
    %4107 = vmatprep.mubr.f32.mxu0 0.0
    %4108 = vmatmul.mubr.f32.gmra.mxu0 %v1390
    %v4109 = vpop.f32.mrf.mxu0
    %v4110 = vadd.f32 %v3709, %v4109
    %v4111 = vpop.f32.mrf.mxu0
    %4112 = vmatprep.mubr.f32.mxu0 0.0
    %4113 = vmatmul.mubr.f32.gmra.mxu0 %v1391
    %v4114 = vpop.f32.mrf.mxu0
    %v4115 = vadd.f32 %v3714, %v4114
    %v4116 = vpop.f32.mrf.mxu0
    %4117 = vmatprep.mubr.f32.mxu0 0.0
    %4118 = vmatmul.mubr.f32.gmra.mxu0 %v1392
    %v4119 = vpop.f32.mrf.mxu0
    %v4120 = vadd.f32 %v3719, %v4119
    %v4121 = vpop.f32.mrf.mxu0
    %4122 = vmatprep.mubr.f32.mxu0 0.0
    %4123 = vmatmul.mubr.f32.gmra.mxu0 %v1393
    %v4124 = vpop.f32.mrf.mxu0
    %v4125 = vadd.f32 %v3724, %v4124
    %v4126 = vpop.f32.mrf.mxu0
    %4127 = vmatprep.mubr.f32.mxu0 0.0
    %4128 = vmatmul.mubr.f32.gmra.mxu0 %v1394
    %v4129 = vpop.f32.mrf.mxu0
    %v4130 = vadd.f32 %v3729, %v4129
    %v4131 = vpop.f32.mrf.mxu0
    %4132 = vmatprep.mubr.f32.mxu0 0.0
    %4133 = vmatmul.mubr.f32.gmra.mxu0 %v1395
    %v4134 = vpop.f32.mrf.mxu0
    %v4135 = vadd.f32 %v3734, %v4134
    %v4136 = vpop.f32.mrf.mxu0
    %4137 = vmatprep.mubr.f32.mxu0 0.0
    %4138 = vmatmul.mubr.f32.gmra.mxu0 %v1396
    %v4139 = vpop.f32.mrf.mxu0
    %v4140 = vadd.f32 %v3739, %v4139
    %v4141 = vpop.f32.mrf.mxu0
    %4142 = vmatprep.mubr.f32.mxu0 0.0
    %4143 = vmatmul.mubr.f32.gmra.mxu0 %v1397
    %v4144 = vpop.f32.mrf.mxu0
    %v4145 = vadd.f32 %v3744, %v4144
    %v4146 = vpop.f32.mrf.mxu0
    %4147 = vmatprep.mubr.f32.mxu0 0.0
    %4148 = vmatmul.mubr.f32.gmra.mxu0 %v1398
    %v4149 = vpop.f32.mrf.mxu0
    %v4150 = vadd.f32 %v3749, %v4149
    %v4151 = vpop.f32.mrf.mxu0
    %4152 = vmatprep.mubr.f32.mxu0 0.0
    %4153 = vmatmul.mubr.f32.gmra.mxu0 %v1399
    %v4154 = vpop.f32.mrf.mxu0
    %v4155 = vadd.f32 %v3754, %v4154
    %v4156 = vpop.f32.mrf.mxu0
    %4157 = vmatprep.mubr.f32.mxu0 0.0
    %4158 = vmatmul.mubr.f32.gmra.mxu0 %v1400
    %v4159 = vpop.f32.mrf.mxu0
    %v4160 = vadd.f32 %v3759, %v4159
    %v4161 = vpop.f32.mrf.mxu0
    %4162 = vmatprep.mubr.f32.mxu0 0.0
    %4163 = vmatmul.mubr.f32.gmra.mxu0 %v1401
    %v4164 = vpop.f32.mrf.mxu0
    %v4165 = vadd.f32 %v3764, %v4164
    %v4166 = vpop.f32.mrf.mxu0
    %4167 = vmatprep.mubr.f32.mxu0 0.0
    %4168 = vmatmul.mubr.f32.gmra.mxu0 %v1402
    %v4169 = vpop.f32.mrf.mxu0
    %v4170 = vadd.f32 %v3769, %v4169
    %v4171 = vpop.f32.mrf.mxu0
    %4172 = vmatprep.mubr.f32.mxu0 0.0
    %4173 = vmatmul.mubr.f32.gmra.mxu0 %v1403
    %v4174 = vpop.f32.mrf.mxu0
    %v4175 = vadd.f32 %v3774, %v4174
    %v4176 = vpop.f32.mrf.mxu0
    %4177 = vmatprep.mubr.f32.mxu0 0.0
    %4178 = vmatmul.mubr.f32.gmra.mxu0 %v1404
    %v4179 = vpop.f32.mrf.mxu0
    %v4180 = vadd.f32 %v3779, %v4179
    %v4181 = vpop.f32.mrf.mxu0
    %4182 = vmatprep.mubr.f32.mxu0 0.0
    %4183 = vmatmul.mubr.f32.gmra.mxu0 %v1405
    %v4184 = vpop.f32.mrf.mxu0
    %v4185 = vadd.f32 %v3784, %v4184
    %v4186 = vpop.f32.mrf.mxu0
    %4187 = vmatprep.mubr.f32.mxu0 0.0
    %4188 = vmatmul.mubr.f32.gmra.mxu0 %v1406
    %v4189 = vpop.f32.mrf.mxu0
    %v4190 = vadd.f32 %v3789, %v4189
    %v4191 = vpop.f32.mrf.mxu0
    %4192 = vmatprep.mubr.f32.mxu0 0.0
    %4193 = vmatmul.mubr.f32.gmra.mxu0 %v1407
    %v4194 = vpop.f32.mrf.mxu0
    %v4195 = vadd.f32 %v3794, %v4194
    %v4196 = vpop.f32.mrf.mxu0
    %4197 = vmatprep.mubr.f32.mxu0 0.0
    %4198 = vmatmul.mubr.f32.gmra.mxu0 %v1408
    %v4199 = vpop.f32.mrf.mxu0
    %v4200 = vadd.f32 %v3799, %v4199
    %v4201 = vpop.f32.mrf.mxu0
    %4202 = vmatprep.mubr.f32.mxu0 0.0
    %4203 = vmatmul.mubr.f32.gmra.mxu0 %v1409
    %v4204 = vpop.f32.mrf.mxu0
    %v4205 = vadd.f32 %v3804, %v4204
    %v4206 = vpop.f32.mrf.mxu0
    %4207 = vmatprep.mubr.f32.mxu0 0.0
    %4208 = vmatmul.mubr.f32.gmra.mxu0 %v1410
    %v4209 = vpop.f32.mrf.mxu0
    %v4210 = vadd.f32 %v3809, %v4209
    %v4211 = vpop.f32.mrf.mxu0
    %4212 = vmatprep.mubr.f32.mxu0 0.0
    %4213 = vmatmul.mubr.f32.gmra.mxu0 %v1411
    %v4214 = vpop.f32.mrf.mxu0
    %v4215 = vadd.f32 %v3814, %v4214
    %v4216 = vpop.f32.mrf.mxu0
    %4217 = vmatprep.mubr.f32.mxu0 0.0
    %4218 = vmatmul.mubr.f32.gmra.mxu0 %v1412
    %v4219 = vpop.f32.mrf.mxu0
    %v4220 = vadd.f32 %v3819, %v4219
    %v4221 = vpop.f32.mrf.mxu0
    %4222 = vmatprep.mubr.f32.mxu0 0.0
    %4223 = vmatmul.mubr.f32.gmra.mxu0 %v1413
    %v4224 = vpop.f32.mrf.mxu0
    %v4225 = vadd.f32 %v3824, %v4224
    %v4226 = vpop.f32.mrf.mxu0
    %4227 = vmatprep.mubr.f32.mxu0 0.0
    %4228 = vmatmul.mubr.f32.gmra.mxu0 %v1414
    %v4229 = vpop.f32.mrf.mxu0
    %v4230 = vadd.f32 %v3829, %v4229
    %v4231 = vpop.f32.mrf.mxu0
    %4232 = vmatprep.mubr.f32.mxu0 0.0
    %4233 = vmatmul.mubr.f32.gmra.mxu0 %v1415
    %v4234 = vpop.f32.mrf.mxu0
    %v4235 = vadd.f32 %v3834, %v4234
    %v4236 = vpop.f32.mrf.mxu0
    %4237 = vmatprep.mubr.f32.mxu0 0.0
    %4238 = vmatmul.mubr.f32.gmra.mxu0 %v1416
    %v4239 = vpop.f32.mrf.mxu0
    %v4240 = vadd.f32 %v3839, %v4239
    %v4241 = vpop.f32.mrf.mxu0
    %4242 = vmatprep.mubr.f32.mxu0 0.0
    %4243 = vmatmul.mubr.f32.gmra.mxu0 %v1417
    %v4244 = vpop.f32.mrf.mxu0
    %v4245 = vadd.f32 %v3844, %v4244
    %v4246 = vpop.f32.mrf.mxu0
    %4247 = vmatprep.mubr.f32.mxu0 0.0
    %4248 = vmatmul.mubr.f32.gmra.mxu0 %v1418
    %v4249 = vpop.f32.mrf.mxu0
    %v4250 = vadd.f32 %v3849, %v4249
    %v4251 = vpop.f32.mrf.mxu0
    %4252 = vmatprep.mubr.f32.mxu0 0.0
    %4253 = vmatmul.mubr.f32.gmra.mxu0 %v1419
    %v4254 = vpop.f32.mrf.mxu0
    %v4255 = vadd.f32 %v3854, %v4254
    %v4256 = vpop.f32.mrf.mxu0
    %4257 = vmatprep.mubr.f32.mxu0 0.0
    %4258 = vmatmul.mubr.f32.gmra.mxu0 %v1420
    %v4259 = vpop.f32.mrf.mxu0
    %v4260 = vadd.f32 %v3859, %v4259
    %v4261 = vpop.f32.mrf.mxu0
    %4262 = vmatprep.mubr.f32.mxu0 0.0
    %4263 = vmatmul.mubr.f32.gmra.mxu0 %v1421
    %v4264 = vpop.f32.mrf.mxu0
    %v4265 = vadd.f32 %v3864, %v4264
    %v4266 = vpop.f32.mrf.mxu0
    %4267 = vmatprep.mubr.f32.mxu0 0.0
    %4268 = vmatmul.mubr.f32.gmra.mxu0 %v1422
    %v4269 = vpop.f32.mrf.mxu0
    %v4270 = vadd.f32 %v3869, %v4269
    %v4271 = vpop.f32.mrf.mxu0
    %4272 = vmatprep.mubr.f32.mxu0 0.0
    %4273 = vmatmul.mubr.f32.gmra.mxu0 %v1423
    %v4274 = vpop.f32.mrf.mxu0
    %v4275 = vadd.f32 %v3874, %v4274
    %v4276 = vpop.f32.mrf.mxu0
    %4277 = vmatprep.mubr.f32.mxu0 0.0
    %4278 = vmatmul.mubr.f32.gmra.mxu0 %v1424
    %v4279 = vpop.f32.mrf.mxu0
    %v4280 = vadd.f32 %v3879, %v4279
    %v4281 = vpop.f32.mrf.mxu0
    %4282 = vmatprep.mubr.f32.mxu0 0.0
    %4283 = vmatmul.mubr.f32.gmra.mxu0 %v1425
    %v4284 = vpop.f32.mrf.mxu0
    %v4285 = vadd.f32 %v3884, %v4284
    %v4286 = vpop.f32.mrf.mxu0
    %4287 = vmatprep.mubr.f32.mxu0 0.0
    %4288 = vmatmul.mubr.f32.gmra.mxu0 %v1426
    %v4289 = vpop.f32.mrf.mxu0
    %v4290 = vadd.f32 %v3889, %v4289
    %v4291 = vpop.f32.mrf.mxu0
    %4292 = vmatprep.mubr.f32.mxu0 0.0
    %4293 = vmatmul.mubr.f32.gmra.mxu0 %v1427
    %v4294 = vpop.f32.mrf.mxu0
    %v4295 = vadd.f32 %v3894, %v4294
    %v4296 = vpop.f32.mrf.mxu0
    %4297 = vmatprep.mubr.f32.mxu0 0.0
    %4298 = vmatmul.mubr.f32.gmra.mxu0 %v1428
    %v4299 = vpop.f32.mrf.mxu0
    %v4300 = vadd.f32 %v3899, %v4299
    %v4301 = vpop.f32.mrf.mxu0
    %4302 = vmatprep.mubr.f32.mxu0 0.0
    %4303 = vmatmul.mubr.f32.gmra.mxu0 %v1429
    %v4304 = vpop.f32.mrf.mxu0
    %v4305 = vadd.f32 %v3904, %v4304
    %v4306 = vpop.f32.mrf.mxu0
    %4307 = vmatprep.mubr.f32.mxu0 0.0
    %4308 = vmatmul.mubr.f32.gmra.mxu0 %v1430
    %v4309 = vpop.f32.mrf.mxu0
    %v4310 = vadd.f32 %v3909, %v4309
    %v4311 = vpop.f32.mrf.mxu0
    %4312 = vmatprep.mubr.f32.mxu0 0.0
    %4313 = vmatmul.mubr.f32.gmra.mxu0 %v1431
    %v4314 = vpop.f32.mrf.mxu0
    %v4315 = vadd.f32 %v3914, %v4314
    %v4316 = vpop.f32.mrf.mxu0
    %4317 = vmatprep.mubr.f32.mxu0 0.0
    %4318 = vmatmul.mubr.f32.gmra.mxu0 %v1432
    %v4319 = vpop.f32.mrf.mxu0
    %v4320 = vadd.f32 %v3919, %v4319
    %v4321 = vpop.f32.mrf.mxu0
    %4322 = vmatprep.mubr.f32.mxu0 0.0
    %4323 = vmatmul.mubr.f32.gmra.mxu0 %v1433
    %v4324 = vpop.f32.mrf.mxu0
    %v4325 = vadd.f32 %v3924, %v4324
    %v4326 = vpop.f32.mrf.mxu0
    %4327 = vmatprep.mubr.f32.mxu0 0.0
    %4328 = vmatmul.mubr.f32.gmra.mxu0 %v1434
    %v4329 = vpop.f32.mrf.mxu0
    %v4330 = vadd.f32 %v3929, %v4329
    %v4331 = vpop.f32.mrf.mxu0
    %4332 = vmatprep.mubr.f32.mxu0 0.0
    %4333 = vmatmul.mubr.f32.gmra.mxu0 %v1435
    %v4334 = vpop.f32.mrf.mxu0
    %v4335 = vadd.f32 %v3934, %v4334
    %v4336 = vpop.f32.mrf.mxu0
    %4337 = vmatprep.mubr.f32.mxu0 0.0
    %4338 = vmatmul.mubr.f32.gmra.mxu0 %v1436
    %v4339 = vpop.f32.mrf.mxu0
    %v4340 = vadd.f32 %v3939, %v4339
    %v4341 = vpop.f32.mrf.mxu0
    %4342 = vmatprep.mubr.f32.mxu0 0.0
    %4343 = vmatmul.mubr.f32.gmra.mxu0 %v1437
    %v4344 = vpop.f32.mrf.mxu0
    %v4345 = vadd.f32 %v3944, %v4344
    %v4346 = vpop.f32.mrf.mxu0
    %4347 = vmatprep.mubr.f32.mxu0 0.0
    %4348 = vmatmul.mubr.f32.gmra.mxu0 %v1438
    %v4349 = vpop.f32.mrf.mxu0
    %v4350 = vadd.f32 %v3949, %v4349
    %v4351 = vpop.f32.mrf.mxu0
    %4352 = vmatprep.mubr.f32.mxu0 0.0
    %4353 = vmatmul.mubr.f32.gmra.mxu0 %v1439
    %v4354 = vpop.f32.mrf.mxu0
    %v4355 = vadd.f32 %v3954, %v4354
    %v4356 = vpop.f32.mrf.mxu0
    %4357 = vmatprep.mubr.f32.mxu0 0.0
    %4358 = vmatmul.mubr.f32.gmra.mxu0 %v1440
    %v4359 = vpop.f32.mrf.mxu0
    %v4360 = vadd.f32 %v3959, %v4359
    %v4361 = vpop.f32.mrf.mxu0
    %4362 = vmatprep.mubr.f32.mxu0 0.0
    %4363 = vmatmul.mubr.f32.gmra.mxu0 %v1441
    %v4364 = vpop.f32.mrf.mxu0
    %v4365 = vadd.f32 %v3964, %v4364
    %v4366 = vpop.f32.mrf.mxu0
    %4367 = vmatprep.mubr.f32.mxu0 0.0
    %4368 = vmatmul.mubr.f32.gmra.mxu0 %v1442
    %v4369 = vpop.f32.mrf.mxu0
    %v4370 = vadd.f32 %v3969, %v4369
    %v4371 = vpop.f32.mrf.mxu0
    %4372 = vmatprep.mubr.f32.mxu0 0.0
    %4373 = vmatmul.mubr.f32.gmra.mxu0 %v1443
    %v4374 = vpop.f32.mrf.mxu0
    %v4375 = vadd.f32 %v3974, %v4374
    %v4376 = vpop.f32.mrf.mxu0
    %4377 = vmatprep.mubr.f32.mxu0 0.0
    %4378 = vmatmul.mubr.f32.gmra.mxu0 %v1444
    %v4379 = vpop.f32.mrf.mxu0
    %v4380 = vadd.f32 %v3979, %v4379
    %v4381 = vpop.f32.mrf.mxu0
    %4382 = vmatprep.mubr.f32.mxu0 0.0
    %4383 = vmatmul.mubr.f32.gmra.mxu0 %v1445
    %v4384 = vpop.f32.mrf.mxu0
    %v4385 = vadd.f32 %v3984, %v4384
    %v4386 = vpop.f32.mrf.mxu0
    %4387 = vmatprep.mubr.f32.mxu0 0.0
    %4388 = vmatmul.mubr.f32.gmra.mxu0 %v1446
    %v4389 = vpop.f32.mrf.mxu0
    %v4390 = vadd.f32 %v3989, %v4389
    %v4391 = vpop.f32.mrf.mxu0
    %4392 = vmatprep.mubr.f32.mxu0 0.0
    %4393 = vmatmul.mubr.f32.gmra.mxu0 %v1447
    %v4394 = vpop.f32.mrf.mxu0
    %v4395 = vadd.f32 %v3994, %v4394
    %v4396 = vpop.f32.mrf.mxu0
    %4397 = vmatprep.mubr.f32.mxu0 0.0
    %4398 = vmatmul.mubr.f32.gmra.mxu0 %v1448
    %v4399 = vpop.f32.mrf.mxu0
    %v4400 = vadd.f32 %v3999, %v4399
    %v4401 = vpop.f32.mrf.mxu0
    %4402 = vmatprep.mubr.f32.mxu0 0.0
    %4403 = vmatmul.mubr.f32.gmra.mxu0 %v1449
    %v4404 = vpop.f32.mrf.mxu0
    %v4405 = vadd.f32 %v4004, %v4404
    %v4406 = vpop.f32.mrf.mxu0
    %4407 = vmatprep.mubr.f32.mxu0 0.0
    %4408 = vmatmul.mubr.f32.gmra.mxu0 %v1450
    %v4409 = vpop.f32.mrf.mxu0
    %v4410 = vadd.f32 %v4009, %v4409
    %v4411 = vpop.f32.mrf.mxu0
    %4412 = vmatprep.mubr.f32.mxu0 0.0
    %4413 = vmatmul.mubr.f32.gmra.mxu0 %v1451
    %v4414 = vpop.f32.mrf.mxu0
    %v4415 = vadd.f32 %v4014, %v4414
    %v4416 = vpop.f32.mrf.mxu0
    %4417 = vdwg.mxu0
    %4422 = vrot.lane.b32.xlu0 %v4120, 8
    %v4423 = vpop.permute.xlu0 %4422
    %4424 = vrot.lane.b32.xlu0 %v4125, 8
    %v4425 = vpop.permute.xlu0 %4424
    %4426 = vrot.lane.b32.xlu0 %v4130, 8
    %v4427 = vpop.permute.xlu0 %4426
    %4428 = vrot.lane.b32.xlu0 %v4135, 8
    %v4429 = vpop.permute.xlu0 %4428
    %4438 = vrot.lane.b32.xlu0 %v4140, 16
    %v4439 = vpop.permute.xlu0 %4438
    %4440 = vrot.lane.b32.xlu0 %v4145, 16
    %v4441 = vpop.permute.xlu0 %4440
    %4442 = vrot.lane.b32.xlu0 %v4150, 16
    %v4443 = vpop.permute.xlu0 %4442
    %4444 = vrot.lane.b32.xlu0 %v4155, 16
    %v4445 = vpop.permute.xlu0 %4444
    %4454 = vrot.lane.b32.xlu0 %v4160, 24
    %v4455 = vpop.permute.xlu0 %4454
    %4456 = vrot.lane.b32.xlu0 %v4165, 24
    %v4457 = vpop.permute.xlu0 %4456
    %4458 = vrot.lane.b32.xlu0 %v4170, 24
    %v4459 = vpop.permute.xlu0 %4458
    %4460 = vrot.lane.b32.xlu0 %v4175, 24
    %v4461 = vpop.permute.xlu0 %4460
    %4470 = vrot.lane.b32.xlu0 %v4180, 32
    %v4471 = vpop.permute.xlu0 %4470
    %4472 = vrot.lane.b32.xlu0 %v4185, 32
    %v4473 = vpop.permute.xlu0 %4472
    %4474 = vrot.lane.b32.xlu0 %v4190, 32
    %v4475 = vpop.permute.xlu0 %4474
    %4476 = vrot.lane.b32.xlu0 %v4195, 32
    %v4477 = vpop.permute.xlu0 %4476
    %4486 = vrot.lane.b32.xlu0 %v4200, 40
    %v4487 = vpop.permute.xlu0 %4486
    %4488 = vrot.lane.b32.xlu0 %v4205, 40
    %v4489 = vpop.permute.xlu0 %4488
    %4490 = vrot.lane.b32.xlu0 %v4210, 40
    %v4491 = vpop.permute.xlu0 %4490
    %4492 = vrot.lane.b32.xlu0 %v4215, 40
    %v4493 = vpop.permute.xlu0 %4492
    %4502 = vrot.lane.b32.xlu0 %v4220, 48
    %v4503 = vpop.permute.xlu0 %4502
    %4504 = vrot.lane.b32.xlu0 %v4225, 48
    %v4505 = vpop.permute.xlu0 %4504
    %4506 = vrot.lane.b32.xlu0 %v4230, 48
    %v4507 = vpop.permute.xlu0 %4506
    %4508 = vrot.lane.b32.xlu0 %v4235, 48
    %v4509 = vpop.permute.xlu0 %4508
    %4518 = vrot.lane.b32.xlu0 %v4240, 56
    %v4519 = vpop.permute.xlu0 %4518
    %4520 = vrot.lane.b32.xlu0 %v4245, 56
    %v4521 = vpop.permute.xlu0 %4520
    %4522 = vrot.lane.b32.xlu0 %v4250, 56
    %v4523 = vpop.permute.xlu0 %4522
    %4524 = vrot.lane.b32.xlu0 %v4255, 56
    %v4525 = vpop.permute.xlu0 %4524
    %4534 = vrot.lane.b32.xlu0 %v4260, 64
    %v4535 = vpop.permute.xlu0 %4534
    %4536 = vrot.lane.b32.xlu0 %v4265, 64
    %v4537 = vpop.permute.xlu0 %4536
    %4538 = vrot.lane.b32.xlu0 %v4270, 64
    %v4539 = vpop.permute.xlu0 %4538
    %4540 = vrot.lane.b32.xlu0 %v4275, 64
    %v4541 = vpop.permute.xlu0 %4540
    %4550 = vrot.lane.b32.xlu0 %v4280, 72
    %v4551 = vpop.permute.xlu0 %4550
    %4552 = vrot.lane.b32.xlu0 %v4285, 72
    %v4553 = vpop.permute.xlu0 %4552
    %4554 = vrot.lane.b32.xlu0 %v4290, 72
    %v4555 = vpop.permute.xlu0 %4554
    %4556 = vrot.lane.b32.xlu0 %v4295, 72
    %v4557 = vpop.permute.xlu0 %4556
    %4566 = vrot.lane.b32.xlu0 %v4300, 80
    %v4567 = vpop.permute.xlu0 %4566
    %4568 = vrot.lane.b32.xlu0 %v4305, 80
    %v4569 = vpop.permute.xlu0 %4568
    %4570 = vrot.lane.b32.xlu0 %v4310, 80
    %v4571 = vpop.permute.xlu0 %4570
    %4572 = vrot.lane.b32.xlu0 %v4315, 80
    %v4573 = vpop.permute.xlu0 %4572
    %4582 = vrot.lane.b32.xlu0 %v4320, 88
    %v4583 = vpop.permute.xlu0 %4582
    %4584 = vrot.lane.b32.xlu0 %v4325, 88
    %v4585 = vpop.permute.xlu0 %4584
    %4586 = vrot.lane.b32.xlu0 %v4330, 88
    %v4587 = vpop.permute.xlu0 %4586
    %4588 = vrot.lane.b32.xlu0 %v4335, 88
    %v4589 = vpop.permute.xlu0 %4588
    %4598 = vrot.lane.b32.xlu0 %v4340, 96
    %v4599 = vpop.permute.xlu0 %4598
    %4600 = vrot.lane.b32.xlu0 %v4345, 96
    %v4601 = vpop.permute.xlu0 %4600
    %4602 = vrot.lane.b32.xlu0 %v4350, 96
    %v4603 = vpop.permute.xlu0 %4602
    %4604 = vrot.lane.b32.xlu0 %v4355, 96
    %v4605 = vpop.permute.xlu0 %4604
    %4614 = vrot.lane.b32.xlu0 %v4360, 104
    %v4615 = vpop.permute.xlu0 %4614
    %4616 = vrot.lane.b32.xlu0 %v4365, 104
    %v4617 = vpop.permute.xlu0 %4616
    %4618 = vrot.lane.b32.xlu0 %v4370, 104
    %v4619 = vpop.permute.xlu0 %4618
    %4620 = vrot.lane.b32.xlu0 %v4375, 104
    %v4621 = vpop.permute.xlu0 %4620
    %4630 = vrot.lane.b32.xlu0 %v4380, 112
    %v4631 = vpop.permute.xlu0 %4630
    %4632 = vrot.lane.b32.xlu0 %v4385, 112
    %v4633 = vpop.permute.xlu0 %4632
    %4634 = vrot.lane.b32.xlu0 %v4390, 112
    %v4635 = vpop.permute.xlu0 %4634
    %4636 = vrot.lane.b32.xlu0 %v4395, 112
    %v4637 = vpop.permute.xlu0 %4636
    %4646 = vrot.lane.b32.xlu0 %v4400, 120
    %v4647 = vpop.permute.xlu0 %4646
    %4648 = vrot.lane.b32.xlu0 %v4405, 120
    %v4649 = vpop.permute.xlu0 %4648
    %4650 = vrot.lane.b32.xlu0 %v4410, 120
    %v4651 = vpop.permute.xlu0 %4650
    %4652 = vrot.lane.b32.xlu0 %v4415, 120
    %v4653 = vpop.permute.xlu0 %4652
    %vm4658 = vcmask 64512
    %v4659 = vsel %vm4658, %v4100, %v4423
    %v4660 = vsel %vm4658, %v4105, %v4425
    %v4661 = vsel %vm4658, %v4110, %v4427
    %v4662 = vsel %vm4658, %v4115, %v4429
    %vm4663 = vcmask 130048
    %v4664 = vsel %vm4663, %v4659, %v4439
    %v4665 = vsel %vm4663, %v4660, %v4441
    %v4666 = vsel %vm4663, %v4661, %v4443
    %v4667 = vsel %vm4663, %v4662, %v4445
    %vm4668 = vcmask 195584
    %v4669 = vsel %vm4668, %v4664, %v4455
    %v4670 = vsel %vm4668, %v4665, %v4457
    %v4671 = vsel %vm4668, %v4666, %v4459
    %v4672 = vsel %vm4668, %v4667, %v4461
    %vm4673 = vcmask 261120
    %v4674 = vsel %vm4673, %v4669, %v4471
    %v4675 = vsel %vm4673, %v4670, %v4473
    %v4676 = vsel %vm4673, %v4671, %v4475
    %v4677 = vsel %vm4673, %v4672, %v4477
    %vm4678 = vcmask 326656
    %v4679 = vsel %vm4678, %v4674, %v4487
    %v4680 = vsel %vm4678, %v4675, %v4489
    %v4681 = vsel %vm4678, %v4676, %v4491
    %v4682 = vsel %vm4678, %v4677, %v4493
    %v4683 = vsel %vm71, %v4679, %v4503
    %v4684 = vsel %vm71, %v4680, %v4505
    %v4685 = vsel %vm71, %v4681, %v4507
    %v4686 = vsel %vm71, %v4682, %v4509
    %vm4687 = vcmask 457728
    %v4688 = vsel %vm4687, %v4683, %v4519
    %v4689 = vsel %vm4687, %v4684, %v4521
    %v4690 = vsel %vm4687, %v4685, %v4523
    %v4691 = vsel %vm4687, %v4686, %v4525
    %vm4692 = vcmask 523264
    %v4693 = vsel %vm4692, %v4688, %v4535
    %v4694 = vsel %vm4692, %v4689, %v4537
    %v4695 = vsel %vm4692, %v4690, %v4539
    %v4696 = vsel %vm4692, %v4691, %v4541
    %vm4697 = vcmask 588800
    %v4698 = vsel %vm4697, %v4693, %v4551
    %v4699 = vsel %vm4697, %v4694, %v4553
    %v4700 = vsel %vm4697, %v4695, %v4555
    %v4701 = vsel %vm4697, %v4696, %v4557
    %vm4702 = vcmask 654336
    %v4703 = vsel %vm4702, %v4698, %v4567
    %v4704 = vsel %vm4702, %v4699, %v4569
    %v4705 = vsel %vm4702, %v4700, %v4571
    %v4706 = vsel %vm4702, %v4701, %v4573
    %vm4707 = vcmask 719872
    %v4708 = vsel %vm4707, %v4703, %v4583
    %v4709 = vsel %vm4707, %v4704, %v4585
    %v4710 = vsel %vm4707, %v4705, %v4587
    %v4711 = vsel %vm4707, %v4706, %v4589
    %vm4712 = vcmask 785408
    %v4713 = vsel %vm4712, %v4708, %v4599
    %v4714 = vsel %vm4712, %v4709, %v4601
    %v4715 = vsel %vm4712, %v4710, %v4603
    %v4716 = vsel %vm4712, %v4711, %v4605
    %vm4717 = vcmask 850944
    %v4718 = vsel %vm4717, %v4713, %v4615
    %v4719 = vsel %vm4717, %v4714, %v4617
    %v4720 = vsel %vm4717, %v4715, %v4619
    %v4721 = vsel %vm4717, %v4716, %v4621
    %vm4722 = vcmask 916480
    %v4723 = vsel %vm4722, %v4718, %v4631
    %v4724 = vsel %vm4722, %v4719, %v4633
    %v4725 = vsel %vm4722, %v4720, %v4635
    %v4726 = vsel %vm4722, %v4721, %v4637
    %vm4727 = vcmask 982016
    %v4728 = vsel %vm4727, %v4723, %v4647
    %v4729 = vsel %vm4727, %v4724, %v4649
    %v4730 = vsel %vm4727, %v4725, %v4651
    %v4731 = vsel %vm4727, %v4726, %v4653
    %v4732 = vld [vmem:[%s4] sm:$0xff]
    %v4733 = vld [vmem:[%s4 + $0x8] sm:$0xff]
    %v4734 = vld [vmem:[%s4 + $0x10] sm:$0xff]
    %v4735 = vld [vmem:[%s4 + $0x18] sm:$0xff]
    %v4736 = vld [vmem:[%s4 + $0x20] sm:$0xff]
    %v4737 = vld [vmem:[%s4 + $0x28] sm:$0xff]
    %v4738 = vld [vmem:[%s4 + $0x30] sm:$0xff]
    %v4739 = vld [vmem:[%s4 + $0x38] sm:$0xff]
    %v4740 = vld [vmem:[%s4 + $0x40] sm:$0xff]
    %v4741 = vld [vmem:[%s4 + $0x48] sm:$0xff]
    %v4742 = vld [vmem:[%s4 + $0x50] sm:$0xff]
    %v4743 = vld [vmem:[%s4 + $0x58] sm:$0xff]
    %v4744 = vld [vmem:[%s4 + $0x60] sm:$0xff]
    %v4745 = vld [vmem:[%s4 + $0x68] sm:$0xff]
    %v4746 = vld [vmem:[%s4 + $0x70] sm:$0xff]
    %v4747 = vld [vmem:[%s4 + $0x78] sm:$0xff]
    %v4748 = vld [vmem:[%s5] sm:$0x1]
    %v4749 = vlaneseq
    %v4750 = vshrl.u32 %v4749, 7
    %v4751 = vsub.s32 0, %v4750
    %v4752 = vrot.slane %v4748, %v4751
    %4753 = vmatprep.subr.mxu0 0.0
    %v4754 = vand.u32 %v4747, 4294901760
    %4755 = vmatpush1.msra.mxu0 %v4754
    %4756 = vmatprep.subr.mxu0 0.0
    %v4757 = vand.u32 %v4746, 4294901760
    %4758 = vmatpush1.msra.mxu0 %v4757
    %4759 = vmatprep.subr.mxu0 0.0
    %v4760 = vand.u32 %v4745, 4294901760
    %4761 = vmatpush1.msra.mxu0 %v4760
    %4762 = vmatprep.subr.mxu0 0.0
    %v4763 = vand.u32 %v4744, 4294901760
    %4764 = vmatpush1.msra.mxu0 %v4763
    %4765 = vmatprep.subr.mxu0 0.0
    %v4766 = vand.u32 %v4743, 4294901760
    %4767 = vmatpush1.msra.mxu0 %v4766
    %4768 = vmatprep.subr.mxu0 0.0
    %v4769 = vand.u32 %v4742, 4294901760
    %4770 = vmatpush1.msra.mxu0 %v4769
    %4771 = vmatprep.subr.mxu0 0.0
    %v4772 = vand.u32 %v4741, 4294901760
    %4773 = vmatpush1.msra.mxu0 %v4772
    %4774 = vmatprep.subr.mxu0 0.0
    %v4775 = vand.u32 %v4740, 4294901760
    %4776 = vmatpush1.msra.mxu0 %v4775
    %4777 = vmatprep.subr.mxu0 0.0
    %v4778 = vand.u32 %v4739, 4294901760
    %4779 = vmatpush1.msra.mxu0 %v4778
    %4780 = vmatprep.subr.mxu0 0.0
    %v4781 = vand.u32 %v4738, 4294901760
    %4782 = vmatpush1.msra.mxu0 %v4781
    %4783 = vmatprep.subr.mxu0 0.0
    %v4784 = vand.u32 %v4737, 4294901760
    %4785 = vmatpush1.msra.mxu0 %v4784
    %4786 = vmatprep.subr.mxu0 0.0
    %v4787 = vand.u32 %v4736, 4294901760
    %4788 = vmatpush1.msra.mxu0 %v4787
    %4789 = vmatprep.subr.mxu0 0.0
    %v4790 = vand.u32 %v4735, 4294901760
    %4791 = vmatpush1.msra.mxu0 %v4790
    %4792 = vmatprep.subr.mxu0 0.0
    %v4793 = vand.u32 %v4734, 4294901760
    %4794 = vmatpush1.msra.mxu0 %v4793
    %4795 = vmatprep.subr.mxu0 0.0
    %v4796 = vand.u32 %v4733, 4294901760
    %4797 = vmatpush1.msra.mxu0 %v4796
    %4798 = vmatprep.subr.mxu0 0.0
    %v4799 = vand.u32 %v4732, 4294901760
    %4800 = vmatpush1.msra.mxu0 %v4799
    %4801 = vmatprep.subr.mxu0 0.0
    %4802 = vmatpush2.msra.mxu0 0.0
    %4803 = vmatprep.subr.mxu0 0.0
    %4804 = vmatpush2.msra.mxu0 0.0
    %4805 = vmatprep.subr.mxu0 0.0
    %4806 = vmatpush2.msra.mxu0 0.0
    %4807 = vmatprep.subr.mxu0 0.0
    %4808 = vmatpush2.msra.mxu0 0.0
    %4809 = vmatprep.subr.mxu0 0.0
    %4810 = vmatpush2.msra.mxu0 0.0
    %4811 = vmatprep.subr.mxu0 0.0
    %4812 = vmatpush2.msra.mxu0 0.0
    %4813 = vmatprep.subr.mxu0 0.0
    %4814 = vmatpush2.msra.mxu0 0.0
    %4815 = vmatprep.subr.mxu0 0.0
    %4816 = vmatpush2.msra.mxu0 0.0
    %4817 = vmatprep.subr.mxu0 0.0
    %4818 = vmatpush2.msra.mxu0 0.0
    %4819 = vmatprep.subr.mxu0 0.0
    %4820 = vmatpush2.msra.mxu0 0.0
    %4821 = vmatprep.subr.mxu0 0.0
    %4822 = vmatpush2.msra.mxu0 0.0
    %4823 = vmatprep.subr.mxu0 0.0
    %4824 = vmatpush2.msra.mxu0 0.0
    %4825 = vmatprep.subr.mxu0 0.0
    %4826 = vmatpush2.msra.mxu0 0.0
    %4827 = vmatprep.subr.mxu0 0.0
    %4828 = vmatpush2.msra.mxu0 0.0
    %4829 = vmatprep.subr.mxu0 0.0
    %4830 = vmatpush2.msra.mxu0 0.0
    %4831 = vmatprep.subr.mxu0 0.0
    %4832 = vmatpush2.msra.mxu0 0.0
    %4833 = vmatprep.mubr.f32.mxu0 0.0
    %v4834 = vand.u32 %v4728, 4294901760
    %v4835 = vsub.f32 %v4728, %v4834
    %v4836 = vand.u32 %v4835, 4294901760
    %v4837 = vsub.f32 %v4835, %v4836
    %v4838 = vand.u32 %v4837, 4294901760
    %4839 = vmatmul.mubr.f32.gmra.mxu0 %v4838
    %v4840 = vpop.f32.mrf.mxu0
    %v4841 = vadd.f32 %v4752, %v4840
    %v4842 = vpop.f32.mrf.mxu0
    %4843 = vmatprep.mubr.f32.mxu0 0.0
    %v4844 = vand.u32 %v4729, 4294901760
    %v4845 = vsub.f32 %v4729, %v4844
    %v4846 = vand.u32 %v4845, 4294901760
    %v4847 = vsub.f32 %v4845, %v4846
    %v4848 = vand.u32 %v4847, 4294901760
    %4849 = vmatmul.mubr.f32.gmra.mxu0 %v4848
    %v4850 = vpop.f32.mrf.mxu0
    %v4851 = vadd.f32 %v4752, %v4850
    %v4852 = vpop.f32.mrf.mxu0
    %4853 = vmatprep.mubr.f32.mxu0 0.0
    %v4854 = vand.u32 %v4730, 4294901760
    %v4855 = vsub.f32 %v4730, %v4854
    %v4856 = vand.u32 %v4855, 4294901760
    %v4857 = vsub.f32 %v4855, %v4856
    %v4858 = vand.u32 %v4857, 4294901760
    %4859 = vmatmul.mubr.f32.gmra.mxu0 %v4858
    %v4860 = vpop.f32.mrf.mxu0
    %v4861 = vadd.f32 %v4752, %v4860
    %v4862 = vpop.f32.mrf.mxu0
    %4863 = vmatprep.mubr.f32.mxu0 0.0
    %v4864 = vand.u32 %v4731, 4294901760
    %v4865 = vsub.f32 %v4731, %v4864
    %v4866 = vand.u32 %v4865, 4294901760
    %v4867 = vsub.f32 %v4865, %v4866
    %v4868 = vand.u32 %v4867, 4294901760
    %4869 = vmatmul.mubr.f32.gmra.mxu0 %v4868
    %v4870 = vpop.f32.mrf.mxu0
    %v4871 = vadd.f32 %v4752, %v4870
    %v4872 = vpop.f32.mrf.mxu0
    %4873 = vdwg.mxu0
    %4874 = vmatprep.subr.mxu0 0.0
    %v4875 = vand.u32 %v4747, 4294901760
    %v4876 = vsub.f32 %v4747, %v4875
    %v4877 = vand.u32 %v4876, 4294901760
    %v4878 = vsub.f32 %v4876, %v4877
    %v4879 = vand.u32 %v4878, 4294901760
    %4880 = vmatpush1.msra.mxu0 %v4879
    %4881 = vmatprep.subr.mxu0 0.0
    %v4882 = vand.u32 %v4746, 4294901760
    %v4883 = vsub.f32 %v4746, %v4882
    %v4884 = vand.u32 %v4883, 4294901760
    %v4885 = vsub.f32 %v4883, %v4884
    %v4886 = vand.u32 %v4885, 4294901760
    %4887 = vmatpush1.msra.mxu0 %v4886
    %4888 = vmatprep.subr.mxu0 0.0
    %v4889 = vand.u32 %v4745, 4294901760
    %v4890 = vsub.f32 %v4745, %v4889
    %v4891 = vand.u32 %v4890, 4294901760
    %v4892 = vsub.f32 %v4890, %v4891
    %v4893 = vand.u32 %v4892, 4294901760
    %4894 = vmatpush1.msra.mxu0 %v4893
    %4895 = vmatprep.subr.mxu0 0.0
    %v4896 = vand.u32 %v4744, 4294901760
    %v4897 = vsub.f32 %v4744, %v4896
    %v4898 = vand.u32 %v4897, 4294901760
    %v4899 = vsub.f32 %v4897, %v4898
    %v4900 = vand.u32 %v4899, 4294901760
    %4901 = vmatpush1.msra.mxu0 %v4900
    %4902 = vmatprep.subr.mxu0 0.0
    %v4903 = vand.u32 %v4743, 4294901760
    %v4904 = vsub.f32 %v4743, %v4903
    %v4905 = vand.u32 %v4904, 4294901760
    %v4906 = vsub.f32 %v4904, %v4905
    %v4907 = vand.u32 %v4906, 4294901760
    %4908 = vmatpush1.msra.mxu0 %v4907
    %4909 = vmatprep.subr.mxu0 0.0
    %v4910 = vand.u32 %v4742, 4294901760
    %v4911 = vsub.f32 %v4742, %v4910
    %v4912 = vand.u32 %v4911, 4294901760
    %v4913 = vsub.f32 %v4911, %v4912
    %v4914 = vand.u32 %v4913, 4294901760
    %4915 = vmatpush1.msra.mxu0 %v4914
    %4916 = vmatprep.subr.mxu0 0.0
    %v4917 = vand.u32 %v4741, 4294901760
    %v4918 = vsub.f32 %v4741, %v4917
    %v4919 = vand.u32 %v4918, 4294901760
    %v4920 = vsub.f32 %v4918, %v4919
    %v4921 = vand.u32 %v4920, 4294901760
    %4922 = vmatpush1.msra.mxu0 %v4921
    %4923 = vmatprep.subr.mxu0 0.0
    %v4924 = vand.u32 %v4740, 4294901760
    %v4925 = vsub.f32 %v4740, %v4924
    %v4926 = vand.u32 %v4925, 4294901760
    %v4927 = vsub.f32 %v4925, %v4926
    %v4928 = vand.u32 %v4927, 4294901760
    %4929 = vmatpush1.msra.mxu0 %v4928
    %4930 = vmatprep.subr.mxu0 0.0
    %v4931 = vand.u32 %v4739, 4294901760
    %v4932 = vsub.f32 %v4739, %v4931
    %v4933 = vand.u32 %v4932, 4294901760
    %v4934 = vsub.f32 %v4932, %v4933
    %v4935 = vand.u32 %v4934, 4294901760
    %4936 = vmatpush1.msra.mxu0 %v4935
    %4937 = vmatprep.subr.mxu0 0.0
    %v4938 = vand.u32 %v4738, 4294901760
    %v4939 = vsub.f32 %v4738, %v4938
    %v4940 = vand.u32 %v4939, 4294901760
    %v4941 = vsub.f32 %v4939, %v4940
    %v4942 = vand.u32 %v4941, 4294901760
    %4943 = vmatpush1.msra.mxu0 %v4942
    %4944 = vmatprep.subr.mxu0 0.0
    %v4945 = vand.u32 %v4737, 4294901760
    %v4946 = vsub.f32 %v4737, %v4945
    %v4947 = vand.u32 %v4946, 4294901760
    %v4948 = vsub.f32 %v4946, %v4947
    %v4949 = vand.u32 %v4948, 4294901760
    %4950 = vmatpush1.msra.mxu0 %v4949
    %4951 = vmatprep.subr.mxu0 0.0
    %v4952 = vand.u32 %v4736, 4294901760
    %v4953 = vsub.f32 %v4736, %v4952
    %v4954 = vand.u32 %v4953, 4294901760
    %v4955 = vsub.f32 %v4953, %v4954
    %v4956 = vand.u32 %v4955, 4294901760
    %4957 = vmatpush1.msra.mxu0 %v4956
    %4958 = vmatprep.subr.mxu0 0.0
    %v4959 = vand.u32 %v4735, 4294901760
    %v4960 = vsub.f32 %v4735, %v4959
    %v4961 = vand.u32 %v4960, 4294901760
    %v4962 = vsub.f32 %v4960, %v4961
    %v4963 = vand.u32 %v4962, 4294901760
    %4964 = vmatpush1.msra.mxu0 %v4963
    %4965 = vmatprep.subr.mxu0 0.0
    %v4966 = vand.u32 %v4734, 4294901760
    %v4967 = vsub.f32 %v4734, %v4966
    %v4968 = vand.u32 %v4967, 4294901760
    %v4969 = vsub.f32 %v4967, %v4968
    %v4970 = vand.u32 %v4969, 4294901760
    %4971 = vmatpush1.msra.mxu0 %v4970
    %4972 = vmatprep.subr.mxu0 0.0
    %v4973 = vand.u32 %v4733, 4294901760
    %v4974 = vsub.f32 %v4733, %v4973
    %v4975 = vand.u32 %v4974, 4294901760
    %v4976 = vsub.f32 %v4974, %v4975
    %v4977 = vand.u32 %v4976, 4294901760
    %4978 = vmatpush1.msra.mxu0 %v4977
    %4979 = vmatprep.subr.mxu0 0.0
    %v4980 = vand.u32 %v4732, 4294901760
    %v4981 = vsub.f32 %v4732, %v4980
    %v4982 = vand.u32 %v4981, 4294901760
    %v4983 = vsub.f32 %v4981, %v4982
    %v4984 = vand.u32 %v4983, 4294901760
    %4985 = vmatpush1.msra.mxu0 %v4984
    %4986 = vmatprep.subr.mxu0 0.0
    %4987 = vmatpush2.msra.mxu0 0.0
    %4988 = vmatprep.subr.mxu0 0.0
    %4989 = vmatpush2.msra.mxu0 0.0
    %4990 = vmatprep.subr.mxu0 0.0
    %4991 = vmatpush2.msra.mxu0 0.0
    %4992 = vmatprep.subr.mxu0 0.0
    %4993 = vmatpush2.msra.mxu0 0.0
    %4994 = vmatprep.subr.mxu0 0.0
    %4995 = vmatpush2.msra.mxu0 0.0
    %4996 = vmatprep.subr.mxu0 0.0
    %4997 = vmatpush2.msra.mxu0 0.0
    %4998 = vmatprep.subr.mxu0 0.0
    %4999 = vmatpush2.msra.mxu0 0.0
    %5000 = vmatprep.subr.mxu0 0.0
    %5001 = vmatpush2.msra.mxu0 0.0
    %5002 = vmatprep.subr.mxu0 0.0
    %5003 = vmatpush2.msra.mxu0 0.0
    %5004 = vmatprep.subr.mxu0 0.0
    %5005 = vmatpush2.msra.mxu0 0.0
    %5006 = vmatprep.subr.mxu0 0.0
    %5007 = vmatpush2.msra.mxu0 0.0
    %5008 = vmatprep.subr.mxu0 0.0
    %5009 = vmatpush2.msra.mxu0 0.0
    %5010 = vmatprep.subr.mxu0 0.0
    %5011 = vmatpush2.msra.mxu0 0.0
    %5012 = vmatprep.subr.mxu0 0.0
    %5013 = vmatpush2.msra.mxu0 0.0
    %5014 = vmatprep.subr.mxu0 0.0
    %5015 = vmatpush2.msra.mxu0 0.0
    %5016 = vmatprep.subr.mxu0 0.0
    %5017 = vmatpush2.msra.mxu0 0.0
    %5018 = vmatprep.mubr.f32.mxu0 0.0
    %v5019 = vand.u32 %v4728, 4294901760
    %5020 = vmatmul.mubr.f32.gmra.mxu0 %v5019
    %v5021 = vpop.f32.mrf.mxu0
    %v5022 = vadd.f32 %v4841, %v5021
    %v5023 = vpop.f32.mrf.mxu0
    %5024 = vmatprep.mubr.f32.mxu0 0.0
    %v5025 = vand.u32 %v4729, 4294901760
    %5026 = vmatmul.mubr.f32.gmra.mxu0 %v5025
    %v5027 = vpop.f32.mrf.mxu0
    %v5028 = vadd.f32 %v4851, %v5027
    %v5029 = vpop.f32.mrf.mxu0
    %5030 = vmatprep.mubr.f32.mxu0 0.0
    %v5031 = vand.u32 %v4730, 4294901760
    %5032 = vmatmul.mubr.f32.gmra.mxu0 %v5031
    %v5033 = vpop.f32.mrf.mxu0
    %v5034 = vadd.f32 %v4861, %v5033
    %v5035 = vpop.f32.mrf.mxu0
    %5036 = vmatprep.mubr.f32.mxu0 0.0
    %v5037 = vand.u32 %v4731, 4294901760
    %5038 = vmatmul.mubr.f32.gmra.mxu0 %v5037
    %v5039 = vpop.f32.mrf.mxu0
    %v5040 = vadd.f32 %v4871, %v5039
    %v5041 = vpop.f32.mrf.mxu0
    %5042 = vdwg.mxu0
    %5043 = vmatprep.subr.mxu0 0.0
    %v5044 = vand.u32 %v4747, 4294901760
    %v5045 = vsub.f32 %v4747, %v5044
    %5046 = vmatpush1.msra.mxu0 %v5045
    %5047 = vmatprep.subr.mxu0 0.0
    %v5048 = vand.u32 %v4746, 4294901760
    %v5049 = vsub.f32 %v4746, %v5048
    %5050 = vmatpush1.msra.mxu0 %v5049
    %5051 = vmatprep.subr.mxu0 0.0
    %v5052 = vand.u32 %v4745, 4294901760
    %v5053 = vsub.f32 %v4745, %v5052
    %5054 = vmatpush1.msra.mxu0 %v5053
    %5055 = vmatprep.subr.mxu0 0.0
    %v5056 = vand.u32 %v4744, 4294901760
    %v5057 = vsub.f32 %v4744, %v5056
    %5058 = vmatpush1.msra.mxu0 %v5057
    %5059 = vmatprep.subr.mxu0 0.0
    %v5060 = vand.u32 %v4743, 4294901760
    %v5061 = vsub.f32 %v4743, %v5060
    %5062 = vmatpush1.msra.mxu0 %v5061
    %5063 = vmatprep.subr.mxu0 0.0
    %v5064 = vand.u32 %v4742, 4294901760
    %v5065 = vsub.f32 %v4742, %v5064
    %5066 = vmatpush1.msra.mxu0 %v5065
    %5067 = vmatprep.subr.mxu0 0.0
    %v5068 = vand.u32 %v4741, 4294901760
    %v5069 = vsub.f32 %v4741, %v5068
    %5070 = vmatpush1.msra.mxu0 %v5069
    %5071 = vmatprep.subr.mxu0 0.0
    %v5072 = vand.u32 %v4740, 4294901760
    %v5073 = vsub.f32 %v4740, %v5072
    %5074 = vmatpush1.msra.mxu0 %v5073
    %5075 = vmatprep.subr.mxu0 0.0
    %v5076 = vand.u32 %v4739, 4294901760
    %v5077 = vsub.f32 %v4739, %v5076
    %5078 = vmatpush1.msra.mxu0 %v5077
    %5079 = vmatprep.subr.mxu0 0.0
    %v5080 = vand.u32 %v4738, 4294901760
    %v5081 = vsub.f32 %v4738, %v5080
    %5082 = vmatpush1.msra.mxu0 %v5081
    %5083 = vmatprep.subr.mxu0 0.0
    %v5084 = vand.u32 %v4737, 4294901760
    %v5085 = vsub.f32 %v4737, %v5084
    %5086 = vmatpush1.msra.mxu0 %v5085
    %5087 = vmatprep.subr.mxu0 0.0
    %v5088 = vand.u32 %v4736, 4294901760
    %v5089 = vsub.f32 %v4736, %v5088
    %5090 = vmatpush1.msra.mxu0 %v5089
    %5091 = vmatprep.subr.mxu0 0.0
    %v5092 = vand.u32 %v4735, 4294901760
    %v5093 = vsub.f32 %v4735, %v5092
    %5094 = vmatpush1.msra.mxu0 %v5093
    %5095 = vmatprep.subr.mxu0 0.0
    %v5096 = vand.u32 %v4734, 4294901760
    %v5097 = vsub.f32 %v4734, %v5096
    %5098 = vmatpush1.msra.mxu0 %v5097
    %5099 = vmatprep.subr.mxu0 0.0
    %v5100 = vand.u32 %v4733, 4294901760
    %v5101 = vsub.f32 %v4733, %v5100
    %5102 = vmatpush1.msra.mxu0 %v5101
    %5103 = vmatprep.subr.mxu0 0.0
    %v5104 = vand.u32 %v4732, 4294901760
    %v5105 = vsub.f32 %v4732, %v5104
    %5106 = vmatpush1.msra.mxu0 %v5105
    %5107 = vmatprep.subr.mxu0 0.0
    %5108 = vmatpush2.msra.mxu0 0.0
    %5109 = vmatprep.subr.mxu0 0.0
    %5110 = vmatpush2.msra.mxu0 0.0
    %5111 = vmatprep.subr.mxu0 0.0
    %5112 = vmatpush2.msra.mxu0 0.0
    %5113 = vmatprep.subr.mxu0 0.0
    %5114 = vmatpush2.msra.mxu0 0.0
    %5115 = vmatprep.subr.mxu0 0.0
    %5116 = vmatpush2.msra.mxu0 0.0
    %5117 = vmatprep.subr.mxu0 0.0
    %5118 = vmatpush2.msra.mxu0 0.0
    %5119 = vmatprep.subr.mxu0 0.0
    %5120 = vmatpush2.msra.mxu0 0.0
    %5121 = vmatprep.subr.mxu0 0.0
    %5122 = vmatpush2.msra.mxu0 0.0
    %5123 = vmatprep.subr.mxu0 0.0
    %5124 = vmatpush2.msra.mxu0 0.0
    %5125 = vmatprep.subr.mxu0 0.0
    %5126 = vmatpush2.msra.mxu0 0.0
    %5127 = vmatprep.subr.mxu0 0.0
    %5128 = vmatpush2.msra.mxu0 0.0
    %5129 = vmatprep.subr.mxu0 0.0
    %5130 = vmatpush2.msra.mxu0 0.0
    %5131 = vmatprep.subr.mxu0 0.0
    %5132 = vmatpush2.msra.mxu0 0.0
    %5133 = vmatprep.subr.mxu0 0.0
    %5134 = vmatpush2.msra.mxu0 0.0
    %5135 = vmatprep.subr.mxu0 0.0
    %5136 = vmatpush2.msra.mxu0 0.0
    %5137 = vmatprep.subr.mxu0 0.0
    %5138 = vmatpush2.msra.mxu0 0.0
    %5139 = vmatprep.mubr.f32.mxu0 0.0
    %v5140 = vand.u32 %v4728, 4294901760
    %v5141 = vsub.f32 %v4728, %v5140
    %5142 = vmatmul.mubr.f32.gmra.mxu0 %v5141
    %v5143 = vpop.f32.mrf.mxu0
    %v5144 = vadd.f32 %v5022, %v5143
    %v5145 = vpop.f32.mrf.mxu0
    %5146 = vmatprep.mubr.f32.mxu0 0.0
    %v5147 = vand.u32 %v4729, 4294901760
    %v5148 = vsub.f32 %v4729, %v5147
    %5149 = vmatmul.mubr.f32.gmra.mxu0 %v5148
    %v5150 = vpop.f32.mrf.mxu0
    %v5151 = vadd.f32 %v5028, %v5150
    %v5152 = vpop.f32.mrf.mxu0
    %5153 = vmatprep.mubr.f32.mxu0 0.0
    %v5154 = vand.u32 %v4730, 4294901760
    %v5155 = vsub.f32 %v4730, %v5154
    %5156 = vmatmul.mubr.f32.gmra.mxu0 %v5155
    %v5157 = vpop.f32.mrf.mxu0
    %v5158 = vadd.f32 %v5034, %v5157
    %v5159 = vpop.f32.mrf.mxu0
    %5160 = vmatprep.mubr.f32.mxu0 0.0
    %v5161 = vand.u32 %v4731, 4294901760
    %v5162 = vsub.f32 %v4731, %v5161
    %5163 = vmatmul.mubr.f32.gmra.mxu0 %v5162
    %v5164 = vpop.f32.mrf.mxu0
    %v5165 = vadd.f32 %v5040, %v5164
    %v5166 = vpop.f32.mrf.mxu0
    %5167 = vdwg.mxu0
    %5168 = vmatprep.subr.mxu0 0.0
    %v5169 = vand.u32 %v4747, 4294901760
    %5170 = vmatpush1.msra.mxu0 %v5169
    %5171 = vmatprep.subr.mxu0 0.0
    %v5172 = vand.u32 %v4746, 4294901760
    %5173 = vmatpush1.msra.mxu0 %v5172
    %5174 = vmatprep.subr.mxu0 0.0
    %v5175 = vand.u32 %v4745, 4294901760
    %5176 = vmatpush1.msra.mxu0 %v5175
    %5177 = vmatprep.subr.mxu0 0.0
    %v5178 = vand.u32 %v4744, 4294901760
    %5179 = vmatpush1.msra.mxu0 %v5178
    %5180 = vmatprep.subr.mxu0 0.0
    %v5181 = vand.u32 %v4743, 4294901760
    %5182 = vmatpush1.msra.mxu0 %v5181
    %5183 = vmatprep.subr.mxu0 0.0
    %v5184 = vand.u32 %v4742, 4294901760
    %5185 = vmatpush1.msra.mxu0 %v5184
    %5186 = vmatprep.subr.mxu0 0.0
    %v5187 = vand.u32 %v4741, 4294901760
    %5188 = vmatpush1.msra.mxu0 %v5187
    %5189 = vmatprep.subr.mxu0 0.0
    %v5190 = vand.u32 %v4740, 4294901760
    %5191 = vmatpush1.msra.mxu0 %v5190
    %5192 = vmatprep.subr.mxu0 0.0
    %v5193 = vand.u32 %v4739, 4294901760
    %5194 = vmatpush1.msra.mxu0 %v5193
    %5195 = vmatprep.subr.mxu0 0.0
    %v5196 = vand.u32 %v4738, 4294901760
    %5197 = vmatpush1.msra.mxu0 %v5196
    %5198 = vmatprep.subr.mxu0 0.0
    %v5199 = vand.u32 %v4737, 4294901760
    %5200 = vmatpush1.msra.mxu0 %v5199
    %5201 = vmatprep.subr.mxu0 0.0
    %v5202 = vand.u32 %v4736, 4294901760
    %5203 = vmatpush1.msra.mxu0 %v5202
    %5204 = vmatprep.subr.mxu0 0.0
    %v5205 = vand.u32 %v4735, 4294901760
    %5206 = vmatpush1.msra.mxu0 %v5205
    %5207 = vmatprep.subr.mxu0 0.0
    %v5208 = vand.u32 %v4734, 4294901760
    %5209 = vmatpush1.msra.mxu0 %v5208
    %5210 = vmatprep.subr.mxu0 0.0
    %v5211 = vand.u32 %v4733, 4294901760
    %5212 = vmatpush1.msra.mxu0 %v5211
    %5213 = vmatprep.subr.mxu0 0.0
    %v5214 = vand.u32 %v4732, 4294901760
    %5215 = vmatpush1.msra.mxu0 %v5214
    %5216 = vmatprep.subr.mxu0 0.0
    %5217 = vmatpush2.msra.mxu0 0.0
    %5218 = vmatprep.subr.mxu0 0.0
    %5219 = vmatpush2.msra.mxu0 0.0
    %5220 = vmatprep.subr.mxu0 0.0
    %5221 = vmatpush2.msra.mxu0 0.0
    %5222 = vmatprep.subr.mxu0 0.0
    %5223 = vmatpush2.msra.mxu0 0.0
    %5224 = vmatprep.subr.mxu0 0.0
    %5225 = vmatpush2.msra.mxu0 0.0
    %5226 = vmatprep.subr.mxu0 0.0
    %5227 = vmatpush2.msra.mxu0 0.0
    %5228 = vmatprep.subr.mxu0 0.0
    %5229 = vmatpush2.msra.mxu0 0.0
    %5230 = vmatprep.subr.mxu0 0.0
    %5231 = vmatpush2.msra.mxu0 0.0
    %5232 = vmatprep.subr.mxu0 0.0
    %5233 = vmatpush2.msra.mxu0 0.0
    %5234 = vmatprep.subr.mxu0 0.0
    %5235 = vmatpush2.msra.mxu0 0.0
    %5236 = vmatprep.subr.mxu0 0.0
    %5237 = vmatpush2.msra.mxu0 0.0
    %5238 = vmatprep.subr.mxu0 0.0
    %5239 = vmatpush2.msra.mxu0 0.0
    %5240 = vmatprep.subr.mxu0 0.0
    %5241 = vmatpush2.msra.mxu0 0.0
    %5242 = vmatprep.subr.mxu0 0.0
    %5243 = vmatpush2.msra.mxu0 0.0
    %5244 = vmatprep.subr.mxu0 0.0
    %5245 = vmatpush2.msra.mxu0 0.0
    %5246 = vmatprep.subr.mxu0 0.0
    %5247 = vmatpush2.msra.mxu0 0.0
    %5248 = vmatprep.mubr.f32.mxu0 0.0
    %v5249 = vand.u32 %v4728, 4294901760
    %v5250 = vsub.f32 %v4728, %v5249
    %v5251 = vand.u32 %v5250, 4294901760
    %5252 = vmatmul.mubr.f32.gmra.mxu0 %v5251
    %v5253 = vpop.f32.mrf.mxu0
    %v5254 = vadd.f32 %v5144, %v5253
    %v5255 = vpop.f32.mrf.mxu0
    %5256 = vmatprep.mubr.f32.mxu0 0.0
    %v5257 = vand.u32 %v4729, 4294901760
    %v5258 = vsub.f32 %v4729, %v5257
    %v5259 = vand.u32 %v5258, 4294901760
    %5260 = vmatmul.mubr.f32.gmra.mxu0 %v5259
    %v5261 = vpop.f32.mrf.mxu0
    %v5262 = vadd.f32 %v5151, %v5261
    %v5263 = vpop.f32.mrf.mxu0
    %5264 = vmatprep.mubr.f32.mxu0 0.0
    %v5265 = vand.u32 %v4730, 4294901760
    %v5266 = vsub.f32 %v4730, %v5265
    %v5267 = vand.u32 %v5266, 4294901760
    %5268 = vmatmul.mubr.f32.gmra.mxu0 %v5267
    %v5269 = vpop.f32.mrf.mxu0
    %v5270 = vadd.f32 %v5158, %v5269
    %v5271 = vpop.f32.mrf.mxu0
    %5272 = vmatprep.mubr.f32.mxu0 0.0
    %v5273 = vand.u32 %v4731, 4294901760
    %v5274 = vsub.f32 %v4731, %v5273
    %v5275 = vand.u32 %v5274, 4294901760
    %5276 = vmatmul.mubr.f32.gmra.mxu0 %v5275
    %v5277 = vpop.f32.mrf.mxu0
    %v5278 = vadd.f32 %v5165, %v5277
    %v5279 = vpop.f32.mrf.mxu0
    %5280 = vdwg.mxu0
    %5281 = vmatprep.subr.mxu0 0.0
    %v5282 = vand.u32 %v4747, 4294901760
    %v5283 = vsub.f32 %v4747, %v5282
    %v5284 = vand.u32 %v5283, 4294901760
    %5285 = vmatpush1.msra.mxu0 %v5284
    %5286 = vmatprep.subr.mxu0 0.0
    %v5287 = vand.u32 %v4746, 4294901760
    %v5288 = vsub.f32 %v4746, %v5287
    %v5289 = vand.u32 %v5288, 4294901760
    %5290 = vmatpush1.msra.mxu0 %v5289
    %5291 = vmatprep.subr.mxu0 0.0
    %v5292 = vand.u32 %v4745, 4294901760
    %v5293 = vsub.f32 %v4745, %v5292
    %v5294 = vand.u32 %v5293, 4294901760
    %5295 = vmatpush1.msra.mxu0 %v5294
    %5296 = vmatprep.subr.mxu0 0.0
    %v5297 = vand.u32 %v4744, 4294901760
    %v5298 = vsub.f32 %v4744, %v5297
    %v5299 = vand.u32 %v5298, 4294901760
    %5300 = vmatpush1.msra.mxu0 %v5299
    %5301 = vmatprep.subr.mxu0 0.0
    %v5302 = vand.u32 %v4743, 4294901760
    %v5303 = vsub.f32 %v4743, %v5302
    %v5304 = vand.u32 %v5303, 4294901760
    %5305 = vmatpush1.msra.mxu0 %v5304
    %5306 = vmatprep.subr.mxu0 0.0
    %v5307 = vand.u32 %v4742, 4294901760
    %v5308 = vsub.f32 %v4742, %v5307
    %v5309 = vand.u32 %v5308, 4294901760
    %5310 = vmatpush1.msra.mxu0 %v5309
    %5311 = vmatprep.subr.mxu0 0.0
    %v5312 = vand.u32 %v4741, 4294901760
    %v5313 = vsub.f32 %v4741, %v5312
    %v5314 = vand.u32 %v5313, 4294901760
    %5315 = vmatpush1.msra.mxu0 %v5314
    %5316 = vmatprep.subr.mxu0 0.0
    %v5317 = vand.u32 %v4740, 4294901760
    %v5318 = vsub.f32 %v4740, %v5317
    %v5319 = vand.u32 %v5318, 4294901760
    %5320 = vmatpush1.msra.mxu0 %v5319
    %5321 = vmatprep.subr.mxu0 0.0
    %v5322 = vand.u32 %v4739, 4294901760
    %v5323 = vsub.f32 %v4739, %v5322
    %v5324 = vand.u32 %v5323, 4294901760
    %5325 = vmatpush1.msra.mxu0 %v5324
    %5326 = vmatprep.subr.mxu0 0.0
    %v5327 = vand.u32 %v4738, 4294901760
    %v5328 = vsub.f32 %v4738, %v5327
    %v5329 = vand.u32 %v5328, 4294901760
    %5330 = vmatpush1.msra.mxu0 %v5329
    %5331 = vmatprep.subr.mxu0 0.0
    %v5332 = vand.u32 %v4737, 4294901760
    %v5333 = vsub.f32 %v4737, %v5332
    %v5334 = vand.u32 %v5333, 4294901760
    %5335 = vmatpush1.msra.mxu0 %v5334
    %5336 = vmatprep.subr.mxu0 0.0
    %v5337 = vand.u32 %v4736, 4294901760
    %v5338 = vsub.f32 %v4736, %v5337
    %v5339 = vand.u32 %v5338, 4294901760
    %5340 = vmatpush1.msra.mxu0 %v5339
    %5341 = vmatprep.subr.mxu0 0.0
    %v5342 = vand.u32 %v4735, 4294901760
    %v5343 = vsub.f32 %v4735, %v5342
    %v5344 = vand.u32 %v5343, 4294901760
    %5345 = vmatpush1.msra.mxu0 %v5344
    %5346 = vmatprep.subr.mxu0 0.0
    %v5347 = vand.u32 %v4734, 4294901760
    %v5348 = vsub.f32 %v4734, %v5347
    %v5349 = vand.u32 %v5348, 4294901760
    %5350 = vmatpush1.msra.mxu0 %v5349
    %5351 = vmatprep.subr.mxu0 0.0
    %v5352 = vand.u32 %v4733, 4294901760
    %v5353 = vsub.f32 %v4733, %v5352
    %v5354 = vand.u32 %v5353, 4294901760
    %5355 = vmatpush1.msra.mxu0 %v5354
    %5356 = vmatprep.subr.mxu0 0.0
    %v5357 = vand.u32 %v4732, 4294901760
    %v5358 = vsub.f32 %v4732, %v5357
    %v5359 = vand.u32 %v5358, 4294901760
    %5360 = vmatpush1.msra.mxu0 %v5359
    %5361 = vmatprep.subr.mxu0 0.0
    %5362 = vmatpush2.msra.mxu0 0.0
    %5363 = vmatprep.subr.mxu0 0.0
    %5364 = vmatpush2.msra.mxu0 0.0
    %5365 = vmatprep.subr.mxu0 0.0
    %5366 = vmatpush2.msra.mxu0 0.0
    %5367 = vmatprep.subr.mxu0 0.0
    %5368 = vmatpush2.msra.mxu0 0.0
    %5369 = vmatprep.subr.mxu0 0.0
    %5370 = vmatpush2.msra.mxu0 0.0
    %5371 = vmatprep.subr.mxu0 0.0
    %5372 = vmatpush2.msra.mxu0 0.0
    %5373 = vmatprep.subr.mxu0 0.0
    %5374 = vmatpush2.msra.mxu0 0.0
    %5375 = vmatprep.subr.mxu0 0.0
    %5376 = vmatpush2.msra.mxu0 0.0
    %5377 = vmatprep.subr.mxu0 0.0
    %5378 = vmatpush2.msra.mxu0 0.0
    %5379 = vmatprep.subr.mxu0 0.0
    %5380 = vmatpush2.msra.mxu0 0.0
    %5381 = vmatprep.subr.mxu0 0.0
    %5382 = vmatpush2.msra.mxu0 0.0
    %5383 = vmatprep.subr.mxu0 0.0
    %5384 = vmatpush2.msra.mxu0 0.0
    %5385 = vmatprep.subr.mxu0 0.0
    %5386 = vmatpush2.msra.mxu0 0.0
    %5387 = vmatprep.subr.mxu0 0.0
    %5388 = vmatpush2.msra.mxu0 0.0
    %5389 = vmatprep.subr.mxu0 0.0
    %5390 = vmatpush2.msra.mxu0 0.0
    %5391 = vmatprep.subr.mxu0 0.0
    %5392 = vmatpush2.msra.mxu0 0.0
    %5393 = vmatprep.mubr.f32.mxu0 0.0
    %v5394 = vand.u32 %v4728, 4294901760
    %5395 = vmatmul.mubr.f32.gmra.mxu0 %v5394
    %v5396 = vpop.f32.mrf.mxu0
    %v5397 = vadd.f32 %v5254, %v5396
    %v5398 = vpop.f32.mrf.mxu0
    %5399 = vmatprep.mubr.f32.mxu0 0.0
    %v5400 = vand.u32 %v4729, 4294901760
    %5401 = vmatmul.mubr.f32.gmra.mxu0 %v5400
    %v5402 = vpop.f32.mrf.mxu0
    %v5403 = vadd.f32 %v5262, %v5402
    %v5404 = vpop.f32.mrf.mxu0
    %5405 = vmatprep.mubr.f32.mxu0 0.0
    %v5406 = vand.u32 %v4730, 4294901760
    %5407 = vmatmul.mubr.f32.gmra.mxu0 %v5406
    %v5408 = vpop.f32.mrf.mxu0
    %v5409 = vadd.f32 %v5270, %v5408
    %v5410 = vpop.f32.mrf.mxu0
    %5411 = vmatprep.mubr.f32.mxu0 0.0
    %v5412 = vand.u32 %v4731, 4294901760
    %5413 = vmatmul.mubr.f32.gmra.mxu0 %v5412
    %v5414 = vpop.f32.mrf.mxu0
    %v5415 = vadd.f32 %v5278, %v5414
    %v5416 = vpop.f32.mrf.mxu0
    %5417 = vdwg.mxu0
    %5418 = vmatprep.subr.mxu0 0.0
    %v5419 = vand.u32 %v4747, 4294901760
    %5420 = vmatpush1.msra.mxu0 %v5419
    %5421 = vmatprep.subr.mxu0 0.0
    %v5422 = vand.u32 %v4746, 4294901760
    %5423 = vmatpush1.msra.mxu0 %v5422
    %5424 = vmatprep.subr.mxu0 0.0
    %v5425 = vand.u32 %v4745, 4294901760
    %5426 = vmatpush1.msra.mxu0 %v5425
    %5427 = vmatprep.subr.mxu0 0.0
    %v5428 = vand.u32 %v4744, 4294901760
    %5429 = vmatpush1.msra.mxu0 %v5428
    %5430 = vmatprep.subr.mxu0 0.0
    %v5431 = vand.u32 %v4743, 4294901760
    %5432 = vmatpush1.msra.mxu0 %v5431
    %5433 = vmatprep.subr.mxu0 0.0
    %v5434 = vand.u32 %v4742, 4294901760
    %5435 = vmatpush1.msra.mxu0 %v5434
    %5436 = vmatprep.subr.mxu0 0.0
    %v5437 = vand.u32 %v4741, 4294901760
    %5438 = vmatpush1.msra.mxu0 %v5437
    %5439 = vmatprep.subr.mxu0 0.0
    %v5440 = vand.u32 %v4740, 4294901760
    %5441 = vmatpush1.msra.mxu0 %v5440
    %5442 = vmatprep.subr.mxu0 0.0
    %v5443 = vand.u32 %v4739, 4294901760
    %5444 = vmatpush1.msra.mxu0 %v5443
    %5445 = vmatprep.subr.mxu0 0.0
    %v5446 = vand.u32 %v4738, 4294901760
    %5447 = vmatpush1.msra.mxu0 %v5446
    %5448 = vmatprep.subr.mxu0 0.0
    %v5449 = vand.u32 %v4737, 4294901760
    %5450 = vmatpush1.msra.mxu0 %v5449
    %5451 = vmatprep.subr.mxu0 0.0
    %v5452 = vand.u32 %v4736, 4294901760
    %5453 = vmatpush1.msra.mxu0 %v5452
    %5454 = vmatprep.subr.mxu0 0.0
    %v5455 = vand.u32 %v4735, 4294901760
    %5456 = vmatpush1.msra.mxu0 %v5455
    %5457 = vmatprep.subr.mxu0 0.0
    %v5458 = vand.u32 %v4734, 4294901760
    %5459 = vmatpush1.msra.mxu0 %v5458
    %5460 = vmatprep.subr.mxu0 0.0
    %v5461 = vand.u32 %v4733, 4294901760
    %5462 = vmatpush1.msra.mxu0 %v5461
    %5463 = vmatprep.subr.mxu0 0.0
    %v5464 = vand.u32 %v4732, 4294901760
    %5465 = vmatpush1.msra.mxu0 %v5464
    %5466 = vmatprep.subr.mxu0 0.0
    %5467 = vmatpush2.msra.mxu0 0.0
    %5468 = vmatprep.subr.mxu0 0.0
    %5469 = vmatpush2.msra.mxu0 0.0
    %5470 = vmatprep.subr.mxu0 0.0
    %5471 = vmatpush2.msra.mxu0 0.0
    %5472 = vmatprep.subr.mxu0 0.0
    %5473 = vmatpush2.msra.mxu0 0.0
    %5474 = vmatprep.subr.mxu0 0.0
    %5475 = vmatpush2.msra.mxu0 0.0
    %5476 = vmatprep.subr.mxu0 0.0
    %5477 = vmatpush2.msra.mxu0 0.0
    %5478 = vmatprep.subr.mxu0 0.0
    %5479 = vmatpush2.msra.mxu0 0.0
    %5480 = vmatprep.subr.mxu0 0.0
    %5481 = vmatpush2.msra.mxu0 0.0
    %5482 = vmatprep.subr.mxu0 0.0
    %5483 = vmatpush2.msra.mxu0 0.0
    %5484 = vmatprep.subr.mxu0 0.0
    %5485 = vmatpush2.msra.mxu0 0.0
    %5486 = vmatprep.subr.mxu0 0.0
    %5487 = vmatpush2.msra.mxu0 0.0
    %5488 = vmatprep.subr.mxu0 0.0
    %5489 = vmatpush2.msra.mxu0 0.0
    %5490 = vmatprep.subr.mxu0 0.0
    %5491 = vmatpush2.msra.mxu0 0.0
    %5492 = vmatprep.subr.mxu0 0.0
    %5493 = vmatpush2.msra.mxu0 0.0
    %5494 = vmatprep.subr.mxu0 0.0
    %5495 = vmatpush2.msra.mxu0 0.0
    %5496 = vmatprep.subr.mxu0 0.0
    %5497 = vmatpush2.msra.mxu0 0.0
    %5498 = vmatprep.mubr.f32.mxu0 0.0
    %v5499 = vand.u32 %v4728, 4294901760
    %5500 = vmatmul.mubr.f32.gmra.mxu0 %v5499
    %v5501 = vpop.f32.mrf.mxu0
    %v5502 = vadd.f32 %v5397, %v5501
    %v5503 = vpop.f32.mrf.mxu0
    %5504 = vmatprep.mubr.f32.mxu0 0.0
    %v5505 = vand.u32 %v4729, 4294901760
    %5506 = vmatmul.mubr.f32.gmra.mxu0 %v5505
    %v5507 = vpop.f32.mrf.mxu0
    %v5508 = vadd.f32 %v5403, %v5507
    %v5509 = vpop.f32.mrf.mxu0
    %5510 = vmatprep.mubr.f32.mxu0 0.0
    %v5511 = vand.u32 %v4730, 4294901760
    %5512 = vmatmul.mubr.f32.gmra.mxu0 %v5511
    %v5513 = vpop.f32.mrf.mxu0
    %v5514 = vadd.f32 %v5409, %v5513
    %v5515 = vpop.f32.mrf.mxu0
    %5516 = vmatprep.mubr.f32.mxu0 0.0
    %v5517 = vand.u32 %v4731, 4294901760
    %5518 = vmatmul.mubr.f32.gmra.mxu0 %v5517
    %v5519 = vpop.f32.mrf.mxu0
    %v5520 = vadd.f32 %v5415, %v5519
    %v5521 = vpop.f32.mrf.mxu0
    %5522 = vdwg.mxu0
    %v5523 = vsel %vm4663, %v5502, 0.0
    %v5524 = vsel %vm4663, %v5508, 0.0
    %v5525 = vadd.f32 %v5523, %v5524
    %v5526 = vsel %vm4663, %v5514, 0.0
    %v5527 = vadd.f32 %v5525, %v5526
    %v5528 = vsel %vm4663, %v5520, 0.0
    %v5529 = vadd.f32 %v5527, %v5528
    %v5530 = vrot.slane %v5529, 4
    %v5531 = vadd.f32 %v5529, %v5530
    %v5532 = vrot.slane %v5531, 2
    %v5533 = vadd.f32 %v5531, %v5532
    %v5534 = vrot.slane %v5533, 1
    %v5535 = vadd.f32 %v5533, %v5534
    %v5536 = vrcp.pop 32.0
    %v5537 = vmul.f32 %v5535, %v5536
    %v5538 = vsub.f32 %v5502, %v5537
    %v5539 = vsub.f32 %v5508, %v5537
    %v5540 = vsub.f32 %v5514, %v5537
    %v5541 = vsub.f32 %v5520, %v5537
    %v5542 = vmul.f32 %v5538, %v5538
    %v5543 = vmul.f32 %v5539, %v5539
    %v5544 = vmul.f32 %v5540, %v5540
    %v5545 = vmul.f32 %v5541, %v5541
    %v5546 = vsel %vm4663, %v5542, 0.0
    %v5547 = vsel %vm4663, %v5543, 0.0
    %v5548 = vadd.f32 %v5546, %v5547
    %v5549 = vsel %vm4663, %v5544, 0.0
    %v5550 = vadd.f32 %v5548, %v5549
    %v5551 = vsel %vm4663, %v5545, 0.0
    %v5552 = vadd.f32 %v5550, %v5551
    %v5553 = vrot.slane %v5552, 4
    %v5554 = vadd.f32 %v5552, %v5553
    %v5555 = vrot.slane %v5554, 2
    %v5556 = vadd.f32 %v5554, %v5555
    %v5557 = vrot.slane %v5556, 1
    %v5558 = vadd.f32 %v5556, %v5557
    %v5559 = vmul.f32 %v5558, %v5536
    %v5560 = vadd.f32 %v5559, 1e-05
    %v5561 = vrsqrt.pop %v5560
    %v5562 = vmul.f32 %v5538, %v5561
    %v5563 = vmul.f32 %v5539, %v5561
    %v5564 = vmul.f32 %v5540, %v5561
    %v5565 = vmul.f32 %v5541, %v5561
    %v5566 = vld [vmem:[%s5 + $0x1] sm:$0x1]
    %v5567 = vlaneseq
    %v5568 = vshrl.u32 %v5567, 7
    %v5569 = vsub.s32 0, %v5568
    %v5570 = vrot.slane %v5566, %v5569
    %v5571 = vmul.f32 %v5562, %v5570
    %v5572 = vmul.f32 %v5563, %v5570
    %v5573 = vmul.f32 %v5564, %v5570
    %v5574 = vmul.f32 %v5565, %v5570
    %v5575 = vld [vmem:[%s5 + $0x2] sm:$0x1]
    %v5576 = vlaneseq
    %v5577 = vshrl.u32 %v5576, 7
    %v5578 = vsub.s32 0, %v5577
    %v5579 = vrot.slane %v5575, %v5578
    %v5580 = vadd.f32 %v5571, %v5579
    %v5581 = vadd.f32 %v5572, %v5579
    %v5582 = vadd.f32 %v5573, %v5579
    %v5583 = vadd.f32 %v5574, %v5579
    %vm5584 = vcmp.ge.f32.partialorder %v5580, 0.0
    %vm5585 = vcmp.ge.f32.partialorder %v5581, 0.0
    %vm5586 = vcmp.ge.f32.partialorder %v5582, 0.0
    %vm5587 = vcmp.ge.f32.partialorder %v5583, 0.0
    %v5588 = vmul.f32 %v5580, 0.2
    %v5589 = vmul.f32 %v5581, 0.2
    %v5590 = vmul.f32 %v5582, 0.2
    %v5591 = vmul.f32 %v5583, 0.2
    %v5592 = vsel %vm5584, %v5580, %v5588
    %v5593 = vsel %vm5585, %v5581, %v5589
    %v5594 = vsel %vm5586, %v5582, %v5590
    %v5595 = vsel %vm5587, %v5583, %v5591
    %v5596 = vld [vmem:[%s6] sm:$0xf]
    %v5597 = vld [vmem:[%s6 + $0x4] sm:$0xf]
    %v5598 = vld [vmem:[%s6 + $0x8] sm:$0xf]
    %v5599 = vld [vmem:[%s6 + $0xc] sm:$0xf]
    %v5600 = vld [vmem:[%s6 + $0x10] sm:$0xf]
    %v5601 = vld [vmem:[%s6 + $0x14] sm:$0xf]
    %v5602 = vld [vmem:[%s6 + $0x18] sm:$0xf]
    %v5603 = vld [vmem:[%s6 + $0x1c] sm:$0xf]
    %v5604 = vld [vmem:[%s6 + $0x20] sm:$0xf]
    %v5605 = vld [vmem:[%s6 + $0x24] sm:$0xf]
    %v5606 = vld [vmem:[%s6 + $0x28] sm:$0xf]
    %v5607 = vld [vmem:[%s6 + $0x2c] sm:$0xf]
    %v5608 = vld [vmem:[%s6 + $0x30] sm:$0xf]
    %v5609 = vld [vmem:[%s6 + $0x34] sm:$0xf]
    %v5610 = vld [vmem:[%s6 + $0x38] sm:$0xf]
    %v5611 = vld [vmem:[%s6 + $0x3c] sm:$0xf]
    %v5612 = vunpack.c.l.bf16 %v5596
    %v5613 = vunpack.c.l.bf16 %v5597
    %v5614 = vunpack.c.l.bf16 %v5598
    %v5615 = vunpack.c.l.bf16 %v5599
    %v5616 = vunpack.c.l.bf16 %v5600
    %v5617 = vunpack.c.l.bf16 %v5601
    %v5618 = vunpack.c.l.bf16 %v5602
    %v5619 = vunpack.c.l.bf16 %v5603
    %v5620 = vunpack.c.l.bf16 %v5604
    %v5621 = vunpack.c.l.bf16 %v5605
    %v5622 = vunpack.c.l.bf16 %v5606
    %v5623 = vunpack.c.l.bf16 %v5607
    %v5624 = vunpack.c.l.bf16 %v5608
    %v5625 = vunpack.c.l.bf16 %v5609
    %v5626 = vunpack.c.l.bf16 %v5610
    %v5627 = vunpack.c.l.bf16 %v5611
    %v5629 = vsel %vm4673, %v5612, 0
    %v5632 = vsel %vm4673, %v5613, 0
    %v5635 = vsel %vm4673, %v5614, 0
    %v5638 = vsel %vm4673, %v5615, 0
    %v5641 = vsel %vm4673, %v5616, 0
    %v5644 = vsel %vm4673, %v5617, 0
    %v5647 = vsel %vm4673, %v5618, 0
    %v5650 = vsel %vm4673, %v5619, 0
    %v5653 = vsel %vm4673, %v5620, 0
    %v5656 = vsel %vm4673, %v5621, 0
    %v5659 = vsel %vm4673, %v5622, 0
    %v5662 = vsel %vm4673, %v5623, 0
    %v5665 = vsel %vm4673, %v5624, 0
    %v5668 = vsel %vm4673, %v5625, 0
    %v5671 = vsel %vm4673, %v5626, 0
    %v5674 = vsel %vm4673, %v5627, 0
    %5676 = vmatprep.subr.mxu0 0.0
    %5677 = vmatpush1.msra.mxu0 0.0
    %5678 = vmatprep.subr.mxu0 0.0
    %5679 = vmatpush1.msra.mxu0 0.0
    %5680 = vmatprep.subr.mxu0 0.0
    %5681 = vmatpush1.msra.mxu0 0.0
    %5682 = vmatprep.subr.mxu0 0.0
    %5683 = vmatpush1.msra.mxu0 0.0
    %5684 = vmatprep.subr.mxu0 0.0
    %5685 = vmatpush1.msra.mxu0 0.0
    %5686 = vmatprep.subr.mxu0 0.0
    %5687 = vmatpush1.msra.mxu0 0.0
    %5688 = vmatprep.subr.mxu0 0.0
    %5689 = vmatpush1.msra.mxu0 0.0
    %5690 = vmatprep.subr.mxu0 0.0
    %5691 = vmatpush1.msra.mxu0 0.0
    %5692 = vmatprep.subr.mxu0 0.0
    %5693 = vmatpush1.msra.mxu0 0.0
    %5694 = vmatprep.subr.mxu0 0.0
    %5695 = vmatpush1.msra.mxu0 0.0
    %5696 = vmatprep.subr.mxu0 0.0
    %5697 = vmatpush1.msra.mxu0 0.0
    %5698 = vmatprep.subr.mxu0 0.0
    %5699 = vmatpush1.msra.mxu0 0.0
    %5700 = vmatprep.subr.mxu0 0.0
    %v5701 = vand.u32 %v5595, 4294901760
    %5702 = vmatpush1.msra.mxu0 %v5701
    %5703 = vmatprep.subr.mxu0 0.0
    %v5704 = vand.u32 %v5594, 4294901760
    %5705 = vmatpush1.msra.mxu0 %v5704
    %5706 = vmatprep.subr.mxu0 0.0
    %v5707 = vand.u32 %v5593, 4294901760
    %5708 = vmatpush1.msra.mxu0 %v5707
    %5709 = vmatprep.subr.mxu0 0.0
    %v5710 = vand.u32 %v5592, 4294901760
    %5711 = vmatpush1.msra.mxu0 %v5710
    %5712 = vmatprep.subr.mxu0 0.0
    %5713 = vmatpush2.msra.mxu0 0.0
    %5714 = vmatprep.subr.mxu0 0.0
    %5715 = vmatpush2.msra.mxu0 0.0
    %5716 = vmatprep.subr.mxu0 0.0
    %5717 = vmatpush2.msra.mxu0 0.0
    %5718 = vmatprep.subr.mxu0 0.0
    %5719 = vmatpush2.msra.mxu0 0.0
    %5720 = vmatprep.subr.mxu0 0.0
    %5721 = vmatpush2.msra.mxu0 0.0
    %5722 = vmatprep.subr.mxu0 0.0
    %5723 = vmatpush2.msra.mxu0 0.0
    %5724 = vmatprep.subr.mxu0 0.0
    %5725 = vmatpush2.msra.mxu0 0.0
    %5726 = vmatprep.subr.mxu0 0.0
    %5727 = vmatpush2.msra.mxu0 0.0
    %5728 = vmatprep.subr.mxu0 0.0
    %5729 = vmatpush2.msra.mxu0 0.0
    %5730 = vmatprep.subr.mxu0 0.0
    %5731 = vmatpush2.msra.mxu0 0.0
    %5732 = vmatprep.subr.mxu0 0.0
    %5733 = vmatpush2.msra.mxu0 0.0
    %5734 = vmatprep.subr.mxu0 0.0
    %5735 = vmatpush2.msra.mxu0 0.0
    %5736 = vmatprep.subr.mxu0 0.0
    %5737 = vmatpush2.msra.mxu0 0.0
    %5738 = vmatprep.subr.mxu0 0.0
    %5739 = vmatpush2.msra.mxu0 0.0
    %5740 = vmatprep.subr.mxu0 0.0
    %5741 = vmatpush2.msra.mxu0 0.0
    %5742 = vmatprep.subr.mxu0 0.0
    %5743 = vmatpush2.msra.mxu0 0.0
    %5744 = vmatprep.mubr.f32.mxu0 0.0
    %v5745 = vand.u32 %v5629, 4294901760
    %v5746 = vsub.f32 %v5629, %v5745
    %v5747 = vand.u32 %v5746, 4294901760
    %v5748 = vsub.f32 %v5746, %v5747
    %v5749 = vand.u32 %v5748, 4294901760
    %5750 = vmatmul.mubr.f32.gmra.mxu0 %v5749
    %v5751 = vpop.f32.mrf.mxu0
    %v5752 = vadd.f32 0.0, %v5751
    %v5753 = vpop.f32.mrf.mxu0
    %5754 = vmatprep.mubr.f32.mxu0 0.0
    %v5755 = vand.u32 %v5632, 4294901760
    %v5756 = vsub.f32 %v5632, %v5755
    %v5757 = vand.u32 %v5756, 4294901760
    %v5758 = vsub.f32 %v5756, %v5757
    %v5759 = vand.u32 %v5758, 4294901760
    %5760 = vmatmul.mubr.f32.gmra.mxu0 %v5759
    %v5761 = vpop.f32.mrf.mxu0
    %v5762 = vadd.f32 0.0, %v5761
    %v5763 = vpop.f32.mrf.mxu0
    %5764 = vmatprep.mubr.f32.mxu0 0.0
    %v5765 = vand.u32 %v5635, 4294901760
    %v5766 = vsub.f32 %v5635, %v5765
    %v5767 = vand.u32 %v5766, 4294901760
    %v5768 = vsub.f32 %v5766, %v5767
    %v5769 = vand.u32 %v5768, 4294901760
    %5770 = vmatmul.mubr.f32.gmra.mxu0 %v5769
    %v5771 = vpop.f32.mrf.mxu0
    %v5772 = vadd.f32 0.0, %v5771
    %v5773 = vpop.f32.mrf.mxu0
    %5774 = vmatprep.mubr.f32.mxu0 0.0
    %v5775 = vand.u32 %v5638, 4294901760
    %v5776 = vsub.f32 %v5638, %v5775
    %v5777 = vand.u32 %v5776, 4294901760
    %v5778 = vsub.f32 %v5776, %v5777
    %v5779 = vand.u32 %v5778, 4294901760
    %5780 = vmatmul.mubr.f32.gmra.mxu0 %v5779
    %v5781 = vpop.f32.mrf.mxu0
    %v5782 = vadd.f32 0.0, %v5781
    %v5783 = vpop.f32.mrf.mxu0
    %5784 = vmatprep.mubr.f32.mxu0 0.0
    %v5785 = vand.u32 %v5641, 4294901760
    %v5786 = vsub.f32 %v5641, %v5785
    %v5787 = vand.u32 %v5786, 4294901760
    %v5788 = vsub.f32 %v5786, %v5787
    %v5789 = vand.u32 %v5788, 4294901760
    %5790 = vmatmul.mubr.f32.gmra.mxu0 %v5789
    %v5791 = vpop.f32.mrf.mxu0
    %v5792 = vadd.f32 0.0, %v5791
    %v5793 = vpop.f32.mrf.mxu0
    %5794 = vmatprep.mubr.f32.mxu0 0.0
    %v5795 = vand.u32 %v5644, 4294901760
    %v5796 = vsub.f32 %v5644, %v5795
    %v5797 = vand.u32 %v5796, 4294901760
    %v5798 = vsub.f32 %v5796, %v5797
    %v5799 = vand.u32 %v5798, 4294901760
    %5800 = vmatmul.mubr.f32.gmra.mxu0 %v5799
    %v5801 = vpop.f32.mrf.mxu0
    %v5802 = vadd.f32 0.0, %v5801
    %v5803 = vpop.f32.mrf.mxu0
    %5804 = vmatprep.mubr.f32.mxu0 0.0
    %v5805 = vand.u32 %v5647, 4294901760
    %v5806 = vsub.f32 %v5647, %v5805
    %v5807 = vand.u32 %v5806, 4294901760
    %v5808 = vsub.f32 %v5806, %v5807
    %v5809 = vand.u32 %v5808, 4294901760
    %5810 = vmatmul.mubr.f32.gmra.mxu0 %v5809
    %v5811 = vpop.f32.mrf.mxu0
    %v5812 = vadd.f32 0.0, %v5811
    %v5813 = vpop.f32.mrf.mxu0
    %5814 = vmatprep.mubr.f32.mxu0 0.0
    %v5815 = vand.u32 %v5650, 4294901760
    %v5816 = vsub.f32 %v5650, %v5815
    %v5817 = vand.u32 %v5816, 4294901760
    %v5818 = vsub.f32 %v5816, %v5817
    %v5819 = vand.u32 %v5818, 4294901760
    %5820 = vmatmul.mubr.f32.gmra.mxu0 %v5819
    %v5821 = vpop.f32.mrf.mxu0
    %v5822 = vadd.f32 0.0, %v5821
    %v5823 = vpop.f32.mrf.mxu0
    %5824 = vmatprep.mubr.f32.mxu0 0.0
    %v5825 = vand.u32 %v5653, 4294901760
    %v5826 = vsub.f32 %v5653, %v5825
    %v5827 = vand.u32 %v5826, 4294901760
    %v5828 = vsub.f32 %v5826, %v5827
    %v5829 = vand.u32 %v5828, 4294901760
    %5830 = vmatmul.mubr.f32.gmra.mxu0 %v5829
    %v5831 = vpop.f32.mrf.mxu0
    %v5832 = vadd.f32 0.0, %v5831
    %v5833 = vpop.f32.mrf.mxu0
    %5834 = vmatprep.mubr.f32.mxu0 0.0
    %v5835 = vand.u32 %v5656, 4294901760
    %v5836 = vsub.f32 %v5656, %v5835
    %v5837 = vand.u32 %v5836, 4294901760
    %v5838 = vsub.f32 %v5836, %v5837
    %v5839 = vand.u32 %v5838, 4294901760
    %5840 = vmatmul.mubr.f32.gmra.mxu0 %v5839
    %v5841 = vpop.f32.mrf.mxu0
    %v5842 = vadd.f32 0.0, %v5841
    %v5843 = vpop.f32.mrf.mxu0
    %5844 = vmatprep.mubr.f32.mxu0 0.0
    %v5845 = vand.u32 %v5659, 4294901760
    %v5846 = vsub.f32 %v5659, %v5845
    %v5847 = vand.u32 %v5846, 4294901760
    %v5848 = vsub.f32 %v5846, %v5847
    %v5849 = vand.u32 %v5848, 4294901760
    %5850 = vmatmul.mubr.f32.gmra.mxu0 %v5849
    %v5851 = vpop.f32.mrf.mxu0
    %v5852 = vadd.f32 0.0, %v5851
    %v5853 = vpop.f32.mrf.mxu0
    %5854 = vmatprep.mubr.f32.mxu0 0.0
    %v5855 = vand.u32 %v5662, 4294901760
    %v5856 = vsub.f32 %v5662, %v5855
    %v5857 = vand.u32 %v5856, 4294901760
    %v5858 = vsub.f32 %v5856, %v5857
    %v5859 = vand.u32 %v5858, 4294901760
    %5860 = vmatmul.mubr.f32.gmra.mxu0 %v5859
    %v5861 = vpop.f32.mrf.mxu0
    %v5862 = vadd.f32 0.0, %v5861
    %v5863 = vpop.f32.mrf.mxu0
    %5864 = vmatprep.mubr.f32.mxu0 0.0
    %v5865 = vand.u32 %v5665, 4294901760
    %v5866 = vsub.f32 %v5665, %v5865
    %v5867 = vand.u32 %v5866, 4294901760
    %v5868 = vsub.f32 %v5866, %v5867
    %v5869 = vand.u32 %v5868, 4294901760
    %5870 = vmatmul.mubr.f32.gmra.mxu0 %v5869
    %v5871 = vpop.f32.mrf.mxu0
    %v5872 = vadd.f32 0.0, %v5871
    %v5873 = vpop.f32.mrf.mxu0
    %5874 = vmatprep.mubr.f32.mxu0 0.0
    %v5875 = vand.u32 %v5668, 4294901760
    %v5876 = vsub.f32 %v5668, %v5875
    %v5877 = vand.u32 %v5876, 4294901760
    %v5878 = vsub.f32 %v5876, %v5877
    %v5879 = vand.u32 %v5878, 4294901760
    %5880 = vmatmul.mubr.f32.gmra.mxu0 %v5879
    %v5881 = vpop.f32.mrf.mxu0
    %v5882 = vadd.f32 0.0, %v5881
    %v5883 = vpop.f32.mrf.mxu0
    %5884 = vmatprep.mubr.f32.mxu0 0.0
    %v5885 = vand.u32 %v5671, 4294901760
    %v5886 = vsub.f32 %v5671, %v5885
    %v5887 = vand.u32 %v5886, 4294901760
    %v5888 = vsub.f32 %v5886, %v5887
    %v5889 = vand.u32 %v5888, 4294901760
    %5890 = vmatmul.mubr.f32.gmra.mxu0 %v5889
    %v5891 = vpop.f32.mrf.mxu0
    %v5892 = vadd.f32 0.0, %v5891
    %v5893 = vpop.f32.mrf.mxu0
    %5894 = vmatprep.mubr.f32.mxu0 0.0
    %v5895 = vand.u32 %v5674, 4294901760
    %v5896 = vsub.f32 %v5674, %v5895
    %v5897 = vand.u32 %v5896, 4294901760
    %v5898 = vsub.f32 %v5896, %v5897
    %v5899 = vand.u32 %v5898, 4294901760
    %5900 = vmatmul.mubr.f32.gmra.mxu0 %v5899
    %v5901 = vpop.f32.mrf.mxu0
    %v5902 = vadd.f32 0.0, %v5901
    %v5903 = vpop.f32.mrf.mxu0
    %5904 = vdwg.mxu0
    %5905 = vmatprep.subr.mxu0 0.0
    %5906 = vmatpush1.msra.mxu0 0.0
    %5907 = vmatprep.subr.mxu0 0.0
    %5908 = vmatpush1.msra.mxu0 0.0
    %5909 = vmatprep.subr.mxu0 0.0
    %5910 = vmatpush1.msra.mxu0 0.0
    %5911 = vmatprep.subr.mxu0 0.0
    %5912 = vmatpush1.msra.mxu0 0.0
    %5913 = vmatprep.subr.mxu0 0.0
    %5914 = vmatpush1.msra.mxu0 0.0
    %5915 = vmatprep.subr.mxu0 0.0
    %5916 = vmatpush1.msra.mxu0 0.0
    %5917 = vmatprep.subr.mxu0 0.0
    %5918 = vmatpush1.msra.mxu0 0.0
    %5919 = vmatprep.subr.mxu0 0.0
    %5920 = vmatpush1.msra.mxu0 0.0
    %5921 = vmatprep.subr.mxu0 0.0
    %5922 = vmatpush1.msra.mxu0 0.0
    %5923 = vmatprep.subr.mxu0 0.0
    %5924 = vmatpush1.msra.mxu0 0.0
    %5925 = vmatprep.subr.mxu0 0.0
    %5926 = vmatpush1.msra.mxu0 0.0
    %5927 = vmatprep.subr.mxu0 0.0
    %5928 = vmatpush1.msra.mxu0 0.0
    %5929 = vmatprep.subr.mxu0 0.0
    %v5930 = vand.u32 %v5595, 4294901760
    %v5931 = vsub.f32 %v5595, %v5930
    %v5932 = vand.u32 %v5931, 4294901760
    %v5933 = vsub.f32 %v5931, %v5932
    %v5934 = vand.u32 %v5933, 4294901760
    %5935 = vmatpush1.msra.mxu0 %v5934
    %5936 = vmatprep.subr.mxu0 0.0
    %v5937 = vand.u32 %v5594, 4294901760
    %v5938 = vsub.f32 %v5594, %v5937
    %v5939 = vand.u32 %v5938, 4294901760
    %v5940 = vsub.f32 %v5938, %v5939
    %v5941 = vand.u32 %v5940, 4294901760
    %5942 = vmatpush1.msra.mxu0 %v5941
    %5943 = vmatprep.subr.mxu0 0.0
    %v5944 = vand.u32 %v5593, 4294901760
    %v5945 = vsub.f32 %v5593, %v5944
    %v5946 = vand.u32 %v5945, 4294901760
    %v5947 = vsub.f32 %v5945, %v5946
    %v5948 = vand.u32 %v5947, 4294901760
    %5949 = vmatpush1.msra.mxu0 %v5948
    %5950 = vmatprep.subr.mxu0 0.0
    %v5951 = vand.u32 %v5592, 4294901760
    %v5952 = vsub.f32 %v5592, %v5951
    %v5953 = vand.u32 %v5952, 4294901760
    %v5954 = vsub.f32 %v5952, %v5953
    %v5955 = vand.u32 %v5954, 4294901760
    %5956 = vmatpush1.msra.mxu0 %v5955
    %5957 = vmatprep.subr.mxu0 0.0
    %5958 = vmatpush2.msra.mxu0 0.0
    %5959 = vmatprep.subr.mxu0 0.0
    %5960 = vmatpush2.msra.mxu0 0.0
    %5961 = vmatprep.subr.mxu0 0.0
    %5962 = vmatpush2.msra.mxu0 0.0
    %5963 = vmatprep.subr.mxu0 0.0
    %5964 = vmatpush2.msra.mxu0 0.0
    %5965 = vmatprep.subr.mxu0 0.0
    %5966 = vmatpush2.msra.mxu0 0.0
    %5967 = vmatprep.subr.mxu0 0.0
    %5968 = vmatpush2.msra.mxu0 0.0
    %5969 = vmatprep.subr.mxu0 0.0
    %5970 = vmatpush2.msra.mxu0 0.0
    %5971 = vmatprep.subr.mxu0 0.0
    %5972 = vmatpush2.msra.mxu0 0.0
    %5973 = vmatprep.subr.mxu0 0.0
    %5974 = vmatpush2.msra.mxu0 0.0
    %5975 = vmatprep.subr.mxu0 0.0
    %5976 = vmatpush2.msra.mxu0 0.0
    %5977 = vmatprep.subr.mxu0 0.0
    %5978 = vmatpush2.msra.mxu0 0.0
    %5979 = vmatprep.subr.mxu0 0.0
    %5980 = vmatpush2.msra.mxu0 0.0
    %5981 = vmatprep.subr.mxu0 0.0
    %5982 = vmatpush2.msra.mxu0 0.0
    %5983 = vmatprep.subr.mxu0 0.0
    %5984 = vmatpush2.msra.mxu0 0.0
    %5985 = vmatprep.subr.mxu0 0.0
    %5986 = vmatpush2.msra.mxu0 0.0
    %5987 = vmatprep.subr.mxu0 0.0
    %5988 = vmatpush2.msra.mxu0 0.0
    %5989 = vmatprep.mubr.f32.mxu0 0.0
    %v5990 = vand.u32 %v5629, 4294901760
    %5991 = vmatmul.mubr.f32.gmra.mxu0 %v5990
    %v5992 = vpop.f32.mrf.mxu0
    %v5993 = vadd.f32 %v5752, %v5992
    %v5994 = vpop.f32.mrf.mxu0
    %5995 = vmatprep.mubr.f32.mxu0 0.0
    %v5996 = vand.u32 %v5632, 4294901760
    %5997 = vmatmul.mubr.f32.gmra.mxu0 %v5996
    %v5998 = vpop.f32.mrf.mxu0
    %v5999 = vadd.f32 %v5762, %v5998
    %v6000 = vpop.f32.mrf.mxu0
    %6001 = vmatprep.mubr.f32.mxu0 0.0
    %v6002 = vand.u32 %v5635, 4294901760
    %6003 = vmatmul.mubr.f32.gmra.mxu0 %v6002
    %v6004 = vpop.f32.mrf.mxu0
    %v6005 = vadd.f32 %v5772, %v6004
    %v6006 = vpop.f32.mrf.mxu0
    %6007 = vmatprep.mubr.f32.mxu0 0.0
    %v6008 = vand.u32 %v5638, 4294901760
    %6009 = vmatmul.mubr.f32.gmra.mxu0 %v6008
    %v6010 = vpop.f32.mrf.mxu0
    %v6011 = vadd.f32 %v5782, %v6010
    %v6012 = vpop.f32.mrf.mxu0
    %6013 = vmatprep.mubr.f32.mxu0 0.0
    %v6014 = vand.u32 %v5641, 4294901760
    %6015 = vmatmul.mubr.f32.gmra.mxu0 %v6014
    %v6016 = vpop.f32.mrf.mxu0
    %v6017 = vadd.f32 %v5792, %v6016
    %v6018 = vpop.f32.mrf.mxu0
    %6019 = vmatprep.mubr.f32.mxu0 0.0
    %v6020 = vand.u32 %v5644, 4294901760
    %6021 = vmatmul.mubr.f32.gmra.mxu0 %v6020
    %v6022 = vpop.f32.mrf.mxu0
    %v6023 = vadd.f32 %v5802, %v6022
    %v6024 = vpop.f32.mrf.mxu0
    %6025 = vmatprep.mubr.f32.mxu0 0.0
    %v6026 = vand.u32 %v5647, 4294901760
    %6027 = vmatmul.mubr.f32.gmra.mxu0 %v6026
    %v6028 = vpop.f32.mrf.mxu0
    %v6029 = vadd.f32 %v5812, %v6028
    %v6030 = vpop.f32.mrf.mxu0
    %6031 = vmatprep.mubr.f32.mxu0 0.0
    %v6032 = vand.u32 %v5650, 4294901760
    %6033 = vmatmul.mubr.f32.gmra.mxu0 %v6032
    %v6034 = vpop.f32.mrf.mxu0
    %v6035 = vadd.f32 %v5822, %v6034
    %v6036 = vpop.f32.mrf.mxu0
    %6037 = vmatprep.mubr.f32.mxu0 0.0
    %v6038 = vand.u32 %v5653, 4294901760
    %6039 = vmatmul.mubr.f32.gmra.mxu0 %v6038
    %v6040 = vpop.f32.mrf.mxu0
    %v6041 = vadd.f32 %v5832, %v6040
    %v6042 = vpop.f32.mrf.mxu0
    %6043 = vmatprep.mubr.f32.mxu0 0.0
    %v6044 = vand.u32 %v5656, 4294901760
    %6045 = vmatmul.mubr.f32.gmra.mxu0 %v6044
    %v6046 = vpop.f32.mrf.mxu0
    %v6047 = vadd.f32 %v5842, %v6046
    %v6048 = vpop.f32.mrf.mxu0
    %6049 = vmatprep.mubr.f32.mxu0 0.0
    %v6050 = vand.u32 %v5659, 4294901760
    %6051 = vmatmul.mubr.f32.gmra.mxu0 %v6050
    %v6052 = vpop.f32.mrf.mxu0
    %v6053 = vadd.f32 %v5852, %v6052
    %v6054 = vpop.f32.mrf.mxu0
    %6055 = vmatprep.mubr.f32.mxu0 0.0
    %v6056 = vand.u32 %v5662, 4294901760
    %6057 = vmatmul.mubr.f32.gmra.mxu0 %v6056
    %v6058 = vpop.f32.mrf.mxu0
    %v6059 = vadd.f32 %v5862, %v6058
    %v6060 = vpop.f32.mrf.mxu0
    %6061 = vmatprep.mubr.f32.mxu0 0.0
    %v6062 = vand.u32 %v5665, 4294901760
    %6063 = vmatmul.mubr.f32.gmra.mxu0 %v6062
    %v6064 = vpop.f32.mrf.mxu0
    %v6065 = vadd.f32 %v5872, %v6064
    %v6066 = vpop.f32.mrf.mxu0
    %6067 = vmatprep.mubr.f32.mxu0 0.0
    %v6068 = vand.u32 %v5668, 4294901760
    %6069 = vmatmul.mubr.f32.gmra.mxu0 %v6068
    %v6070 = vpop.f32.mrf.mxu0
    %v6071 = vadd.f32 %v5882, %v6070
    %v6072 = vpop.f32.mrf.mxu0
    %6073 = vmatprep.mubr.f32.mxu0 0.0
    %v6074 = vand.u32 %v5671, 4294901760
    %6075 = vmatmul.mubr.f32.gmra.mxu0 %v6074
    %v6076 = vpop.f32.mrf.mxu0
    %v6077 = vadd.f32 %v5892, %v6076
    %v6078 = vpop.f32.mrf.mxu0
    %6079 = vmatprep.mubr.f32.mxu0 0.0
    %v6080 = vand.u32 %v5674, 4294901760
    %6081 = vmatmul.mubr.f32.gmra.mxu0 %v6080
    %v6082 = vpop.f32.mrf.mxu0
    %v6083 = vadd.f32 %v5902, %v6082
    %v6084 = vpop.f32.mrf.mxu0
    %6085 = vdwg.mxu0
    %6086 = vmatprep.subr.mxu0 0.0
    %6087 = vmatpush1.msra.mxu0 0.0
    %6088 = vmatprep.subr.mxu0 0.0
    %6089 = vmatpush1.msra.mxu0 0.0
    %6090 = vmatprep.subr.mxu0 0.0
    %6091 = vmatpush1.msra.mxu0 0.0
    %6092 = vmatprep.subr.mxu0 0.0
    %6093 = vmatpush1.msra.mxu0 0.0
    %6094 = vmatprep.subr.mxu0 0.0
    %6095 = vmatpush1.msra.mxu0 0.0
    %6096 = vmatprep.subr.mxu0 0.0
    %6097 = vmatpush1.msra.mxu0 0.0
    %6098 = vmatprep.subr.mxu0 0.0
    %6099 = vmatpush1.msra.mxu0 0.0
    %6100 = vmatprep.subr.mxu0 0.0
    %6101 = vmatpush1.msra.mxu0 0.0
    %6102 = vmatprep.subr.mxu0 0.0
    %6103 = vmatpush1.msra.mxu0 0.0
    %6104 = vmatprep.subr.mxu0 0.0
    %6105 = vmatpush1.msra.mxu0 0.0
    %6106 = vmatprep.subr.mxu0 0.0
    %6107 = vmatpush1.msra.mxu0 0.0
    %6108 = vmatprep.subr.mxu0 0.0
    %6109 = vmatpush1.msra.mxu0 0.0
    %6110 = vmatprep.subr.mxu0 0.0
    %v6111 = vand.u32 %v5595, 4294901760
    %v6112 = vsub.f32 %v5595, %v6111
    %6113 = vmatpush1.msra.mxu0 %v6112
    %6114 = vmatprep.subr.mxu0 0.0
    %v6115 = vand.u32 %v5594, 4294901760
    %v6116 = vsub.f32 %v5594, %v6115
    %6117 = vmatpush1.msra.mxu0 %v6116
    %6118 = vmatprep.subr.mxu0 0.0
    %v6119 = vand.u32 %v5593, 4294901760
    %v6120 = vsub.f32 %v5593, %v6119
    %6121 = vmatpush1.msra.mxu0 %v6120
    %6122 = vmatprep.subr.mxu0 0.0
    %v6123 = vand.u32 %v5592, 4294901760
    %v6124 = vsub.f32 %v5592, %v6123
    %6125 = vmatpush1.msra.mxu0 %v6124
    %6126 = vmatprep.subr.mxu0 0.0
    %6127 = vmatpush2.msra.mxu0 0.0
    %6128 = vmatprep.subr.mxu0 0.0
    %6129 = vmatpush2.msra.mxu0 0.0
    %6130 = vmatprep.subr.mxu0 0.0
    %6131 = vmatpush2.msra.mxu0 0.0
    %6132 = vmatprep.subr.mxu0 0.0
    %6133 = vmatpush2.msra.mxu0 0.0
    %6134 = vmatprep.subr.mxu0 0.0
    %6135 = vmatpush2.msra.mxu0 0.0
    %6136 = vmatprep.subr.mxu0 0.0
    %6137 = vmatpush2.msra.mxu0 0.0
    %6138 = vmatprep.subr.mxu0 0.0
    %6139 = vmatpush2.msra.mxu0 0.0
    %6140 = vmatprep.subr.mxu0 0.0
    %6141 = vmatpush2.msra.mxu0 0.0
    %6142 = vmatprep.subr.mxu0 0.0
    %6143 = vmatpush2.msra.mxu0 0.0
    %6144 = vmatprep.subr.mxu0 0.0
    %6145 = vmatpush2.msra.mxu0 0.0
    %6146 = vmatprep.subr.mxu0 0.0
    %6147 = vmatpush2.msra.mxu0 0.0
    %6148 = vmatprep.subr.mxu0 0.0
    %6149 = vmatpush2.msra.mxu0 0.0
    %6150 = vmatprep.subr.mxu0 0.0
    %6151 = vmatpush2.msra.mxu0 0.0
    %6152 = vmatprep.subr.mxu0 0.0
    %6153 = vmatpush2.msra.mxu0 0.0
    %6154 = vmatprep.subr.mxu0 0.0
    %6155 = vmatpush2.msra.mxu0 0.0
    %6156 = vmatprep.subr.mxu0 0.0
    %6157 = vmatpush2.msra.mxu0 0.0
    %6158 = vmatprep.mubr.f32.mxu0 0.0
    %v6159 = vand.u32 %v5629, 4294901760
    %v6160 = vsub.f32 %v5629, %v6159
    %6161 = vmatmul.mubr.f32.gmra.mxu0 %v6160
    %v6162 = vpop.f32.mrf.mxu0
    %v6163 = vadd.f32 %v5993, %v6162
    %v6164 = vpop.f32.mrf.mxu0
    %6165 = vmatprep.mubr.f32.mxu0 0.0
    %v6166 = vand.u32 %v5632, 4294901760
    %v6167 = vsub.f32 %v5632, %v6166
    %6168 = vmatmul.mubr.f32.gmra.mxu0 %v6167
    %v6169 = vpop.f32.mrf.mxu0
    %v6170 = vadd.f32 %v5999, %v6169
    %v6171 = vpop.f32.mrf.mxu0
    %6172 = vmatprep.mubr.f32.mxu0 0.0
    %v6173 = vand.u32 %v5635, 4294901760
    %v6174 = vsub.f32 %v5635, %v6173
    %6175 = vmatmul.mubr.f32.gmra.mxu0 %v6174
    %v6176 = vpop.f32.mrf.mxu0
    %v6177 = vadd.f32 %v6005, %v6176
    %v6178 = vpop.f32.mrf.mxu0
    %6179 = vmatprep.mubr.f32.mxu0 0.0
    %v6180 = vand.u32 %v5638, 4294901760
    %v6181 = vsub.f32 %v5638, %v6180
    %6182 = vmatmul.mubr.f32.gmra.mxu0 %v6181
    %v6183 = vpop.f32.mrf.mxu0
    %v6184 = vadd.f32 %v6011, %v6183
    %v6185 = vpop.f32.mrf.mxu0
    %6186 = vmatprep.mubr.f32.mxu0 0.0
    %v6187 = vand.u32 %v5641, 4294901760
    %v6188 = vsub.f32 %v5641, %v6187
    %6189 = vmatmul.mubr.f32.gmra.mxu0 %v6188
    %v6190 = vpop.f32.mrf.mxu0
    %v6191 = vadd.f32 %v6017, %v6190
    %v6192 = vpop.f32.mrf.mxu0
    %6193 = vmatprep.mubr.f32.mxu0 0.0
    %v6194 = vand.u32 %v5644, 4294901760
    %v6195 = vsub.f32 %v5644, %v6194
    %6196 = vmatmul.mubr.f32.gmra.mxu0 %v6195
    %v6197 = vpop.f32.mrf.mxu0
    %v6198 = vadd.f32 %v6023, %v6197
    %v6199 = vpop.f32.mrf.mxu0
    %6200 = vmatprep.mubr.f32.mxu0 0.0
    %v6201 = vand.u32 %v5647, 4294901760
    %v6202 = vsub.f32 %v5647, %v6201
    %6203 = vmatmul.mubr.f32.gmra.mxu0 %v6202
    %v6204 = vpop.f32.mrf.mxu0
    %v6205 = vadd.f32 %v6029, %v6204
    %v6206 = vpop.f32.mrf.mxu0
    %6207 = vmatprep.mubr.f32.mxu0 0.0
    %v6208 = vand.u32 %v5650, 4294901760
    %v6209 = vsub.f32 %v5650, %v6208
    %6210 = vmatmul.mubr.f32.gmra.mxu0 %v6209
    %v6211 = vpop.f32.mrf.mxu0
    %v6212 = vadd.f32 %v6035, %v6211
    %v6213 = vpop.f32.mrf.mxu0
    %6214 = vmatprep.mubr.f32.mxu0 0.0
    %v6215 = vand.u32 %v5653, 4294901760
    %v6216 = vsub.f32 %v5653, %v6215
    %6217 = vmatmul.mubr.f32.gmra.mxu0 %v6216
    %v6218 = vpop.f32.mrf.mxu0
    %v6219 = vadd.f32 %v6041, %v6218
    %v6220 = vpop.f32.mrf.mxu0
    %6221 = vmatprep.mubr.f32.mxu0 0.0
    %v6222 = vand.u32 %v5656, 4294901760
    %v6223 = vsub.f32 %v5656, %v6222
    %6224 = vmatmul.mubr.f32.gmra.mxu0 %v6223
    %v6225 = vpop.f32.mrf.mxu0
    %v6226 = vadd.f32 %v6047, %v6225
    %v6227 = vpop.f32.mrf.mxu0
    %6228 = vmatprep.mubr.f32.mxu0 0.0
    %v6229 = vand.u32 %v5659, 4294901760
    %v6230 = vsub.f32 %v5659, %v6229
    %6231 = vmatmul.mubr.f32.gmra.mxu0 %v6230
    %v6232 = vpop.f32.mrf.mxu0
    %v6233 = vadd.f32 %v6053, %v6232
    %v6234 = vpop.f32.mrf.mxu0
    %6235 = vmatprep.mubr.f32.mxu0 0.0
    %v6236 = vand.u32 %v5662, 4294901760
    %v6237 = vsub.f32 %v5662, %v6236
    %6238 = vmatmul.mubr.f32.gmra.mxu0 %v6237
    %v6239 = vpop.f32.mrf.mxu0
    %v6240 = vadd.f32 %v6059, %v6239
    %v6241 = vpop.f32.mrf.mxu0
    %6242 = vmatprep.mubr.f32.mxu0 0.0
    %v6243 = vand.u32 %v5665, 4294901760
    %v6244 = vsub.f32 %v5665, %v6243
    %6245 = vmatmul.mubr.f32.gmra.mxu0 %v6244
    %v6246 = vpop.f32.mrf.mxu0
    %v6247 = vadd.f32 %v6065, %v6246
    %v6248 = vpop.f32.mrf.mxu0
    %6249 = vmatprep.mubr.f32.mxu0 0.0
    %v6250 = vand.u32 %v5668, 4294901760
    %v6251 = vsub.f32 %v5668, %v6250
    %6252 = vmatmul.mubr.f32.gmra.mxu0 %v6251
    %v6253 = vpop.f32.mrf.mxu0
    %v6254 = vadd.f32 %v6071, %v6253
    %v6255 = vpop.f32.mrf.mxu0
    %6256 = vmatprep.mubr.f32.mxu0 0.0
    %v6257 = vand.u32 %v5671, 4294901760
    %v6258 = vsub.f32 %v5671, %v6257
    %6259 = vmatmul.mubr.f32.gmra.mxu0 %v6258
    %v6260 = vpop.f32.mrf.mxu0
    %v6261 = vadd.f32 %v6077, %v6260
    %v6262 = vpop.f32.mrf.mxu0
    %6263 = vmatprep.mubr.f32.mxu0 0.0
    %v6264 = vand.u32 %v5674, 4294901760
    %v6265 = vsub.f32 %v5674, %v6264
    %6266 = vmatmul.mubr.f32.gmra.mxu0 %v6265
    %v6267 = vpop.f32.mrf.mxu0
    %v6268 = vadd.f32 %v6083, %v6267
    %v6269 = vpop.f32.mrf.mxu0
    %6270 = vdwg.mxu0
    %6271 = vmatprep.subr.mxu0 0.0
    %6272 = vmatpush1.msra.mxu0 0.0
    %6273 = vmatprep.subr.mxu0 0.0
    %6274 = vmatpush1.msra.mxu0 0.0
    %6275 = vmatprep.subr.mxu0 0.0
    %6276 = vmatpush1.msra.mxu0 0.0
    %6277 = vmatprep.subr.mxu0 0.0
    %6278 = vmatpush1.msra.mxu0 0.0
    %6279 = vmatprep.subr.mxu0 0.0
    %6280 = vmatpush1.msra.mxu0 0.0
    %6281 = vmatprep.subr.mxu0 0.0
    %6282 = vmatpush1.msra.mxu0 0.0
    %6283 = vmatprep.subr.mxu0 0.0
    %6284 = vmatpush1.msra.mxu0 0.0
    %6285 = vmatprep.subr.mxu0 0.0
    %6286 = vmatpush1.msra.mxu0 0.0
    %6287 = vmatprep.subr.mxu0 0.0
    %6288 = vmatpush1.msra.mxu0 0.0
    %6289 = vmatprep.subr.mxu0 0.0
    %6290 = vmatpush1.msra.mxu0 0.0
    %6291 = vmatprep.subr.mxu0 0.0
    %6292 = vmatpush1.msra.mxu0 0.0
    %6293 = vmatprep.subr.mxu0 0.0
    %6294 = vmatpush1.msra.mxu0 0.0
    %6295 = vmatprep.subr.mxu0 0.0
    %v6296 = vand.u32 %v5595, 4294901760
    %6297 = vmatpush1.msra.mxu0 %v6296
    %6298 = vmatprep.subr.mxu0 0.0
    %v6299 = vand.u32 %v5594, 4294901760
    %6300 = vmatpush1.msra.mxu0 %v6299
    %6301 = vmatprep.subr.mxu0 0.0
    %v6302 = vand.u32 %v5593, 4294901760
    %6303 = vmatpush1.msra.mxu0 %v6302
    %6304 = vmatprep.subr.mxu0 0.0
    %v6305 = vand.u32 %v5592, 4294901760
    %6306 = vmatpush1.msra.mxu0 %v6305
    %6307 = vmatprep.subr.mxu0 0.0
    %6308 = vmatpush2.msra.mxu0 0.0
    %6309 = vmatprep.subr.mxu0 0.0
    %6310 = vmatpush2.msra.mxu0 0.0
    %6311 = vmatprep.subr.mxu0 0.0
    %6312 = vmatpush2.msra.mxu0 0.0
    %6313 = vmatprep.subr.mxu0 0.0
    %6314 = vmatpush2.msra.mxu0 0.0
    %6315 = vmatprep.subr.mxu0 0.0
    %6316 = vmatpush2.msra.mxu0 0.0
    %6317 = vmatprep.subr.mxu0 0.0
    %6318 = vmatpush2.msra.mxu0 0.0
    %6319 = vmatprep.subr.mxu0 0.0
    %6320 = vmatpush2.msra.mxu0 0.0
    %6321 = vmatprep.subr.mxu0 0.0
    %6322 = vmatpush2.msra.mxu0 0.0
    %6323 = vmatprep.subr.mxu0 0.0
    %6324 = vmatpush2.msra.mxu0 0.0
    %6325 = vmatprep.subr.mxu0 0.0
    %6326 = vmatpush2.msra.mxu0 0.0
    %6327 = vmatprep.subr.mxu0 0.0
    %6328 = vmatpush2.msra.mxu0 0.0
    %6329 = vmatprep.subr.mxu0 0.0
    %6330 = vmatpush2.msra.mxu0 0.0
    %6331 = vmatprep.subr.mxu0 0.0
    %6332 = vmatpush2.msra.mxu0 0.0
    %6333 = vmatprep.subr.mxu0 0.0
    %6334 = vmatpush2.msra.mxu0 0.0
    %6335 = vmatprep.subr.mxu0 0.0
    %6336 = vmatpush2.msra.mxu0 0.0
    %6337 = vmatprep.subr.mxu0 0.0
    %6338 = vmatpush2.msra.mxu0 0.0
    %6339 = vmatprep.mubr.f32.mxu0 0.0
    %v6340 = vand.u32 %v5629, 4294901760
    %v6341 = vsub.f32 %v5629, %v6340
    %v6342 = vand.u32 %v6341, 4294901760
    %6343 = vmatmul.mubr.f32.gmra.mxu0 %v6342
    %v6344 = vpop.f32.mrf.mxu0
    %v6345 = vadd.f32 %v6163, %v6344
    %v6346 = vpop.f32.mrf.mxu0
    %6347 = vmatprep.mubr.f32.mxu0 0.0
    %v6348 = vand.u32 %v5632, 4294901760
    %v6349 = vsub.f32 %v5632, %v6348
    %v6350 = vand.u32 %v6349, 4294901760
    %6351 = vmatmul.mubr.f32.gmra.mxu0 %v6350
    %v6352 = vpop.f32.mrf.mxu0
    %v6353 = vadd.f32 %v6170, %v6352
    %v6354 = vpop.f32.mrf.mxu0
    %6355 = vmatprep.mubr.f32.mxu0 0.0
    %v6356 = vand.u32 %v5635, 4294901760
    %v6357 = vsub.f32 %v5635, %v6356
    %v6358 = vand.u32 %v6357, 4294901760
    %6359 = vmatmul.mubr.f32.gmra.mxu0 %v6358
    %v6360 = vpop.f32.mrf.mxu0
    %v6361 = vadd.f32 %v6177, %v6360
    %v6362 = vpop.f32.mrf.mxu0
    %6363 = vmatprep.mubr.f32.mxu0 0.0
    %v6364 = vand.u32 %v5638, 4294901760
    %v6365 = vsub.f32 %v5638, %v6364
    %v6366 = vand.u32 %v6365, 4294901760
    %6367 = vmatmul.mubr.f32.gmra.mxu0 %v6366
    %v6368 = vpop.f32.mrf.mxu0
    %v6369 = vadd.f32 %v6184, %v6368
    %v6370 = vpop.f32.mrf.mxu0
    %6371 = vmatprep.mubr.f32.mxu0 0.0
    %v6372 = vand.u32 %v5641, 4294901760
    %v6373 = vsub.f32 %v5641, %v6372
    %v6374 = vand.u32 %v6373, 4294901760
    %6375 = vmatmul.mubr.f32.gmra.mxu0 %v6374
    %v6376 = vpop.f32.mrf.mxu0
    %v6377 = vadd.f32 %v6191, %v6376
    %v6378 = vpop.f32.mrf.mxu0
    %6379 = vmatprep.mubr.f32.mxu0 0.0
    %v6380 = vand.u32 %v5644, 4294901760
    %v6381 = vsub.f32 %v5644, %v6380
    %v6382 = vand.u32 %v6381, 4294901760
    %6383 = vmatmul.mubr.f32.gmra.mxu0 %v6382
    %v6384 = vpop.f32.mrf.mxu0
    %v6385 = vadd.f32 %v6198, %v6384
    %v6386 = vpop.f32.mrf.mxu0
    %6387 = vmatprep.mubr.f32.mxu0 0.0
    %v6388 = vand.u32 %v5647, 4294901760
    %v6389 = vsub.f32 %v5647, %v6388
    %v6390 = vand.u32 %v6389, 4294901760
    %6391 = vmatmul.mubr.f32.gmra.mxu0 %v6390
    %v6392 = vpop.f32.mrf.mxu0
    %v6393 = vadd.f32 %v6205, %v6392
    %v6394 = vpop.f32.mrf.mxu0
    %6395 = vmatprep.mubr.f32.mxu0 0.0
    %v6396 = vand.u32 %v5650, 4294901760
    %v6397 = vsub.f32 %v5650, %v6396
    %v6398 = vand.u32 %v6397, 4294901760
    %6399 = vmatmul.mubr.f32.gmra.mxu0 %v6398
    %v6400 = vpop.f32.mrf.mxu0
    %v6401 = vadd.f32 %v6212, %v6400
    %v6402 = vpop.f32.mrf.mxu0
    %6403 = vmatprep.mubr.f32.mxu0 0.0
    %v6404 = vand.u32 %v5653, 4294901760
    %v6405 = vsub.f32 %v5653, %v6404
    %v6406 = vand.u32 %v6405, 4294901760
    %6407 = vmatmul.mubr.f32.gmra.mxu0 %v6406
    %v6408 = vpop.f32.mrf.mxu0
    %v6409 = vadd.f32 %v6219, %v6408
    %v6410 = vpop.f32.mrf.mxu0
    %6411 = vmatprep.mubr.f32.mxu0 0.0
    %v6412 = vand.u32 %v5656, 4294901760
    %v6413 = vsub.f32 %v5656, %v6412
    %v6414 = vand.u32 %v6413, 4294901760
    %6415 = vmatmul.mubr.f32.gmra.mxu0 %v6414
    %v6416 = vpop.f32.mrf.mxu0
    %v6417 = vadd.f32 %v6226, %v6416
    %v6418 = vpop.f32.mrf.mxu0
    %6419 = vmatprep.mubr.f32.mxu0 0.0
    %v6420 = vand.u32 %v5659, 4294901760
    %v6421 = vsub.f32 %v5659, %v6420
    %v6422 = vand.u32 %v6421, 4294901760
    %6423 = vmatmul.mubr.f32.gmra.mxu0 %v6422
    %v6424 = vpop.f32.mrf.mxu0
    %v6425 = vadd.f32 %v6233, %v6424
    %v6426 = vpop.f32.mrf.mxu0
    %6427 = vmatprep.mubr.f32.mxu0 0.0
    %v6428 = vand.u32 %v5662, 4294901760
    %v6429 = vsub.f32 %v5662, %v6428
    %v6430 = vand.u32 %v6429, 4294901760
    %6431 = vmatmul.mubr.f32.gmra.mxu0 %v6430
    %v6432 = vpop.f32.mrf.mxu0
    %v6433 = vadd.f32 %v6240, %v6432
    %v6434 = vpop.f32.mrf.mxu0
    %6435 = vmatprep.mubr.f32.mxu0 0.0
    %v6436 = vand.u32 %v5665, 4294901760
    %v6437 = vsub.f32 %v5665, %v6436
    %v6438 = vand.u32 %v6437, 4294901760
    %6439 = vmatmul.mubr.f32.gmra.mxu0 %v6438
    %v6440 = vpop.f32.mrf.mxu0
    %v6441 = vadd.f32 %v6247, %v6440
    %v6442 = vpop.f32.mrf.mxu0
    %6443 = vmatprep.mubr.f32.mxu0 0.0
    %v6444 = vand.u32 %v5668, 4294901760
    %v6445 = vsub.f32 %v5668, %v6444
    %v6446 = vand.u32 %v6445, 4294901760
    %6447 = vmatmul.mubr.f32.gmra.mxu0 %v6446
    %v6448 = vpop.f32.mrf.mxu0
    %v6449 = vadd.f32 %v6254, %v6448
    %v6450 = vpop.f32.mrf.mxu0
    %6451 = vmatprep.mubr.f32.mxu0 0.0
    %v6452 = vand.u32 %v5671, 4294901760
    %v6453 = vsub.f32 %v5671, %v6452
    %v6454 = vand.u32 %v6453, 4294901760
    %6455 = vmatmul.mubr.f32.gmra.mxu0 %v6454
    %v6456 = vpop.f32.mrf.mxu0
    %v6457 = vadd.f32 %v6261, %v6456
    %v6458 = vpop.f32.mrf.mxu0
    %6459 = vmatprep.mubr.f32.mxu0 0.0
    %v6460 = vand.u32 %v5674, 4294901760
    %v6461 = vsub.f32 %v5674, %v6460
    %v6462 = vand.u32 %v6461, 4294901760
    %6463 = vmatmul.mubr.f32.gmra.mxu0 %v6462
    %v6464 = vpop.f32.mrf.mxu0
    %v6465 = vadd.f32 %v6268, %v6464
    %v6466 = vpop.f32.mrf.mxu0
    %6467 = vdwg.mxu0
    %6468 = vmatprep.subr.mxu0 0.0
    %6469 = vmatpush1.msra.mxu0 0.0
    %6470 = vmatprep.subr.mxu0 0.0
    %6471 = vmatpush1.msra.mxu0 0.0
    %6472 = vmatprep.subr.mxu0 0.0
    %6473 = vmatpush1.msra.mxu0 0.0
    %6474 = vmatprep.subr.mxu0 0.0
    %6475 = vmatpush1.msra.mxu0 0.0
    %6476 = vmatprep.subr.mxu0 0.0
    %6477 = vmatpush1.msra.mxu0 0.0
    %6478 = vmatprep.subr.mxu0 0.0
    %6479 = vmatpush1.msra.mxu0 0.0
    %6480 = vmatprep.subr.mxu0 0.0
    %6481 = vmatpush1.msra.mxu0 0.0
    %6482 = vmatprep.subr.mxu0 0.0
    %6483 = vmatpush1.msra.mxu0 0.0
    %6484 = vmatprep.subr.mxu0 0.0
    %6485 = vmatpush1.msra.mxu0 0.0
    %6486 = vmatprep.subr.mxu0 0.0
    %6487 = vmatpush1.msra.mxu0 0.0
    %6488 = vmatprep.subr.mxu0 0.0
    %6489 = vmatpush1.msra.mxu0 0.0
    %6490 = vmatprep.subr.mxu0 0.0
    %6491 = vmatpush1.msra.mxu0 0.0
    %6492 = vmatprep.subr.mxu0 0.0
    %v6493 = vand.u32 %v5595, 4294901760
    %v6494 = vsub.f32 %v5595, %v6493
    %v6495 = vand.u32 %v6494, 4294901760
    %6496 = vmatpush1.msra.mxu0 %v6495
    %6497 = vmatprep.subr.mxu0 0.0
    %v6498 = vand.u32 %v5594, 4294901760
    %v6499 = vsub.f32 %v5594, %v6498
    %v6500 = vand.u32 %v6499, 4294901760
    %6501 = vmatpush1.msra.mxu0 %v6500
    %6502 = vmatprep.subr.mxu0 0.0
    %v6503 = vand.u32 %v5593, 4294901760
    %v6504 = vsub.f32 %v5593, %v6503
    %v6505 = vand.u32 %v6504, 4294901760
    %6506 = vmatpush1.msra.mxu0 %v6505
    %6507 = vmatprep.subr.mxu0 0.0
    %v6508 = vand.u32 %v5592, 4294901760
    %v6509 = vsub.f32 %v5592, %v6508
    %v6510 = vand.u32 %v6509, 4294901760
    %6511 = vmatpush1.msra.mxu0 %v6510
    %6512 = vmatprep.subr.mxu0 0.0
    %6513 = vmatpush2.msra.mxu0 0.0
    %6514 = vmatprep.subr.mxu0 0.0
    %6515 = vmatpush2.msra.mxu0 0.0
    %6516 = vmatprep.subr.mxu0 0.0
    %6517 = vmatpush2.msra.mxu0 0.0
    %6518 = vmatprep.subr.mxu0 0.0
    %6519 = vmatpush2.msra.mxu0 0.0
    %6520 = vmatprep.subr.mxu0 0.0
    %6521 = vmatpush2.msra.mxu0 0.0
    %6522 = vmatprep.subr.mxu0 0.0
    %6523 = vmatpush2.msra.mxu0 0.0
    %6524 = vmatprep.subr.mxu0 0.0
    %6525 = vmatpush2.msra.mxu0 0.0
    %6526 = vmatprep.subr.mxu0 0.0
    %6527 = vmatpush2.msra.mxu0 0.0
    %6528 = vmatprep.subr.mxu0 0.0
    %6529 = vmatpush2.msra.mxu0 0.0
    %6530 = vmatprep.subr.mxu0 0.0
    %6531 = vmatpush2.msra.mxu0 0.0
    %6532 = vmatprep.subr.mxu0 0.0
    %6533 = vmatpush2.msra.mxu0 0.0
    %6534 = vmatprep.subr.mxu0 0.0
    %6535 = vmatpush2.msra.mxu0 0.0
    %6536 = vmatprep.subr.mxu0 0.0
    %6537 = vmatpush2.msra.mxu0 0.0
    %6538 = vmatprep.subr.mxu0 0.0
    %6539 = vmatpush2.msra.mxu0 0.0
    %6540 = vmatprep.subr.mxu0 0.0
    %6541 = vmatpush2.msra.mxu0 0.0
    %6542 = vmatprep.subr.mxu0 0.0
    %6543 = vmatpush2.msra.mxu0 0.0
    %6544 = vmatprep.mubr.f32.mxu0 0.0
    %v6545 = vand.u32 %v5629, 4294901760
    %6546 = vmatmul.mubr.f32.gmra.mxu0 %v6545
    %v6547 = vpop.f32.mrf.mxu0
    %v6548 = vadd.f32 %v6345, %v6547
    %v6549 = vpop.f32.mrf.mxu0
    %6550 = vmatprep.mubr.f32.mxu0 0.0
    %v6551 = vand.u32 %v5632, 4294901760
    %6552 = vmatmul.mubr.f32.gmra.mxu0 %v6551
    %v6553 = vpop.f32.mrf.mxu0
    %v6554 = vadd.f32 %v6353, %v6553
    %v6555 = vpop.f32.mrf.mxu0
    %6556 = vmatprep.mubr.f32.mxu0 0.0
    %v6557 = vand.u32 %v5635, 4294901760
    %6558 = vmatmul.mubr.f32.gmra.mxu0 %v6557
    %v6559 = vpop.f32.mrf.mxu0
    %v6560 = vadd.f32 %v6361, %v6559
    %v6561 = vpop.f32.mrf.mxu0
    %6562 = vmatprep.mubr.f32.mxu0 0.0
    %v6563 = vand.u32 %v5638, 4294901760
    %6564 = vmatmul.mubr.f32.gmra.mxu0 %v6563
    %v6565 = vpop.f32.mrf.mxu0
    %v6566 = vadd.f32 %v6369, %v6565
    %v6567 = vpop.f32.mrf.mxu0
    %6568 = vmatprep.mubr.f32.mxu0 0.0
    %v6569 = vand.u32 %v5641, 4294901760
    %6570 = vmatmul.mubr.f32.gmra.mxu0 %v6569
    %v6571 = vpop.f32.mrf.mxu0
    %v6572 = vadd.f32 %v6377, %v6571
    %v6573 = vpop.f32.mrf.mxu0
    %6574 = vmatprep.mubr.f32.mxu0 0.0
    %v6575 = vand.u32 %v5644, 4294901760
    %6576 = vmatmul.mubr.f32.gmra.mxu0 %v6575
    %v6577 = vpop.f32.mrf.mxu0
    %v6578 = vadd.f32 %v6385, %v6577
    %v6579 = vpop.f32.mrf.mxu0
    %6580 = vmatprep.mubr.f32.mxu0 0.0
    %v6581 = vand.u32 %v5647, 4294901760
    %6582 = vmatmul.mubr.f32.gmra.mxu0 %v6581
    %v6583 = vpop.f32.mrf.mxu0
    %v6584 = vadd.f32 %v6393, %v6583
    %v6585 = vpop.f32.mrf.mxu0
    %6586 = vmatprep.mubr.f32.mxu0 0.0
    %v6587 = vand.u32 %v5650, 4294901760
    %6588 = vmatmul.mubr.f32.gmra.mxu0 %v6587
    %v6589 = vpop.f32.mrf.mxu0
    %v6590 = vadd.f32 %v6401, %v6589
    %v6591 = vpop.f32.mrf.mxu0
    %6592 = vmatprep.mubr.f32.mxu0 0.0
    %v6593 = vand.u32 %v5653, 4294901760
    %6594 = vmatmul.mubr.f32.gmra.mxu0 %v6593
    %v6595 = vpop.f32.mrf.mxu0
    %v6596 = vadd.f32 %v6409, %v6595
    %v6597 = vpop.f32.mrf.mxu0
    %6598 = vmatprep.mubr.f32.mxu0 0.0
    %v6599 = vand.u32 %v5656, 4294901760
    %6600 = vmatmul.mubr.f32.gmra.mxu0 %v6599
    %v6601 = vpop.f32.mrf.mxu0
    %v6602 = vadd.f32 %v6417, %v6601
    %v6603 = vpop.f32.mrf.mxu0
    %6604 = vmatprep.mubr.f32.mxu0 0.0
    %v6605 = vand.u32 %v5659, 4294901760
    %6606 = vmatmul.mubr.f32.gmra.mxu0 %v6605
    %v6607 = vpop.f32.mrf.mxu0
    %v6608 = vadd.f32 %v6425, %v6607
    %v6609 = vpop.f32.mrf.mxu0
    %6610 = vmatprep.mubr.f32.mxu0 0.0
    %v6611 = vand.u32 %v5662, 4294901760
    %6612 = vmatmul.mubr.f32.gmra.mxu0 %v6611
    %v6613 = vpop.f32.mrf.mxu0
    %v6614 = vadd.f32 %v6433, %v6613
    %v6615 = vpop.f32.mrf.mxu0
    %6616 = vmatprep.mubr.f32.mxu0 0.0
    %v6617 = vand.u32 %v5665, 4294901760
    %6618 = vmatmul.mubr.f32.gmra.mxu0 %v6617
    %v6619 = vpop.f32.mrf.mxu0
    %v6620 = vadd.f32 %v6441, %v6619
    %v6621 = vpop.f32.mrf.mxu0
    %6622 = vmatprep.mubr.f32.mxu0 0.0
    %v6623 = vand.u32 %v5668, 4294901760
    %6624 = vmatmul.mubr.f32.gmra.mxu0 %v6623
    %v6625 = vpop.f32.mrf.mxu0
    %v6626 = vadd.f32 %v6449, %v6625
    %v6627 = vpop.f32.mrf.mxu0
    %6628 = vmatprep.mubr.f32.mxu0 0.0
    %v6629 = vand.u32 %v5671, 4294901760
    %6630 = vmatmul.mubr.f32.gmra.mxu0 %v6629
    %v6631 = vpop.f32.mrf.mxu0
    %v6632 = vadd.f32 %v6457, %v6631
    %v6633 = vpop.f32.mrf.mxu0
    %6634 = vmatprep.mubr.f32.mxu0 0.0
    %v6635 = vand.u32 %v5674, 4294901760
    %6636 = vmatmul.mubr.f32.gmra.mxu0 %v6635
    %v6637 = vpop.f32.mrf.mxu0
    %v6638 = vadd.f32 %v6465, %v6637
    %v6639 = vpop.f32.mrf.mxu0
    %6640 = vdwg.mxu0
    %6641 = vmatprep.subr.mxu0 0.0
    %6642 = vmatpush1.msra.mxu0 0.0
    %6643 = vmatprep.subr.mxu0 0.0
    %6644 = vmatpush1.msra.mxu0 0.0
    %6645 = vmatprep.subr.mxu0 0.0
    %6646 = vmatpush1.msra.mxu0 0.0
    %6647 = vmatprep.subr.mxu0 0.0
    %6648 = vmatpush1.msra.mxu0 0.0
    %6649 = vmatprep.subr.mxu0 0.0
    %6650 = vmatpush1.msra.mxu0 0.0
    %6651 = vmatprep.subr.mxu0 0.0
    %6652 = vmatpush1.msra.mxu0 0.0
    %6653 = vmatprep.subr.mxu0 0.0
    %6654 = vmatpush1.msra.mxu0 0.0
    %6655 = vmatprep.subr.mxu0 0.0
    %6656 = vmatpush1.msra.mxu0 0.0
    %6657 = vmatprep.subr.mxu0 0.0
    %6658 = vmatpush1.msra.mxu0 0.0
    %6659 = vmatprep.subr.mxu0 0.0
    %6660 = vmatpush1.msra.mxu0 0.0
    %6661 = vmatprep.subr.mxu0 0.0
    %6662 = vmatpush1.msra.mxu0 0.0
    %6663 = vmatprep.subr.mxu0 0.0
    %6664 = vmatpush1.msra.mxu0 0.0
    %6665 = vmatprep.subr.mxu0 0.0
    %v6666 = vand.u32 %v5595, 4294901760
    %6667 = vmatpush1.msra.mxu0 %v6666
    %6668 = vmatprep.subr.mxu0 0.0
    %v6669 = vand.u32 %v5594, 4294901760
    %6670 = vmatpush1.msra.mxu0 %v6669
    %6671 = vmatprep.subr.mxu0 0.0
    %v6672 = vand.u32 %v5593, 4294901760
    %6673 = vmatpush1.msra.mxu0 %v6672
    %6674 = vmatprep.subr.mxu0 0.0
    %v6675 = vand.u32 %v5592, 4294901760
    %6676 = vmatpush1.msra.mxu0 %v6675
    %6677 = vmatprep.subr.mxu0 0.0
    %6678 = vmatpush2.msra.mxu0 0.0
    %6679 = vmatprep.subr.mxu0 0.0
    %6680 = vmatpush2.msra.mxu0 0.0
    %6681 = vmatprep.subr.mxu0 0.0
    %6682 = vmatpush2.msra.mxu0 0.0
    %6683 = vmatprep.subr.mxu0 0.0
    %6684 = vmatpush2.msra.mxu0 0.0
    %6685 = vmatprep.subr.mxu0 0.0
    %6686 = vmatpush2.msra.mxu0 0.0
    %6687 = vmatprep.subr.mxu0 0.0
    %6688 = vmatpush2.msra.mxu0 0.0
    %6689 = vmatprep.subr.mxu0 0.0
    %6690 = vmatpush2.msra.mxu0 0.0
    %6691 = vmatprep.subr.mxu0 0.0
    %6692 = vmatpush2.msra.mxu0 0.0
    %6693 = vmatprep.subr.mxu0 0.0
    %6694 = vmatpush2.msra.mxu0 0.0
    %6695 = vmatprep.subr.mxu0 0.0
    %6696 = vmatpush2.msra.mxu0 0.0
    %6697 = vmatprep.subr.mxu0 0.0
    %6698 = vmatpush2.msra.mxu0 0.0
    %6699 = vmatprep.subr.mxu0 0.0
    %6700 = vmatpush2.msra.mxu0 0.0
    %6701 = vmatprep.subr.mxu0 0.0
    %6702 = vmatpush2.msra.mxu0 0.0
    %6703 = vmatprep.subr.mxu0 0.0
    %6704 = vmatpush2.msra.mxu0 0.0
    %6705 = vmatprep.subr.mxu0 0.0
    %6706 = vmatpush2.msra.mxu0 0.0
    %6707 = vmatprep.subr.mxu0 0.0
    %6708 = vmatpush2.msra.mxu0 0.0
    %6709 = vmatprep.mubr.f32.mxu0 0.0
    %v6710 = vand.u32 %v5629, 4294901760
    %6711 = vmatmul.mubr.f32.gmra.mxu0 %v6710
    %v6712 = vpop.f32.mrf.mxu0
    %v6713 = vadd.f32 %v6548, %v6712
    %v6714 = vpop.f32.mrf.mxu0
    %6715 = vmatprep.mubr.f32.mxu0 0.0
    %v6716 = vand.u32 %v5632, 4294901760
    %6717 = vmatmul.mubr.f32.gmra.mxu0 %v6716
    %v6718 = vpop.f32.mrf.mxu0
    %v6719 = vadd.f32 %v6554, %v6718
    %v6720 = vpop.f32.mrf.mxu0
    %6721 = vmatprep.mubr.f32.mxu0 0.0
    %v6722 = vand.u32 %v5635, 4294901760
    %6723 = vmatmul.mubr.f32.gmra.mxu0 %v6722
    %v6724 = vpop.f32.mrf.mxu0
    %v6725 = vadd.f32 %v6560, %v6724
    %v6726 = vpop.f32.mrf.mxu0
    %6727 = vmatprep.mubr.f32.mxu0 0.0
    %v6728 = vand.u32 %v5638, 4294901760
    %6729 = vmatmul.mubr.f32.gmra.mxu0 %v6728
    %v6730 = vpop.f32.mrf.mxu0
    %v6731 = vadd.f32 %v6566, %v6730
    %v6732 = vpop.f32.mrf.mxu0
    %6733 = vmatprep.mubr.f32.mxu0 0.0
    %v6734 = vand.u32 %v5641, 4294901760
    %6735 = vmatmul.mubr.f32.gmra.mxu0 %v6734
    %v6736 = vpop.f32.mrf.mxu0
    %v6737 = vadd.f32 %v6572, %v6736
    %v6738 = vpop.f32.mrf.mxu0
    %6739 = vmatprep.mubr.f32.mxu0 0.0
    %v6740 = vand.u32 %v5644, 4294901760
    %6741 = vmatmul.mubr.f32.gmra.mxu0 %v6740
    %v6742 = vpop.f32.mrf.mxu0
    %v6743 = vadd.f32 %v6578, %v6742
    %v6744 = vpop.f32.mrf.mxu0
    %6745 = vmatprep.mubr.f32.mxu0 0.0
    %v6746 = vand.u32 %v5647, 4294901760
    %6747 = vmatmul.mubr.f32.gmra.mxu0 %v6746
    %v6748 = vpop.f32.mrf.mxu0
    %v6749 = vadd.f32 %v6584, %v6748
    %v6750 = vpop.f32.mrf.mxu0
    %6751 = vmatprep.mubr.f32.mxu0 0.0
    %v6752 = vand.u32 %v5650, 4294901760
    %6753 = vmatmul.mubr.f32.gmra.mxu0 %v6752
    %v6754 = vpop.f32.mrf.mxu0
    %v6755 = vadd.f32 %v6590, %v6754
    %v6756 = vpop.f32.mrf.mxu0
    %6757 = vmatprep.mubr.f32.mxu0 0.0
    %v6758 = vand.u32 %v5653, 4294901760
    %6759 = vmatmul.mubr.f32.gmra.mxu0 %v6758
    %v6760 = vpop.f32.mrf.mxu0
    %v6761 = vadd.f32 %v6596, %v6760
    %v6762 = vpop.f32.mrf.mxu0
    %6763 = vmatprep.mubr.f32.mxu0 0.0
    %v6764 = vand.u32 %v5656, 4294901760
    %6765 = vmatmul.mubr.f32.gmra.mxu0 %v6764
    %v6766 = vpop.f32.mrf.mxu0
    %v6767 = vadd.f32 %v6602, %v6766
    %v6768 = vpop.f32.mrf.mxu0
    %6769 = vmatprep.mubr.f32.mxu0 0.0
    %v6770 = vand.u32 %v5659, 4294901760
    %6771 = vmatmul.mubr.f32.gmra.mxu0 %v6770
    %v6772 = vpop.f32.mrf.mxu0
    %v6773 = vadd.f32 %v6608, %v6772
    %v6774 = vpop.f32.mrf.mxu0
    %6775 = vmatprep.mubr.f32.mxu0 0.0
    %v6776 = vand.u32 %v5662, 4294901760
    %6777 = vmatmul.mubr.f32.gmra.mxu0 %v6776
    %v6778 = vpop.f32.mrf.mxu0
    %v6779 = vadd.f32 %v6614, %v6778
    %v6780 = vpop.f32.mrf.mxu0
    %6781 = vmatprep.mubr.f32.mxu0 0.0
    %v6782 = vand.u32 %v5665, 4294901760
    %6783 = vmatmul.mubr.f32.gmra.mxu0 %v6782
    %v6784 = vpop.f32.mrf.mxu0
    %v6785 = vadd.f32 %v6620, %v6784
    %v6786 = vpop.f32.mrf.mxu0
    %6787 = vmatprep.mubr.f32.mxu0 0.0
    %v6788 = vand.u32 %v5668, 4294901760
    %6789 = vmatmul.mubr.f32.gmra.mxu0 %v6788
    %v6790 = vpop.f32.mrf.mxu0
    %v6791 = vadd.f32 %v6626, %v6790
    %v6792 = vpop.f32.mrf.mxu0
    %6793 = vmatprep.mubr.f32.mxu0 0.0
    %v6794 = vand.u32 %v5671, 4294901760
    %6795 = vmatmul.mubr.f32.gmra.mxu0 %v6794
    %v6796 = vpop.f32.mrf.mxu0
    %v6797 = vadd.f32 %v6632, %v6796
    %v6798 = vpop.f32.mrf.mxu0
    %6799 = vmatprep.mubr.f32.mxu0 0.0
    %v6800 = vand.u32 %v5674, 4294901760
    %6801 = vmatmul.mubr.f32.gmra.mxu0 %v6800
    %v6802 = vpop.f32.mrf.mxu0
    %v6803 = vadd.f32 %v6638, %v6802
    %v6804 = vpop.f32.mrf.mxu0
    %6805 = vdwg.mxu0
    %6807 = vrot.lane.b32.xlu0 %v6719, 16
    %v6808 = vpop.permute.xlu0 %6807
    %6811 = vrot.lane.b32.xlu0 %v6725, 32
    %v6812 = vpop.permute.xlu0 %6811
    %6815 = vrot.lane.b32.xlu0 %v6731, 48
    %v6816 = vpop.permute.xlu0 %6815
    %6819 = vrot.lane.b32.xlu0 %v6737, 64
    %v6820 = vpop.permute.xlu0 %6819
    %6823 = vrot.lane.b32.xlu0 %v6743, 80
    %v6824 = vpop.permute.xlu0 %6823
    %6827 = vrot.lane.b32.xlu0 %v6749, 96
    %v6828 = vpop.permute.xlu0 %6827
    %6831 = vrot.lane.b32.xlu0 %v6755, 112
    %v6832 = vpop.permute.xlu0 %6831
    %6835 = vrot.lane.b32.xlu0 %v6767, 16
    %v6836 = vpop.permute.xlu0 %6835
    %6839 = vrot.lane.b32.xlu0 %v6773, 32
    %v6840 = vpop.permute.xlu0 %6839
    %6843 = vrot.lane.b32.xlu0 %v6779, 48
    %v6844 = vpop.permute.xlu0 %6843
    %6847 = vrot.lane.b32.xlu0 %v6785, 64
    %v6848 = vpop.permute.xlu0 %6847
    %6851 = vrot.lane.b32.xlu0 %v6791, 80
    %v6852 = vpop.permute.xlu0 %6851
    %6855 = vrot.lane.b32.xlu0 %v6797, 96
    %v6856 = vpop.permute.xlu0 %6855
    %6859 = vrot.lane.b32.xlu0 %v6803, 112
    %v6860 = vpop.permute.xlu0 %6859
    %v6862 = vsel %vm4663, %v6713, %v6808
    %v6863 = vsel %vm4673, %v6862, %v6812
    %v6864 = vsel %vm71, %v6863, %v6816
    %v6865 = vsel %vm4692, %v6864, %v6820
    %v6866 = vsel %vm4702, %v6865, %v6824
    %v6867 = vsel %vm4712, %v6866, %v6828
    %v6868 = vsel %vm4722, %v6867, %v6832
    %v6869 = vsel %vm4663, %v6761, %v6836
    %v6870 = vsel %vm4673, %v6869, %v6840
    %v6871 = vsel %vm71, %v6870, %v6844
    %v6872 = vsel %vm4692, %v6871, %v6848
    %v6873 = vsel %vm4702, %v6872, %v6852
    %v6874 = vsel %vm4712, %v6873, %v6856
    %v6875 = vsel %vm4722, %v6874, %v6860
    %v6876 = vld [vmem:[%s7] sm:$0xff]
    %v6877 = vld [vmem:[%s7 + $0x8] sm:$0xff]
    %v6878 = vld [vmem:[%s7 + $0x10] sm:$0xff]
    %v6879 = vld [vmem:[%s7 + $0x18] sm:$0xff]
    %v6880 = vld [vmem:[%s7 + $0x20] sm:$0xff]
    %v6881 = vld [vmem:[%s7 + $0x28] sm:$0xff]
    %v6882 = vld [vmem:[%s7 + $0x30] sm:$0xff]
    %v6883 = vld [vmem:[%s7 + $0x38] sm:$0xff]
    %v6884 = vld [vmem:[%s7 + $0x40] sm:$0xff]
    %v6885 = vld [vmem:[%s7 + $0x48] sm:$0xff]
    %v6886 = vld [vmem:[%s7 + $0x50] sm:$0xff]
    %v6887 = vld [vmem:[%s7 + $0x58] sm:$0xff]
    %v6888 = vld [vmem:[%s7 + $0x60] sm:$0xff]
    %v6889 = vld [vmem:[%s7 + $0x68] sm:$0xff]
    %v6890 = vld [vmem:[%s7 + $0x70] sm:$0xff]
    %v6891 = vld [vmem:[%s7 + $0x78] sm:$0xff]
    %v6892 = vld [vmem:[%s7 + $0x80] sm:$0xff]
    %v6893 = vld [vmem:[%s7 + $0x88] sm:$0xff]
    %v6894 = vld [vmem:[%s7 + $0x90] sm:$0xff]
    %v6895 = vld [vmem:[%s7 + $0x98] sm:$0xff]
    %v6896 = vld [vmem:[%s7 + $0xa0] sm:$0xff]
    %v6897 = vld [vmem:[%s7 + $0xa8] sm:$0xff]
    %v6898 = vld [vmem:[%s7 + $0xb0] sm:$0xff]
    %v6899 = vld [vmem:[%s7 + $0xb8] sm:$0xff]
    %v6900 = vld [vmem:[%s7 + $0xc0] sm:$0xff]
    %v6901 = vld [vmem:[%s7 + $0xc8] sm:$0xff]
    %v6902 = vld [vmem:[%s7 + $0xd0] sm:$0xff]
    %v6903 = vld [vmem:[%s7 + $0xd8] sm:$0xff]
    %v6904 = vld [vmem:[%s7 + $0xe0] sm:$0xff]
    %v6905 = vld [vmem:[%s7 + $0xe8] sm:$0xff]
    %v6906 = vld [vmem:[%s7 + $0xf0] sm:$0xff]
    %v6907 = vld [vmem:[%s7 + $0xf8] sm:$0xff]
    %v6908 = vld [vmem:[%s8] sm:$0x1]
    %v6909 = vlaneseq
    %v6910 = vshrl.u32 %v6909, 7
    %v6911 = vsub.s32 0, %v6910
    %v6912 = vrot.slane %v6908, %v6911
    %6913 = vmatprep.subr.mxu0 0.0
    %v6914 = vand.u32 %v6891, 4294901760
    %6915 = vmatpush1.msra.mxu0 %v6914
    %6916 = vmatprep.subr.mxu0 0.0
    %v6917 = vand.u32 %v6890, 4294901760
    %6918 = vmatpush1.msra.mxu0 %v6917
    %6919 = vmatprep.subr.mxu0 0.0
    %v6920 = vand.u32 %v6889, 4294901760
    %6921 = vmatpush1.msra.mxu0 %v6920
    %6922 = vmatprep.subr.mxu0 0.0
    %v6923 = vand.u32 %v6888, 4294901760
    %6924 = vmatpush1.msra.mxu0 %v6923
    %6925 = vmatprep.subr.mxu0 0.0
    %v6926 = vand.u32 %v6887, 4294901760
    %6927 = vmatpush1.msra.mxu0 %v6926
    %6928 = vmatprep.subr.mxu0 0.0
    %v6929 = vand.u32 %v6886, 4294901760
    %6930 = vmatpush1.msra.mxu0 %v6929
    %6931 = vmatprep.subr.mxu0 0.0
    %v6932 = vand.u32 %v6885, 4294901760
    %6933 = vmatpush1.msra.mxu0 %v6932
    %6934 = vmatprep.subr.mxu0 0.0
    %v6935 = vand.u32 %v6884, 4294901760
    %6936 = vmatpush1.msra.mxu0 %v6935
    %6937 = vmatprep.subr.mxu0 0.0
    %v6938 = vand.u32 %v6883, 4294901760
    %6939 = vmatpush1.msra.mxu0 %v6938
    %6940 = vmatprep.subr.mxu0 0.0
    %v6941 = vand.u32 %v6882, 4294901760
    %6942 = vmatpush1.msra.mxu0 %v6941
    %6943 = vmatprep.subr.mxu0 0.0
    %v6944 = vand.u32 %v6881, 4294901760
    %6945 = vmatpush1.msra.mxu0 %v6944
    %6946 = vmatprep.subr.mxu0 0.0
    %v6947 = vand.u32 %v6880, 4294901760
    %6948 = vmatpush1.msra.mxu0 %v6947
    %6949 = vmatprep.subr.mxu0 0.0
    %v6950 = vand.u32 %v6879, 4294901760
    %6951 = vmatpush1.msra.mxu0 %v6950
    %6952 = vmatprep.subr.mxu0 0.0
    %v6953 = vand.u32 %v6878, 4294901760
    %6954 = vmatpush1.msra.mxu0 %v6953
    %6955 = vmatprep.subr.mxu0 0.0
    %v6956 = vand.u32 %v6877, 4294901760
    %6957 = vmatpush1.msra.mxu0 %v6956
    %6958 = vmatprep.subr.mxu0 0.0
    %v6959 = vand.u32 %v6876, 4294901760
    %6960 = vmatpush1.msra.mxu0 %v6959
    %6961 = vmatprep.subr.mxu0 0.0
    %v6962 = vand.u32 %v6907, 4294901760
    %6963 = vmatpush2.msra.mxu0 %v6962
    %6964 = vmatprep.subr.mxu0 0.0
    %v6965 = vand.u32 %v6906, 4294901760
    %6966 = vmatpush2.msra.mxu0 %v6965
    %6967 = vmatprep.subr.mxu0 0.0
    %v6968 = vand.u32 %v6905, 4294901760
    %6969 = vmatpush2.msra.mxu0 %v6968
    %6970 = vmatprep.subr.mxu0 0.0
    %v6971 = vand.u32 %v6904, 4294901760
    %6972 = vmatpush2.msra.mxu0 %v6971
    %6973 = vmatprep.subr.mxu0 0.0
    %v6974 = vand.u32 %v6903, 4294901760
    %6975 = vmatpush2.msra.mxu0 %v6974
    %6976 = vmatprep.subr.mxu0 0.0
    %v6977 = vand.u32 %v6902, 4294901760
    %6978 = vmatpush2.msra.mxu0 %v6977
    %6979 = vmatprep.subr.mxu0 0.0
    %v6980 = vand.u32 %v6901, 4294901760
    %6981 = vmatpush2.msra.mxu0 %v6980
    %6982 = vmatprep.subr.mxu0 0.0
    %v6983 = vand.u32 %v6900, 4294901760
    %6984 = vmatpush2.msra.mxu0 %v6983
    %6985 = vmatprep.subr.mxu0 0.0
    %v6986 = vand.u32 %v6899, 4294901760
    %6987 = vmatpush2.msra.mxu0 %v6986
    %6988 = vmatprep.subr.mxu0 0.0
    %v6989 = vand.u32 %v6898, 4294901760
    %6990 = vmatpush2.msra.mxu0 %v6989
    %6991 = vmatprep.subr.mxu0 0.0
    %v6992 = vand.u32 %v6897, 4294901760
    %6993 = vmatpush2.msra.mxu0 %v6992
    %6994 = vmatprep.subr.mxu0 0.0
    %v6995 = vand.u32 %v6896, 4294901760
    %6996 = vmatpush2.msra.mxu0 %v6995
    %6997 = vmatprep.subr.mxu0 0.0
    %v6998 = vand.u32 %v6895, 4294901760
    %6999 = vmatpush2.msra.mxu0 %v6998
    %7000 = vmatprep.subr.mxu0 0.0
    %v7001 = vand.u32 %v6894, 4294901760
    %7002 = vmatpush2.msra.mxu0 %v7001
    %7003 = vmatprep.subr.mxu0 0.0
    %v7004 = vand.u32 %v6893, 4294901760
    %7005 = vmatpush2.msra.mxu0 %v7004
    %7006 = vmatprep.subr.mxu0 0.0
    %v7007 = vand.u32 %v6892, 4294901760
    %7008 = vmatpush2.msra.mxu0 %v7007
    %v7009 = vand.u32 %v6875, 4294901760
    %v7010 = vsub.f32 %v6875, %v7009
    %v7011 = vand.u32 %v7010, 4294901760
    %v7012 = vsub.f32 %v7010, %v7011
    %v7013 = vand.u32 %v7012, 4294901760
    %7014 = vmatprep.mubr.f32.mxu0 %v7013
    %v7015 = vand.u32 %v6868, 4294901760
    %v7016 = vsub.f32 %v6868, %v7015
    %v7017 = vand.u32 %v7016, 4294901760
    %v7018 = vsub.f32 %v7016, %v7017
    %v7019 = vand.u32 %v7018, 4294901760
    %7020 = vmatmul.mubr.f32.gmra.mxu0 %v7019
    %v7021 = vpop.f32.mrf.mxu0
    %v7022 = vadd.f32 %v6912, %v7021
    %v7023 = vpop.f32.mrf.mxu0
    %7024 = vdwg.mxu0
    %7025 = vmatprep.subr.mxu0 0.0
    %v7026 = vand.u32 %v6891, 4294901760
    %v7027 = vsub.f32 %v6891, %v7026
    %v7028 = vand.u32 %v7027, 4294901760
    %v7029 = vsub.f32 %v7027, %v7028
    %v7030 = vand.u32 %v7029, 4294901760
    %7031 = vmatpush1.msra.mxu0 %v7030
    %7032 = vmatprep.subr.mxu0 0.0
    %v7033 = vand.u32 %v6890, 4294901760
    %v7034 = vsub.f32 %v6890, %v7033
    %v7035 = vand.u32 %v7034, 4294901760
    %v7036 = vsub.f32 %v7034, %v7035
    %v7037 = vand.u32 %v7036, 4294901760
    %7038 = vmatpush1.msra.mxu0 %v7037
    %7039 = vmatprep.subr.mxu0 0.0
    %v7040 = vand.u32 %v6889, 4294901760
    %v7041 = vsub.f32 %v6889, %v7040
    %v7042 = vand.u32 %v7041, 4294901760
    %v7043 = vsub.f32 %v7041, %v7042
    %v7044 = vand.u32 %v7043, 4294901760
    %7045 = vmatpush1.msra.mxu0 %v7044
    %7046 = vmatprep.subr.mxu0 0.0
    %v7047 = vand.u32 %v6888, 4294901760
    %v7048 = vsub.f32 %v6888, %v7047
    %v7049 = vand.u32 %v7048, 4294901760
    %v7050 = vsub.f32 %v7048, %v7049
    %v7051 = vand.u32 %v7050, 4294901760
    %7052 = vmatpush1.msra.mxu0 %v7051
    %7053 = vmatprep.subr.mxu0 0.0
    %v7054 = vand.u32 %v6887, 4294901760
    %v7055 = vsub.f32 %v6887, %v7054
    %v7056 = vand.u32 %v7055, 4294901760
    %v7057 = vsub.f32 %v7055, %v7056
    %v7058 = vand.u32 %v7057, 4294901760
    %7059 = vmatpush1.msra.mxu0 %v7058
    %7060 = vmatprep.subr.mxu0 0.0
    %v7061 = vand.u32 %v6886, 4294901760
    %v7062 = vsub.f32 %v6886, %v7061
    %v7063 = vand.u32 %v7062, 4294901760
    %v7064 = vsub.f32 %v7062, %v7063
    %v7065 = vand.u32 %v7064, 4294901760
    %7066 = vmatpush1.msra.mxu0 %v7065
    %7067 = vmatprep.subr.mxu0 0.0
    %v7068 = vand.u32 %v6885, 4294901760
    %v7069 = vsub.f32 %v6885, %v7068
    %v7070 = vand.u32 %v7069, 4294901760
    %v7071 = vsub.f32 %v7069, %v7070
    %v7072 = vand.u32 %v7071, 4294901760
    %7073 = vmatpush1.msra.mxu0 %v7072
    %7074 = vmatprep.subr.mxu0 0.0
    %v7075 = vand.u32 %v6884, 4294901760
    %v7076 = vsub.f32 %v6884, %v7075
    %v7077 = vand.u32 %v7076, 4294901760
    %v7078 = vsub.f32 %v7076, %v7077
    %v7079 = vand.u32 %v7078, 4294901760
    %7080 = vmatpush1.msra.mxu0 %v7079
    %7081 = vmatprep.subr.mxu0 0.0
    %v7082 = vand.u32 %v6883, 4294901760
    %v7083 = vsub.f32 %v6883, %v7082
    %v7084 = vand.u32 %v7083, 4294901760
    %v7085 = vsub.f32 %v7083, %v7084
    %v7086 = vand.u32 %v7085, 4294901760
    %7087 = vmatpush1.msra.mxu0 %v7086
    %7088 = vmatprep.subr.mxu0 0.0
    %v7089 = vand.u32 %v6882, 4294901760
    %v7090 = vsub.f32 %v6882, %v7089
    %v7091 = vand.u32 %v7090, 4294901760
    %v7092 = vsub.f32 %v7090, %v7091
    %v7093 = vand.u32 %v7092, 4294901760
    %7094 = vmatpush1.msra.mxu0 %v7093
    %7095 = vmatprep.subr.mxu0 0.0
    %v7096 = vand.u32 %v6881, 4294901760
    %v7097 = vsub.f32 %v6881, %v7096
    %v7098 = vand.u32 %v7097, 4294901760
    %v7099 = vsub.f32 %v7097, %v7098
    %v7100 = vand.u32 %v7099, 4294901760
    %7101 = vmatpush1.msra.mxu0 %v7100
    %7102 = vmatprep.subr.mxu0 0.0
    %v7103 = vand.u32 %v6880, 4294901760
    %v7104 = vsub.f32 %v6880, %v7103
    %v7105 = vand.u32 %v7104, 4294901760
    %v7106 = vsub.f32 %v7104, %v7105
    %v7107 = vand.u32 %v7106, 4294901760
    %7108 = vmatpush1.msra.mxu0 %v7107
    %7109 = vmatprep.subr.mxu0 0.0
    %v7110 = vand.u32 %v6879, 4294901760
    %v7111 = vsub.f32 %v6879, %v7110
    %v7112 = vand.u32 %v7111, 4294901760
    %v7113 = vsub.f32 %v7111, %v7112
    %v7114 = vand.u32 %v7113, 4294901760
    %7115 = vmatpush1.msra.mxu0 %v7114
    %7116 = vmatprep.subr.mxu0 0.0
    %v7117 = vand.u32 %v6878, 4294901760
    %v7118 = vsub.f32 %v6878, %v7117
    %v7119 = vand.u32 %v7118, 4294901760
    %v7120 = vsub.f32 %v7118, %v7119
    %v7121 = vand.u32 %v7120, 4294901760
    %7122 = vmatpush1.msra.mxu0 %v7121
    %7123 = vmatprep.subr.mxu0 0.0
    %v7124 = vand.u32 %v6877, 4294901760
    %v7125 = vsub.f32 %v6877, %v7124
    %v7126 = vand.u32 %v7125, 4294901760
    %v7127 = vsub.f32 %v7125, %v7126
    %v7128 = vand.u32 %v7127, 4294901760
    %7129 = vmatpush1.msra.mxu0 %v7128
    %7130 = vmatprep.subr.mxu0 0.0
    %v7131 = vand.u32 %v6876, 4294901760
    %v7132 = vsub.f32 %v6876, %v7131
    %v7133 = vand.u32 %v7132, 4294901760
    %v7134 = vsub.f32 %v7132, %v7133
    %v7135 = vand.u32 %v7134, 4294901760
    %7136 = vmatpush1.msra.mxu0 %v7135
    %7137 = vmatprep.subr.mxu0 0.0
    %v7138 = vand.u32 %v6907, 4294901760
    %v7139 = vsub.f32 %v6907, %v7138
    %v7140 = vand.u32 %v7139, 4294901760
    %v7141 = vsub.f32 %v7139, %v7140
    %v7142 = vand.u32 %v7141, 4294901760
    %7143 = vmatpush2.msra.mxu0 %v7142
    %7144 = vmatprep.subr.mxu0 0.0
    %v7145 = vand.u32 %v6906, 4294901760
    %v7146 = vsub.f32 %v6906, %v7145
    %v7147 = vand.u32 %v7146, 4294901760
    %v7148 = vsub.f32 %v7146, %v7147
    %v7149 = vand.u32 %v7148, 4294901760
    %7150 = vmatpush2.msra.mxu0 %v7149
    %7151 = vmatprep.subr.mxu0 0.0
    %v7152 = vand.u32 %v6905, 4294901760
    %v7153 = vsub.f32 %v6905, %v7152
    %v7154 = vand.u32 %v7153, 4294901760
    %v7155 = vsub.f32 %v7153, %v7154
    %v7156 = vand.u32 %v7155, 4294901760
    %7157 = vmatpush2.msra.mxu0 %v7156
    %7158 = vmatprep.subr.mxu0 0.0
    %v7159 = vand.u32 %v6904, 4294901760
    %v7160 = vsub.f32 %v6904, %v7159
    %v7161 = vand.u32 %v7160, 4294901760
    %v7162 = vsub.f32 %v7160, %v7161
    %v7163 = vand.u32 %v7162, 4294901760
    %7164 = vmatpush2.msra.mxu0 %v7163
    %7165 = vmatprep.subr.mxu0 0.0
    %v7166 = vand.u32 %v6903, 4294901760
    %v7167 = vsub.f32 %v6903, %v7166
    %v7168 = vand.u32 %v7167, 4294901760
    %v7169 = vsub.f32 %v7167, %v7168
    %v7170 = vand.u32 %v7169, 4294901760
    %7171 = vmatpush2.msra.mxu0 %v7170
    %7172 = vmatprep.subr.mxu0 0.0
    %v7173 = vand.u32 %v6902, 4294901760
    %v7174 = vsub.f32 %v6902, %v7173
    %v7175 = vand.u32 %v7174, 4294901760
    %v7176 = vsub.f32 %v7174, %v7175
    %v7177 = vand.u32 %v7176, 4294901760
    %7178 = vmatpush2.msra.mxu0 %v7177
    %7179 = vmatprep.subr.mxu0 0.0
    %v7180 = vand.u32 %v6901, 4294901760
    %v7181 = vsub.f32 %v6901, %v7180
    %v7182 = vand.u32 %v7181, 4294901760
    %v7183 = vsub.f32 %v7181, %v7182
    %v7184 = vand.u32 %v7183, 4294901760
    %7185 = vmatpush2.msra.mxu0 %v7184
    %7186 = vmatprep.subr.mxu0 0.0
    %v7187 = vand.u32 %v6900, 4294901760
    %v7188 = vsub.f32 %v6900, %v7187
    %v7189 = vand.u32 %v7188, 4294901760
    %v7190 = vsub.f32 %v7188, %v7189
    %v7191 = vand.u32 %v7190, 4294901760
    %7192 = vmatpush2.msra.mxu0 %v7191
    %7193 = vmatprep.subr.mxu0 0.0
    %v7194 = vand.u32 %v6899, 4294901760
    %v7195 = vsub.f32 %v6899, %v7194
    %v7196 = vand.u32 %v7195, 4294901760
    %v7197 = vsub.f32 %v7195, %v7196
    %v7198 = vand.u32 %v7197, 4294901760
    %7199 = vmatpush2.msra.mxu0 %v7198
    %7200 = vmatprep.subr.mxu0 0.0
    %v7201 = vand.u32 %v6898, 4294901760
    %v7202 = vsub.f32 %v6898, %v7201
    %v7203 = vand.u32 %v7202, 4294901760
    %v7204 = vsub.f32 %v7202, %v7203
    %v7205 = vand.u32 %v7204, 4294901760
    %7206 = vmatpush2.msra.mxu0 %v7205
    %7207 = vmatprep.subr.mxu0 0.0
    %v7208 = vand.u32 %v6897, 4294901760
    %v7209 = vsub.f32 %v6897, %v7208
    %v7210 = vand.u32 %v7209, 4294901760
    %v7211 = vsub.f32 %v7209, %v7210
    %v7212 = vand.u32 %v7211, 4294901760
    %7213 = vmatpush2.msra.mxu0 %v7212
    %7214 = vmatprep.subr.mxu0 0.0
    %v7215 = vand.u32 %v6896, 4294901760
    %v7216 = vsub.f32 %v6896, %v7215
    %v7217 = vand.u32 %v7216, 4294901760
    %v7218 = vsub.f32 %v7216, %v7217
    %v7219 = vand.u32 %v7218, 4294901760
    %7220 = vmatpush2.msra.mxu0 %v7219
    %7221 = vmatprep.subr.mxu0 0.0
    %v7222 = vand.u32 %v6895, 4294901760
    %v7223 = vsub.f32 %v6895, %v7222
    %v7224 = vand.u32 %v7223, 4294901760
    %v7225 = vsub.f32 %v7223, %v7224
    %v7226 = vand.u32 %v7225, 4294901760
    %7227 = vmatpush2.msra.mxu0 %v7226
    %7228 = vmatprep.subr.mxu0 0.0
    %v7229 = vand.u32 %v6894, 4294901760
    %v7230 = vsub.f32 %v6894, %v7229
    %v7231 = vand.u32 %v7230, 4294901760
    %v7232 = vsub.f32 %v7230, %v7231
    %v7233 = vand.u32 %v7232, 4294901760
    %7234 = vmatpush2.msra.mxu0 %v7233
    %7235 = vmatprep.subr.mxu0 0.0
    %v7236 = vand.u32 %v6893, 4294901760
    %v7237 = vsub.f32 %v6893, %v7236
    %v7238 = vand.u32 %v7237, 4294901760
    %v7239 = vsub.f32 %v7237, %v7238
    %v7240 = vand.u32 %v7239, 4294901760
    %7241 = vmatpush2.msra.mxu0 %v7240
    %7242 = vmatprep.subr.mxu0 0.0
    %v7243 = vand.u32 %v6892, 4294901760
    %v7244 = vsub.f32 %v6892, %v7243
    %v7245 = vand.u32 %v7244, 4294901760
    %v7246 = vsub.f32 %v7244, %v7245
    %v7247 = vand.u32 %v7246, 4294901760
    %7248 = vmatpush2.msra.mxu0 %v7247
    %v7249 = vand.u32 %v6875, 4294901760
    %7250 = vmatprep.mubr.f32.mxu0 %v7249
    %v7251 = vand.u32 %v6868, 4294901760
    %7252 = vmatmul.mubr.f32.gmra.mxu0 %v7251
    %v7253 = vpop.f32.mrf.mxu0
    %v7254 = vadd.f32 %v7022, %v7253
    %v7255 = vpop.f32.mrf.mxu0
    %7256 = vdwg.mxu0
    %7257 = vmatprep.subr.mxu0 0.0
    %v7258 = vand.u32 %v6891, 4294901760
    %v7259 = vsub.f32 %v6891, %v7258
    %7260 = vmatpush1.msra.mxu0 %v7259
    %7261 = vmatprep.subr.mxu0 0.0
    %v7262 = vand.u32 %v6890, 4294901760
    %v7263 = vsub.f32 %v6890, %v7262
    %7264 = vmatpush1.msra.mxu0 %v7263
    %7265 = vmatprep.subr.mxu0 0.0
    %v7266 = vand.u32 %v6889, 4294901760
    %v7267 = vsub.f32 %v6889, %v7266
    %7268 = vmatpush1.msra.mxu0 %v7267
    %7269 = vmatprep.subr.mxu0 0.0
    %v7270 = vand.u32 %v6888, 4294901760
    %v7271 = vsub.f32 %v6888, %v7270
    %7272 = vmatpush1.msra.mxu0 %v7271
    %7273 = vmatprep.subr.mxu0 0.0
    %v7274 = vand.u32 %v6887, 4294901760
    %v7275 = vsub.f32 %v6887, %v7274
    %7276 = vmatpush1.msra.mxu0 %v7275
    %7277 = vmatprep.subr.mxu0 0.0
    %v7278 = vand.u32 %v6886, 4294901760
    %v7279 = vsub.f32 %v6886, %v7278
    %7280 = vmatpush1.msra.mxu0 %v7279
    %7281 = vmatprep.subr.mxu0 0.0
    %v7282 = vand.u32 %v6885, 4294901760
    %v7283 = vsub.f32 %v6885, %v7282
    %7284 = vmatpush1.msra.mxu0 %v7283
    %7285 = vmatprep.subr.mxu0 0.0
    %v7286 = vand.u32 %v6884, 4294901760
    %v7287 = vsub.f32 %v6884, %v7286
    %7288 = vmatpush1.msra.mxu0 %v7287
    %7289 = vmatprep.subr.mxu0 0.0
    %v7290 = vand.u32 %v6883, 4294901760
    %v7291 = vsub.f32 %v6883, %v7290
    %7292 = vmatpush1.msra.mxu0 %v7291
    %7293 = vmatprep.subr.mxu0 0.0
    %v7294 = vand.u32 %v6882, 4294901760
    %v7295 = vsub.f32 %v6882, %v7294
    %7296 = vmatpush1.msra.mxu0 %v7295
    %7297 = vmatprep.subr.mxu0 0.0
    %v7298 = vand.u32 %v6881, 4294901760
    %v7299 = vsub.f32 %v6881, %v7298
    %7300 = vmatpush1.msra.mxu0 %v7299
    %7301 = vmatprep.subr.mxu0 0.0
    %v7302 = vand.u32 %v6880, 4294901760
    %v7303 = vsub.f32 %v6880, %v7302
    %7304 = vmatpush1.msra.mxu0 %v7303
    %7305 = vmatprep.subr.mxu0 0.0
    %v7306 = vand.u32 %v6879, 4294901760
    %v7307 = vsub.f32 %v6879, %v7306
    %7308 = vmatpush1.msra.mxu0 %v7307
    %7309 = vmatprep.subr.mxu0 0.0
    %v7310 = vand.u32 %v6878, 4294901760
    %v7311 = vsub.f32 %v6878, %v7310
    %7312 = vmatpush1.msra.mxu0 %v7311
    %7313 = vmatprep.subr.mxu0 0.0
    %v7314 = vand.u32 %v6877, 4294901760
    %v7315 = vsub.f32 %v6877, %v7314
    %7316 = vmatpush1.msra.mxu0 %v7315
    %7317 = vmatprep.subr.mxu0 0.0
    %v7318 = vand.u32 %v6876, 4294901760
    %v7319 = vsub.f32 %v6876, %v7318
    %7320 = vmatpush1.msra.mxu0 %v7319
    %7321 = vmatprep.subr.mxu0 0.0
    %v7322 = vand.u32 %v6907, 4294901760
    %v7323 = vsub.f32 %v6907, %v7322
    %7324 = vmatpush2.msra.mxu0 %v7323
    %7325 = vmatprep.subr.mxu0 0.0
    %v7326 = vand.u32 %v6906, 4294901760
    %v7327 = vsub.f32 %v6906, %v7326
    %7328 = vmatpush2.msra.mxu0 %v7327
    %7329 = vmatprep.subr.mxu0 0.0
    %v7330 = vand.u32 %v6905, 4294901760
    %v7331 = vsub.f32 %v6905, %v7330
    %7332 = vmatpush2.msra.mxu0 %v7331
    %7333 = vmatprep.subr.mxu0 0.0
    %v7334 = vand.u32 %v6904, 4294901760
    %v7335 = vsub.f32 %v6904, %v7334
    %7336 = vmatpush2.msra.mxu0 %v7335
    %7337 = vmatprep.subr.mxu0 0.0
    %v7338 = vand.u32 %v6903, 4294901760
    %v7339 = vsub.f32 %v6903, %v7338
    %7340 = vmatpush2.msra.mxu0 %v7339
    %7341 = vmatprep.subr.mxu0 0.0
    %v7342 = vand.u32 %v6902, 4294901760
    %v7343 = vsub.f32 %v6902, %v7342
    %7344 = vmatpush2.msra.mxu0 %v7343
    %7345 = vmatprep.subr.mxu0 0.0
    %v7346 = vand.u32 %v6901, 4294901760
    %v7347 = vsub.f32 %v6901, %v7346
    %7348 = vmatpush2.msra.mxu0 %v7347
    %7349 = vmatprep.subr.mxu0 0.0
    %v7350 = vand.u32 %v6900, 4294901760
    %v7351 = vsub.f32 %v6900, %v7350
    %7352 = vmatpush2.msra.mxu0 %v7351
    %7353 = vmatprep.subr.mxu0 0.0
    %v7354 = vand.u32 %v6899, 4294901760
    %v7355 = vsub.f32 %v6899, %v7354
    %7356 = vmatpush2.msra.mxu0 %v7355
    %7357 = vmatprep.subr.mxu0 0.0
    %v7358 = vand.u32 %v6898, 4294901760
    %v7359 = vsub.f32 %v6898, %v7358
    %7360 = vmatpush2.msra.mxu0 %v7359
    %7361 = vmatprep.subr.mxu0 0.0
    %v7362 = vand.u32 %v6897, 4294901760
    %v7363 = vsub.f32 %v6897, %v7362
    %7364 = vmatpush2.msra.mxu0 %v7363
    %7365 = vmatprep.subr.mxu0 0.0
    %v7366 = vand.u32 %v6896, 4294901760
    %v7367 = vsub.f32 %v6896, %v7366
    %7368 = vmatpush2.msra.mxu0 %v7367
    %7369 = vmatprep.subr.mxu0 0.0
    %v7370 = vand.u32 %v6895, 4294901760
    %v7371 = vsub.f32 %v6895, %v7370
    %7372 = vmatpush2.msra.mxu0 %v7371
    %7373 = vmatprep.subr.mxu0 0.0
    %v7374 = vand.u32 %v6894, 4294901760
    %v7375 = vsub.f32 %v6894, %v7374
    %7376 = vmatpush2.msra.mxu0 %v7375
    %7377 = vmatprep.subr.mxu0 0.0
    %v7378 = vand.u32 %v6893, 4294901760
    %v7379 = vsub.f32 %v6893, %v7378
    %7380 = vmatpush2.msra.mxu0 %v7379
    %7381 = vmatprep.subr.mxu0 0.0
    %v7382 = vand.u32 %v6892, 4294901760
    %v7383 = vsub.f32 %v6892, %v7382
    %7384 = vmatpush2.msra.mxu0 %v7383
    %v7385 = vand.u32 %v6875, 4294901760
    %v7386 = vsub.f32 %v6875, %v7385
    %7387 = vmatprep.mubr.f32.mxu0 %v7386
    %v7388 = vand.u32 %v6868, 4294901760
    %v7389 = vsub.f32 %v6868, %v7388
    %7390 = vmatmul.mubr.f32.gmra.mxu0 %v7389
    %v7391 = vpop.f32.mrf.mxu0
    %v7392 = vadd.f32 %v7254, %v7391
    %v7393 = vpop.f32.mrf.mxu0
    %7394 = vdwg.mxu0
    %7395 = vmatprep.subr.mxu0 0.0
    %v7396 = vand.u32 %v6891, 4294901760
    %7397 = vmatpush1.msra.mxu0 %v7396
    %7398 = vmatprep.subr.mxu0 0.0
    %v7399 = vand.u32 %v6890, 4294901760
    %7400 = vmatpush1.msra.mxu0 %v7399
    %7401 = vmatprep.subr.mxu0 0.0
    %v7402 = vand.u32 %v6889, 4294901760
    %7403 = vmatpush1.msra.mxu0 %v7402
    %7404 = vmatprep.subr.mxu0 0.0
    %v7405 = vand.u32 %v6888, 4294901760
    %7406 = vmatpush1.msra.mxu0 %v7405
    %7407 = vmatprep.subr.mxu0 0.0
    %v7408 = vand.u32 %v6887, 4294901760
    %7409 = vmatpush1.msra.mxu0 %v7408
    %7410 = vmatprep.subr.mxu0 0.0
    %v7411 = vand.u32 %v6886, 4294901760
    %7412 = vmatpush1.msra.mxu0 %v7411
    %7413 = vmatprep.subr.mxu0 0.0
    %v7414 = vand.u32 %v6885, 4294901760
    %7415 = vmatpush1.msra.mxu0 %v7414
    %7416 = vmatprep.subr.mxu0 0.0
    %v7417 = vand.u32 %v6884, 4294901760
    %7418 = vmatpush1.msra.mxu0 %v7417
    %7419 = vmatprep.subr.mxu0 0.0
    %v7420 = vand.u32 %v6883, 4294901760
    %7421 = vmatpush1.msra.mxu0 %v7420
    %7422 = vmatprep.subr.mxu0 0.0
    %v7423 = vand.u32 %v6882, 4294901760
    %7424 = vmatpush1.msra.mxu0 %v7423
    %7425 = vmatprep.subr.mxu0 0.0
    %v7426 = vand.u32 %v6881, 4294901760
    %7427 = vmatpush1.msra.mxu0 %v7426
    %7428 = vmatprep.subr.mxu0 0.0
    %v7429 = vand.u32 %v6880, 4294901760
    %7430 = vmatpush1.msra.mxu0 %v7429
    %7431 = vmatprep.subr.mxu0 0.0
    %v7432 = vand.u32 %v6879, 4294901760
    %7433 = vmatpush1.msra.mxu0 %v7432
    %7434 = vmatprep.subr.mxu0 0.0
    %v7435 = vand.u32 %v6878, 4294901760
    %7436 = vmatpush1.msra.mxu0 %v7435
    %7437 = vmatprep.subr.mxu0 0.0
    %v7438 = vand.u32 %v6877, 4294901760
    %7439 = vmatpush1.msra.mxu0 %v7438
    %7440 = vmatprep.subr.mxu0 0.0
    %v7441 = vand.u32 %v6876, 4294901760
    %7442 = vmatpush1.msra.mxu0 %v7441
    %7443 = vmatprep.subr.mxu0 0.0
    %v7444 = vand.u32 %v6907, 4294901760
    %7445 = vmatpush2.msra.mxu0 %v7444
    %7446 = vmatprep.subr.mxu0 0.0
    %v7447 = vand.u32 %v6906, 4294901760
    %7448 = vmatpush2.msra.mxu0 %v7447
    %7449 = vmatprep.subr.mxu0 0.0
    %v7450 = vand.u32 %v6905, 4294901760
    %7451 = vmatpush2.msra.mxu0 %v7450
    %7452 = vmatprep.subr.mxu0 0.0
    %v7453 = vand.u32 %v6904, 4294901760
    %7454 = vmatpush2.msra.mxu0 %v7453
    %7455 = vmatprep.subr.mxu0 0.0
    %v7456 = vand.u32 %v6903, 4294901760
    %7457 = vmatpush2.msra.mxu0 %v7456
    %7458 = vmatprep.subr.mxu0 0.0
    %v7459 = vand.u32 %v6902, 4294901760
    %7460 = vmatpush2.msra.mxu0 %v7459
    %7461 = vmatprep.subr.mxu0 0.0
    %v7462 = vand.u32 %v6901, 4294901760
    %7463 = vmatpush2.msra.mxu0 %v7462
    %7464 = vmatprep.subr.mxu0 0.0
    %v7465 = vand.u32 %v6900, 4294901760
    %7466 = vmatpush2.msra.mxu0 %v7465
    %7467 = vmatprep.subr.mxu0 0.0
    %v7468 = vand.u32 %v6899, 4294901760
    %7469 = vmatpush2.msra.mxu0 %v7468
    %7470 = vmatprep.subr.mxu0 0.0
    %v7471 = vand.u32 %v6898, 4294901760
    %7472 = vmatpush2.msra.mxu0 %v7471
    %7473 = vmatprep.subr.mxu0 0.0
    %v7474 = vand.u32 %v6897, 4294901760
    %7475 = vmatpush2.msra.mxu0 %v7474
    %7476 = vmatprep.subr.mxu0 0.0
    %v7477 = vand.u32 %v6896, 4294901760
    %7478 = vmatpush2.msra.mxu0 %v7477
    %7479 = vmatprep.subr.mxu0 0.0
    %v7480 = vand.u32 %v6895, 4294901760
    %7481 = vmatpush2.msra.mxu0 %v7480
    %7482 = vmatprep.subr.mxu0 0.0
    %v7483 = vand.u32 %v6894, 4294901760
    %7484 = vmatpush2.msra.mxu0 %v7483
    %7485 = vmatprep.subr.mxu0 0.0
    %v7486 = vand.u32 %v6893, 4294901760
    %7487 = vmatpush2.msra.mxu0 %v7486
    %7488 = vmatprep.subr.mxu0 0.0
    %v7489 = vand.u32 %v6892, 4294901760
    %7490 = vmatpush2.msra.mxu0 %v7489
    %v7491 = vand.u32 %v6875, 4294901760
    %v7492 = vsub.f32 %v6875, %v7491
    %v7493 = vand.u32 %v7492, 4294901760
    %7494 = vmatprep.mubr.f32.mxu0 %v7493
    %v7495 = vand.u32 %v6868, 4294901760
    %v7496 = vsub.f32 %v6868, %v7495
    %v7497 = vand.u32 %v7496, 4294901760
    %7498 = vmatmul.mubr.f32.gmra.mxu0 %v7497
    %v7499 = vpop.f32.mrf.mxu0
    %v7500 = vadd.f32 %v7392, %v7499
    %v7501 = vpop.f32.mrf.mxu0
    %7502 = vdwg.mxu0
    %7503 = vmatprep.subr.mxu0 0.0
    %v7504 = vand.u32 %v6891, 4294901760
    %v7505 = vsub.f32 %v6891, %v7504
    %v7506 = vand.u32 %v7505, 4294901760
    %7507 = vmatpush1.msra.mxu0 %v7506
    %7508 = vmatprep.subr.mxu0 0.0
    %v7509 = vand.u32 %v6890, 4294901760
    %v7510 = vsub.f32 %v6890, %v7509
    %v7511 = vand.u32 %v7510, 4294901760
    %7512 = vmatpush1.msra.mxu0 %v7511
    %7513 = vmatprep.subr.mxu0 0.0
    %v7514 = vand.u32 %v6889, 4294901760
    %v7515 = vsub.f32 %v6889, %v7514
    %v7516 = vand.u32 %v7515, 4294901760
    %7517 = vmatpush1.msra.mxu0 %v7516
    %7518 = vmatprep.subr.mxu0 0.0
    %v7519 = vand.u32 %v6888, 4294901760
    %v7520 = vsub.f32 %v6888, %v7519
    %v7521 = vand.u32 %v7520, 4294901760
    %7522 = vmatpush1.msra.mxu0 %v7521
    %7523 = vmatprep.subr.mxu0 0.0
    %v7524 = vand.u32 %v6887, 4294901760
    %v7525 = vsub.f32 %v6887, %v7524
    %v7526 = vand.u32 %v7525, 4294901760
    %7527 = vmatpush1.msra.mxu0 %v7526
    %7528 = vmatprep.subr.mxu0 0.0
    %v7529 = vand.u32 %v6886, 4294901760
    %v7530 = vsub.f32 %v6886, %v7529
    %v7531 = vand.u32 %v7530, 4294901760
    %7532 = vmatpush1.msra.mxu0 %v7531
    %7533 = vmatprep.subr.mxu0 0.0
    %v7534 = vand.u32 %v6885, 4294901760
    %v7535 = vsub.f32 %v6885, %v7534
    %v7536 = vand.u32 %v7535, 4294901760
    %7537 = vmatpush1.msra.mxu0 %v7536
    %7538 = vmatprep.subr.mxu0 0.0
    %v7539 = vand.u32 %v6884, 4294901760
    %v7540 = vsub.f32 %v6884, %v7539
    %v7541 = vand.u32 %v7540, 4294901760
    %7542 = vmatpush1.msra.mxu0 %v7541
    %7543 = vmatprep.subr.mxu0 0.0
    %v7544 = vand.u32 %v6883, 4294901760
    %v7545 = vsub.f32 %v6883, %v7544
    %v7546 = vand.u32 %v7545, 4294901760
    %7547 = vmatpush1.msra.mxu0 %v7546
    %7548 = vmatprep.subr.mxu0 0.0
    %v7549 = vand.u32 %v6882, 4294901760
    %v7550 = vsub.f32 %v6882, %v7549
    %v7551 = vand.u32 %v7550, 4294901760
    %7552 = vmatpush1.msra.mxu0 %v7551
    %7553 = vmatprep.subr.mxu0 0.0
    %v7554 = vand.u32 %v6881, 4294901760
    %v7555 = vsub.f32 %v6881, %v7554
    %v7556 = vand.u32 %v7555, 4294901760
    %7557 = vmatpush1.msra.mxu0 %v7556
    %7558 = vmatprep.subr.mxu0 0.0
    %v7559 = vand.u32 %v6880, 4294901760
    %v7560 = vsub.f32 %v6880, %v7559
    %v7561 = vand.u32 %v7560, 4294901760
    %7562 = vmatpush1.msra.mxu0 %v7561
    %7563 = vmatprep.subr.mxu0 0.0
    %v7564 = vand.u32 %v6879, 4294901760
    %v7565 = vsub.f32 %v6879, %v7564
    %v7566 = vand.u32 %v7565, 4294901760
    %7567 = vmatpush1.msra.mxu0 %v7566
    %7568 = vmatprep.subr.mxu0 0.0
    %v7569 = vand.u32 %v6878, 4294901760
    %v7570 = vsub.f32 %v6878, %v7569
    %v7571 = vand.u32 %v7570, 4294901760
    %7572 = vmatpush1.msra.mxu0 %v7571
    %7573 = vmatprep.subr.mxu0 0.0
    %v7574 = vand.u32 %v6877, 4294901760
    %v7575 = vsub.f32 %v6877, %v7574
    %v7576 = vand.u32 %v7575, 4294901760
    %7577 = vmatpush1.msra.mxu0 %v7576
    %7578 = vmatprep.subr.mxu0 0.0
    %v7579 = vand.u32 %v6876, 4294901760
    %v7580 = vsub.f32 %v6876, %v7579
    %v7581 = vand.u32 %v7580, 4294901760
    %7582 = vmatpush1.msra.mxu0 %v7581
    %7583 = vmatprep.subr.mxu0 0.0
    %v7584 = vand.u32 %v6907, 4294901760
    %v7585 = vsub.f32 %v6907, %v7584
    %v7586 = vand.u32 %v7585, 4294901760
    %7587 = vmatpush2.msra.mxu0 %v7586
    %7588 = vmatprep.subr.mxu0 0.0
    %v7589 = vand.u32 %v6906, 4294901760
    %v7590 = vsub.f32 %v6906, %v7589
    %v7591 = vand.u32 %v7590, 4294901760
    %7592 = vmatpush2.msra.mxu0 %v7591
    %7593 = vmatprep.subr.mxu0 0.0
    %v7594 = vand.u32 %v6905, 4294901760
    %v7595 = vsub.f32 %v6905, %v7594
    %v7596 = vand.u32 %v7595, 4294901760
    %7597 = vmatpush2.msra.mxu0 %v7596
    %7598 = vmatprep.subr.mxu0 0.0
    %v7599 = vand.u32 %v6904, 4294901760
    %v7600 = vsub.f32 %v6904, %v7599
    %v7601 = vand.u32 %v7600, 4294901760
    %7602 = vmatpush2.msra.mxu0 %v7601
    %7603 = vmatprep.subr.mxu0 0.0
    %v7604 = vand.u32 %v6903, 4294901760
    %v7605 = vsub.f32 %v6903, %v7604
    %v7606 = vand.u32 %v7605, 4294901760
    %7607 = vmatpush2.msra.mxu0 %v7606
    %7608 = vmatprep.subr.mxu0 0.0
    %v7609 = vand.u32 %v6902, 4294901760
    %v7610 = vsub.f32 %v6902, %v7609
    %v7611 = vand.u32 %v7610, 4294901760
    %7612 = vmatpush2.msra.mxu0 %v7611
    %7613 = vmatprep.subr.mxu0 0.0
    %v7614 = vand.u32 %v6901, 4294901760
    %v7615 = vsub.f32 %v6901, %v7614
    %v7616 = vand.u32 %v7615, 4294901760
    %7617 = vmatpush2.msra.mxu0 %v7616
    %7618 = vmatprep.subr.mxu0 0.0
    %v7619 = vand.u32 %v6900, 4294901760
    %v7620 = vsub.f32 %v6900, %v7619
    %v7621 = vand.u32 %v7620, 4294901760
    %7622 = vmatpush2.msra.mxu0 %v7621
    %7623 = vmatprep.subr.mxu0 0.0
    %v7624 = vand.u32 %v6899, 4294901760
    %v7625 = vsub.f32 %v6899, %v7624
    %v7626 = vand.u32 %v7625, 4294901760
    %7627 = vmatpush2.msra.mxu0 %v7626
    %7628 = vmatprep.subr.mxu0 0.0
    %v7629 = vand.u32 %v6898, 4294901760
    %v7630 = vsub.f32 %v6898, %v7629
    %v7631 = vand.u32 %v7630, 4294901760
    %7632 = vmatpush2.msra.mxu0 %v7631
    %7633 = vmatprep.subr.mxu0 0.0
    %v7634 = vand.u32 %v6897, 4294901760
    %v7635 = vsub.f32 %v6897, %v7634
    %v7636 = vand.u32 %v7635, 4294901760
    %7637 = vmatpush2.msra.mxu0 %v7636
    %7638 = vmatprep.subr.mxu0 0.0
    %v7639 = vand.u32 %v6896, 4294901760
    %v7640 = vsub.f32 %v6896, %v7639
    %v7641 = vand.u32 %v7640, 4294901760
    %7642 = vmatpush2.msra.mxu0 %v7641
    %7643 = vmatprep.subr.mxu0 0.0
    %v7644 = vand.u32 %v6895, 4294901760
    %v7645 = vsub.f32 %v6895, %v7644
    %v7646 = vand.u32 %v7645, 4294901760
    %7647 = vmatpush2.msra.mxu0 %v7646
    %7648 = vmatprep.subr.mxu0 0.0
    %v7649 = vand.u32 %v6894, 4294901760
    %v7650 = vsub.f32 %v6894, %v7649
    %v7651 = vand.u32 %v7650, 4294901760
    %7652 = vmatpush2.msra.mxu0 %v7651
    %7653 = vmatprep.subr.mxu0 0.0
    %v7654 = vand.u32 %v6893, 4294901760
    %v7655 = vsub.f32 %v6893, %v7654
    %v7656 = vand.u32 %v7655, 4294901760
    %7657 = vmatpush2.msra.mxu0 %v7656
    %7658 = vmatprep.subr.mxu0 0.0
    %v7659 = vand.u32 %v6892, 4294901760
    %v7660 = vsub.f32 %v6892, %v7659
    %v7661 = vand.u32 %v7660, 4294901760
    %7662 = vmatpush2.msra.mxu0 %v7661
    %v7663 = vand.u32 %v6875, 4294901760
    %7664 = vmatprep.mubr.f32.mxu0 %v7663
    %v7665 = vand.u32 %v6868, 4294901760
    %7666 = vmatmul.mubr.f32.gmra.mxu0 %v7665
    %v7667 = vpop.f32.mrf.mxu0
    %v7668 = vadd.f32 %v7500, %v7667
    %v7669 = vpop.f32.mrf.mxu0
    %7670 = vdwg.mxu0
    %7671 = vmatprep.subr.mxu0 0.0
    %v7672 = vand.u32 %v6891, 4294901760
    %7673 = vmatpush1.msra.mxu0 %v7672
    %7674 = vmatprep.subr.mxu0 0.0
    %v7675 = vand.u32 %v6890, 4294901760
    %7676 = vmatpush1.msra.mxu0 %v7675
    %7677 = vmatprep.subr.mxu0 0.0
    %v7678 = vand.u32 %v6889, 4294901760
    %7679 = vmatpush1.msra.mxu0 %v7678
    %7680 = vmatprep.subr.mxu0 0.0
    %v7681 = vand.u32 %v6888, 4294901760
    %7682 = vmatpush1.msra.mxu0 %v7681
    %7683 = vmatprep.subr.mxu0 0.0
    %v7684 = vand.u32 %v6887, 4294901760
    %7685 = vmatpush1.msra.mxu0 %v7684
    %7686 = vmatprep.subr.mxu0 0.0
    %v7687 = vand.u32 %v6886, 4294901760
    %7688 = vmatpush1.msra.mxu0 %v7687
    %7689 = vmatprep.subr.mxu0 0.0
    %v7690 = vand.u32 %v6885, 4294901760
    %7691 = vmatpush1.msra.mxu0 %v7690
    %7692 = vmatprep.subr.mxu0 0.0
    %v7693 = vand.u32 %v6884, 4294901760
    %7694 = vmatpush1.msra.mxu0 %v7693
    %7695 = vmatprep.subr.mxu0 0.0
    %v7696 = vand.u32 %v6883, 4294901760
    %7697 = vmatpush1.msra.mxu0 %v7696
    %7698 = vmatprep.subr.mxu0 0.0
    %v7699 = vand.u32 %v6882, 4294901760
    %7700 = vmatpush1.msra.mxu0 %v7699
    %7701 = vmatprep.subr.mxu0 0.0
    %v7702 = vand.u32 %v6881, 4294901760
    %7703 = vmatpush1.msra.mxu0 %v7702
    %7704 = vmatprep.subr.mxu0 0.0
    %v7705 = vand.u32 %v6880, 4294901760
    %7706 = vmatpush1.msra.mxu0 %v7705
    %7707 = vmatprep.subr.mxu0 0.0
    %v7708 = vand.u32 %v6879, 4294901760
    %7709 = vmatpush1.msra.mxu0 %v7708
    %7710 = vmatprep.subr.mxu0 0.0
    %v7711 = vand.u32 %v6878, 4294901760
    %7712 = vmatpush1.msra.mxu0 %v7711
    %7713 = vmatprep.subr.mxu0 0.0
    %v7714 = vand.u32 %v6877, 4294901760
    %7715 = vmatpush1.msra.mxu0 %v7714
    %7716 = vmatprep.subr.mxu0 0.0
    %v7717 = vand.u32 %v6876, 4294901760
    %7718 = vmatpush1.msra.mxu0 %v7717
    %7719 = vmatprep.subr.mxu0 0.0
    %v7720 = vand.u32 %v6907, 4294901760
    %7721 = vmatpush2.msra.mxu0 %v7720
    %7722 = vmatprep.subr.mxu0 0.0
    %v7723 = vand.u32 %v6906, 4294901760
    %7724 = vmatpush2.msra.mxu0 %v7723
    %7725 = vmatprep.subr.mxu0 0.0
    %v7726 = vand.u32 %v6905, 4294901760
    %7727 = vmatpush2.msra.mxu0 %v7726
    %7728 = vmatprep.subr.mxu0 0.0
    %v7729 = vand.u32 %v6904, 4294901760
    %7730 = vmatpush2.msra.mxu0 %v7729
    %7731 = vmatprep.subr.mxu0 0.0
    %v7732 = vand.u32 %v6903, 4294901760
    %7733 = vmatpush2.msra.mxu0 %v7732
    %7734 = vmatprep.subr.mxu0 0.0
    %v7735 = vand.u32 %v6902, 4294901760
    %7736 = vmatpush2.msra.mxu0 %v7735
    %7737 = vmatprep.subr.mxu0 0.0
    %v7738 = vand.u32 %v6901, 4294901760
    %7739 = vmatpush2.msra.mxu0 %v7738
    %7740 = vmatprep.subr.mxu0 0.0
    %v7741 = vand.u32 %v6900, 4294901760
    %7742 = vmatpush2.msra.mxu0 %v7741
    %7743 = vmatprep.subr.mxu0 0.0
    %v7744 = vand.u32 %v6899, 4294901760
    %7745 = vmatpush2.msra.mxu0 %v7744
    %7746 = vmatprep.subr.mxu0 0.0
    %v7747 = vand.u32 %v6898, 4294901760
    %7748 = vmatpush2.msra.mxu0 %v7747
    %7749 = vmatprep.subr.mxu0 0.0
    %v7750 = vand.u32 %v6897, 4294901760
    %7751 = vmatpush2.msra.mxu0 %v7750
    %7752 = vmatprep.subr.mxu0 0.0
    %v7753 = vand.u32 %v6896, 4294901760
    %7754 = vmatpush2.msra.mxu0 %v7753
    %7755 = vmatprep.subr.mxu0 0.0
    %v7756 = vand.u32 %v6895, 4294901760
    %7757 = vmatpush2.msra.mxu0 %v7756
    %7758 = vmatprep.subr.mxu0 0.0
    %v7759 = vand.u32 %v6894, 4294901760
    %7760 = vmatpush2.msra.mxu0 %v7759
    %7761 = vmatprep.subr.mxu0 0.0
    %v7762 = vand.u32 %v6893, 4294901760
    %7763 = vmatpush2.msra.mxu0 %v7762
    %7764 = vmatprep.subr.mxu0 0.0
    %v7765 = vand.u32 %v6892, 4294901760
    %7766 = vmatpush2.msra.mxu0 %v7765
    %v7767 = vand.u32 %v6875, 4294901760
    %7768 = vmatprep.mubr.f32.mxu0 %v7767
    %v7769 = vand.u32 %v6868, 4294901760
    %7770 = vmatmul.mubr.f32.gmra.mxu0 %v7769
    %v7771 = vpop.f32.mrf.mxu0
    %v7772 = vadd.f32 %v7668, %v7771
    %v7773 = vpop.f32.mrf.mxu0
    %7774 = vdwg.mxu0
    %v7775 = vsel %vm4673, %v7772, 0.0
    %v7776 = vrot.slane %v7775, 4
    %v7777 = vadd.f32 %v7775, %v7776
    %v7778 = vrot.slane %v7777, 2
    %v7779 = vadd.f32 %v7777, %v7778
    %v7780 = vrot.slane %v7779, 1
    %v7781 = vadd.f32 %v7779, %v7780
    %v7782 = vrcp.pop 8.0
    %v7783 = vmul.f32 %v7781, %v7782
    %v7784 = vsub.f32 %v7772, %v7783
    %v7785 = vmul.f32 %v7784, %v7784
    %v7786 = vsel %vm4673, %v7785, 0.0
    %v7787 = vrot.slane %v7786, 4
    %v7788 = vadd.f32 %v7786, %v7787
    %v7789 = vrot.slane %v7788, 2
    %v7790 = vadd.f32 %v7788, %v7789
    %v7791 = vrot.slane %v7790, 1
    %v7792 = vadd.f32 %v7790, %v7791
    %v7793 = vmul.f32 %v7792, %v7782
    %v7794 = vadd.f32 %v7793, 1e-05
    %v7795 = vrsqrt.pop %v7794
    %v7796 = vmul.f32 %v7784, %v7795
    %v7797 = vld [vmem:[%s8 + $0x1] sm:$0x1]
    %v7798 = vlaneseq
    %v7799 = vshrl.u32 %v7798, 7
    %v7800 = vsub.s32 0, %v7799
    %v7801 = vrot.slane %v7797, %v7800
    %v7802 = vmul.f32 %v7796, %v7801
    %v7803 = vld [vmem:[%s8 + $0x2] sm:$0x1]
    %v7804 = vlaneseq
    %v7805 = vshrl.u32 %v7804, 7
    %v7806 = vsub.s32 0, %v7805
    %v7807 = vrot.slane %v7803, %v7806
    %v7808 = vadd.f32 %v7802, %v7807
    %vm7809 = vcmp.ge.f32.partialorder %v7808, 0.0
    %v7810 = vmul.f32 %v7808, 0.2
    %v7811 = vsel %vm7809, %v7808, %v7810
    %v7812 = vld [vmem:[%s9] sm:$0xf]
    %v7813 = vld [vmem:[%s9 + $0x4] sm:$0xf]
    %v7814 = vld [vmem:[%s9 + $0x8] sm:$0xf]
    %v7815 = vld [vmem:[%s9 + $0xc] sm:$0xf]
    %v7816 = vunpack.c.l.bf16 %v7812
    %v7817 = vunpack.c.l.bf16 %v7813
    %v7818 = vunpack.c.l.bf16 %v7814
    %v7819 = vunpack.c.l.bf16 %v7815
    %v7821 = vsel %vm4658, %v7816, 0
    %v7824 = vsel %vm4658, %v7817, 0
    %v7827 = vsel %vm4658, %v7818, 0
    %v7830 = vsel %vm4658, %v7819, 0
    %7832 = vmatprep.subr.mxu0 0.0
    %7833 = vmatpush1.msra.mxu0 0.0
    %7834 = vmatprep.subr.mxu0 0.0
    %7835 = vmatpush1.msra.mxu0 0.0
    %7836 = vmatprep.subr.mxu0 0.0
    %7837 = vmatpush1.msra.mxu0 0.0
    %7838 = vmatprep.subr.mxu0 0.0
    %7839 = vmatpush1.msra.mxu0 0.0
    %7840 = vmatprep.subr.mxu0 0.0
    %7841 = vmatpush1.msra.mxu0 0.0
    %7842 = vmatprep.subr.mxu0 0.0
    %7843 = vmatpush1.msra.mxu0 0.0
    %7844 = vmatprep.subr.mxu0 0.0
    %7845 = vmatpush1.msra.mxu0 0.0
    %7846 = vmatprep.subr.mxu0 0.0
    %7847 = vmatpush1.msra.mxu0 0.0
    %7848 = vmatprep.subr.mxu0 0.0
    %7849 = vmatpush1.msra.mxu0 0.0
    %7850 = vmatprep.subr.mxu0 0.0
    %7851 = vmatpush1.msra.mxu0 0.0
    %7852 = vmatprep.subr.mxu0 0.0
    %7853 = vmatpush1.msra.mxu0 0.0
    %7854 = vmatprep.subr.mxu0 0.0
    %7855 = vmatpush1.msra.mxu0 0.0
    %7856 = vmatprep.subr.mxu0 0.0
    %7857 = vmatpush1.msra.mxu0 0.0
    %7858 = vmatprep.subr.mxu0 0.0
    %7859 = vmatpush1.msra.mxu0 0.0
    %7860 = vmatprep.subr.mxu0 0.0
    %7861 = vmatpush1.msra.mxu0 0.0
    %7862 = vmatprep.subr.mxu0 0.0
    %v7863 = vand.u32 %v7811, 4294901760
    %7864 = vmatpush1.msra.mxu0 %v7863
    %7865 = vmatprep.subr.mxu0 0.0
    %7866 = vmatpush2.msra.mxu0 0.0
    %7867 = vmatprep.subr.mxu0 0.0
    %7868 = vmatpush2.msra.mxu0 0.0
    %7869 = vmatprep.subr.mxu0 0.0
    %7870 = vmatpush2.msra.mxu0 0.0
    %7871 = vmatprep.subr.mxu0 0.0
    %7872 = vmatpush2.msra.mxu0 0.0
    %7873 = vmatprep.subr.mxu0 0.0
    %7874 = vmatpush2.msra.mxu0 0.0
    %7875 = vmatprep.subr.mxu0 0.0
    %7876 = vmatpush2.msra.mxu0 0.0
    %7877 = vmatprep.subr.mxu0 0.0
    %7878 = vmatpush2.msra.mxu0 0.0
    %7879 = vmatprep.subr.mxu0 0.0
    %7880 = vmatpush2.msra.mxu0 0.0
    %7881 = vmatprep.subr.mxu0 0.0
    %7882 = vmatpush2.msra.mxu0 0.0
    %7883 = vmatprep.subr.mxu0 0.0
    %7884 = vmatpush2.msra.mxu0 0.0
    %7885 = vmatprep.subr.mxu0 0.0
    %7886 = vmatpush2.msra.mxu0 0.0
    %7887 = vmatprep.subr.mxu0 0.0
    %7888 = vmatpush2.msra.mxu0 0.0
    %7889 = vmatprep.subr.mxu0 0.0
    %7890 = vmatpush2.msra.mxu0 0.0
    %7891 = vmatprep.subr.mxu0 0.0
    %7892 = vmatpush2.msra.mxu0 0.0
    %7893 = vmatprep.subr.mxu0 0.0
    %7894 = vmatpush2.msra.mxu0 0.0
    %7895 = vmatprep.subr.mxu0 0.0
    %7896 = vmatpush2.msra.mxu0 0.0
    %7897 = vmatprep.mubr.f32.mxu0 0.0
    %v7898 = vand.u32 %v7821, 4294901760
    %v7899 = vsub.f32 %v7821, %v7898
    %v7900 = vand.u32 %v7899, 4294901760
    %v7901 = vsub.f32 %v7899, %v7900
    %v7902 = vand.u32 %v7901, 4294901760
    %7903 = vmatmul.mubr.f32.gmra.mxu0 %v7902
    %v7904 = vpop.f32.mrf.mxu0
    %v7905 = vadd.f32 0.0, %v7904
    %v7906 = vpop.f32.mrf.mxu0
    %7907 = vmatprep.mubr.f32.mxu0 0.0
    %v7908 = vand.u32 %v7824, 4294901760
    %v7909 = vsub.f32 %v7824, %v7908
    %v7910 = vand.u32 %v7909, 4294901760
    %v7911 = vsub.f32 %v7909, %v7910
    %v7912 = vand.u32 %v7911, 4294901760
    %7913 = vmatmul.mubr.f32.gmra.mxu0 %v7912
    %v7914 = vpop.f32.mrf.mxu0
    %v7915 = vadd.f32 0.0, %v7914
    %v7916 = vpop.f32.mrf.mxu0
    %7917 = vmatprep.mubr.f32.mxu0 0.0
    %v7918 = vand.u32 %v7827, 4294901760
    %v7919 = vsub.f32 %v7827, %v7918
    %v7920 = vand.u32 %v7919, 4294901760
    %v7921 = vsub.f32 %v7919, %v7920
    %v7922 = vand.u32 %v7921, 4294901760
    %7923 = vmatmul.mubr.f32.gmra.mxu0 %v7922
    %v7924 = vpop.f32.mrf.mxu0
    %v7925 = vadd.f32 0.0, %v7924
    %v7926 = vpop.f32.mrf.mxu0
    %7927 = vmatprep.mubr.f32.mxu0 0.0
    %v7928 = vand.u32 %v7830, 4294901760
    %v7929 = vsub.f32 %v7830, %v7928
    %v7930 = vand.u32 %v7929, 4294901760
    %v7931 = vsub.f32 %v7929, %v7930
    %v7932 = vand.u32 %v7931, 4294901760
    %7933 = vmatmul.mubr.f32.gmra.mxu0 %v7932
    %v7934 = vpop.f32.mrf.mxu0
    %v7935 = vadd.f32 0.0, %v7934
    %v7936 = vpop.f32.mrf.mxu0
    %7937 = vdwg.mxu0
    %7938 = vmatprep.subr.mxu0 0.0
    %7939 = vmatpush1.msra.mxu0 0.0
    %7940 = vmatprep.subr.mxu0 0.0
    %7941 = vmatpush1.msra.mxu0 0.0
    %7942 = vmatprep.subr.mxu0 0.0
    %7943 = vmatpush1.msra.mxu0 0.0
    %7944 = vmatprep.subr.mxu0 0.0
    %7945 = vmatpush1.msra.mxu0 0.0
    %7946 = vmatprep.subr.mxu0 0.0
    %7947 = vmatpush1.msra.mxu0 0.0
    %7948 = vmatprep.subr.mxu0 0.0
    %7949 = vmatpush1.msra.mxu0 0.0
    %7950 = vmatprep.subr.mxu0 0.0
    %7951 = vmatpush1.msra.mxu0 0.0
    %7952 = vmatprep.subr.mxu0 0.0
    %7953 = vmatpush1.msra.mxu0 0.0
    %7954 = vmatprep.subr.mxu0 0.0
    %7955 = vmatpush1.msra.mxu0 0.0
    %7956 = vmatprep.subr.mxu0 0.0
    %7957 = vmatpush1.msra.mxu0 0.0
    %7958 = vmatprep.subr.mxu0 0.0
    %7959 = vmatpush1.msra.mxu0 0.0
    %7960 = vmatprep.subr.mxu0 0.0
    %7961 = vmatpush1.msra.mxu0 0.0
    %7962 = vmatprep.subr.mxu0 0.0
    %7963 = vmatpush1.msra.mxu0 0.0
    %7964 = vmatprep.subr.mxu0 0.0
    %7965 = vmatpush1.msra.mxu0 0.0
    %7966 = vmatprep.subr.mxu0 0.0
    %7967 = vmatpush1.msra.mxu0 0.0
    %7968 = vmatprep.subr.mxu0 0.0
    %v7969 = vand.u32 %v7811, 4294901760
    %v7970 = vsub.f32 %v7811, %v7969
    %v7971 = vand.u32 %v7970, 4294901760
    %v7972 = vsub.f32 %v7970, %v7971
    %v7973 = vand.u32 %v7972, 4294901760
    %7974 = vmatpush1.msra.mxu0 %v7973
    %7975 = vmatprep.subr.mxu0 0.0
    %7976 = vmatpush2.msra.mxu0 0.0
    %7977 = vmatprep.subr.mxu0 0.0
    %7978 = vmatpush2.msra.mxu0 0.0
    %7979 = vmatprep.subr.mxu0 0.0
    %7980 = vmatpush2.msra.mxu0 0.0
    %7981 = vmatprep.subr.mxu0 0.0
    %7982 = vmatpush2.msra.mxu0 0.0
    %7983 = vmatprep.subr.mxu0 0.0
    %7984 = vmatpush2.msra.mxu0 0.0
    %7985 = vmatprep.subr.mxu0 0.0
    %7986 = vmatpush2.msra.mxu0 0.0
    %7987 = vmatprep.subr.mxu0 0.0
    %7988 = vmatpush2.msra.mxu0 0.0
    %7989 = vmatprep.subr.mxu0 0.0
    %7990 = vmatpush2.msra.mxu0 0.0
    %7991 = vmatprep.subr.mxu0 0.0
    %7992 = vmatpush2.msra.mxu0 0.0
    %7993 = vmatprep.subr.mxu0 0.0
    %7994 = vmatpush2.msra.mxu0 0.0
    %7995 = vmatprep.subr.mxu0 0.0
    %7996 = vmatpush2.msra.mxu0 0.0
    %7997 = vmatprep.subr.mxu0 0.0
    %7998 = vmatpush2.msra.mxu0 0.0
    %7999 = vmatprep.subr.mxu0 0.0
    %8000 = vmatpush2.msra.mxu0 0.0
    %8001 = vmatprep.subr.mxu0 0.0
    %8002 = vmatpush2.msra.mxu0 0.0
    %8003 = vmatprep.subr.mxu0 0.0
    %8004 = vmatpush2.msra.mxu0 0.0
    %8005 = vmatprep.subr.mxu0 0.0
    %8006 = vmatpush2.msra.mxu0 0.0
    %8007 = vmatprep.mubr.f32.mxu0 0.0
    %v8008 = vand.u32 %v7821, 4294901760
    %8009 = vmatmul.mubr.f32.gmra.mxu0 %v8008
    %v8010 = vpop.f32.mrf.mxu0
    %v8011 = vadd.f32 %v7905, %v8010
    %v8012 = vpop.f32.mrf.mxu0
    %8013 = vmatprep.mubr.f32.mxu0 0.0
    %v8014 = vand.u32 %v7824, 4294901760
    %8015 = vmatmul.mubr.f32.gmra.mxu0 %v8014
    %v8016 = vpop.f32.mrf.mxu0
    %v8017 = vadd.f32 %v7915, %v8016
    %v8018 = vpop.f32.mrf.mxu0
    %8019 = vmatprep.mubr.f32.mxu0 0.0
    %v8020 = vand.u32 %v7827, 4294901760
    %8021 = vmatmul.mubr.f32.gmra.mxu0 %v8020
    %v8022 = vpop.f32.mrf.mxu0
    %v8023 = vadd.f32 %v7925, %v8022
    %v8024 = vpop.f32.mrf.mxu0
    %8025 = vmatprep.mubr.f32.mxu0 0.0
    %v8026 = vand.u32 %v7830, 4294901760
    %8027 = vmatmul.mubr.f32.gmra.mxu0 %v8026
    %v8028 = vpop.f32.mrf.mxu0
    %v8029 = vadd.f32 %v7935, %v8028
    %v8030 = vpop.f32.mrf.mxu0
    %8031 = vdwg.mxu0
    %8032 = vmatprep.subr.mxu0 0.0
    %8033 = vmatpush1.msra.mxu0 0.0
    %8034 = vmatprep.subr.mxu0 0.0
    %8035 = vmatpush1.msra.mxu0 0.0
    %8036 = vmatprep.subr.mxu0 0.0
    %8037 = vmatpush1.msra.mxu0 0.0
    %8038 = vmatprep.subr.mxu0 0.0
    %8039 = vmatpush1.msra.mxu0 0.0
    %8040 = vmatprep.subr.mxu0 0.0
    %8041 = vmatpush1.msra.mxu0 0.0
    %8042 = vmatprep.subr.mxu0 0.0
    %8043 = vmatpush1.msra.mxu0 0.0
    %8044 = vmatprep.subr.mxu0 0.0
    %8045 = vmatpush1.msra.mxu0 0.0
    %8046 = vmatprep.subr.mxu0 0.0
    %8047 = vmatpush1.msra.mxu0 0.0
    %8048 = vmatprep.subr.mxu0 0.0
    %8049 = vmatpush1.msra.mxu0 0.0
    %8050 = vmatprep.subr.mxu0 0.0
    %8051 = vmatpush1.msra.mxu0 0.0
    %8052 = vmatprep.subr.mxu0 0.0
    %8053 = vmatpush1.msra.mxu0 0.0
    %8054 = vmatprep.subr.mxu0 0.0
    %8055 = vmatpush1.msra.mxu0 0.0
    %8056 = vmatprep.subr.mxu0 0.0
    %8057 = vmatpush1.msra.mxu0 0.0
    %8058 = vmatprep.subr.mxu0 0.0
    %8059 = vmatpush1.msra.mxu0 0.0
    %8060 = vmatprep.subr.mxu0 0.0
    %8061 = vmatpush1.msra.mxu0 0.0
    %8062 = vmatprep.subr.mxu0 0.0
    %v8063 = vand.u32 %v7811, 4294901760
    %v8064 = vsub.f32 %v7811, %v8063
    %8065 = vmatpush1.msra.mxu0 %v8064
    %8066 = vmatprep.subr.mxu0 0.0
    %8067 = vmatpush2.msra.mxu0 0.0
    %8068 = vmatprep.subr.mxu0 0.0
    %8069 = vmatpush2.msra.mxu0 0.0
    %8070 = vmatprep.subr.mxu0 0.0
    %8071 = vmatpush2.msra.mxu0 0.0
    %8072 = vmatprep.subr.mxu0 0.0
    %8073 = vmatpush2.msra.mxu0 0.0
    %8074 = vmatprep.subr.mxu0 0.0
    %8075 = vmatpush2.msra.mxu0 0.0
    %8076 = vmatprep.subr.mxu0 0.0
    %8077 = vmatpush2.msra.mxu0 0.0
    %8078 = vmatprep.subr.mxu0 0.0
    %8079 = vmatpush2.msra.mxu0 0.0
    %8080 = vmatprep.subr.mxu0 0.0
    %8081 = vmatpush2.msra.mxu0 0.0
    %8082 = vmatprep.subr.mxu0 0.0
    %8083 = vmatpush2.msra.mxu0 0.0
    %8084 = vmatprep.subr.mxu0 0.0
    %8085 = vmatpush2.msra.mxu0 0.0
    %8086 = vmatprep.subr.mxu0 0.0
    %8087 = vmatpush2.msra.mxu0 0.0
    %8088 = vmatprep.subr.mxu0 0.0
    %8089 = vmatpush2.msra.mxu0 0.0
    %8090 = vmatprep.subr.mxu0 0.0
    %8091 = vmatpush2.msra.mxu0 0.0
    %8092 = vmatprep.subr.mxu0 0.0
    %8093 = vmatpush2.msra.mxu0 0.0
    %8094 = vmatprep.subr.mxu0 0.0
    %8095 = vmatpush2.msra.mxu0 0.0
    %8096 = vmatprep.subr.mxu0 0.0
    %8097 = vmatpush2.msra.mxu0 0.0
    %8098 = vmatprep.mubr.f32.mxu0 0.0
    %v8099 = vand.u32 %v7821, 4294901760
    %v8100 = vsub.f32 %v7821, %v8099
    %8101 = vmatmul.mubr.f32.gmra.mxu0 %v8100
    %v8102 = vpop.f32.mrf.mxu0
    %v8103 = vadd.f32 %v8011, %v8102
    %v8104 = vpop.f32.mrf.mxu0
    %8105 = vmatprep.mubr.f32.mxu0 0.0
    %v8106 = vand.u32 %v7824, 4294901760
    %v8107 = vsub.f32 %v7824, %v8106
    %8108 = vmatmul.mubr.f32.gmra.mxu0 %v8107
    %v8109 = vpop.f32.mrf.mxu0
    %v8110 = vadd.f32 %v8017, %v8109
    %v8111 = vpop.f32.mrf.mxu0
    %8112 = vmatprep.mubr.f32.mxu0 0.0
    %v8113 = vand.u32 %v7827, 4294901760
    %v8114 = vsub.f32 %v7827, %v8113
    %8115 = vmatmul.mubr.f32.gmra.mxu0 %v8114
    %v8116 = vpop.f32.mrf.mxu0
    %v8117 = vadd.f32 %v8023, %v8116
    %v8118 = vpop.f32.mrf.mxu0
    %8119 = vmatprep.mubr.f32.mxu0 0.0
    %v8120 = vand.u32 %v7830, 4294901760
    %v8121 = vsub.f32 %v7830, %v8120
    %8122 = vmatmul.mubr.f32.gmra.mxu0 %v8121
    %v8123 = vpop.f32.mrf.mxu0
    %v8124 = vadd.f32 %v8029, %v8123
    %v8125 = vpop.f32.mrf.mxu0
    %8126 = vdwg.mxu0
    %8127 = vmatprep.subr.mxu0 0.0
    %8128 = vmatpush1.msra.mxu0 0.0
    %8129 = vmatprep.subr.mxu0 0.0
    %8130 = vmatpush1.msra.mxu0 0.0
    %8131 = vmatprep.subr.mxu0 0.0
    %8132 = vmatpush1.msra.mxu0 0.0
    %8133 = vmatprep.subr.mxu0 0.0
    %8134 = vmatpush1.msra.mxu0 0.0
    %8135 = vmatprep.subr.mxu0 0.0
    %8136 = vmatpush1.msra.mxu0 0.0
    %8137 = vmatprep.subr.mxu0 0.0
    %8138 = vmatpush1.msra.mxu0 0.0
    %8139 = vmatprep.subr.mxu0 0.0
    %8140 = vmatpush1.msra.mxu0 0.0
    %8141 = vmatprep.subr.mxu0 0.0
    %8142 = vmatpush1.msra.mxu0 0.0
    %8143 = vmatprep.subr.mxu0 0.0
    %8144 = vmatpush1.msra.mxu0 0.0
    %8145 = vmatprep.subr.mxu0 0.0
    %8146 = vmatpush1.msra.mxu0 0.0
    %8147 = vmatprep.subr.mxu0 0.0
    %8148 = vmatpush1.msra.mxu0 0.0
    %8149 = vmatprep.subr.mxu0 0.0
    %8150 = vmatpush1.msra.mxu0 0.0
    %8151 = vmatprep.subr.mxu0 0.0
    %8152 = vmatpush1.msra.mxu0 0.0
    %8153 = vmatprep.subr.mxu0 0.0
    %8154 = vmatpush1.msra.mxu0 0.0
    %8155 = vmatprep.subr.mxu0 0.0
    %8156 = vmatpush1.msra.mxu0 0.0
    %8157 = vmatprep.subr.mxu0 0.0
    %v8158 = vand.u32 %v7811, 4294901760
    %8159 = vmatpush1.msra.mxu0 %v8158
    %8160 = vmatprep.subr.mxu0 0.0
    %8161 = vmatpush2.msra.mxu0 0.0
    %8162 = vmatprep.subr.mxu0 0.0
    %8163 = vmatpush2.msra.mxu0 0.0
    %8164 = vmatprep.subr.mxu0 0.0
    %8165 = vmatpush2.msra.mxu0 0.0
    %8166 = vmatprep.subr.mxu0 0.0
    %8167 = vmatpush2.msra.mxu0 0.0
    %8168 = vmatprep.subr.mxu0 0.0
    %8169 = vmatpush2.msra.mxu0 0.0
    %8170 = vmatprep.subr.mxu0 0.0
    %8171 = vmatpush2.msra.mxu0 0.0
    %8172 = vmatprep.subr.mxu0 0.0
    %8173 = vmatpush2.msra.mxu0 0.0
    %8174 = vmatprep.subr.mxu0 0.0
    %8175 = vmatpush2.msra.mxu0 0.0
    %8176 = vmatprep.subr.mxu0 0.0
    %8177 = vmatpush2.msra.mxu0 0.0
    %8178 = vmatprep.subr.mxu0 0.0
    %8179 = vmatpush2.msra.mxu0 0.0
    %8180 = vmatprep.subr.mxu0 0.0
    %8181 = vmatpush2.msra.mxu0 0.0
    %8182 = vmatprep.subr.mxu0 0.0
    %8183 = vmatpush2.msra.mxu0 0.0
    %8184 = vmatprep.subr.mxu0 0.0
    %8185 = vmatpush2.msra.mxu0 0.0
    %8186 = vmatprep.subr.mxu0 0.0
    %8187 = vmatpush2.msra.mxu0 0.0
    %8188 = vmatprep.subr.mxu0 0.0
    %8189 = vmatpush2.msra.mxu0 0.0
    %8190 = vmatprep.subr.mxu0 0.0
    %8191 = vmatpush2.msra.mxu0 0.0
    %8192 = vmatprep.mubr.f32.mxu0 0.0
    %v8193 = vand.u32 %v7821, 4294901760
    %v8194 = vsub.f32 %v7821, %v8193
    %v8195 = vand.u32 %v8194, 4294901760
    %8196 = vmatmul.mubr.f32.gmra.mxu0 %v8195
    %v8197 = vpop.f32.mrf.mxu0
    %v8198 = vadd.f32 %v8103, %v8197
    %v8199 = vpop.f32.mrf.mxu0
    %8200 = vmatprep.mubr.f32.mxu0 0.0
    %v8201 = vand.u32 %v7824, 4294901760
    %v8202 = vsub.f32 %v7824, %v8201
    %v8203 = vand.u32 %v8202, 4294901760
    %8204 = vmatmul.mubr.f32.gmra.mxu0 %v8203
    %v8205 = vpop.f32.mrf.mxu0
    %v8206 = vadd.f32 %v8110, %v8205
    %v8207 = vpop.f32.mrf.mxu0
    %8208 = vmatprep.mubr.f32.mxu0 0.0
    %v8209 = vand.u32 %v7827, 4294901760
    %v8210 = vsub.f32 %v7827, %v8209
    %v8211 = vand.u32 %v8210, 4294901760
    %8212 = vmatmul.mubr.f32.gmra.mxu0 %v8211
    %v8213 = vpop.f32.mrf.mxu0
    %v8214 = vadd.f32 %v8117, %v8213
    %v8215 = vpop.f32.mrf.mxu0
    %8216 = vmatprep.mubr.f32.mxu0 0.0
    %v8217 = vand.u32 %v7830, 4294901760
    %v8218 = vsub.f32 %v7830, %v8217
    %v8219 = vand.u32 %v8218, 4294901760
    %8220 = vmatmul.mubr.f32.gmra.mxu0 %v8219
    %v8221 = vpop.f32.mrf.mxu0
    %v8222 = vadd.f32 %v8124, %v8221
    %v8223 = vpop.f32.mrf.mxu0
    %8224 = vdwg.mxu0
    %8225 = vmatprep.subr.mxu0 0.0
    %8226 = vmatpush1.msra.mxu0 0.0
    %8227 = vmatprep.subr.mxu0 0.0
    %8228 = vmatpush1.msra.mxu0 0.0
    %8229 = vmatprep.subr.mxu0 0.0
    %8230 = vmatpush1.msra.mxu0 0.0
    %8231 = vmatprep.subr.mxu0 0.0
    %8232 = vmatpush1.msra.mxu0 0.0
    %8233 = vmatprep.subr.mxu0 0.0
    %8234 = vmatpush1.msra.mxu0 0.0
    %8235 = vmatprep.subr.mxu0 0.0
    %8236 = vmatpush1.msra.mxu0 0.0
    %8237 = vmatprep.subr.mxu0 0.0
    %8238 = vmatpush1.msra.mxu0 0.0
    %8239 = vmatprep.subr.mxu0 0.0
    %8240 = vmatpush1.msra.mxu0 0.0
    %8241 = vmatprep.subr.mxu0 0.0
    %8242 = vmatpush1.msra.mxu0 0.0
    %8243 = vmatprep.subr.mxu0 0.0
    %8244 = vmatpush1.msra.mxu0 0.0
    %8245 = vmatprep.subr.mxu0 0.0
    %8246 = vmatpush1.msra.mxu0 0.0
    %8247 = vmatprep.subr.mxu0 0.0
    %8248 = vmatpush1.msra.mxu0 0.0
    %8249 = vmatprep.subr.mxu0 0.0
    %8250 = vmatpush1.msra.mxu0 0.0
    %8251 = vmatprep.subr.mxu0 0.0
    %8252 = vmatpush1.msra.mxu0 0.0
    %8253 = vmatprep.subr.mxu0 0.0
    %8254 = vmatpush1.msra.mxu0 0.0
    %8255 = vmatprep.subr.mxu0 0.0
    %v8256 = vand.u32 %v7811, 4294901760
    %v8257 = vsub.f32 %v7811, %v8256
    %v8258 = vand.u32 %v8257, 4294901760
    %8259 = vmatpush1.msra.mxu0 %v8258
    %8260 = vmatprep.subr.mxu0 0.0
    %8261 = vmatpush2.msra.mxu0 0.0
    %8262 = vmatprep.subr.mxu0 0.0
    %8263 = vmatpush2.msra.mxu0 0.0
    %8264 = vmatprep.subr.mxu0 0.0
    %8265 = vmatpush2.msra.mxu0 0.0
    %8266 = vmatprep.subr.mxu0 0.0
    %8267 = vmatpush2.msra.mxu0 0.0
    %8268 = vmatprep.subr.mxu0 0.0
    %8269 = vmatpush2.msra.mxu0 0.0
    %8270 = vmatprep.subr.mxu0 0.0
    %8271 = vmatpush2.msra.mxu0 0.0
    %8272 = vmatprep.subr.mxu0 0.0
    %8273 = vmatpush2.msra.mxu0 0.0
    %8274 = vmatprep.subr.mxu0 0.0
    %8275 = vmatpush2.msra.mxu0 0.0
    %8276 = vmatprep.subr.mxu0 0.0
    %8277 = vmatpush2.msra.mxu0 0.0
    %8278 = vmatprep.subr.mxu0 0.0
    %8279 = vmatpush2.msra.mxu0 0.0
    %8280 = vmatprep.subr.mxu0 0.0
    %8281 = vmatpush2.msra.mxu0 0.0
    %8282 = vmatprep.subr.mxu0 0.0
    %8283 = vmatpush2.msra.mxu0 0.0
    %8284 = vmatprep.subr.mxu0 0.0
    %8285 = vmatpush2.msra.mxu0 0.0
    %8286 = vmatprep.subr.mxu0 0.0
    %8287 = vmatpush2.msra.mxu0 0.0
    %8288 = vmatprep.subr.mxu0 0.0
    %8289 = vmatpush2.msra.mxu0 0.0
    %8290 = vmatprep.subr.mxu0 0.0
    %8291 = vmatpush2.msra.mxu0 0.0
    %8292 = vmatprep.mubr.f32.mxu0 0.0
    %v8293 = vand.u32 %v7821, 4294901760
    %8294 = vmatmul.mubr.f32.gmra.mxu0 %v8293
    %v8295 = vpop.f32.mrf.mxu0
    %v8296 = vadd.f32 %v8198, %v8295
    %v8297 = vpop.f32.mrf.mxu0
    %8298 = vmatprep.mubr.f32.mxu0 0.0
    %v8299 = vand.u32 %v7824, 4294901760
    %8300 = vmatmul.mubr.f32.gmra.mxu0 %v8299
    %v8301 = vpop.f32.mrf.mxu0
    %v8302 = vadd.f32 %v8206, %v8301
    %v8303 = vpop.f32.mrf.mxu0
    %8304 = vmatprep.mubr.f32.mxu0 0.0
    %v8305 = vand.u32 %v7827, 4294901760
    %8306 = vmatmul.mubr.f32.gmra.mxu0 %v8305
    %v8307 = vpop.f32.mrf.mxu0
    %v8308 = vadd.f32 %v8214, %v8307
    %v8309 = vpop.f32.mrf.mxu0
    %8310 = vmatprep.mubr.f32.mxu0 0.0
    %v8311 = vand.u32 %v7830, 4294901760
    %8312 = vmatmul.mubr.f32.gmra.mxu0 %v8311
    %v8313 = vpop.f32.mrf.mxu0
    %v8314 = vadd.f32 %v8222, %v8313
    %v8315 = vpop.f32.mrf.mxu0
    %8316 = vdwg.mxu0
    %8317 = vmatprep.subr.mxu0 0.0
    %8318 = vmatpush1.msra.mxu0 0.0
    %8319 = vmatprep.subr.mxu0 0.0
    %8320 = vmatpush1.msra.mxu0 0.0
    %8321 = vmatprep.subr.mxu0 0.0
    %8322 = vmatpush1.msra.mxu0 0.0
    %8323 = vmatprep.subr.mxu0 0.0
    %8324 = vmatpush1.msra.mxu0 0.0
    %8325 = vmatprep.subr.mxu0 0.0
    %8326 = vmatpush1.msra.mxu0 0.0
    %8327 = vmatprep.subr.mxu0 0.0
    %8328 = vmatpush1.msra.mxu0 0.0
    %8329 = vmatprep.subr.mxu0 0.0
    %8330 = vmatpush1.msra.mxu0 0.0
    %8331 = vmatprep.subr.mxu0 0.0
    %8332 = vmatpush1.msra.mxu0 0.0
    %8333 = vmatprep.subr.mxu0 0.0
    %8334 = vmatpush1.msra.mxu0 0.0
    %8335 = vmatprep.subr.mxu0 0.0
    %8336 = vmatpush1.msra.mxu0 0.0
    %8337 = vmatprep.subr.mxu0 0.0
    %8338 = vmatpush1.msra.mxu0 0.0
    %8339 = vmatprep.subr.mxu0 0.0
    %8340 = vmatpush1.msra.mxu0 0.0
    %8341 = vmatprep.subr.mxu0 0.0
    %8342 = vmatpush1.msra.mxu0 0.0
    %8343 = vmatprep.subr.mxu0 0.0
    %8344 = vmatpush1.msra.mxu0 0.0
    %8345 = vmatprep.subr.mxu0 0.0
    %8346 = vmatpush1.msra.mxu0 0.0
    %8347 = vmatprep.subr.mxu0 0.0
    %v8348 = vand.u32 %v7811, 4294901760
    %8349 = vmatpush1.msra.mxu0 %v8348
    %8350 = vmatprep.subr.mxu0 0.0
    %8351 = vmatpush2.msra.mxu0 0.0
    %8352 = vmatprep.subr.mxu0 0.0
    %8353 = vmatpush2.msra.mxu0 0.0
    %8354 = vmatprep.subr.mxu0 0.0
    %8355 = vmatpush2.msra.mxu0 0.0
    %8356 = vmatprep.subr.mxu0 0.0
    %8357 = vmatpush2.msra.mxu0 0.0
    %8358 = vmatprep.subr.mxu0 0.0
    %8359 = vmatpush2.msra.mxu0 0.0
    %8360 = vmatprep.subr.mxu0 0.0
    %8361 = vmatpush2.msra.mxu0 0.0
    %8362 = vmatprep.subr.mxu0 0.0
    %8363 = vmatpush2.msra.mxu0 0.0
    %8364 = vmatprep.subr.mxu0 0.0
    %8365 = vmatpush2.msra.mxu0 0.0
    %8366 = vmatprep.subr.mxu0 0.0
    %8367 = vmatpush2.msra.mxu0 0.0
    %8368 = vmatprep.subr.mxu0 0.0
    %8369 = vmatpush2.msra.mxu0 0.0
    %8370 = vmatprep.subr.mxu0 0.0
    %8371 = vmatpush2.msra.mxu0 0.0
    %8372 = vmatprep.subr.mxu0 0.0
    %8373 = vmatpush2.msra.mxu0 0.0
    %8374 = vmatprep.subr.mxu0 0.0
    %8375 = vmatpush2.msra.mxu0 0.0
    %8376 = vmatprep.subr.mxu0 0.0
    %8377 = vmatpush2.msra.mxu0 0.0
    %8378 = vmatprep.subr.mxu0 0.0
    %8379 = vmatpush2.msra.mxu0 0.0
    %8380 = vmatprep.subr.mxu0 0.0
    %8381 = vmatpush2.msra.mxu0 0.0
    %8382 = vmatprep.mubr.f32.mxu0 0.0
    %v8383 = vand.u32 %v7821, 4294901760
    %8384 = vmatmul.mubr.f32.gmra.mxu0 %v8383
    %v8385 = vpop.f32.mrf.mxu0
    %v8386 = vadd.f32 %v8296, %v8385
    %v8387 = vpop.f32.mrf.mxu0
    %8388 = vmatprep.mubr.f32.mxu0 0.0
    %v8389 = vand.u32 %v7824, 4294901760
    %8390 = vmatmul.mubr.f32.gmra.mxu0 %v8389
    %v8391 = vpop.f32.mrf.mxu0
    %v8392 = vadd.f32 %v8302, %v8391
    %v8393 = vpop.f32.mrf.mxu0
    %8394 = vmatprep.mubr.f32.mxu0 0.0
    %v8395 = vand.u32 %v7827, 4294901760
    %8396 = vmatmul.mubr.f32.gmra.mxu0 %v8395
    %v8397 = vpop.f32.mrf.mxu0
    %v8398 = vadd.f32 %v8308, %v8397
    %v8399 = vpop.f32.mrf.mxu0
    %8400 = vmatprep.mubr.f32.mxu0 0.0
    %v8401 = vand.u32 %v7830, 4294901760
    %8402 = vmatmul.mubr.f32.gmra.mxu0 %v8401
    %v8403 = vpop.f32.mrf.mxu0
    %v8404 = vadd.f32 %v8314, %v8403
    %v8405 = vpop.f32.mrf.mxu0
    %8406 = vdwg.mxu0
    %v8408 = vrot.slane %v8386, 2
    %8409 = vrot.lane.b32.xlu0 %v8408, 32
    %v8410 = vpop.permute.xlu0 %8409
    %v8412 = vrot.slane %v8386, 4
    %8413 = vrot.lane.b32.xlu0 %v8412, 64
    %v8414 = vpop.permute.xlu0 %8413
    %v8416 = vrot.slane %v8386, 6
    %8417 = vrot.lane.b32.xlu0 %v8416, 96
    %v8418 = vpop.permute.xlu0 %8417
    %v8421 = vrot.slane %v8392, 2
    %8422 = vrot.lane.b32.xlu0 %v8421, 32
    %v8423 = vpop.permute.xlu0 %8422
    %v8425 = vrot.slane %v8392, 4
    %8426 = vrot.lane.b32.xlu0 %v8425, 64
    %v8427 = vpop.permute.xlu0 %8426
    %v8429 = vrot.slane %v8392, 6
    %8430 = vrot.lane.b32.xlu0 %v8429, 96
    %v8431 = vpop.permute.xlu0 %8430
    %v8434 = vrot.slane %v8398, 2
    %8435 = vrot.lane.b32.xlu0 %v8434, 32
    %v8436 = vpop.permute.xlu0 %8435
    %v8438 = vrot.slane %v8398, 4
    %8439 = vrot.lane.b32.xlu0 %v8438, 64
    %v8440 = vpop.permute.xlu0 %8439
    %v8442 = vrot.slane %v8398, 6
    %8443 = vrot.lane.b32.xlu0 %v8442, 96
    %v8444 = vpop.permute.xlu0 %8443
    %v8447 = vrot.slane %v8404, 2
    %8448 = vrot.lane.b32.xlu0 %v8447, 32
    %v8449 = vpop.permute.xlu0 %8448
    %v8451 = vrot.slane %v8404, 4
    %8452 = vrot.lane.b32.xlu0 %v8451, 64
    %v8453 = vpop.permute.xlu0 %8452
    %v8455 = vrot.slane %v8404, 6
    %8456 = vrot.lane.b32.xlu0 %v8455, 96
    %v8457 = vpop.permute.xlu0 %8456
    %v8459 = vsel %vm4673, %v8386, %v8410
    %v8460 = vsel %vm4692, %v8459, %v8414
    %v8461 = vsel %vm4712, %v8460, %v8418
    %v8462 = vsel %vm4673, %v8392, %v8423
    %v8463 = vsel %vm4692, %v8462, %v8427
    %v8464 = vsel %vm4712, %v8463, %v8431
    %v8465 = vsel %vm4673, %v8398, %v8436
    %v8466 = vsel %vm4692, %v8465, %v8440
    %v8467 = vsel %vm4712, %v8466, %v8444
    %v8468 = vsel %vm4673, %v8404, %v8449
    %v8469 = vsel %vm4692, %v8468, %v8453
    %v8470 = vsel %vm4712, %v8469, %v8457
    %v8471 = vld [vmem:[%s10] sm:$0xff]
    %v8472 = vld [vmem:[%s10 + $0x8] sm:$0xff]
    %v8473 = vld [vmem:[%s10 + $0x10] sm:$0xff]
    %v8474 = vld [vmem:[%s10 + $0x18] sm:$0xff]
    %v8475 = vld [vmem:[%s10 + $0x20] sm:$0xff]
    %v8476 = vld [vmem:[%s10 + $0x28] sm:$0xff]
    %v8477 = vld [vmem:[%s10 + $0x30] sm:$0xff]
    %v8478 = vld [vmem:[%s10 + $0x38] sm:$0xff]
    %v8479 = vld [vmem:[%s10 + $0x40] sm:$0xff]
    %v8480 = vld [vmem:[%s10 + $0x48] sm:$0xff]
    %v8481 = vld [vmem:[%s10 + $0x50] sm:$0xff]
    %v8482 = vld [vmem:[%s10 + $0x58] sm:$0xff]
    %v8483 = vld [vmem:[%s10 + $0x60] sm:$0xff]
    %v8484 = vld [vmem:[%s10 + $0x68] sm:$0xff]
    %v8485 = vld [vmem:[%s10 + $0x70] sm:$0xff]
    %v8486 = vld [vmem:[%s10 + $0x78] sm:$0xff]
    %v8487 = vld [vmem:[%s10 + $0x80] sm:$0xff]
    %v8488 = vld [vmem:[%s10 + $0x88] sm:$0xff]
    %v8489 = vld [vmem:[%s10 + $0x90] sm:$0xff]
    %v8490 = vld [vmem:[%s10 + $0x98] sm:$0xff]
    %v8491 = vld [vmem:[%s10 + $0xa0] sm:$0xff]
    %v8492 = vld [vmem:[%s10 + $0xa8] sm:$0xff]
    %v8493 = vld [vmem:[%s10 + $0xb0] sm:$0xff]
    %v8494 = vld [vmem:[%s10 + $0xb8] sm:$0xff]
    %v8495 = vld [vmem:[%s10 + $0xc0] sm:$0xff]
    %v8496 = vld [vmem:[%s10 + $0xc8] sm:$0xff]
    %v8497 = vld [vmem:[%s10 + $0xd0] sm:$0xff]
    %v8498 = vld [vmem:[%s10 + $0xd8] sm:$0xff]
    %v8499 = vld [vmem:[%s10 + $0xe0] sm:$0xff]
    %v8500 = vld [vmem:[%s10 + $0xe8] sm:$0xff]
    %v8501 = vld [vmem:[%s10 + $0xf0] sm:$0xff]
    %v8502 = vld [vmem:[%s10 + $0xf8] sm:$0xff]
    %v8503 = vld [vmem:[%s10 + $0x100] sm:$0xff]
    %v8504 = vld [vmem:[%s10 + $0x108] sm:$0xff]
    %v8505 = vld [vmem:[%s10 + $0x110] sm:$0xff]
    %v8506 = vld [vmem:[%s10 + $0x118] sm:$0xff]
    %v8507 = vld [vmem:[%s10 + $0x120] sm:$0xff]
    %v8508 = vld [vmem:[%s10 + $0x128] sm:$0xff]
    %v8509 = vld [vmem:[%s10 + $0x130] sm:$0xff]
    %v8510 = vld [vmem:[%s10 + $0x138] sm:$0xff]
    %v8511 = vld [vmem:[%s10 + $0x140] sm:$0xff]
    %v8512 = vld [vmem:[%s10 + $0x148] sm:$0xff]
    %v8513 = vld [vmem:[%s10 + $0x150] sm:$0xff]
    %v8514 = vld [vmem:[%s10 + $0x158] sm:$0xff]
    %v8515 = vld [vmem:[%s10 + $0x160] sm:$0xff]
    %v8516 = vld [vmem:[%s10 + $0x168] sm:$0xff]
    %v8517 = vld [vmem:[%s10 + $0x170] sm:$0xff]
    %v8518 = vld [vmem:[%s10 + $0x178] sm:$0xff]
    %v8519 = vld [vmem:[%s10 + $0x180] sm:$0xff]
    %v8520 = vld [vmem:[%s10 + $0x188] sm:$0xff]
    %v8521 = vld [vmem:[%s10 + $0x190] sm:$0xff]
    %v8522 = vld [vmem:[%s10 + $0x198] sm:$0xff]
    %v8523 = vld [vmem:[%s10 + $0x1a0] sm:$0xff]
    %v8524 = vld [vmem:[%s10 + $0x1a8] sm:$0xff]
    %v8525 = vld [vmem:[%s10 + $0x1b0] sm:$0xff]
    %v8526 = vld [vmem:[%s10 + $0x1b8] sm:$0xff]
    %v8527 = vld [vmem:[%s10 + $0x1c0] sm:$0xff]
    %v8528 = vld [vmem:[%s10 + $0x1c8] sm:$0xff]
    %v8529 = vld [vmem:[%s10 + $0x1d0] sm:$0xff]
    %v8530 = vld [vmem:[%s10 + $0x1d8] sm:$0xff]
    %v8531 = vld [vmem:[%s10 + $0x1e0] sm:$0xff]
    %v8532 = vld [vmem:[%s10 + $0x1e8] sm:$0xff]
    %v8533 = vld [vmem:[%s10 + $0x1f0] sm:$0xff]
    %v8534 = vld [vmem:[%s10 + $0x1f8] sm:$0xff]
    %v8535 = vld [vmem:[%s11] sm:$0x1]
    %v8536 = vlaneseq
    %v8537 = vshrl.u32 %v8536, 7
    %v8538 = vsub.s32 0, %v8537
    %v8539 = vrot.slane %v8535, %v8538
    %8540 = vmatprep.subr.mxu0 0.0
    %v8541 = vand.u32 %v8486, 4294901760
    %8542 = vmatpush1.msra.mxu0 %v8541
    %8543 = vmatprep.subr.mxu0 0.0
    %v8544 = vand.u32 %v8485, 4294901760
    %8545 = vmatpush1.msra.mxu0 %v8544
    %8546 = vmatprep.subr.mxu0 0.0
    %v8547 = vand.u32 %v8484, 4294901760
    %8548 = vmatpush1.msra.mxu0 %v8547
    %8549 = vmatprep.subr.mxu0 0.0
    %v8550 = vand.u32 %v8483, 4294901760
    %8551 = vmatpush1.msra.mxu0 %v8550
    %8552 = vmatprep.subr.mxu0 0.0
    %v8553 = vand.u32 %v8482, 4294901760
    %8554 = vmatpush1.msra.mxu0 %v8553
    %8555 = vmatprep.subr.mxu0 0.0
    %v8556 = vand.u32 %v8481, 4294901760
    %8557 = vmatpush1.msra.mxu0 %v8556
    %8558 = vmatprep.subr.mxu0 0.0
    %v8559 = vand.u32 %v8480, 4294901760
    %8560 = vmatpush1.msra.mxu0 %v8559
    %8561 = vmatprep.subr.mxu0 0.0
    %v8562 = vand.u32 %v8479, 4294901760
    %8563 = vmatpush1.msra.mxu0 %v8562
    %8564 = vmatprep.subr.mxu0 0.0
    %v8565 = vand.u32 %v8478, 4294901760
    %8566 = vmatpush1.msra.mxu0 %v8565
    %8567 = vmatprep.subr.mxu0 0.0
    %v8568 = vand.u32 %v8477, 4294901760
    %8569 = vmatpush1.msra.mxu0 %v8568
    %8570 = vmatprep.subr.mxu0 0.0
    %v8571 = vand.u32 %v8476, 4294901760
    %8572 = vmatpush1.msra.mxu0 %v8571
    %8573 = vmatprep.subr.mxu0 0.0
    %v8574 = vand.u32 %v8475, 4294901760
    %8575 = vmatpush1.msra.mxu0 %v8574
    %8576 = vmatprep.subr.mxu0 0.0
    %v8577 = vand.u32 %v8474, 4294901760
    %8578 = vmatpush1.msra.mxu0 %v8577
    %8579 = vmatprep.subr.mxu0 0.0
    %v8580 = vand.u32 %v8473, 4294901760
    %8581 = vmatpush1.msra.mxu0 %v8580
    %8582 = vmatprep.subr.mxu0 0.0
    %v8583 = vand.u32 %v8472, 4294901760
    %8584 = vmatpush1.msra.mxu0 %v8583
    %8585 = vmatprep.subr.mxu0 0.0
    %v8586 = vand.u32 %v8471, 4294901760
    %8587 = vmatpush1.msra.mxu0 %v8586
    %8588 = vmatprep.subr.mxu0 0.0
    %v8589 = vand.u32 %v8502, 4294901760
    %8590 = vmatpush2.msra.mxu0 %v8589
    %8591 = vmatprep.subr.mxu0 0.0
    %v8592 = vand.u32 %v8501, 4294901760
    %8593 = vmatpush2.msra.mxu0 %v8592
    %8594 = vmatprep.subr.mxu0 0.0
    %v8595 = vand.u32 %v8500, 4294901760
    %8596 = vmatpush2.msra.mxu0 %v8595
    %8597 = vmatprep.subr.mxu0 0.0
    %v8598 = vand.u32 %v8499, 4294901760
    %8599 = vmatpush2.msra.mxu0 %v8598
    %8600 = vmatprep.subr.mxu0 0.0
    %v8601 = vand.u32 %v8498, 4294901760
    %8602 = vmatpush2.msra.mxu0 %v8601
    %8603 = vmatprep.subr.mxu0 0.0
    %v8604 = vand.u32 %v8497, 4294901760
    %8605 = vmatpush2.msra.mxu0 %v8604
    %8606 = vmatprep.subr.mxu0 0.0
    %v8607 = vand.u32 %v8496, 4294901760
    %8608 = vmatpush2.msra.mxu0 %v8607
    %8609 = vmatprep.subr.mxu0 0.0
    %v8610 = vand.u32 %v8495, 4294901760
    %8611 = vmatpush2.msra.mxu0 %v8610
    %8612 = vmatprep.subr.mxu0 0.0
    %v8613 = vand.u32 %v8494, 4294901760
    %8614 = vmatpush2.msra.mxu0 %v8613
    %8615 = vmatprep.subr.mxu0 0.0
    %v8616 = vand.u32 %v8493, 4294901760
    %8617 = vmatpush2.msra.mxu0 %v8616
    %8618 = vmatprep.subr.mxu0 0.0
    %v8619 = vand.u32 %v8492, 4294901760
    %8620 = vmatpush2.msra.mxu0 %v8619
    %8621 = vmatprep.subr.mxu0 0.0
    %v8622 = vand.u32 %v8491, 4294901760
    %8623 = vmatpush2.msra.mxu0 %v8622
    %8624 = vmatprep.subr.mxu0 0.0
    %v8625 = vand.u32 %v8490, 4294901760
    %8626 = vmatpush2.msra.mxu0 %v8625
    %8627 = vmatprep.subr.mxu0 0.0
    %v8628 = vand.u32 %v8489, 4294901760
    %8629 = vmatpush2.msra.mxu0 %v8628
    %8630 = vmatprep.subr.mxu0 0.0
    %v8631 = vand.u32 %v8488, 4294901760
    %8632 = vmatpush2.msra.mxu0 %v8631
    %8633 = vmatprep.subr.mxu0 0.0
    %v8634 = vand.u32 %v8487, 4294901760
    %8635 = vmatpush2.msra.mxu0 %v8634
    %v8636 = vand.u32 %v8464, 4294901760
    %v8637 = vsub.f32 %v8464, %v8636
    %v8638 = vand.u32 %v8637, 4294901760
    %v8639 = vsub.f32 %v8637, %v8638
    %v8640 = vand.u32 %v8639, 4294901760
    %8641 = vmatprep.mubr.f32.mxu0 %v8640
    %v8642 = vand.u32 %v8461, 4294901760
    %v8643 = vsub.f32 %v8461, %v8642
    %v8644 = vand.u32 %v8643, 4294901760
    %v8645 = vsub.f32 %v8643, %v8644
    %v8646 = vand.u32 %v8645, 4294901760
    %8647 = vmatmul.mubr.f32.gmra.mxu0 %v8646
    %v8648 = vpop.f32.mrf.mxu0
    %v8649 = vadd.f32 %v8539, %v8648
    %v8650 = vpop.f32.mrf.mxu0
    %8651 = vdwg.mxu0
    %8652 = vmatprep.subr.mxu0 0.0
    %v8653 = vand.u32 %v8486, 4294901760
    %v8654 = vsub.f32 %v8486, %v8653
    %v8655 = vand.u32 %v8654, 4294901760
    %v8656 = vsub.f32 %v8654, %v8655
    %v8657 = vand.u32 %v8656, 4294901760
    %8658 = vmatpush1.msra.mxu0 %v8657
    %8659 = vmatprep.subr.mxu0 0.0
    %v8660 = vand.u32 %v8485, 4294901760
    %v8661 = vsub.f32 %v8485, %v8660
    %v8662 = vand.u32 %v8661, 4294901760
    %v8663 = vsub.f32 %v8661, %v8662
    %v8664 = vand.u32 %v8663, 4294901760
    %8665 = vmatpush1.msra.mxu0 %v8664
    %8666 = vmatprep.subr.mxu0 0.0
    %v8667 = vand.u32 %v8484, 4294901760
    %v8668 = vsub.f32 %v8484, %v8667
    %v8669 = vand.u32 %v8668, 4294901760
    %v8670 = vsub.f32 %v8668, %v8669
    %v8671 = vand.u32 %v8670, 4294901760
    %8672 = vmatpush1.msra.mxu0 %v8671
    %8673 = vmatprep.subr.mxu0 0.0
    %v8674 = vand.u32 %v8483, 4294901760
    %v8675 = vsub.f32 %v8483, %v8674
    %v8676 = vand.u32 %v8675, 4294901760
    %v8677 = vsub.f32 %v8675, %v8676
    %v8678 = vand.u32 %v8677, 4294901760
    %8679 = vmatpush1.msra.mxu0 %v8678
    %8680 = vmatprep.subr.mxu0 0.0
    %v8681 = vand.u32 %v8482, 4294901760
    %v8682 = vsub.f32 %v8482, %v8681
    %v8683 = vand.u32 %v8682, 4294901760
    %v8684 = vsub.f32 %v8682, %v8683
    %v8685 = vand.u32 %v8684, 4294901760
    %8686 = vmatpush1.msra.mxu0 %v8685
    %8687 = vmatprep.subr.mxu0 0.0
    %v8688 = vand.u32 %v8481, 4294901760
    %v8689 = vsub.f32 %v8481, %v8688
    %v8690 = vand.u32 %v8689, 4294901760
    %v8691 = vsub.f32 %v8689, %v8690
    %v8692 = vand.u32 %v8691, 4294901760
    %8693 = vmatpush1.msra.mxu0 %v8692
    %8694 = vmatprep.subr.mxu0 0.0
    %v8695 = vand.u32 %v8480, 4294901760
    %v8696 = vsub.f32 %v8480, %v8695
    %v8697 = vand.u32 %v8696, 4294901760
    %v8698 = vsub.f32 %v8696, %v8697
    %v8699 = vand.u32 %v8698, 4294901760
    %8700 = vmatpush1.msra.mxu0 %v8699
    %8701 = vmatprep.subr.mxu0 0.0
    %v8702 = vand.u32 %v8479, 4294901760
    %v8703 = vsub.f32 %v8479, %v8702
    %v8704 = vand.u32 %v8703, 4294901760
    %v8705 = vsub.f32 %v8703, %v8704
    %v8706 = vand.u32 %v8705, 4294901760
    %8707 = vmatpush1.msra.mxu0 %v8706
    %8708 = vmatprep.subr.mxu0 0.0
    %v8709 = vand.u32 %v8478, 4294901760
    %v8710 = vsub.f32 %v8478, %v8709
    %v8711 = vand.u32 %v8710, 4294901760
    %v8712 = vsub.f32 %v8710, %v8711
    %v8713 = vand.u32 %v8712, 4294901760
    %8714 = vmatpush1.msra.mxu0 %v8713
    %8715 = vmatprep.subr.mxu0 0.0
    %v8716 = vand.u32 %v8477, 4294901760
    %v8717 = vsub.f32 %v8477, %v8716
    %v8718 = vand.u32 %v8717, 4294901760
    %v8719 = vsub.f32 %v8717, %v8718
    %v8720 = vand.u32 %v8719, 4294901760
    %8721 = vmatpush1.msra.mxu0 %v8720
    %8722 = vmatprep.subr.mxu0 0.0
    %v8723 = vand.u32 %v8476, 4294901760
    %v8724 = vsub.f32 %v8476, %v8723
    %v8725 = vand.u32 %v8724, 4294901760
    %v8726 = vsub.f32 %v8724, %v8725
    %v8727 = vand.u32 %v8726, 4294901760
    %8728 = vmatpush1.msra.mxu0 %v8727
    %8729 = vmatprep.subr.mxu0 0.0
    %v8730 = vand.u32 %v8475, 4294901760
    %v8731 = vsub.f32 %v8475, %v8730
    %v8732 = vand.u32 %v8731, 4294901760
    %v8733 = vsub.f32 %v8731, %v8732
    %v8734 = vand.u32 %v8733, 4294901760
    %8735 = vmatpush1.msra.mxu0 %v8734
    %8736 = vmatprep.subr.mxu0 0.0
    %v8737 = vand.u32 %v8474, 4294901760
    %v8738 = vsub.f32 %v8474, %v8737
    %v8739 = vand.u32 %v8738, 4294901760
    %v8740 = vsub.f32 %v8738, %v8739
    %v8741 = vand.u32 %v8740, 4294901760
    %8742 = vmatpush1.msra.mxu0 %v8741
    %8743 = vmatprep.subr.mxu0 0.0
    %v8744 = vand.u32 %v8473, 4294901760
    %v8745 = vsub.f32 %v8473, %v8744
    %v8746 = vand.u32 %v8745, 4294901760
    %v8747 = vsub.f32 %v8745, %v8746
    %v8748 = vand.u32 %v8747, 4294901760
    %8749 = vmatpush1.msra.mxu0 %v8748
    %8750 = vmatprep.subr.mxu0 0.0
    %v8751 = vand.u32 %v8472, 4294901760
    %v8752 = vsub.f32 %v8472, %v8751
    %v8753 = vand.u32 %v8752, 4294901760
    %v8754 = vsub.f32 %v8752, %v8753
    %v8755 = vand.u32 %v8754, 4294901760
    %8756 = vmatpush1.msra.mxu0 %v8755
    %8757 = vmatprep.subr.mxu0 0.0
    %v8758 = vand.u32 %v8471, 4294901760
    %v8759 = vsub.f32 %v8471, %v8758
    %v8760 = vand.u32 %v8759, 4294901760
    %v8761 = vsub.f32 %v8759, %v8760
    %v8762 = vand.u32 %v8761, 4294901760
    %8763 = vmatpush1.msra.mxu0 %v8762
    %8764 = vmatprep.subr.mxu0 0.0
    %v8765 = vand.u32 %v8502, 4294901760
    %v8766 = vsub.f32 %v8502, %v8765
    %v8767 = vand.u32 %v8766, 4294901760
    %v8768 = vsub.f32 %v8766, %v8767
    %v8769 = vand.u32 %v8768, 4294901760
    %8770 = vmatpush2.msra.mxu0 %v8769
    %8771 = vmatprep.subr.mxu0 0.0
    %v8772 = vand.u32 %v8501, 4294901760
    %v8773 = vsub.f32 %v8501, %v8772
    %v8774 = vand.u32 %v8773, 4294901760
    %v8775 = vsub.f32 %v8773, %v8774
    %v8776 = vand.u32 %v8775, 4294901760
    %8777 = vmatpush2.msra.mxu0 %v8776
    %8778 = vmatprep.subr.mxu0 0.0
    %v8779 = vand.u32 %v8500, 4294901760
    %v8780 = vsub.f32 %v8500, %v8779
    %v8781 = vand.u32 %v8780, 4294901760
    %v8782 = vsub.f32 %v8780, %v8781
    %v8783 = vand.u32 %v8782, 4294901760
    %8784 = vmatpush2.msra.mxu0 %v8783
    %8785 = vmatprep.subr.mxu0 0.0
    %v8786 = vand.u32 %v8499, 4294901760
    %v8787 = vsub.f32 %v8499, %v8786
    %v8788 = vand.u32 %v8787, 4294901760
    %v8789 = vsub.f32 %v8787, %v8788
    %v8790 = vand.u32 %v8789, 4294901760
    %8791 = vmatpush2.msra.mxu0 %v8790
    %8792 = vmatprep.subr.mxu0 0.0
    %v8793 = vand.u32 %v8498, 4294901760
    %v8794 = vsub.f32 %v8498, %v8793
    %v8795 = vand.u32 %v8794, 4294901760
    %v8796 = vsub.f32 %v8794, %v8795
    %v8797 = vand.u32 %v8796, 4294901760
    %8798 = vmatpush2.msra.mxu0 %v8797
    %8799 = vmatprep.subr.mxu0 0.0
    %v8800 = vand.u32 %v8497, 4294901760
    %v8801 = vsub.f32 %v8497, %v8800
    %v8802 = vand.u32 %v8801, 4294901760
    %v8803 = vsub.f32 %v8801, %v8802
    %v8804 = vand.u32 %v8803, 4294901760
    %8805 = vmatpush2.msra.mxu0 %v8804
    %8806 = vmatprep.subr.mxu0 0.0
    %v8807 = vand.u32 %v8496, 4294901760
    %v8808 = vsub.f32 %v8496, %v8807
    %v8809 = vand.u32 %v8808, 4294901760
    %v8810 = vsub.f32 %v8808, %v8809
    %v8811 = vand.u32 %v8810, 4294901760
    %8812 = vmatpush2.msra.mxu0 %v8811
    %8813 = vmatprep.subr.mxu0 0.0
    %v8814 = vand.u32 %v8495, 4294901760
    %v8815 = vsub.f32 %v8495, %v8814
    %v8816 = vand.u32 %v8815, 4294901760
    %v8817 = vsub.f32 %v8815, %v8816
    %v8818 = vand.u32 %v8817, 4294901760
    %8819 = vmatpush2.msra.mxu0 %v8818
    %8820 = vmatprep.subr.mxu0 0.0
    %v8821 = vand.u32 %v8494, 4294901760
    %v8822 = vsub.f32 %v8494, %v8821
    %v8823 = vand.u32 %v8822, 4294901760
    %v8824 = vsub.f32 %v8822, %v8823
    %v8825 = vand.u32 %v8824, 4294901760
    %8826 = vmatpush2.msra.mxu0 %v8825
    %8827 = vmatprep.subr.mxu0 0.0
    %v8828 = vand.u32 %v8493, 4294901760
    %v8829 = vsub.f32 %v8493, %v8828
    %v8830 = vand.u32 %v8829, 4294901760
    %v8831 = vsub.f32 %v8829, %v8830
    %v8832 = vand.u32 %v8831, 4294901760
    %8833 = vmatpush2.msra.mxu0 %v8832
    %8834 = vmatprep.subr.mxu0 0.0
    %v8835 = vand.u32 %v8492, 4294901760
    %v8836 = vsub.f32 %v8492, %v8835
    %v8837 = vand.u32 %v8836, 4294901760
    %v8838 = vsub.f32 %v8836, %v8837
    %v8839 = vand.u32 %v8838, 4294901760
    %8840 = vmatpush2.msra.mxu0 %v8839
    %8841 = vmatprep.subr.mxu0 0.0
    %v8842 = vand.u32 %v8491, 4294901760
    %v8843 = vsub.f32 %v8491, %v8842
    %v8844 = vand.u32 %v8843, 4294901760
    %v8845 = vsub.f32 %v8843, %v8844
    %v8846 = vand.u32 %v8845, 4294901760
    %8847 = vmatpush2.msra.mxu0 %v8846
    %8848 = vmatprep.subr.mxu0 0.0
    %v8849 = vand.u32 %v8490, 4294901760
    %v8850 = vsub.f32 %v8490, %v8849
    %v8851 = vand.u32 %v8850, 4294901760
    %v8852 = vsub.f32 %v8850, %v8851
    %v8853 = vand.u32 %v8852, 4294901760
    %8854 = vmatpush2.msra.mxu0 %v8853
    %8855 = vmatprep.subr.mxu0 0.0
    %v8856 = vand.u32 %v8489, 4294901760
    %v8857 = vsub.f32 %v8489, %v8856
    %v8858 = vand.u32 %v8857, 4294901760
    %v8859 = vsub.f32 %v8857, %v8858
    %v8860 = vand.u32 %v8859, 4294901760
    %8861 = vmatpush2.msra.mxu0 %v8860
    %8862 = vmatprep.subr.mxu0 0.0
    %v8863 = vand.u32 %v8488, 4294901760
    %v8864 = vsub.f32 %v8488, %v8863
    %v8865 = vand.u32 %v8864, 4294901760
    %v8866 = vsub.f32 %v8864, %v8865
    %v8867 = vand.u32 %v8866, 4294901760
    %8868 = vmatpush2.msra.mxu0 %v8867
    %8869 = vmatprep.subr.mxu0 0.0
    %v8870 = vand.u32 %v8487, 4294901760
    %v8871 = vsub.f32 %v8487, %v8870
    %v8872 = vand.u32 %v8871, 4294901760
    %v8873 = vsub.f32 %v8871, %v8872
    %v8874 = vand.u32 %v8873, 4294901760
    %8875 = vmatpush2.msra.mxu0 %v8874
    %v8876 = vand.u32 %v8464, 4294901760
    %8877 = vmatprep.mubr.f32.mxu0 %v8876
    %v8878 = vand.u32 %v8461, 4294901760
    %8879 = vmatmul.mubr.f32.gmra.mxu0 %v8878
    %v8880 = vpop.f32.mrf.mxu0
    %v8881 = vadd.f32 %v8649, %v8880
    %v8882 = vpop.f32.mrf.mxu0
    %8883 = vdwg.mxu0
    %8884 = vmatprep.subr.mxu0 0.0
    %v8885 = vand.u32 %v8486, 4294901760
    %v8886 = vsub.f32 %v8486, %v8885
    %8887 = vmatpush1.msra.mxu0 %v8886
    %8888 = vmatprep.subr.mxu0 0.0
    %v8889 = vand.u32 %v8485, 4294901760
    %v8890 = vsub.f32 %v8485, %v8889
    %8891 = vmatpush1.msra.mxu0 %v8890
    %8892 = vmatprep.subr.mxu0 0.0
    %v8893 = vand.u32 %v8484, 4294901760
    %v8894 = vsub.f32 %v8484, %v8893
    %8895 = vmatpush1.msra.mxu0 %v8894
    %8896 = vmatprep.subr.mxu0 0.0
    %v8897 = vand.u32 %v8483, 4294901760
    %v8898 = vsub.f32 %v8483, %v8897
    %8899 = vmatpush1.msra.mxu0 %v8898
    %8900 = vmatprep.subr.mxu0 0.0
    %v8901 = vand.u32 %v8482, 4294901760
    %v8902 = vsub.f32 %v8482, %v8901
    %8903 = vmatpush1.msra.mxu0 %v8902
    %8904 = vmatprep.subr.mxu0 0.0
    %v8905 = vand.u32 %v8481, 4294901760
    %v8906 = vsub.f32 %v8481, %v8905
    %8907 = vmatpush1.msra.mxu0 %v8906
    %8908 = vmatprep.subr.mxu0 0.0
    %v8909 = vand.u32 %v8480, 4294901760
    %v8910 = vsub.f32 %v8480, %v8909
    %8911 = vmatpush1.msra.mxu0 %v8910
    %8912 = vmatprep.subr.mxu0 0.0
    %v8913 = vand.u32 %v8479, 4294901760
    %v8914 = vsub.f32 %v8479, %v8913
    %8915 = vmatpush1.msra.mxu0 %v8914
    %8916 = vmatprep.subr.mxu0 0.0
    %v8917 = vand.u32 %v8478, 4294901760
    %v8918 = vsub.f32 %v8478, %v8917
    %8919 = vmatpush1.msra.mxu0 %v8918
    %8920 = vmatprep.subr.mxu0 0.0
    %v8921 = vand.u32 %v8477, 4294901760
    %v8922 = vsub.f32 %v8477, %v8921
    %8923 = vmatpush1.msra.mxu0 %v8922
    %8924 = vmatprep.subr.mxu0 0.0
    %v8925 = vand.u32 %v8476, 4294901760
    %v8926 = vsub.f32 %v8476, %v8925
    %8927 = vmatpush1.msra.mxu0 %v8926
    %8928 = vmatprep.subr.mxu0 0.0
    %v8929 = vand.u32 %v8475, 4294901760
    %v8930 = vsub.f32 %v8475, %v8929
    %8931 = vmatpush1.msra.mxu0 %v8930
    %8932 = vmatprep.subr.mxu0 0.0
    %v8933 = vand.u32 %v8474, 4294901760
    %v8934 = vsub.f32 %v8474, %v8933
    %8935 = vmatpush1.msra.mxu0 %v8934
    %8936 = vmatprep.subr.mxu0 0.0
    %v8937 = vand.u32 %v8473, 4294901760
    %v8938 = vsub.f32 %v8473, %v8937
    %8939 = vmatpush1.msra.mxu0 %v8938
    %8940 = vmatprep.subr.mxu0 0.0
    %v8941 = vand.u32 %v8472, 4294901760
    %v8942 = vsub.f32 %v8472, %v8941
    %8943 = vmatpush1.msra.mxu0 %v8942
    %8944 = vmatprep.subr.mxu0 0.0
    %v8945 = vand.u32 %v8471, 4294901760
    %v8946 = vsub.f32 %v8471, %v8945
    %8947 = vmatpush1.msra.mxu0 %v8946
    %8948 = vmatprep.subr.mxu0 0.0
    %v8949 = vand.u32 %v8502, 4294901760
    %v8950 = vsub.f32 %v8502, %v8949
    %8951 = vmatpush2.msra.mxu0 %v8950
    %8952 = vmatprep.subr.mxu0 0.0
    %v8953 = vand.u32 %v8501, 4294901760
    %v8954 = vsub.f32 %v8501, %v8953
    %8955 = vmatpush2.msra.mxu0 %v8954
    %8956 = vmatprep.subr.mxu0 0.0
    %v8957 = vand.u32 %v8500, 4294901760
    %v8958 = vsub.f32 %v8500, %v8957
    %8959 = vmatpush2.msra.mxu0 %v8958
    %8960 = vmatprep.subr.mxu0 0.0
    %v8961 = vand.u32 %v8499, 4294901760
    %v8962 = vsub.f32 %v8499, %v8961
    %8963 = vmatpush2.msra.mxu0 %v8962
    %8964 = vmatprep.subr.mxu0 0.0
    %v8965 = vand.u32 %v8498, 4294901760
    %v8966 = vsub.f32 %v8498, %v8965
    %8967 = vmatpush2.msra.mxu0 %v8966
    %8968 = vmatprep.subr.mxu0 0.0
    %v8969 = vand.u32 %v8497, 4294901760
    %v8970 = vsub.f32 %v8497, %v8969
    %8971 = vmatpush2.msra.mxu0 %v8970
    %8972 = vmatprep.subr.mxu0 0.0
    %v8973 = vand.u32 %v8496, 4294901760
    %v8974 = vsub.f32 %v8496, %v8973
    %8975 = vmatpush2.msra.mxu0 %v8974
    %8976 = vmatprep.subr.mxu0 0.0
    %v8977 = vand.u32 %v8495, 4294901760
    %v8978 = vsub.f32 %v8495, %v8977
    %8979 = vmatpush2.msra.mxu0 %v8978
    %8980 = vmatprep.subr.mxu0 0.0
    %v8981 = vand.u32 %v8494, 4294901760
    %v8982 = vsub.f32 %v8494, %v8981
    %8983 = vmatpush2.msra.mxu0 %v8982
    %8984 = vmatprep.subr.mxu0 0.0
    %v8985 = vand.u32 %v8493, 4294901760
    %v8986 = vsub.f32 %v8493, %v8985
    %8987 = vmatpush2.msra.mxu0 %v8986
    %8988 = vmatprep.subr.mxu0 0.0
    %v8989 = vand.u32 %v8492, 4294901760
    %v8990 = vsub.f32 %v8492, %v8989
    %8991 = vmatpush2.msra.mxu0 %v8990
    %8992 = vmatprep.subr.mxu0 0.0
    %v8993 = vand.u32 %v8491, 4294901760
    %v8994 = vsub.f32 %v8491, %v8993
    %8995 = vmatpush2.msra.mxu0 %v8994
    %8996 = vmatprep.subr.mxu0 0.0
    %v8997 = vand.u32 %v8490, 4294901760
    %v8998 = vsub.f32 %v8490, %v8997
    %8999 = vmatpush2.msra.mxu0 %v8998
    %9000 = vmatprep.subr.mxu0 0.0
    %v9001 = vand.u32 %v8489, 4294901760
    %v9002 = vsub.f32 %v8489, %v9001
    %9003 = vmatpush2.msra.mxu0 %v9002
    %9004 = vmatprep.subr.mxu0 0.0
    %v9005 = vand.u32 %v8488, 4294901760
    %v9006 = vsub.f32 %v8488, %v9005
    %9007 = vmatpush2.msra.mxu0 %v9006
    %9008 = vmatprep.subr.mxu0 0.0
    %v9009 = vand.u32 %v8487, 4294901760
    %v9010 = vsub.f32 %v8487, %v9009
    %9011 = vmatpush2.msra.mxu0 %v9010
    %v9012 = vand.u32 %v8464, 4294901760
    %v9013 = vsub.f32 %v8464, %v9012
    %9014 = vmatprep.mubr.f32.mxu0 %v9013
    %v9015 = vand.u32 %v8461, 4294901760
    %v9016 = vsub.f32 %v8461, %v9015
    %9017 = vmatmul.mubr.f32.gmra.mxu0 %v9016
    %v9018 = vpop.f32.mrf.mxu0
    %v9019 = vadd.f32 %v8881, %v9018
    %v9020 = vpop.f32.mrf.mxu0
    %9021 = vdwg.mxu0
    %9022 = vmatprep.subr.mxu0 0.0
    %v9023 = vand.u32 %v8486, 4294901760
    %9024 = vmatpush1.msra.mxu0 %v9023
    %9025 = vmatprep.subr.mxu0 0.0
    %v9026 = vand.u32 %v8485, 4294901760
    %9027 = vmatpush1.msra.mxu0 %v9026
    %9028 = vmatprep.subr.mxu0 0.0
    %v9029 = vand.u32 %v8484, 4294901760
    %9030 = vmatpush1.msra.mxu0 %v9029
    %9031 = vmatprep.subr.mxu0 0.0
    %v9032 = vand.u32 %v8483, 4294901760
    %9033 = vmatpush1.msra.mxu0 %v9032
    %9034 = vmatprep.subr.mxu0 0.0
    %v9035 = vand.u32 %v8482, 4294901760
    %9036 = vmatpush1.msra.mxu0 %v9035
    %9037 = vmatprep.subr.mxu0 0.0
    %v9038 = vand.u32 %v8481, 4294901760
    %9039 = vmatpush1.msra.mxu0 %v9038
    %9040 = vmatprep.subr.mxu0 0.0
    %v9041 = vand.u32 %v8480, 4294901760
    %9042 = vmatpush1.msra.mxu0 %v9041
    %9043 = vmatprep.subr.mxu0 0.0
    %v9044 = vand.u32 %v8479, 4294901760
    %9045 = vmatpush1.msra.mxu0 %v9044
    %9046 = vmatprep.subr.mxu0 0.0
    %v9047 = vand.u32 %v8478, 4294901760
    %9048 = vmatpush1.msra.mxu0 %v9047
    %9049 = vmatprep.subr.mxu0 0.0
    %v9050 = vand.u32 %v8477, 4294901760
    %9051 = vmatpush1.msra.mxu0 %v9050
    %9052 = vmatprep.subr.mxu0 0.0
    %v9053 = vand.u32 %v8476, 4294901760
    %9054 = vmatpush1.msra.mxu0 %v9053
    %9055 = vmatprep.subr.mxu0 0.0
    %v9056 = vand.u32 %v8475, 4294901760
    %9057 = vmatpush1.msra.mxu0 %v9056
    %9058 = vmatprep.subr.mxu0 0.0
    %v9059 = vand.u32 %v8474, 4294901760
    %9060 = vmatpush1.msra.mxu0 %v9059
    %9061 = vmatprep.subr.mxu0 0.0
    %v9062 = vand.u32 %v8473, 4294901760
    %9063 = vmatpush1.msra.mxu0 %v9062
    %9064 = vmatprep.subr.mxu0 0.0
    %v9065 = vand.u32 %v8472, 4294901760
    %9066 = vmatpush1.msra.mxu0 %v9065
    %9067 = vmatprep.subr.mxu0 0.0
    %v9068 = vand.u32 %v8471, 4294901760
    %9069 = vmatpush1.msra.mxu0 %v9068
    %9070 = vmatprep.subr.mxu0 0.0
    %v9071 = vand.u32 %v8502, 4294901760
    %9072 = vmatpush2.msra.mxu0 %v9071
    %9073 = vmatprep.subr.mxu0 0.0
    %v9074 = vand.u32 %v8501, 4294901760
    %9075 = vmatpush2.msra.mxu0 %v9074
    %9076 = vmatprep.subr.mxu0 0.0
    %v9077 = vand.u32 %v8500, 4294901760
    %9078 = vmatpush2.msra.mxu0 %v9077
    %9079 = vmatprep.subr.mxu0 0.0
    %v9080 = vand.u32 %v8499, 4294901760
    %9081 = vmatpush2.msra.mxu0 %v9080
    %9082 = vmatprep.subr.mxu0 0.0
    %v9083 = vand.u32 %v8498, 4294901760
    %9084 = vmatpush2.msra.mxu0 %v9083
    %9085 = vmatprep.subr.mxu0 0.0
    %v9086 = vand.u32 %v8497, 4294901760
    %9087 = vmatpush2.msra.mxu0 %v9086
    %9088 = vmatprep.subr.mxu0 0.0
    %v9089 = vand.u32 %v8496, 4294901760
    %9090 = vmatpush2.msra.mxu0 %v9089
    %9091 = vmatprep.subr.mxu0 0.0
    %v9092 = vand.u32 %v8495, 4294901760
    %9093 = vmatpush2.msra.mxu0 %v9092
    %9094 = vmatprep.subr.mxu0 0.0
    %v9095 = vand.u32 %v8494, 4294901760
    %9096 = vmatpush2.msra.mxu0 %v9095
    %9097 = vmatprep.subr.mxu0 0.0
    %v9098 = vand.u32 %v8493, 4294901760
    %9099 = vmatpush2.msra.mxu0 %v9098
    %9100 = vmatprep.subr.mxu0 0.0
    %v9101 = vand.u32 %v8492, 4294901760
    %9102 = vmatpush2.msra.mxu0 %v9101
    %9103 = vmatprep.subr.mxu0 0.0
    %v9104 = vand.u32 %v8491, 4294901760
    %9105 = vmatpush2.msra.mxu0 %v9104
    %9106 = vmatprep.subr.mxu0 0.0
    %v9107 = vand.u32 %v8490, 4294901760
    %9108 = vmatpush2.msra.mxu0 %v9107
    %9109 = vmatprep.subr.mxu0 0.0
    %v9110 = vand.u32 %v8489, 4294901760
    %9111 = vmatpush2.msra.mxu0 %v9110
    %9112 = vmatprep.subr.mxu0 0.0
    %v9113 = vand.u32 %v8488, 4294901760
    %9114 = vmatpush2.msra.mxu0 %v9113
    %9115 = vmatprep.subr.mxu0 0.0
    %v9116 = vand.u32 %v8487, 4294901760
    %9117 = vmatpush2.msra.mxu0 %v9116
    %v9118 = vand.u32 %v8464, 4294901760
    %v9119 = vsub.f32 %v8464, %v9118
    %v9120 = vand.u32 %v9119, 4294901760
    %9121 = vmatprep.mubr.f32.mxu0 %v9120
    %v9122 = vand.u32 %v8461, 4294901760
    %v9123 = vsub.f32 %v8461, %v9122
    %v9124 = vand.u32 %v9123, 4294901760
    %9125 = vmatmul.mubr.f32.gmra.mxu0 %v9124
    %v9126 = vpop.f32.mrf.mxu0
    %v9127 = vadd.f32 %v9019, %v9126
    %v9128 = vpop.f32.mrf.mxu0
    %9129 = vdwg.mxu0
    %9130 = vmatprep.subr.mxu0 0.0
    %v9131 = vand.u32 %v8486, 4294901760
    %v9132 = vsub.f32 %v8486, %v9131
    %v9133 = vand.u32 %v9132, 4294901760
    %9134 = vmatpush1.msra.mxu0 %v9133
    %9135 = vmatprep.subr.mxu0 0.0
    %v9136 = vand.u32 %v8485, 4294901760
    %v9137 = vsub.f32 %v8485, %v9136
    %v9138 = vand.u32 %v9137, 4294901760
    %9139 = vmatpush1.msra.mxu0 %v9138
    %9140 = vmatprep.subr.mxu0 0.0
    %v9141 = vand.u32 %v8484, 4294901760
    %v9142 = vsub.f32 %v8484, %v9141
    %v9143 = vand.u32 %v9142, 4294901760
    %9144 = vmatpush1.msra.mxu0 %v9143
    %9145 = vmatprep.subr.mxu0 0.0
    %v9146 = vand.u32 %v8483, 4294901760
    %v9147 = vsub.f32 %v8483, %v9146
    %v9148 = vand.u32 %v9147, 4294901760
    %9149 = vmatpush1.msra.mxu0 %v9148
    %9150 = vmatprep.subr.mxu0 0.0
    %v9151 = vand.u32 %v8482, 4294901760
    %v9152 = vsub.f32 %v8482, %v9151
    %v9153 = vand.u32 %v9152, 4294901760
    %9154 = vmatpush1.msra.mxu0 %v9153
    %9155 = vmatprep.subr.mxu0 0.0
    %v9156 = vand.u32 %v8481, 4294901760
    %v9157 = vsub.f32 %v8481, %v9156
    %v9158 = vand.u32 %v9157, 4294901760
    %9159 = vmatpush1.msra.mxu0 %v9158
    %9160 = vmatprep.subr.mxu0 0.0
    %v9161 = vand.u32 %v8480, 4294901760
    %v9162 = vsub.f32 %v8480, %v9161
    %v9163 = vand.u32 %v9162, 4294901760
    %9164 = vmatpush1.msra.mxu0 %v9163
    %9165 = vmatprep.subr.mxu0 0.0
    %v9166 = vand.u32 %v8479, 4294901760
    %v9167 = vsub.f32 %v8479, %v9166
    %v9168 = vand.u32 %v9167, 4294901760
    %9169 = vmatpush1.msra.mxu0 %v9168
    %9170 = vmatprep.subr.mxu0 0.0
    %v9171 = vand.u32 %v8478, 4294901760
    %v9172 = vsub.f32 %v8478, %v9171
    %v9173 = vand.u32 %v9172, 4294901760
    %9174 = vmatpush1.msra.mxu0 %v9173
    %9175 = vmatprep.subr.mxu0 0.0
    %v9176 = vand.u32 %v8477, 4294901760
    %v9177 = vsub.f32 %v8477, %v9176
    %v9178 = vand.u32 %v9177, 4294901760
    %9179 = vmatpush1.msra.mxu0 %v9178
    %9180 = vmatprep.subr.mxu0 0.0
    %v9181 = vand.u32 %v8476, 4294901760
    %v9182 = vsub.f32 %v8476, %v9181
    %v9183 = vand.u32 %v9182, 4294901760
    %9184 = vmatpush1.msra.mxu0 %v9183
    %9185 = vmatprep.subr.mxu0 0.0
    %v9186 = vand.u32 %v8475, 4294901760
    %v9187 = vsub.f32 %v8475, %v9186
    %v9188 = vand.u32 %v9187, 4294901760
    %9189 = vmatpush1.msra.mxu0 %v9188
    %9190 = vmatprep.subr.mxu0 0.0
    %v9191 = vand.u32 %v8474, 4294901760
    %v9192 = vsub.f32 %v8474, %v9191
    %v9193 = vand.u32 %v9192, 4294901760
    %9194 = vmatpush1.msra.mxu0 %v9193
    %9195 = vmatprep.subr.mxu0 0.0
    %v9196 = vand.u32 %v8473, 4294901760
    %v9197 = vsub.f32 %v8473, %v9196
    %v9198 = vand.u32 %v9197, 4294901760
    %9199 = vmatpush1.msra.mxu0 %v9198
    %9200 = vmatprep.subr.mxu0 0.0
    %v9201 = vand.u32 %v8472, 4294901760
    %v9202 = vsub.f32 %v8472, %v9201
    %v9203 = vand.u32 %v9202, 4294901760
    %9204 = vmatpush1.msra.mxu0 %v9203
    %9205 = vmatprep.subr.mxu0 0.0
    %v9206 = vand.u32 %v8471, 4294901760
    %v9207 = vsub.f32 %v8471, %v9206
    %v9208 = vand.u32 %v9207, 4294901760
    %9209 = vmatpush1.msra.mxu0 %v9208
    %9210 = vmatprep.subr.mxu0 0.0
    %v9211 = vand.u32 %v8502, 4294901760
    %v9212 = vsub.f32 %v8502, %v9211
    %v9213 = vand.u32 %v9212, 4294901760
    %9214 = vmatpush2.msra.mxu0 %v9213
    %9215 = vmatprep.subr.mxu0 0.0
    %v9216 = vand.u32 %v8501, 4294901760
    %v9217 = vsub.f32 %v8501, %v9216
    %v9218 = vand.u32 %v9217, 4294901760
    %9219 = vmatpush2.msra.mxu0 %v9218
    %9220 = vmatprep.subr.mxu0 0.0
    %v9221 = vand.u32 %v8500, 4294901760
    %v9222 = vsub.f32 %v8500, %v9221
    %v9223 = vand.u32 %v9222, 4294901760
    %9224 = vmatpush2.msra.mxu0 %v9223
    %9225 = vmatprep.subr.mxu0 0.0
    %v9226 = vand.u32 %v8499, 4294901760
    %v9227 = vsub.f32 %v8499, %v9226
    %v9228 = vand.u32 %v9227, 4294901760
    %9229 = vmatpush2.msra.mxu0 %v9228
    %9230 = vmatprep.subr.mxu0 0.0
    %v9231 = vand.u32 %v8498, 4294901760
    %v9232 = vsub.f32 %v8498, %v9231
    %v9233 = vand.u32 %v9232, 4294901760
    %9234 = vmatpush2.msra.mxu0 %v9233
    %9235 = vmatprep.subr.mxu0 0.0
    %v9236 = vand.u32 %v8497, 4294901760
    %v9237 = vsub.f32 %v8497, %v9236
    %v9238 = vand.u32 %v9237, 4294901760
    %9239 = vmatpush2.msra.mxu0 %v9238
    %9240 = vmatprep.subr.mxu0 0.0
    %v9241 = vand.u32 %v8496, 4294901760
    %v9242 = vsub.f32 %v8496, %v9241
    %v9243 = vand.u32 %v9242, 4294901760
    %9244 = vmatpush2.msra.mxu0 %v9243
    %9245 = vmatprep.subr.mxu0 0.0
    %v9246 = vand.u32 %v8495, 4294901760
    %v9247 = vsub.f32 %v8495, %v9246
    %v9248 = vand.u32 %v9247, 4294901760
    %9249 = vmatpush2.msra.mxu0 %v9248
    %9250 = vmatprep.subr.mxu0 0.0
    %v9251 = vand.u32 %v8494, 4294901760
    %v9252 = vsub.f32 %v8494, %v9251
    %v9253 = vand.u32 %v9252, 4294901760
    %9254 = vmatpush2.msra.mxu0 %v9253
    %9255 = vmatprep.subr.mxu0 0.0
    %v9256 = vand.u32 %v8493, 4294901760
    %v9257 = vsub.f32 %v8493, %v9256
    %v9258 = vand.u32 %v9257, 4294901760
    %9259 = vmatpush2.msra.mxu0 %v9258
    %9260 = vmatprep.subr.mxu0 0.0
    %v9261 = vand.u32 %v8492, 4294901760
    %v9262 = vsub.f32 %v8492, %v9261
    %v9263 = vand.u32 %v9262, 4294901760
    %9264 = vmatpush2.msra.mxu0 %v9263
    %9265 = vmatprep.subr.mxu0 0.0
    %v9266 = vand.u32 %v8491, 4294901760
    %v9267 = vsub.f32 %v8491, %v9266
    %v9268 = vand.u32 %v9267, 4294901760
    %9269 = vmatpush2.msra.mxu0 %v9268
    %9270 = vmatprep.subr.mxu0 0.0
    %v9271 = vand.u32 %v8490, 4294901760
    %v9272 = vsub.f32 %v8490, %v9271
    %v9273 = vand.u32 %v9272, 4294901760
    %9274 = vmatpush2.msra.mxu0 %v9273
    %9275 = vmatprep.subr.mxu0 0.0
    %v9276 = vand.u32 %v8489, 4294901760
    %v9277 = vsub.f32 %v8489, %v9276
    %v9278 = vand.u32 %v9277, 4294901760
    %9279 = vmatpush2.msra.mxu0 %v9278
    %9280 = vmatprep.subr.mxu0 0.0
    %v9281 = vand.u32 %v8488, 4294901760
    %v9282 = vsub.f32 %v8488, %v9281
    %v9283 = vand.u32 %v9282, 4294901760
    %9284 = vmatpush2.msra.mxu0 %v9283
    %9285 = vmatprep.subr.mxu0 0.0
    %v9286 = vand.u32 %v8487, 4294901760
    %v9287 = vsub.f32 %v8487, %v9286
    %v9288 = vand.u32 %v9287, 4294901760
    %9289 = vmatpush2.msra.mxu0 %v9288
    %v9290 = vand.u32 %v8464, 4294901760
    %9291 = vmatprep.mubr.f32.mxu0 %v9290
    %v9292 = vand.u32 %v8461, 4294901760
    %9293 = vmatmul.mubr.f32.gmra.mxu0 %v9292
    %v9294 = vpop.f32.mrf.mxu0
    %v9295 = vadd.f32 %v9127, %v9294
    %v9296 = vpop.f32.mrf.mxu0
    %9297 = vdwg.mxu0
    %9298 = vmatprep.subr.mxu0 0.0
    %v9299 = vand.u32 %v8486, 4294901760
    %9300 = vmatpush1.msra.mxu0 %v9299
    %9301 = vmatprep.subr.mxu0 0.0
    %v9302 = vand.u32 %v8485, 4294901760
    %9303 = vmatpush1.msra.mxu0 %v9302
    %9304 = vmatprep.subr.mxu0 0.0
    %v9305 = vand.u32 %v8484, 4294901760
    %9306 = vmatpush1.msra.mxu0 %v9305
    %9307 = vmatprep.subr.mxu0 0.0
    %v9308 = vand.u32 %v8483, 4294901760
    %9309 = vmatpush1.msra.mxu0 %v9308
    %9310 = vmatprep.subr.mxu0 0.0
    %v9311 = vand.u32 %v8482, 4294901760
    %9312 = vmatpush1.msra.mxu0 %v9311
    %9313 = vmatprep.subr.mxu0 0.0
    %v9314 = vand.u32 %v8481, 4294901760
    %9315 = vmatpush1.msra.mxu0 %v9314
    %9316 = vmatprep.subr.mxu0 0.0
    %v9317 = vand.u32 %v8480, 4294901760
    %9318 = vmatpush1.msra.mxu0 %v9317
    %9319 = vmatprep.subr.mxu0 0.0
    %v9320 = vand.u32 %v8479, 4294901760
    %9321 = vmatpush1.msra.mxu0 %v9320
    %9322 = vmatprep.subr.mxu0 0.0
    %v9323 = vand.u32 %v8478, 4294901760
    %9324 = vmatpush1.msra.mxu0 %v9323
    %9325 = vmatprep.subr.mxu0 0.0
    %v9326 = vand.u32 %v8477, 4294901760
    %9327 = vmatpush1.msra.mxu0 %v9326
    %9328 = vmatprep.subr.mxu0 0.0
    %v9329 = vand.u32 %v8476, 4294901760
    %9330 = vmatpush1.msra.mxu0 %v9329
    %9331 = vmatprep.subr.mxu0 0.0
    %v9332 = vand.u32 %v8475, 4294901760
    %9333 = vmatpush1.msra.mxu0 %v9332
    %9334 = vmatprep.subr.mxu0 0.0
    %v9335 = vand.u32 %v8474, 4294901760
    %9336 = vmatpush1.msra.mxu0 %v9335
    %9337 = vmatprep.subr.mxu0 0.0
    %v9338 = vand.u32 %v8473, 4294901760
    %9339 = vmatpush1.msra.mxu0 %v9338
    %9340 = vmatprep.subr.mxu0 0.0
    %v9341 = vand.u32 %v8472, 4294901760
    %9342 = vmatpush1.msra.mxu0 %v9341
    %9343 = vmatprep.subr.mxu0 0.0
    %v9344 = vand.u32 %v8471, 4294901760
    %9345 = vmatpush1.msra.mxu0 %v9344
    %9346 = vmatprep.subr.mxu0 0.0
    %v9347 = vand.u32 %v8502, 4294901760
    %9348 = vmatpush2.msra.mxu0 %v9347
    %9349 = vmatprep.subr.mxu0 0.0
    %v9350 = vand.u32 %v8501, 4294901760
    %9351 = vmatpush2.msra.mxu0 %v9350
    %9352 = vmatprep.subr.mxu0 0.0
    %v9353 = vand.u32 %v8500, 4294901760
    %9354 = vmatpush2.msra.mxu0 %v9353
    %9355 = vmatprep.subr.mxu0 0.0
    %v9356 = vand.u32 %v8499, 4294901760
    %9357 = vmatpush2.msra.mxu0 %v9356
    %9358 = vmatprep.subr.mxu0 0.0
    %v9359 = vand.u32 %v8498, 4294901760
    %9360 = vmatpush2.msra.mxu0 %v9359
    %9361 = vmatprep.subr.mxu0 0.0
    %v9362 = vand.u32 %v8497, 4294901760
    %9363 = vmatpush2.msra.mxu0 %v9362
    %9364 = vmatprep.subr.mxu0 0.0
    %v9365 = vand.u32 %v8496, 4294901760
    %9366 = vmatpush2.msra.mxu0 %v9365
    %9367 = vmatprep.subr.mxu0 0.0
    %v9368 = vand.u32 %v8495, 4294901760
    %9369 = vmatpush2.msra.mxu0 %v9368
    %9370 = vmatprep.subr.mxu0 0.0
    %v9371 = vand.u32 %v8494, 4294901760
    %9372 = vmatpush2.msra.mxu0 %v9371
    %9373 = vmatprep.subr.mxu0 0.0
    %v9374 = vand.u32 %v8493, 4294901760
    %9375 = vmatpush2.msra.mxu0 %v9374
    %9376 = vmatprep.subr.mxu0 0.0
    %v9377 = vand.u32 %v8492, 4294901760
    %9378 = vmatpush2.msra.mxu0 %v9377
    %9379 = vmatprep.subr.mxu0 0.0
    %v9380 = vand.u32 %v8491, 4294901760
    %9381 = vmatpush2.msra.mxu0 %v9380
    %9382 = vmatprep.subr.mxu0 0.0
    %v9383 = vand.u32 %v8490, 4294901760
    %9384 = vmatpush2.msra.mxu0 %v9383
    %9385 = vmatprep.subr.mxu0 0.0
    %v9386 = vand.u32 %v8489, 4294901760
    %9387 = vmatpush2.msra.mxu0 %v9386
    %9388 = vmatprep.subr.mxu0 0.0
    %v9389 = vand.u32 %v8488, 4294901760
    %9390 = vmatpush2.msra.mxu0 %v9389
    %9391 = vmatprep.subr.mxu0 0.0
    %v9392 = vand.u32 %v8487, 4294901760
    %9393 = vmatpush2.msra.mxu0 %v9392
    %v9394 = vand.u32 %v8464, 4294901760
    %9395 = vmatprep.mubr.f32.mxu0 %v9394
    %v9396 = vand.u32 %v8461, 4294901760
    %9397 = vmatmul.mubr.f32.gmra.mxu0 %v9396
    %v9398 = vpop.f32.mrf.mxu0
    %v9399 = vadd.f32 %v9295, %v9398
    %v9400 = vpop.f32.mrf.mxu0
    %9401 = vdwg.mxu0
    %9402 = vmatprep.subr.mxu0 0.0
    %v9403 = vand.u32 %v8518, 4294901760
    %9404 = vmatpush1.msra.mxu0 %v9403
    %9405 = vmatprep.subr.mxu0 0.0
    %v9406 = vand.u32 %v8517, 4294901760
    %9407 = vmatpush1.msra.mxu0 %v9406
    %9408 = vmatprep.subr.mxu0 0.0
    %v9409 = vand.u32 %v8516, 4294901760
    %9410 = vmatpush1.msra.mxu0 %v9409
    %9411 = vmatprep.subr.mxu0 0.0
    %v9412 = vand.u32 %v8515, 4294901760
    %9413 = vmatpush1.msra.mxu0 %v9412
    %9414 = vmatprep.subr.mxu0 0.0
    %v9415 = vand.u32 %v8514, 4294901760
    %9416 = vmatpush1.msra.mxu0 %v9415
    %9417 = vmatprep.subr.mxu0 0.0
    %v9418 = vand.u32 %v8513, 4294901760
    %9419 = vmatpush1.msra.mxu0 %v9418
    %9420 = vmatprep.subr.mxu0 0.0
    %v9421 = vand.u32 %v8512, 4294901760
    %9422 = vmatpush1.msra.mxu0 %v9421
    %9423 = vmatprep.subr.mxu0 0.0
    %v9424 = vand.u32 %v8511, 4294901760
    %9425 = vmatpush1.msra.mxu0 %v9424
    %9426 = vmatprep.subr.mxu0 0.0
    %v9427 = vand.u32 %v8510, 4294901760
    %9428 = vmatpush1.msra.mxu0 %v9427
    %9429 = vmatprep.subr.mxu0 0.0
    %v9430 = vand.u32 %v8509, 4294901760
    %9431 = vmatpush1.msra.mxu0 %v9430
    %9432 = vmatprep.subr.mxu0 0.0
    %v9433 = vand.u32 %v8508, 4294901760
    %9434 = vmatpush1.msra.mxu0 %v9433
    %9435 = vmatprep.subr.mxu0 0.0
    %v9436 = vand.u32 %v8507, 4294901760
    %9437 = vmatpush1.msra.mxu0 %v9436
    %9438 = vmatprep.subr.mxu0 0.0
    %v9439 = vand.u32 %v8506, 4294901760
    %9440 = vmatpush1.msra.mxu0 %v9439
    %9441 = vmatprep.subr.mxu0 0.0
    %v9442 = vand.u32 %v8505, 4294901760
    %9443 = vmatpush1.msra.mxu0 %v9442
    %9444 = vmatprep.subr.mxu0 0.0
    %v9445 = vand.u32 %v8504, 4294901760
    %9446 = vmatpush1.msra.mxu0 %v9445
    %9447 = vmatprep.subr.mxu0 0.0
    %v9448 = vand.u32 %v8503, 4294901760
    %9449 = vmatpush1.msra.mxu0 %v9448
    %9450 = vmatprep.subr.mxu0 0.0
    %v9451 = vand.u32 %v8534, 4294901760
    %9452 = vmatpush2.msra.mxu0 %v9451
    %9453 = vmatprep.subr.mxu0 0.0
    %v9454 = vand.u32 %v8533, 4294901760
    %9455 = vmatpush2.msra.mxu0 %v9454
    %9456 = vmatprep.subr.mxu0 0.0
    %v9457 = vand.u32 %v8532, 4294901760
    %9458 = vmatpush2.msra.mxu0 %v9457
    %9459 = vmatprep.subr.mxu0 0.0
    %v9460 = vand.u32 %v8531, 4294901760
    %9461 = vmatpush2.msra.mxu0 %v9460
    %9462 = vmatprep.subr.mxu0 0.0
    %v9463 = vand.u32 %v8530, 4294901760
    %9464 = vmatpush2.msra.mxu0 %v9463
    %9465 = vmatprep.subr.mxu0 0.0
    %v9466 = vand.u32 %v8529, 4294901760
    %9467 = vmatpush2.msra.mxu0 %v9466
    %9468 = vmatprep.subr.mxu0 0.0
    %v9469 = vand.u32 %v8528, 4294901760
    %9470 = vmatpush2.msra.mxu0 %v9469
    %9471 = vmatprep.subr.mxu0 0.0
    %v9472 = vand.u32 %v8527, 4294901760
    %9473 = vmatpush2.msra.mxu0 %v9472
    %9474 = vmatprep.subr.mxu0 0.0
    %v9475 = vand.u32 %v8526, 4294901760
    %9476 = vmatpush2.msra.mxu0 %v9475
    %9477 = vmatprep.subr.mxu0 0.0
    %v9478 = vand.u32 %v8525, 4294901760
    %9479 = vmatpush2.msra.mxu0 %v9478
    %9480 = vmatprep.subr.mxu0 0.0
    %v9481 = vand.u32 %v8524, 4294901760
    %9482 = vmatpush2.msra.mxu0 %v9481
    %9483 = vmatprep.subr.mxu0 0.0
    %v9484 = vand.u32 %v8523, 4294901760
    %9485 = vmatpush2.msra.mxu0 %v9484
    %9486 = vmatprep.subr.mxu0 0.0
    %v9487 = vand.u32 %v8522, 4294901760
    %9488 = vmatpush2.msra.mxu0 %v9487
    %9489 = vmatprep.subr.mxu0 0.0
    %v9490 = vand.u32 %v8521, 4294901760
    %9491 = vmatpush2.msra.mxu0 %v9490
    %9492 = vmatprep.subr.mxu0 0.0
    %v9493 = vand.u32 %v8520, 4294901760
    %9494 = vmatpush2.msra.mxu0 %v9493
    %9495 = vmatprep.subr.mxu0 0.0
    %v9496 = vand.u32 %v8519, 4294901760
    %9497 = vmatpush2.msra.mxu0 %v9496
    %v9498 = vand.u32 %v8470, 4294901760
    %v9499 = vsub.f32 %v8470, %v9498
    %v9500 = vand.u32 %v9499, 4294901760
    %v9501 = vsub.f32 %v9499, %v9500
    %v9502 = vand.u32 %v9501, 4294901760
    %9503 = vmatprep.mubr.f32.mxu0 %v9502
    %v9504 = vand.u32 %v8467, 4294901760
    %v9505 = vsub.f32 %v8467, %v9504
    %v9506 = vand.u32 %v9505, 4294901760
    %v9507 = vsub.f32 %v9505, %v9506
    %v9508 = vand.u32 %v9507, 4294901760
    %9509 = vmatmul.mubr.f32.gmra.mxu0 %v9508
    %v9510 = vpop.f32.mrf.mxu0
    %v9511 = vadd.f32 %v9399, %v9510
    %v9512 = vpop.f32.mrf.mxu0
    %9513 = vdwg.mxu0
    %9514 = vmatprep.subr.mxu0 0.0
    %v9515 = vand.u32 %v8518, 4294901760
    %v9516 = vsub.f32 %v8518, %v9515
    %v9517 = vand.u32 %v9516, 4294901760
    %v9518 = vsub.f32 %v9516, %v9517
    %v9519 = vand.u32 %v9518, 4294901760
    %9520 = vmatpush1.msra.mxu0 %v9519
    %9521 = vmatprep.subr.mxu0 0.0
    %v9522 = vand.u32 %v8517, 4294901760
    %v9523 = vsub.f32 %v8517, %v9522
    %v9524 = vand.u32 %v9523, 4294901760
    %v9525 = vsub.f32 %v9523, %v9524
    %v9526 = vand.u32 %v9525, 4294901760
    %9527 = vmatpush1.msra.mxu0 %v9526
    %9528 = vmatprep.subr.mxu0 0.0
    %v9529 = vand.u32 %v8516, 4294901760
    %v9530 = vsub.f32 %v8516, %v9529
    %v9531 = vand.u32 %v9530, 4294901760
    %v9532 = vsub.f32 %v9530, %v9531
    %v9533 = vand.u32 %v9532, 4294901760
    %9534 = vmatpush1.msra.mxu0 %v9533
    %9535 = vmatprep.subr.mxu0 0.0
    %v9536 = vand.u32 %v8515, 4294901760
    %v9537 = vsub.f32 %v8515, %v9536
    %v9538 = vand.u32 %v9537, 4294901760
    %v9539 = vsub.f32 %v9537, %v9538
    %v9540 = vand.u32 %v9539, 4294901760
    %9541 = vmatpush1.msra.mxu0 %v9540
    %9542 = vmatprep.subr.mxu0 0.0
    %v9543 = vand.u32 %v8514, 4294901760
    %v9544 = vsub.f32 %v8514, %v9543
    %v9545 = vand.u32 %v9544, 4294901760
    %v9546 = vsub.f32 %v9544, %v9545
    %v9547 = vand.u32 %v9546, 4294901760
    %9548 = vmatpush1.msra.mxu0 %v9547
    %9549 = vmatprep.subr.mxu0 0.0
    %v9550 = vand.u32 %v8513, 4294901760
    %v9551 = vsub.f32 %v8513, %v9550
    %v9552 = vand.u32 %v9551, 4294901760
    %v9553 = vsub.f32 %v9551, %v9552
    %v9554 = vand.u32 %v9553, 4294901760
    %9555 = vmatpush1.msra.mxu0 %v9554
    %9556 = vmatprep.subr.mxu0 0.0
    %v9557 = vand.u32 %v8512, 4294901760
    %v9558 = vsub.f32 %v8512, %v9557
    %v9559 = vand.u32 %v9558, 4294901760
    %v9560 = vsub.f32 %v9558, %v9559
    %v9561 = vand.u32 %v9560, 4294901760
    %9562 = vmatpush1.msra.mxu0 %v9561
    %9563 = vmatprep.subr.mxu0 0.0
    %v9564 = vand.u32 %v8511, 4294901760
    %v9565 = vsub.f32 %v8511, %v9564
    %v9566 = vand.u32 %v9565, 4294901760
    %v9567 = vsub.f32 %v9565, %v9566
    %v9568 = vand.u32 %v9567, 4294901760
    %9569 = vmatpush1.msra.mxu0 %v9568
    %9570 = vmatprep.subr.mxu0 0.0
    %v9571 = vand.u32 %v8510, 4294901760
    %v9572 = vsub.f32 %v8510, %v9571
    %v9573 = vand.u32 %v9572, 4294901760
    %v9574 = vsub.f32 %v9572, %v9573
    %v9575 = vand.u32 %v9574, 4294901760
    %9576 = vmatpush1.msra.mxu0 %v9575
    %9577 = vmatprep.subr.mxu0 0.0
    %v9578 = vand.u32 %v8509, 4294901760
    %v9579 = vsub.f32 %v8509, %v9578
    %v9580 = vand.u32 %v9579, 4294901760
    %v9581 = vsub.f32 %v9579, %v9580
    %v9582 = vand.u32 %v9581, 4294901760
    %9583 = vmatpush1.msra.mxu0 %v9582
    %9584 = vmatprep.subr.mxu0 0.0
    %v9585 = vand.u32 %v8508, 4294901760
    %v9586 = vsub.f32 %v8508, %v9585
    %v9587 = vand.u32 %v9586, 4294901760
    %v9588 = vsub.f32 %v9586, %v9587
    %v9589 = vand.u32 %v9588, 4294901760
    %9590 = vmatpush1.msra.mxu0 %v9589
    %9591 = vmatprep.subr.mxu0 0.0
    %v9592 = vand.u32 %v8507, 4294901760
    %v9593 = vsub.f32 %v8507, %v9592
    %v9594 = vand.u32 %v9593, 4294901760
    %v9595 = vsub.f32 %v9593, %v9594
    %v9596 = vand.u32 %v9595, 4294901760
    %9597 = vmatpush1.msra.mxu0 %v9596
    %9598 = vmatprep.subr.mxu0 0.0
    %v9599 = vand.u32 %v8506, 4294901760
    %v9600 = vsub.f32 %v8506, %v9599
    %v9601 = vand.u32 %v9600, 4294901760
    %v9602 = vsub.f32 %v9600, %v9601
    %v9603 = vand.u32 %v9602, 4294901760
    %9604 = vmatpush1.msra.mxu0 %v9603
    %9605 = vmatprep.subr.mxu0 0.0
    %v9606 = vand.u32 %v8505, 4294901760
    %v9607 = vsub.f32 %v8505, %v9606
    %v9608 = vand.u32 %v9607, 4294901760
    %v9609 = vsub.f32 %v9607, %v9608
    %v9610 = vand.u32 %v9609, 4294901760
    %9611 = vmatpush1.msra.mxu0 %v9610
    %9612 = vmatprep.subr.mxu0 0.0
    %v9613 = vand.u32 %v8504, 4294901760
    %v9614 = vsub.f32 %v8504, %v9613
    %v9615 = vand.u32 %v9614, 4294901760
    %v9616 = vsub.f32 %v9614, %v9615
    %v9617 = vand.u32 %v9616, 4294901760
    %9618 = vmatpush1.msra.mxu0 %v9617
    %9619 = vmatprep.subr.mxu0 0.0
    %v9620 = vand.u32 %v8503, 4294901760
    %v9621 = vsub.f32 %v8503, %v9620
    %v9622 = vand.u32 %v9621, 4294901760
    %v9623 = vsub.f32 %v9621, %v9622
    %v9624 = vand.u32 %v9623, 4294901760
    %9625 = vmatpush1.msra.mxu0 %v9624
    %9626 = vmatprep.subr.mxu0 0.0
    %v9627 = vand.u32 %v8534, 4294901760
    %v9628 = vsub.f32 %v8534, %v9627
    %v9629 = vand.u32 %v9628, 4294901760
    %v9630 = vsub.f32 %v9628, %v9629
    %v9631 = vand.u32 %v9630, 4294901760
    %9632 = vmatpush2.msra.mxu0 %v9631
    %9633 = vmatprep.subr.mxu0 0.0
    %v9634 = vand.u32 %v8533, 4294901760
    %v9635 = vsub.f32 %v8533, %v9634
    %v9636 = vand.u32 %v9635, 4294901760
    %v9637 = vsub.f32 %v9635, %v9636
    %v9638 = vand.u32 %v9637, 4294901760
    %9639 = vmatpush2.msra.mxu0 %v9638
    %9640 = vmatprep.subr.mxu0 0.0
    %v9641 = vand.u32 %v8532, 4294901760
    %v9642 = vsub.f32 %v8532, %v9641
    %v9643 = vand.u32 %v9642, 4294901760
    %v9644 = vsub.f32 %v9642, %v9643
    %v9645 = vand.u32 %v9644, 4294901760
    %9646 = vmatpush2.msra.mxu0 %v9645
    %9647 = vmatprep.subr.mxu0 0.0
    %v9648 = vand.u32 %v8531, 4294901760
    %v9649 = vsub.f32 %v8531, %v9648
    %v9650 = vand.u32 %v9649, 4294901760
    %v9651 = vsub.f32 %v9649, %v9650
    %v9652 = vand.u32 %v9651, 4294901760
    %9653 = vmatpush2.msra.mxu0 %v9652
    %9654 = vmatprep.subr.mxu0 0.0
    %v9655 = vand.u32 %v8530, 4294901760
    %v9656 = vsub.f32 %v8530, %v9655
    %v9657 = vand.u32 %v9656, 4294901760
    %v9658 = vsub.f32 %v9656, %v9657
    %v9659 = vand.u32 %v9658, 4294901760
    %9660 = vmatpush2.msra.mxu0 %v9659
    %9661 = vmatprep.subr.mxu0 0.0
    %v9662 = vand.u32 %v8529, 4294901760
    %v9663 = vsub.f32 %v8529, %v9662
    %v9664 = vand.u32 %v9663, 4294901760
    %v9665 = vsub.f32 %v9663, %v9664
    %v9666 = vand.u32 %v9665, 4294901760
    %9667 = vmatpush2.msra.mxu0 %v9666
    %9668 = vmatprep.subr.mxu0 0.0
    %v9669 = vand.u32 %v8528, 4294901760
    %v9670 = vsub.f32 %v8528, %v9669
    %v9671 = vand.u32 %v9670, 4294901760
    %v9672 = vsub.f32 %v9670, %v9671
    %v9673 = vand.u32 %v9672, 4294901760
    %9674 = vmatpush2.msra.mxu0 %v9673
    %9675 = vmatprep.subr.mxu0 0.0
    %v9676 = vand.u32 %v8527, 4294901760
    %v9677 = vsub.f32 %v8527, %v9676
    %v9678 = vand.u32 %v9677, 4294901760
    %v9679 = vsub.f32 %v9677, %v9678
    %v9680 = vand.u32 %v9679, 4294901760
    %9681 = vmatpush2.msra.mxu0 %v9680
    %9682 = vmatprep.subr.mxu0 0.0
    %v9683 = vand.u32 %v8526, 4294901760
    %v9684 = vsub.f32 %v8526, %v9683
    %v9685 = vand.u32 %v9684, 4294901760
    %v9686 = vsub.f32 %v9684, %v9685
    %v9687 = vand.u32 %v9686, 4294901760
    %9688 = vmatpush2.msra.mxu0 %v9687
    %9689 = vmatprep.subr.mxu0 0.0
    %v9690 = vand.u32 %v8525, 4294901760
    %v9691 = vsub.f32 %v8525, %v9690
    %v9692 = vand.u32 %v9691, 4294901760
    %v9693 = vsub.f32 %v9691, %v9692
    %v9694 = vand.u32 %v9693, 4294901760
    %9695 = vmatpush2.msra.mxu0 %v9694
    %9696 = vmatprep.subr.mxu0 0.0
    %v9697 = vand.u32 %v8524, 4294901760
    %v9698 = vsub.f32 %v8524, %v9697
    %v9699 = vand.u32 %v9698, 4294901760
    %v9700 = vsub.f32 %v9698, %v9699
    %v9701 = vand.u32 %v9700, 4294901760
    %9702 = vmatpush2.msra.mxu0 %v9701
    %9703 = vmatprep.subr.mxu0 0.0
    %v9704 = vand.u32 %v8523, 4294901760
    %v9705 = vsub.f32 %v8523, %v9704
    %v9706 = vand.u32 %v9705, 4294901760
    %v9707 = vsub.f32 %v9705, %v9706
    %v9708 = vand.u32 %v9707, 4294901760
    %9709 = vmatpush2.msra.mxu0 %v9708
    %9710 = vmatprep.subr.mxu0 0.0
    %v9711 = vand.u32 %v8522, 4294901760
    %v9712 = vsub.f32 %v8522, %v9711
    %v9713 = vand.u32 %v9712, 4294901760
    %v9714 = vsub.f32 %v9712, %v9713
    %v9715 = vand.u32 %v9714, 4294901760
    %9716 = vmatpush2.msra.mxu0 %v9715
    %9717 = vmatprep.subr.mxu0 0.0
    %v9718 = vand.u32 %v8521, 4294901760
    %v9719 = vsub.f32 %v8521, %v9718
    %v9720 = vand.u32 %v9719, 4294901760
    %v9721 = vsub.f32 %v9719, %v9720
    %v9722 = vand.u32 %v9721, 4294901760
    %9723 = vmatpush2.msra.mxu0 %v9722
    %9724 = vmatprep.subr.mxu0 0.0
    %v9725 = vand.u32 %v8520, 4294901760
    %v9726 = vsub.f32 %v8520, %v9725
    %v9727 = vand.u32 %v9726, 4294901760
    %v9728 = vsub.f32 %v9726, %v9727
    %v9729 = vand.u32 %v9728, 4294901760
    %9730 = vmatpush2.msra.mxu0 %v9729
    %9731 = vmatprep.subr.mxu0 0.0
    %v9732 = vand.u32 %v8519, 4294901760
    %v9733 = vsub.f32 %v8519, %v9732
    %v9734 = vand.u32 %v9733, 4294901760
    %v9735 = vsub.f32 %v9733, %v9734
    %v9736 = vand.u32 %v9735, 4294901760
    %9737 = vmatpush2.msra.mxu0 %v9736
    %v9738 = vand.u32 %v8470, 4294901760
    %9739 = vmatprep.mubr.f32.mxu0 %v9738
    %v9740 = vand.u32 %v8467, 4294901760
    %9741 = vmatmul.mubr.f32.gmra.mxu0 %v9740
    %v9742 = vpop.f32.mrf.mxu0
    %v9743 = vadd.f32 %v9511, %v9742
    %v9744 = vpop.f32.mrf.mxu0
    %9745 = vdwg.mxu0
    %9746 = vmatprep.subr.mxu0 0.0
    %v9747 = vand.u32 %v8518, 4294901760
    %v9748 = vsub.f32 %v8518, %v9747
    %9749 = vmatpush1.msra.mxu0 %v9748
    %9750 = vmatprep.subr.mxu0 0.0
    %v9751 = vand.u32 %v8517, 4294901760
    %v9752 = vsub.f32 %v8517, %v9751
    %9753 = vmatpush1.msra.mxu0 %v9752
    %9754 = vmatprep.subr.mxu0 0.0
    %v9755 = vand.u32 %v8516, 4294901760
    %v9756 = vsub.f32 %v8516, %v9755
    %9757 = vmatpush1.msra.mxu0 %v9756
    %9758 = vmatprep.subr.mxu0 0.0
    %v9759 = vand.u32 %v8515, 4294901760
    %v9760 = vsub.f32 %v8515, %v9759
    %9761 = vmatpush1.msra.mxu0 %v9760
    %9762 = vmatprep.subr.mxu0 0.0
    %v9763 = vand.u32 %v8514, 4294901760
    %v9764 = vsub.f32 %v8514, %v9763
    %9765 = vmatpush1.msra.mxu0 %v9764
    %9766 = vmatprep.subr.mxu0 0.0
    %v9767 = vand.u32 %v8513, 4294901760
    %v9768 = vsub.f32 %v8513, %v9767
    %9769 = vmatpush1.msra.mxu0 %v9768
    %9770 = vmatprep.subr.mxu0 0.0
    %v9771 = vand.u32 %v8512, 4294901760
    %v9772 = vsub.f32 %v8512, %v9771
    %9773 = vmatpush1.msra.mxu0 %v9772
    %9774 = vmatprep.subr.mxu0 0.0
    %v9775 = vand.u32 %v8511, 4294901760
    %v9776 = vsub.f32 %v8511, %v9775
    %9777 = vmatpush1.msra.mxu0 %v9776
    %9778 = vmatprep.subr.mxu0 0.0
    %v9779 = vand.u32 %v8510, 4294901760
    %v9780 = vsub.f32 %v8510, %v9779
    %9781 = vmatpush1.msra.mxu0 %v9780
    %9782 = vmatprep.subr.mxu0 0.0
    %v9783 = vand.u32 %v8509, 4294901760
    %v9784 = vsub.f32 %v8509, %v9783
    %9785 = vmatpush1.msra.mxu0 %v9784
    %9786 = vmatprep.subr.mxu0 0.0
    %v9787 = vand.u32 %v8508, 4294901760
    %v9788 = vsub.f32 %v8508, %v9787
    %9789 = vmatpush1.msra.mxu0 %v9788
    %9790 = vmatprep.subr.mxu0 0.0
    %v9791 = vand.u32 %v8507, 4294901760
    %v9792 = vsub.f32 %v8507, %v9791
    %9793 = vmatpush1.msra.mxu0 %v9792
    %9794 = vmatprep.subr.mxu0 0.0
    %v9795 = vand.u32 %v8506, 4294901760
    %v9796 = vsub.f32 %v8506, %v9795
    %9797 = vmatpush1.msra.mxu0 %v9796
    %9798 = vmatprep.subr.mxu0 0.0
    %v9799 = vand.u32 %v8505, 4294901760
    %v9800 = vsub.f32 %v8505, %v9799
    %9801 = vmatpush1.msra.mxu0 %v9800
    %9802 = vmatprep.subr.mxu0 0.0
    %v9803 = vand.u32 %v8504, 4294901760
    %v9804 = vsub.f32 %v8504, %v9803
    %9805 = vmatpush1.msra.mxu0 %v9804
    %9806 = vmatprep.subr.mxu0 0.0
    %v9807 = vand.u32 %v8503, 4294901760
    %v9808 = vsub.f32 %v8503, %v9807
    %9809 = vmatpush1.msra.mxu0 %v9808
    %9810 = vmatprep.subr.mxu0 0.0
    %v9811 = vand.u32 %v8534, 4294901760
    %v9812 = vsub.f32 %v8534, %v9811
    %9813 = vmatpush2.msra.mxu0 %v9812
    %9814 = vmatprep.subr.mxu0 0.0
    %v9815 = vand.u32 %v8533, 4294901760
    %v9816 = vsub.f32 %v8533, %v9815
    %9817 = vmatpush2.msra.mxu0 %v9816
    %9818 = vmatprep.subr.mxu0 0.0
    %v9819 = vand.u32 %v8532, 4294901760
    %v9820 = vsub.f32 %v8532, %v9819
    %9821 = vmatpush2.msra.mxu0 %v9820
    %9822 = vmatprep.subr.mxu0 0.0
    %v9823 = vand.u32 %v8531, 4294901760
    %v9824 = vsub.f32 %v8531, %v9823
    %9825 = vmatpush2.msra.mxu0 %v9824
    %9826 = vmatprep.subr.mxu0 0.0
    %v9827 = vand.u32 %v8530, 4294901760
    %v9828 = vsub.f32 %v8530, %v9827
    %9829 = vmatpush2.msra.mxu0 %v9828
    %9830 = vmatprep.subr.mxu0 0.0
    %v9831 = vand.u32 %v8529, 4294901760
    %v9832 = vsub.f32 %v8529, %v9831
    %9833 = vmatpush2.msra.mxu0 %v9832
    %9834 = vmatprep.subr.mxu0 0.0
    %v9835 = vand.u32 %v8528, 4294901760
    %v9836 = vsub.f32 %v8528, %v9835
    %9837 = vmatpush2.msra.mxu0 %v9836
    %9838 = vmatprep.subr.mxu0 0.0
    %v9839 = vand.u32 %v8527, 4294901760
    %v9840 = vsub.f32 %v8527, %v9839
    %9841 = vmatpush2.msra.mxu0 %v9840
    %9842 = vmatprep.subr.mxu0 0.0
    %v9843 = vand.u32 %v8526, 4294901760
    %v9844 = vsub.f32 %v8526, %v9843
    %9845 = vmatpush2.msra.mxu0 %v9844
    %9846 = vmatprep.subr.mxu0 0.0
    %v9847 = vand.u32 %v8525, 4294901760
    %v9848 = vsub.f32 %v8525, %v9847
    %9849 = vmatpush2.msra.mxu0 %v9848
    %9850 = vmatprep.subr.mxu0 0.0
    %v9851 = vand.u32 %v8524, 4294901760
    %v9852 = vsub.f32 %v8524, %v9851
    %9853 = vmatpush2.msra.mxu0 %v9852
    %9854 = vmatprep.subr.mxu0 0.0
    %v9855 = vand.u32 %v8523, 4294901760
    %v9856 = vsub.f32 %v8523, %v9855
    %9857 = vmatpush2.msra.mxu0 %v9856
    %9858 = vmatprep.subr.mxu0 0.0
    %v9859 = vand.u32 %v8522, 4294901760
    %v9860 = vsub.f32 %v8522, %v9859
    %9861 = vmatpush2.msra.mxu0 %v9860
    %9862 = vmatprep.subr.mxu0 0.0
    %v9863 = vand.u32 %v8521, 4294901760
    %v9864 = vsub.f32 %v8521, %v9863
    %9865 = vmatpush2.msra.mxu0 %v9864
    %9866 = vmatprep.subr.mxu0 0.0
    %v9867 = vand.u32 %v8520, 4294901760
    %v9868 = vsub.f32 %v8520, %v9867
    %9869 = vmatpush2.msra.mxu0 %v9868
    %9870 = vmatprep.subr.mxu0 0.0
    %v9871 = vand.u32 %v8519, 4294901760
    %v9872 = vsub.f32 %v8519, %v9871
    %9873 = vmatpush2.msra.mxu0 %v9872
    %v9874 = vand.u32 %v8470, 4294901760
    %v9875 = vsub.f32 %v8470, %v9874
    %9876 = vmatprep.mubr.f32.mxu0 %v9875
    %v9877 = vand.u32 %v8467, 4294901760
    %v9878 = vsub.f32 %v8467, %v9877
    %9879 = vmatmul.mubr.f32.gmra.mxu0 %v9878
    %v9880 = vpop.f32.mrf.mxu0
    %v9881 = vadd.f32 %v9743, %v9880
    %v9882 = vpop.f32.mrf.mxu0
    %9883 = vdwg.mxu0
    %9884 = vmatprep.subr.mxu0 0.0
    %v9885 = vand.u32 %v8518, 4294901760
    %9886 = vmatpush1.msra.mxu0 %v9885
    %9887 = vmatprep.subr.mxu0 0.0
    %v9888 = vand.u32 %v8517, 4294901760
    %9889 = vmatpush1.msra.mxu0 %v9888
    %9890 = vmatprep.subr.mxu0 0.0
    %v9891 = vand.u32 %v8516, 4294901760
    %9892 = vmatpush1.msra.mxu0 %v9891
    %9893 = vmatprep.subr.mxu0 0.0
    %v9894 = vand.u32 %v8515, 4294901760
    %9895 = vmatpush1.msra.mxu0 %v9894
    %9896 = vmatprep.subr.mxu0 0.0
    %v9897 = vand.u32 %v8514, 4294901760
    %9898 = vmatpush1.msra.mxu0 %v9897
    %9899 = vmatprep.subr.mxu0 0.0
    %v9900 = vand.u32 %v8513, 4294901760
    %9901 = vmatpush1.msra.mxu0 %v9900
    %9902 = vmatprep.subr.mxu0 0.0
    %v9903 = vand.u32 %v8512, 4294901760
    %9904 = vmatpush1.msra.mxu0 %v9903
    %9905 = vmatprep.subr.mxu0 0.0
    %v9906 = vand.u32 %v8511, 4294901760
    %9907 = vmatpush1.msra.mxu0 %v9906
    %9908 = vmatprep.subr.mxu0 0.0
    %v9909 = vand.u32 %v8510, 4294901760
    %9910 = vmatpush1.msra.mxu0 %v9909
    %9911 = vmatprep.subr.mxu0 0.0
    %v9912 = vand.u32 %v8509, 4294901760
    %9913 = vmatpush1.msra.mxu0 %v9912
    %9914 = vmatprep.subr.mxu0 0.0
    %v9915 = vand.u32 %v8508, 4294901760
    %9916 = vmatpush1.msra.mxu0 %v9915
    %9917 = vmatprep.subr.mxu0 0.0
    %v9918 = vand.u32 %v8507, 4294901760
    %9919 = vmatpush1.msra.mxu0 %v9918
    %9920 = vmatprep.subr.mxu0 0.0
    %v9921 = vand.u32 %v8506, 4294901760
    %9922 = vmatpush1.msra.mxu0 %v9921
    %9923 = vmatprep.subr.mxu0 0.0
    %v9924 = vand.u32 %v8505, 4294901760
    %9925 = vmatpush1.msra.mxu0 %v9924
    %9926 = vmatprep.subr.mxu0 0.0
    %v9927 = vand.u32 %v8504, 4294901760
    %9928 = vmatpush1.msra.mxu0 %v9927
    %9929 = vmatprep.subr.mxu0 0.0
    %v9930 = vand.u32 %v8503, 4294901760
    %9931 = vmatpush1.msra.mxu0 %v9930
    %9932 = vmatprep.subr.mxu0 0.0
    %v9933 = vand.u32 %v8534, 4294901760
    %9934 = vmatpush2.msra.mxu0 %v9933
    %9935 = vmatprep.subr.mxu0 0.0
    %v9936 = vand.u32 %v8533, 4294901760
    %9937 = vmatpush2.msra.mxu0 %v9936
    %9938 = vmatprep.subr.mxu0 0.0
    %v9939 = vand.u32 %v8532, 4294901760
    %9940 = vmatpush2.msra.mxu0 %v9939
    %9941 = vmatprep.subr.mxu0 0.0
    %v9942 = vand.u32 %v8531, 4294901760
    %9943 = vmatpush2.msra.mxu0 %v9942
    %9944 = vmatprep.subr.mxu0 0.0
    %v9945 = vand.u32 %v8530, 4294901760
    %9946 = vmatpush2.msra.mxu0 %v9945
    %9947 = vmatprep.subr.mxu0 0.0
    %v9948 = vand.u32 %v8529, 4294901760
    %9949 = vmatpush2.msra.mxu0 %v9948
    %9950 = vmatprep.subr.mxu0 0.0
    %v9951 = vand.u32 %v8528, 4294901760
    %9952 = vmatpush2.msra.mxu0 %v9951
    %9953 = vmatprep.subr.mxu0 0.0
    %v9954 = vand.u32 %v8527, 4294901760
    %9955 = vmatpush2.msra.mxu0 %v9954
    %9956 = vmatprep.subr.mxu0 0.0
    %v9957 = vand.u32 %v8526, 4294901760
    %9958 = vmatpush2.msra.mxu0 %v9957
    %9959 = vmatprep.subr.mxu0 0.0
    %v9960 = vand.u32 %v8525, 4294901760
    %9961 = vmatpush2.msra.mxu0 %v9960
    %9962 = vmatprep.subr.mxu0 0.0
    %v9963 = vand.u32 %v8524, 4294901760
    %9964 = vmatpush2.msra.mxu0 %v9963
    %9965 = vmatprep.subr.mxu0 0.0
    %v9966 = vand.u32 %v8523, 4294901760
    %9967 = vmatpush2.msra.mxu0 %v9966
    %9968 = vmatprep.subr.mxu0 0.0
    %v9969 = vand.u32 %v8522, 4294901760
    %9970 = vmatpush2.msra.mxu0 %v9969
    %9971 = vmatprep.subr.mxu0 0.0
    %v9972 = vand.u32 %v8521, 4294901760
    %9973 = vmatpush2.msra.mxu0 %v9972
    %9974 = vmatprep.subr.mxu0 0.0
    %v9975 = vand.u32 %v8520, 4294901760
    %9976 = vmatpush2.msra.mxu0 %v9975
    %9977 = vmatprep.subr.mxu0 0.0
    %v9978 = vand.u32 %v8519, 4294901760
    %9979 = vmatpush2.msra.mxu0 %v9978
    %v9980 = vand.u32 %v8470, 4294901760
    %v9981 = vsub.f32 %v8470, %v9980
    %v9982 = vand.u32 %v9981, 4294901760
    %9983 = vmatprep.mubr.f32.mxu0 %v9982
    %v9984 = vand.u32 %v8467, 4294901760
    %v9985 = vsub.f32 %v8467, %v9984
    %v9986 = vand.u32 %v9985, 4294901760
    %9987 = vmatmul.mubr.f32.gmra.mxu0 %v9986
    %v9988 = vpop.f32.mrf.mxu0
    %v9989 = vadd.f32 %v9881, %v9988
    %v9990 = vpop.f32.mrf.mxu0
    %9991 = vdwg.mxu0
    %9992 = vmatprep.subr.mxu0 0.0
    %v9993 = vand.u32 %v8518, 4294901760
    %v9994 = vsub.f32 %v8518, %v9993
    %v9995 = vand.u32 %v9994, 4294901760
    %9996 = vmatpush1.msra.mxu0 %v9995
    %9997 = vmatprep.subr.mxu0 0.0
    %v9998 = vand.u32 %v8517, 4294901760
    %v9999 = vsub.f32 %v8517, %v9998
    %v10000 = vand.u32 %v9999, 4294901760
    %10001 = vmatpush1.msra.mxu0 %v10000
    %10002 = vmatprep.subr.mxu0 0.0
    %v10003 = vand.u32 %v8516, 4294901760
    %v10004 = vsub.f32 %v8516, %v10003
    %v10005 = vand.u32 %v10004, 4294901760
    %10006 = vmatpush1.msra.mxu0 %v10005
    %10007 = vmatprep.subr.mxu0 0.0
    %v10008 = vand.u32 %v8515, 4294901760
    %v10009 = vsub.f32 %v8515, %v10008
    %v10010 = vand.u32 %v10009, 4294901760
    %10011 = vmatpush1.msra.mxu0 %v10010
    %10012 = vmatprep.subr.mxu0 0.0
    %v10013 = vand.u32 %v8514, 4294901760
    %v10014 = vsub.f32 %v8514, %v10013
    %v10015 = vand.u32 %v10014, 4294901760
    %10016 = vmatpush1.msra.mxu0 %v10015
    %10017 = vmatprep.subr.mxu0 0.0
    %v10018 = vand.u32 %v8513, 4294901760
    %v10019 = vsub.f32 %v8513, %v10018
    %v10020 = vand.u32 %v10019, 4294901760
    %10021 = vmatpush1.msra.mxu0 %v10020
    %10022 = vmatprep.subr.mxu0 0.0
    %v10023 = vand.u32 %v8512, 4294901760
    %v10024 = vsub.f32 %v8512, %v10023
    %v10025 = vand.u32 %v10024, 4294901760
    %10026 = vmatpush1.msra.mxu0 %v10025
    %10027 = vmatprep.subr.mxu0 0.0
    %v10028 = vand.u32 %v8511, 4294901760
    %v10029 = vsub.f32 %v8511, %v10028
    %v10030 = vand.u32 %v10029, 4294901760
    %10031 = vmatpush1.msra.mxu0 %v10030
    %10032 = vmatprep.subr.mxu0 0.0
    %v10033 = vand.u32 %v8510, 4294901760
    %v10034 = vsub.f32 %v8510, %v10033
    %v10035 = vand.u32 %v10034, 4294901760
    %10036 = vmatpush1.msra.mxu0 %v10035
    %10037 = vmatprep.subr.mxu0 0.0
    %v10038 = vand.u32 %v8509, 4294901760
    %v10039 = vsub.f32 %v8509, %v10038
    %v10040 = vand.u32 %v10039, 4294901760
    %10041 = vmatpush1.msra.mxu0 %v10040
    %10042 = vmatprep.subr.mxu0 0.0
    %v10043 = vand.u32 %v8508, 4294901760
    %v10044 = vsub.f32 %v8508, %v10043
    %v10045 = vand.u32 %v10044, 4294901760
    %10046 = vmatpush1.msra.mxu0 %v10045
    %10047 = vmatprep.subr.mxu0 0.0
    %v10048 = vand.u32 %v8507, 4294901760
    %v10049 = vsub.f32 %v8507, %v10048
    %v10050 = vand.u32 %v10049, 4294901760
    %10051 = vmatpush1.msra.mxu0 %v10050
    %10052 = vmatprep.subr.mxu0 0.0
    %v10053 = vand.u32 %v8506, 4294901760
    %v10054 = vsub.f32 %v8506, %v10053
    %v10055 = vand.u32 %v10054, 4294901760
    %10056 = vmatpush1.msra.mxu0 %v10055
    %10057 = vmatprep.subr.mxu0 0.0
    %v10058 = vand.u32 %v8505, 4294901760
    %v10059 = vsub.f32 %v8505, %v10058
    %v10060 = vand.u32 %v10059, 4294901760
    %10061 = vmatpush1.msra.mxu0 %v10060
    %10062 = vmatprep.subr.mxu0 0.0
    %v10063 = vand.u32 %v8504, 4294901760
    %v10064 = vsub.f32 %v8504, %v10063
    %v10065 = vand.u32 %v10064, 4294901760
    %10066 = vmatpush1.msra.mxu0 %v10065
    %10067 = vmatprep.subr.mxu0 0.0
    %v10068 = vand.u32 %v8503, 4294901760
    %v10069 = vsub.f32 %v8503, %v10068
    %v10070 = vand.u32 %v10069, 4294901760
    %10071 = vmatpush1.msra.mxu0 %v10070
    %10072 = vmatprep.subr.mxu0 0.0
    %v10073 = vand.u32 %v8534, 4294901760
    %v10074 = vsub.f32 %v8534, %v10073
    %v10075 = vand.u32 %v10074, 4294901760
    %10076 = vmatpush2.msra.mxu0 %v10075
    %10077 = vmatprep.subr.mxu0 0.0
    %v10078 = vand.u32 %v8533, 4294901760
    %v10079 = vsub.f32 %v8533, %v10078
    %v10080 = vand.u32 %v10079, 4294901760
    %10081 = vmatpush2.msra.mxu0 %v10080
    %10082 = vmatprep.subr.mxu0 0.0
    %v10083 = vand.u32 %v8532, 4294901760
    %v10084 = vsub.f32 %v8532, %v10083
    %v10085 = vand.u32 %v10084, 4294901760
    %10086 = vmatpush2.msra.mxu0 %v10085
    %10087 = vmatprep.subr.mxu0 0.0
    %v10088 = vand.u32 %v8531, 4294901760
    %v10089 = vsub.f32 %v8531, %v10088
    %v10090 = vand.u32 %v10089, 4294901760
    %10091 = vmatpush2.msra.mxu0 %v10090
    %10092 = vmatprep.subr.mxu0 0.0
    %v10093 = vand.u32 %v8530, 4294901760
    %v10094 = vsub.f32 %v8530, %v10093
    %v10095 = vand.u32 %v10094, 4294901760
    %10096 = vmatpush2.msra.mxu0 %v10095
    %10097 = vmatprep.subr.mxu0 0.0
    %v10098 = vand.u32 %v8529, 4294901760
    %v10099 = vsub.f32 %v8529, %v10098
    %v10100 = vand.u32 %v10099, 4294901760
    %10101 = vmatpush2.msra.mxu0 %v10100
    %10102 = vmatprep.subr.mxu0 0.0
    %v10103 = vand.u32 %v8528, 4294901760
    %v10104 = vsub.f32 %v8528, %v10103
    %v10105 = vand.u32 %v10104, 4294901760
    %10106 = vmatpush2.msra.mxu0 %v10105
    %10107 = vmatprep.subr.mxu0 0.0
    %v10108 = vand.u32 %v8527, 4294901760
    %v10109 = vsub.f32 %v8527, %v10108
    %v10110 = vand.u32 %v10109, 4294901760
    %10111 = vmatpush2.msra.mxu0 %v10110
    %10112 = vmatprep.subr.mxu0 0.0
    %v10113 = vand.u32 %v8526, 4294901760
    %v10114 = vsub.f32 %v8526, %v10113
    %v10115 = vand.u32 %v10114, 4294901760
    %10116 = vmatpush2.msra.mxu0 %v10115
    %10117 = vmatprep.subr.mxu0 0.0
    %v10118 = vand.u32 %v8525, 4294901760
    %v10119 = vsub.f32 %v8525, %v10118
    %v10120 = vand.u32 %v10119, 4294901760
    %10121 = vmatpush2.msra.mxu0 %v10120
    %10122 = vmatprep.subr.mxu0 0.0
    %v10123 = vand.u32 %v8524, 4294901760
    %v10124 = vsub.f32 %v8524, %v10123
    %v10125 = vand.u32 %v10124, 4294901760
    %10126 = vmatpush2.msra.mxu0 %v10125
    %10127 = vmatprep.subr.mxu0 0.0
    %v10128 = vand.u32 %v8523, 4294901760
    %v10129 = vsub.f32 %v8523, %v10128
    %v10130 = vand.u32 %v10129, 4294901760
    %10131 = vmatpush2.msra.mxu0 %v10130
    %10132 = vmatprep.subr.mxu0 0.0
    %v10133 = vand.u32 %v8522, 4294901760
    %v10134 = vsub.f32 %v8522, %v10133
    %v10135 = vand.u32 %v10134, 4294901760
    %10136 = vmatpush2.msra.mxu0 %v10135
    %10137 = vmatprep.subr.mxu0 0.0
    %v10138 = vand.u32 %v8521, 4294901760
    %v10139 = vsub.f32 %v8521, %v10138
    %v10140 = vand.u32 %v10139, 4294901760
    %10141 = vmatpush2.msra.mxu0 %v10140
    %10142 = vmatprep.subr.mxu0 0.0
    %v10143 = vand.u32 %v8520, 4294901760
    %v10144 = vsub.f32 %v8520, %v10143
    %v10145 = vand.u32 %v10144, 4294901760
    %10146 = vmatpush2.msra.mxu0 %v10145
    %10147 = vmatprep.subr.mxu0 0.0
    %v10148 = vand.u32 %v8519, 4294901760
    %v10149 = vsub.f32 %v8519, %v10148
    %v10150 = vand.u32 %v10149, 4294901760
    %10151 = vmatpush2.msra.mxu0 %v10150
    %v10152 = vand.u32 %v8470, 4294901760
    %10153 = vmatprep.mubr.f32.mxu0 %v10152
    %v10154 = vand.u32 %v8467, 4294901760
    %10155 = vmatmul.mubr.f32.gmra.mxu0 %v10154
    %v10156 = vpop.f32.mrf.mxu0
    %v10157 = vadd.f32 %v9989, %v10156
    %v10158 = vpop.f32.mrf.mxu0
    %10159 = vdwg.mxu0
    %10160 = vmatprep.subr.mxu0 0.0
    %v10161 = vand.u32 %v8518, 4294901760
    %10162 = vmatpush1.msra.mxu0 %v10161
    %10163 = vmatprep.subr.mxu0 0.0
    %v10164 = vand.u32 %v8517, 4294901760
    %10165 = vmatpush1.msra.mxu0 %v10164
    %10166 = vmatprep.subr.mxu0 0.0
    %v10167 = vand.u32 %v8516, 4294901760
    %10168 = vmatpush1.msra.mxu0 %v10167
    %10169 = vmatprep.subr.mxu0 0.0
    %v10170 = vand.u32 %v8515, 4294901760
    %10171 = vmatpush1.msra.mxu0 %v10170
    %10172 = vmatprep.subr.mxu0 0.0
    %v10173 = vand.u32 %v8514, 4294901760
    %10174 = vmatpush1.msra.mxu0 %v10173
    %10175 = vmatprep.subr.mxu0 0.0
    %v10176 = vand.u32 %v8513, 4294901760
    %10177 = vmatpush1.msra.mxu0 %v10176
    %10178 = vmatprep.subr.mxu0 0.0
    %v10179 = vand.u32 %v8512, 4294901760
    %10180 = vmatpush1.msra.mxu0 %v10179
    %10181 = vmatprep.subr.mxu0 0.0
    %v10182 = vand.u32 %v8511, 4294901760
    %10183 = vmatpush1.msra.mxu0 %v10182
    %10184 = vmatprep.subr.mxu0 0.0
    %v10185 = vand.u32 %v8510, 4294901760
    %10186 = vmatpush1.msra.mxu0 %v10185
    %10187 = vmatprep.subr.mxu0 0.0
    %v10188 = vand.u32 %v8509, 4294901760
    %10189 = vmatpush1.msra.mxu0 %v10188
    %10190 = vmatprep.subr.mxu0 0.0
    %v10191 = vand.u32 %v8508, 4294901760
    %10192 = vmatpush1.msra.mxu0 %v10191
    %10193 = vmatprep.subr.mxu0 0.0
    %v10194 = vand.u32 %v8507, 4294901760
    %10195 = vmatpush1.msra.mxu0 %v10194
    %10196 = vmatprep.subr.mxu0 0.0
    %v10197 = vand.u32 %v8506, 4294901760
    %10198 = vmatpush1.msra.mxu0 %v10197
    %10199 = vmatprep.subr.mxu0 0.0
    %v10200 = vand.u32 %v8505, 4294901760
    %10201 = vmatpush1.msra.mxu0 %v10200
    %10202 = vmatprep.subr.mxu0 0.0
    %v10203 = vand.u32 %v8504, 4294901760
    %10204 = vmatpush1.msra.mxu0 %v10203
    %10205 = vmatprep.subr.mxu0 0.0
    %v10206 = vand.u32 %v8503, 4294901760
    %10207 = vmatpush1.msra.mxu0 %v10206
    %10208 = vmatprep.subr.mxu0 0.0
    %v10209 = vand.u32 %v8534, 4294901760
    %10210 = vmatpush2.msra.mxu0 %v10209
    %10211 = vmatprep.subr.mxu0 0.0
    %v10212 = vand.u32 %v8533, 4294901760
    %10213 = vmatpush2.msra.mxu0 %v10212
    %10214 = vmatprep.subr.mxu0 0.0
    %v10215 = vand.u32 %v8532, 4294901760
    %10216 = vmatpush2.msra.mxu0 %v10215
    %10217 = vmatprep.subr.mxu0 0.0
    %v10218 = vand.u32 %v8531, 4294901760
    %10219 = vmatpush2.msra.mxu0 %v10218
    %10220 = vmatprep.subr.mxu0 0.0
    %v10221 = vand.u32 %v8530, 4294901760
    %10222 = vmatpush2.msra.mxu0 %v10221
    %10223 = vmatprep.subr.mxu0 0.0
    %v10224 = vand.u32 %v8529, 4294901760
    %10225 = vmatpush2.msra.mxu0 %v10224
    %10226 = vmatprep.subr.mxu0 0.0
    %v10227 = vand.u32 %v8528, 4294901760
    %10228 = vmatpush2.msra.mxu0 %v10227
    %10229 = vmatprep.subr.mxu0 0.0
    %v10230 = vand.u32 %v8527, 4294901760
    %10231 = vmatpush2.msra.mxu0 %v10230
    %10232 = vmatprep.subr.mxu0 0.0
    %v10233 = vand.u32 %v8526, 4294901760
    %10234 = vmatpush2.msra.mxu0 %v10233
    %10235 = vmatprep.subr.mxu0 0.0
    %v10236 = vand.u32 %v8525, 4294901760
    %10237 = vmatpush2.msra.mxu0 %v10236
    %10238 = vmatprep.subr.mxu0 0.0
    %v10239 = vand.u32 %v8524, 4294901760
    %10240 = vmatpush2.msra.mxu0 %v10239
    %10241 = vmatprep.subr.mxu0 0.0
    %v10242 = vand.u32 %v8523, 4294901760
    %10243 = vmatpush2.msra.mxu0 %v10242
    %10244 = vmatprep.subr.mxu0 0.0
    %v10245 = vand.u32 %v8522, 4294901760
    %10246 = vmatpush2.msra.mxu0 %v10245
    %10247 = vmatprep.subr.mxu0 0.0
    %v10248 = vand.u32 %v8521, 4294901760
    %10249 = vmatpush2.msra.mxu0 %v10248
    %10250 = vmatprep.subr.mxu0 0.0
    %v10251 = vand.u32 %v8520, 4294901760
    %10252 = vmatpush2.msra.mxu0 %v10251
    %10253 = vmatprep.subr.mxu0 0.0
    %v10254 = vand.u32 %v8519, 4294901760
    %10255 = vmatpush2.msra.mxu0 %v10254
    %v10256 = vand.u32 %v8470, 4294901760
    %10257 = vmatprep.mubr.f32.mxu0 %v10256
    %v10258 = vand.u32 %v8467, 4294901760
    %10259 = vmatmul.mubr.f32.gmra.mxu0 %v10258
    %v10260 = vpop.f32.mrf.mxu0
    %v10261 = vadd.f32 %v10157, %v10260
    %v10262 = vpop.f32.mrf.mxu0
    %10263 = vdwg.mxu0
    %vm10264 = vcmask 517120
    %v10265 = vsel %vm10264, %v10261, 0.0
    %v10266 = vrot.slane %v10265, 4
    %v10267 = vadd.f32 %v10265, %v10266
    %v10268 = vrot.slane %v10267, 2
    %v10269 = vadd.f32 %v10267, %v10268
    %v10270 = vrot.slane %v10269, 1
    %v10271 = vadd.f32 %v10269, %v10270
    %v10272 = vrcp.pop 2.0
    %v10273 = vmul.f32 %v10271, %v10272
    %v10274 = vsub.f32 %v10261, %v10273
    %v10275 = vmul.f32 %v10274, %v10274
    %v10276 = vsel %vm10264, %v10275, 0.0
    %v10277 = vrot.slane %v10276, 4
    %v10278 = vadd.f32 %v10276, %v10277
    %v10279 = vrot.slane %v10278, 2
    %v10280 = vadd.f32 %v10278, %v10279
    %v10281 = vrot.slane %v10280, 1
    %v10282 = vadd.f32 %v10280, %v10281
    %v10283 = vmul.f32 %v10282, %v10272
    %v10284 = vadd.f32 %v10283, 1e-05
    %v10285 = vrsqrt.pop %v10284
    %v10286 = vmul.f32 %v10274, %v10285
    %v10287 = vld [vmem:[%s11 + $0x1] sm:$0x1]
    %v10288 = vlaneseq
    %v10289 = vshrl.u32 %v10288, 7
    %v10290 = vsub.s32 0, %v10289
    %v10291 = vrot.slane %v10287, %v10290
    %v10292 = vmul.f32 %v10286, %v10291
    %v10293 = vld [vmem:[%s11 + $0x2] sm:$0x1]
    %v10294 = vlaneseq
    %v10295 = vshrl.u32 %v10294, 7
    %v10296 = vsub.s32 0, %v10295
    %v10297 = vrot.slane %v10293, %v10296
    %v10298 = vadd.f32 %v10292, %v10297
    %vm10299 = vcmp.ge.f32.partialorder %v10298, 0.0
    %v10300 = vmul.f32 %v10298, 0.2
    %v10301 = vsel %vm10299, %v10298, %v10300
    %10302 = vst.msk [vmem:[#allocation2] sm:$0x3] %vm10264, %v10301
    // Predicated region
    $region50: #{encoder_forward.1} parent=1 // pred_check
      _
    $region51: #{encoder_forward.1} parent=1 // pred_check_branch
      %10304 = sbr.rel (0) target = $region53
    $region52: #{encoder_forward.1} parent=1 // pred_region
      %s10306 = ssub.s32 32, 32
      %10307 = vsyncadd [#allocation3], %s10306
      %s10309 = sshll.u32 [#allocation2], 4
      %s10310 = int_to_ptr.vmem [resolvable:$true] %s10309
      %10312 = dma.vmem_to_hbm [thread:$0]  %s10310, 32, %s12, [#allocation3]
    $region53: #{encoder_forward.1} parent=1 // pred_fallthru
      _
    // Predicated region
    $region54: #{encoder_forward.1} parent=1 // pred_check
      _
    $region55: #{encoder_forward.1} parent=1 // pred_check_branch
      %10314 = sbr.rel (0) target = $region57
    $region56: #{encoder_forward.1} parent=1 // pred_region
      %10315 = dma.done [#allocation3], 32
    $region57: #{encoder_forward.1} parent=1 // pred_fallthru
      _
    %10316 = vsyncpa [#allocation3], 1

</llo_original>
